<compile_context>
chip_gen: v7x
topology: tpu7x:2x2x1
jax: 0.10.0
libtpu: 0.0.40
codegen_flags: <defaults>
</compile_context>

<pallas_src>
import jax
import jax.numpy as jnp
from jax.experimental import pallas as pl
from jax.experimental.pallas import tpu as pltpu

BN_EPS = 1e-5
NEG_SLOPE = 0.2
LATENT = 256
NPTS_OUT = 2048
NOUT = 3 * NPTS_OUT


def _bn_lrelu(h, gamma, beta):
    # BatchNorm1d (training mode: batch stats, biased var) + LeakyReLU(0.2).
    # One-pass stats: var = E[x^2] - E[x]^2 (single sweep over h).
    inv_n = 1.0 / h.shape[0]
    mean = jnp.sum(h, axis=0, keepdims=True) * inv_n
    ex2 = jnp.sum(h * h, axis=0, keepdims=True) * inv_n
    var = jnp.maximum(ex2 - mean * mean, 0.0)
    hn = (h - mean) * jax.lax.rsqrt(var + BN_EPS) * gamma + beta
    return jnp.where(hn >= 0, hn, NEG_SLOPE * hn)


def encode_head_dec_kernel(x_ref,
                           w1_ref, b1_ref, g1_ref, be1_ref,
                           w2_ref, b2_ref, g2_ref, be2_ref,
                           w3_ref, b3_ref, g3_ref, be3_ref,
                           wmu_ref, bmu_ref, wlv_ref, blv_ref,
                           eps_ref,
                           wd1_ref, bd1_ref, gd1_ref, bed1_ref,
                           wd2_ref, bd2_ref, gd2_ref, bed2_ref,
                           mu_ref, lv_ref, h2_ref):
    # ---- encoder: three 1x1 convs as matmuls over channels-last rows ----
    B = mu_ref.shape[0]
    N = x_ref.shape[0] // B
    h = jnp.dot(x_ref[...], w1_ref[...], preferred_element_type=jnp.float32) + b1_ref[...]
    h = _bn_lrelu(h, g1_ref[...], be1_ref[...])
    h = jnp.dot(h, w2_ref[...], preferred_element_type=jnp.float32) + b2_ref[...]
    h = _bn_lrelu(h, g2_ref[...], be2_ref[...])
    h = jnp.dot(h, w3_ref[...], preferred_element_type=jnp.float32) + b3_ref[...]
    h = _bn_lrelu(h, g3_ref[...], be3_ref[...])

    # torch.max(x, dim=2)[0] : vectorized per-batch max over the N points
    feat = jnp.max(h.reshape(B, N, h.shape[-1]), axis=1)

    # ---- mu / logvar heads ----
    mu = jnp.dot(feat, wmu_ref[...], preferred_element_type=jnp.float32) + bmu_ref[...]
    lv = jnp.dot(feat, wlv_ref[...], preferred_element_type=jnp.float32) + blv_ref[...]
    mu_ref[...] = mu
    lv_ref[...] = lv

    # ---- reparameterize: z = mu + eps * exp(0.5 * logvar) ----
    z = mu + eps_ref[...] * jnp.exp(0.5 * lv)

    # ---- first two decoder layers ----
    h1 = jnp.dot(z, wd1_ref[...], preferred_element_type=jnp.float32) + bd1_ref[...]
    h1 = _bn_lrelu(h1, gd1_ref[...], bed1_ref[...])
    h2 = jnp.dot(h1, wd2_ref[...], preferred_element_type=jnp.float32) + bd2_ref[...]
    h2 = _bn_lrelu(h2, gd2_ref[...], bed2_ref[...])
    h2_ref[...] = h2.astype(h2_ref.dtype)   # bf16 activations for the big final matmul


def final_linear_kernel(h_ref, w_ref, b_ref, o_ref):
    # (B_pad, 1024) bf16 @ (1024, TN) bf16 tile, f32 accumulation, + f32 bias
    o_ref[...] = (jnp.dot(h_ref[...], w_ref[...], preferred_element_type=jnp.float32)
                  + b_ref[...])


def init_params(key):
    ks = iter(jax.random.split(key, 32))

    def w(shape, scale=0.05):
        return scale * jax.random.normal(next(ks), shape, jnp.float32)

    p = {}
    # encoder: Conv1d(3,64,1), Conv1d(64,128,1), Conv1d(128,256,1) as (C_in, C_out)
    p['w1'] = jnp.pad(w((3, 64)), ((0, 5), (0, 0)))   # pad C_in 3 -> 8 lanes
    p['b1'], p['g1'], p['be1'] = w((1, 64)), 1.0 + w((1, 64)), w((1, 64))
    p['w2'] = w((64, 128))
    p['b2'], p['g2'], p['be2'] = w((1, 128)), 1.0 + w((1, 128)), w((1, 128))
    p['w3'] = w((128, 256))
    p['b3'], p['g3'], p['be3'] = w((1, 256)), 1.0 + w((1, 256)), w((1, 256))
    # heads
    p['wmu'], p['bmu'] = w((256, LATENT)), w((1, LATENT))
    p['wlv'], p['blv'] = w((256, LATENT)), w((1, LATENT))
    # decoder: Linear(256,512), Linear(512,1024), Linear(1024, 2048*3)
    p['wd1'] = w((LATENT, 512))
    p['bd1'], p['gd1'], p['bed1'] = w((1, 512)), 1.0 + w((1, 512)), w((1, 512))
    p['wd2'] = w((512, 1024))
    p['bd2'], p['gd2'], p['bed2'] = w((1, 1024)), 1.0 + w((1, 1024)), w((1, 1024))
    # wd3 stored bf16: halves the dominant HBM stream (f32 accumulation in-kernel).
    p['wd3'] = w((1024, NOUT)).astype(jnp.bfloat16)
    p['bd3'] = w((1, NOUT))
    return p


def pointvae_forward(x, eps, params):
    B, _, N = x.shape
    vmem = pl.BlockSpec(memory_space=pltpu.MemorySpace.VMEM)

    # (B, 3, N) -> (B*N, 3) -> pad channel axis to 8 lanes
    xf = jnp.transpose(x, (0, 2, 1)).reshape(B * N, 3)
    xf = jnp.pad(xf, ((0, 0), (0, 5)))

    # TODO(synk): at real point-cloud sizes (N=2048, large B) the (B*N, 256) f32
    # activation no longer fits a single VMEM block (v7x: 64 MiB physical); the
    # encoder then needs a gridded two-pass (stats, then normalize) structure
    # because BatchNorm batch statistics span all B*N rows.
    mu, logvar, h2 = pl.pallas_call(
        encode_head_dec_kernel,
        out_shape=(jax.ShapeDtypeStruct((B, LATENT), jnp.float32),
                   jax.ShapeDtypeStruct((B, LATENT), jnp.float32),
                   jax.ShapeDtypeStruct((B, 1024), jnp.bfloat16)),
        in_specs=[vmem] * 26,
        out_specs=(vmem, vmem, vmem),
    )(xf,
      params['w1'], params['b1'], params['g1'], params['be1'],
      params['w2'], params['b2'], params['g2'], params['be2'],
      params['w3'], params['b3'], params['g3'], params['be3'],
      params['wmu'], params['bmu'], params['wlv'], params['blv'],
      eps,
      params['wd1'], params['bd1'], params['gd1'], params['bed1'],
      params['wd2'], params['bd2'], params['gd2'], params['bed2'])

    # Pad rows to a full sublane group so the gridded final matmul stores densely.
    B_pad = ((B + 7) // 8) * 8
    h2_pad = jnp.pad(h2, ((0, B_pad - B), (0, 0)))

    # final Linear(1024, 2048*3): stream the 12 MiB bf16 weight in 6 lane-dense
    # column tiles of TN=1024 (2 MiB/tile, 4 MiB double-buffered -> fits every
    # generation's default scoped VMEM). Even tile count + "parallel" lets v7x
    # megacore split the weight stream across both TensorCores.
    TN = 1024
    recon_flat = pl.pallas_call(
        final_linear_kernel,
        out_shape=jax.ShapeDtypeStruct((B_pad, NOUT), jnp.float32),
        grid=(NOUT // TN,),
        in_specs=[pl.BlockSpec((B_pad, 1024), lambda j: (0, 0)),
                  pl.BlockSpec((1024, TN), lambda j: (0, j)),
                  pl.BlockSpec((1, TN), lambda j: (0, j))],
        out_specs=pl.BlockSpec((B_pad, TN), lambda j: (0, j)),
        compiler_params=pltpu.CompilerParams(dimension_semantics=("parallel",)),
    )(h2_pad, params['wd3'], params['bd3'])

    # .view(-1, 3, 2048).transpose(1, 2)  -> (B, 2048, 3)
    recon = recon_flat[:B].reshape(B, 3, NPTS_OUT).transpose(0, 2, 1)
    return recon, mu, logvar


if __name__ == "__main__":
    key = jax.random.PRNGKey(0)
    kp, kx, ke = jax.random.split(key, 3)

    B, N = 2, 64                       # small point cloud: (batch=2, 3 coords, 64 points)
    params = init_params(kp)
    x = jax.random.normal(kx, (B, 3, N), jnp.float32)
    eps = jax.random.normal(ke, (B, LATENT), jnp.float32)   # reparameterization noise

    recon, mu, logvar = jax.jit(pointvae_forward)(x, eps, params)
    jax.block_until_ready((recon, mu, logvar))

    assert recon.shape == (B, NPTS_OUT, 3)
    assert mu.shape == (B, LATENT) and logvar.shape == (B, LATENT)
    assert jnp.all(jnp.isfinite(recon)) and jnp.all(jnp.isfinite(mu)) and jnp.all(jnp.isfinite(logvar))
    print("KERNEL_OK")
</pallas_src>

<mosaic_0001>
module attributes {stable_mosaic.version = 11 : i64} {
  func.func @encode_head_dec_kernel(%arg0: memref<128x8xf32, #tpu.memory_space<vmem>>, %arg1: memref<8x64xf32, #tpu.memory_space<vmem>>, %arg2: memref<1x64xf32, #tpu.memory_space<vmem>>, %arg3: memref<1x64xf32, #tpu.memory_space<vmem>>, %arg4: memref<1x64xf32, #tpu.memory_space<vmem>>, %arg5: memref<64x128xf32, #tpu.memory_space<vmem>>, %arg6: memref<1x128xf32, #tpu.memory_space<vmem>>, %arg7: memref<1x128xf32, #tpu.memory_space<vmem>>, %arg8: memref<1x128xf32, #tpu.memory_space<vmem>>, %arg9: memref<128x256xf32, #tpu.memory_space<vmem>>, %arg10: memref<1x256xf32, #tpu.memory_space<vmem>>, %arg11: memref<1x256xf32, #tpu.memory_space<vmem>>, %arg12: memref<1x256xf32, #tpu.memory_space<vmem>>, %arg13: memref<256x256xf32, #tpu.memory_space<vmem>>, %arg14: memref<1x256xf32, #tpu.memory_space<vmem>>, %arg15: memref<256x256xf32, #tpu.memory_space<vmem>>, %arg16: memref<1x256xf32, #tpu.memory_space<vmem>>, %arg17: memref<2x256xf32, #tpu.memory_space<vmem>>, %arg18: memref<256x512xf32, #tpu.memory_space<vmem>>, %arg19: memref<1x512xf32, #tpu.memory_space<vmem>>, %arg20: memref<1x512xf32, #tpu.memory_space<vmem>>, %arg21: memref<1x512xf32, #tpu.memory_space<vmem>>, %arg22: memref<512x1024xf32, #tpu.memory_space<vmem>>, %arg23: memref<1x1024xf32, #tpu.memory_space<vmem>>, %arg24: memref<1x1024xf32, #tpu.memory_space<vmem>>, %arg25: memref<1x1024xf32, #tpu.memory_space<vmem>>, %arg26: memref<2x256xf32, #tpu.memory_space<vmem>>, %arg27: memref<2x256xf32, #tpu.memory_space<vmem>>, %arg28: memref<2x1024xbf16, #tpu.memory_space<vmem>>) attributes {dimension_semantics = [], scalar_prefetch = 0 : i64, scratch_operands = 0 : i64, tpu.core_type = #tpu.core_type<tc>} {
    %c0 = arith.constant 0 : index
    %c0_0 = arith.constant 0 : index
    %0 = vector.load %arg0[%c0, %c0_0] : memref<128x8xf32, #tpu.memory_space<vmem>>, vector<128x8xf32>
    %c0_1 = arith.constant 0 : index
    %c0_2 = arith.constant 0 : index
    %1 = vector.load %arg1[%c0_1, %c0_2] : memref<8x64xf32, #tpu.memory_space<vmem>>, vector<8x64xf32>
    %cst = arith.constant dense<0.000000e+00> : vector<128x64xf32>
    %2 = tpu.matmul %0, %1, %cst {dimension_numbers = #tpu.dot_dimension_numbers<[1], [0], [0], [1], [0, 0, 1, 1], [], []>} : vector<128x8xf32>, vector<8x64xf32>, vector<128x64xf32> -> vector<128x64xf32>
    %c0_3 = arith.constant 0 : index
    %c0_4 = arith.constant 0 : index
    %3 = vector.load %arg2[%c0_3, %c0_4] : memref<1x64xf32, #tpu.memory_space<vmem>>, vector<1x64xf32>
    %4 = vector.broadcast %3 : vector<1x64xf32> to vector<128x64xf32>
    %5 = arith.addf %2, %4 : vector<128x64xf32>
    %c0_5 = arith.constant 0 : index
    %c0_6 = arith.constant 0 : index
    %6 = vector.load %arg3[%c0_5, %c0_6] : memref<1x64xf32, #tpu.memory_space<vmem>>, vector<1x64xf32>
    %c0_7 = arith.constant 0 : index
    %c0_8 = arith.constant 0 : index
    %7 = vector.load %arg4[%c0_7, %c0_8] : memref<1x64xf32, #tpu.memory_space<vmem>>, vector<1x64xf32>
    %cst_9 = arith.constant dense<0.000000e+00> : vector<64xf32>
    %8 = vector.multi_reduction <add>, %5, %cst_9 [0] : vector<128x64xf32> to vector<64xf32>
    %9 = vector.shape_cast %8 : vector<64xf32> to vector<1x64xf32>
    %cst_10 = arith.constant 7.812500e-03 : f32
    %10 = vector.broadcast %cst_10 : f32 to vector<1x64xf32>
    %11 = arith.mulf %9, %10 : vector<1x64xf32>
    %12 = arith.mulf %5, %5 : vector<128x64xf32>
    %cst_11 = arith.constant dense<0.000000e+00> : vector<64xf32>
    %13 = vector.multi_reduction <add>, %12, %cst_11 [0] : vector<128x64xf32> to vector<64xf32>
    %14 = vector.shape_cast %13 : vector<64xf32> to vector<1x64xf32>
    %cst_12 = arith.constant 7.812500e-03 : f32
    %15 = vector.broadcast %cst_12 : f32 to vector<1x64xf32>
    %16 = arith.mulf %14, %15 : vector<1x64xf32>
    %17 = arith.mulf %11, %11 : vector<1x64xf32>
    %18 = arith.subf %16, %17 : vector<1x64xf32>
    %cst_13 = arith.constant 0.000000e+00 : f32
    %19 = vector.broadcast %cst_13 : f32 to vector<1x64xf32>
    %20 = arith.maximumf %18, %19 : vector<1x64xf32>
    %21 = vector.broadcast %11 : vector<1x64xf32> to vector<128x64xf32>
    %22 = arith.subf %5, %21 : vector<128x64xf32>
    %cst_14 = arith.constant 9.99999974E-6 : f32
    %23 = vector.broadcast %cst_14 : f32 to vector<1x64xf32>
    %24 = arith.addf %20, %23 : vector<1x64xf32>
    %25 = math.rsqrt %24 : vector<1x64xf32>
    %26 = vector.broadcast %25 : vector<1x64xf32> to vector<128x64xf32>
    %27 = arith.mulf %22, %26 : vector<128x64xf32>
    %28 = vector.broadcast %6 : vector<1x64xf32> to vector<128x64xf32>
    %29 = arith.mulf %27, %28 : vector<128x64xf32>
    %30 = vector.broadcast %7 : vector<1x64xf32> to vector<128x64xf32>
    %31 = arith.addf %29, %30 : vector<128x64xf32>
    %cst_15 = arith.constant 0.000000e+00 : f32
    %32 = vector.broadcast %cst_15 : f32 to vector<128x64xf32>
    %33 = arith.cmpf oge, %31, %32 : vector<128x64xf32>
    %cst_16 = arith.constant 2.000000e-01 : f32
    %34 = vector.broadcast %cst_16 : f32 to vector<128x64xf32>
    %35 = arith.mulf %34, %31 : vector<128x64xf32>
    %36 = arith.select %33, %31, %35 : vector<128x64xi1>, vector<128x64xf32>
    %c0_17 = arith.constant 0 : index
    %c0_18 = arith.constant 0 : index
    %37 = vector.load %arg5[%c0_17, %c0_18] : memref<64x128xf32, #tpu.memory_space<vmem>>, vector<64x128xf32>
    %cst_19 = arith.constant dense<0.000000e+00> : vector<128x128xf32>
    %38 = tpu.matmul %36, %37, %cst_19 {dimension_numbers = #tpu.dot_dimension_numbers<[1], [0], [0], [1], [0, 0, 1, 1], [], []>} : vector<128x64xf32>, vector<64x128xf32>, vector<128x128xf32> -> vector<128x128xf32>
    %c0_20 = arith.constant 0 : index
    %c0_21 = arith.constant 0 : index
    %39 = vector.load %arg6[%c0_20, %c0_21] : memref<1x128xf32, #tpu.memory_space<vmem>>, vector<1x128xf32>
    %40 = vector.broadcast %39 : vector<1x128xf32> to vector<128x128xf32>
    %41 = arith.addf %38, %40 : vector<128x128xf32>
    %c0_22 = arith.constant 0 : index
    %c0_23 = arith.constant 0 : index
    %42 = vector.load %arg7[%c0_22, %c0_23] : memref<1x128xf32, #tpu.memory_space<vmem>>, vector<1x128xf32>
    %c0_24 = arith.constant 0 : index
    %c0_25 = arith.constant 0 : index
    %43 = vector.load %arg8[%c0_24, %c0_25] : memref<1x128xf32, #tpu.memory_space<vmem>>, vector<1x128xf32>
    %cst_26 = arith.constant dense<0.000000e+00> : vector<128xf32>
    %44 = vector.multi_reduction <add>, %41, %cst_26 [0] : vector<128x128xf32> to vector<128xf32>
    %45 = vector.shape_cast %44 : vector<128xf32> to vector<1x128xf32>
    %cst_27 = arith.constant 7.812500e-03 : f32
    %46 = vector.broadcast %cst_27 : f32 to vector<1x128xf32>
    %47 = arith.mulf %45, %46 : vector<1x128xf32>
    %48 = arith.mulf %41, %41 : vector<128x128xf32>
    %cst_28 = arith.constant dense<0.000000e+00> : vector<128xf32>
    %49 = vector.multi_reduction <add>, %48, %cst_28 [0] : vector<128x128xf32> to vector<128xf32>
    %50 = vector.shape_cast %49 : vector<128xf32> to vector<1x128xf32>
    %cst_29 = arith.constant 7.812500e-03 : f32
    %51 = vector.broadcast %cst_29 : f32 to vector<1x128xf32>
    %52 = arith.mulf %50, %51 : vector<1x128xf32>
    %53 = arith.mulf %47, %47 : vector<1x128xf32>
    %54 = arith.subf %52, %53 : vector<1x128xf32>
    %cst_30 = arith.constant 0.000000e+00 : f32
    %55 = vector.broadcast %cst_30 : f32 to vector<1x128xf32>
    %56 = arith.maximumf %54, %55 : vector<1x128xf32>
    %57 = vector.broadcast %47 : vector<1x128xf32> to vector<128x128xf32>
    %58 = arith.subf %41, %57 : vector<128x128xf32>
    %cst_31 = arith.constant 9.99999974E-6 : f32
    %59 = vector.broadcast %cst_31 : f32 to vector<1x128xf32>
    %60 = arith.addf %56, %59 : vector<1x128xf32>
    %61 = math.rsqrt %60 : vector<1x128xf32>
    %62 = vector.broadcast %61 : vector<1x128xf32> to vector<128x128xf32>
    %63 = arith.mulf %58, %62 : vector<128x128xf32>
    %64 = vector.broadcast %42 : vector<1x128xf32> to vector<128x128xf32>
    %65 = arith.mulf %63, %64 : vector<128x128xf32>
    %66 = vector.broadcast %43 : vector<1x128xf32> to vector<128x128xf32>
    %67 = arith.addf %65, %66 : vector<128x128xf32>
    %cst_32 = arith.constant 0.000000e+00 : f32
    %68 = vector.broadcast %cst_32 : f32 to vector<128x128xf32>
    %69 = arith.cmpf oge, %67, %68 : vector<128x128xf32>
    %cst_33 = arith.constant 2.000000e-01 : f32
    %70 = vector.broadcast %cst_33 : f32 to vector<128x128xf32>
    %71 = arith.mulf %70, %67 : vector<128x128xf32>
    %72 = arith.select %69, %67, %71 : vector<128x128xi1>, vector<128x128xf32>
    %c0_34 = arith.constant 0 : index
    %c0_35 = arith.constant 0 : index
    %73 = vector.load %arg9[%c0_34, %c0_35] : memref<128x256xf32, #tpu.memory_space<vmem>>, vector<128x256xf32>
    %cst_36 = arith.constant dense<0.000000e+00> : vector<128x256xf32>
    %74 = tpu.matmul %72, %73, %cst_36 {dimension_numbers = #tpu.dot_dimension_numbers<[1], [0], [0], [1], [0, 0, 1, 1], [], []>} : vector<128x128xf32>, vector<128x256xf32>, vector<128x256xf32> -> vector<128x256xf32>
    %c0_37 = arith.constant 0 : index
    %c0_38 = arith.constant 0 : index
    %75 = vector.load %arg10[%c0_37, %c0_38] : memref<1x256xf32, #tpu.memory_space<vmem>>, vector<1x256xf32>
    %76 = vector.broadcast %75 : vector<1x256xf32> to vector<128x256xf32>
    %77 = arith.addf %74, %76 : vector<128x256xf32>
    %c0_39 = arith.constant 0 : index
    %c0_40 = arith.constant 0 : index
    %78 = vector.load %arg11[%c0_39, %c0_40] : memref<1x256xf32, #tpu.memory_space<vmem>>, vector<1x256xf32>
    %c0_41 = arith.constant 0 : index
    %c0_42 = arith.constant 0 : index
    %79 = vector.load %arg12[%c0_41, %c0_42] : memref<1x256xf32, #tpu.memory_space<vmem>>, vector<1x256xf32>
    %cst_43 = arith.constant dense<0.000000e+00> : vector<256xf32>
    %80 = vector.multi_reduction <add>, %77, %cst_43 [0] : vector<128x256xf32> to vector<256xf32>
    %81 = vector.shape_cast %80 : vector<256xf32> to vector<1x256xf32>
    %cst_44 = arith.constant 7.812500e-03 : f32
    %82 = vector.broadcast %cst_44 : f32 to vector<1x256xf32>
    %83 = arith.mulf %81, %82 : vector<1x256xf32>
    %84 = arith.mulf %77, %77 : vector<128x256xf32>
    %cst_45 = arith.constant dense<0.000000e+00> : vector<256xf32>
    %85 = vector.multi_reduction <add>, %84, %cst_45 [0] : vector<128x256xf32> to vector<256xf32>
    %86 = vector.shape_cast %85 : vector<256xf32> to vector<1x256xf32>
    %cst_46 = arith.constant 7.812500e-03 : f32
    %87 = vector.broadcast %cst_46 : f32 to vector<1x256xf32>
    %88 = arith.mulf %86, %87 : vector<1x256xf32>
    %89 = arith.mulf %83, %83 : vector<1x256xf32>
    %90 = arith.subf %88, %89 : vector<1x256xf32>
    %cst_47 = arith.constant 0.000000e+00 : f32
    %91 = vector.broadcast %cst_47 : f32 to vector<1x256xf32>
    %92 = arith.maximumf %90, %91 : vector<1x256xf32>
    %93 = vector.broadcast %83 : vector<1x256xf32> to vector<128x256xf32>
    %94 = arith.subf %77, %93 : vector<128x256xf32>
    %cst_48 = arith.constant 9.99999974E-6 : f32
    %95 = vector.broadcast %cst_48 : f32 to vector<1x256xf32>
    %96 = arith.addf %92, %95 : vector<1x256xf32>
    %97 = math.rsqrt %96 : vector<1x256xf32>
    %98 = vector.broadcast %97 : vector<1x256xf32> to vector<128x256xf32>
    %99 = arith.mulf %94, %98 : vector<128x256xf32>
    %100 = vector.broadcast %78 : vector<1x256xf32> to vector<128x256xf32>
    %101 = arith.mulf %99, %100 : vector<128x256xf32>
    %102 = vector.broadcast %79 : vector<1x256xf32> to vector<128x256xf32>
    %103 = arith.addf %101, %102 : vector<128x256xf32>
    %cst_49 = arith.constant 0.000000e+00 : f32
    %104 = vector.broadcast %cst_49 : f32 to vector<128x256xf32>
    %105 = arith.cmpf oge, %103, %104 : vector<128x256xf32>
    %cst_50 = arith.constant 2.000000e-01 : f32
    %106 = vector.broadcast %cst_50 : f32 to vector<128x256xf32>
    %107 = arith.mulf %106, %103 : vector<128x256xf32>
    %108 = arith.select %105, %103, %107 : vector<128x256xi1>, vector<128x256xf32>
    %109 = vector.shape_cast %108 : vector<128x256xf32> to vector<2x64x256xf32>
    %cst_51 = arith.constant dense<0xFF800000> : vector<2x256xf32>
    %110 = vector.multi_reduction <maximumf>, %109, %cst_51 [1] : vector<2x64x256xf32> to vector<2x256xf32>
    %c0_52 = arith.constant 0 : index
    %c0_53 = arith.constant 0 : index
    %111 = vector.load %arg13[%c0_52, %c0_53] : memref<256x256xf32, #tpu.memory_space<vmem>>, vector<256x256xf32>
    %cst_54 = arith.constant dense<0.000000e+00> : vector<2x256xf32>
    %112 = tpu.matmul %110, %111, %cst_54 {dimension_numbers = #tpu.dot_dimension_numbers<[1], [0], [0], [1], [0, 0, 1, 1], [], []>} : vector<2x256xf32>, vector<256x256xf32>, vector<2x256xf32> -> vector<2x256xf32>
    %c0_55 = arith.constant 0 : index
    %c0_56 = arith.constant 0 : index
    %113 = vector.load %arg14[%c0_55, %c0_56] : memref<1x256xf32, #tpu.memory_space<vmem>>, vector<1x256xf32>
    %114 = vector.broadcast %113 : vector<1x256xf32> to vector<2x256xf32>
    %115 = arith.addf %112, %114 : vector<2x256xf32>
    %c0_57 = arith.constant 0 : index
    %c0_58 = arith.constant 0 : index
    %116 = vector.load %arg15[%c0_57, %c0_58] : memref<256x256xf32, #tpu.memory_space<vmem>>, vector<256x256xf32>
    %cst_59 = arith.constant dense<0.000000e+00> : vector<2x256xf32>
    %117 = tpu.matmul %110, %116, %cst_59 {dimension_numbers = #tpu.dot_dimension_numbers<[1], [0], [0], [1], [0, 0, 1, 1], [], []>} : vector<2x256xf32>, vector<256x256xf32>, vector<2x256xf32> -> vector<2x256xf32>
    %c0_60 = arith.constant 0 : index
    %c0_61 = arith.constant 0 : index
    %118 = vector.load %arg16[%c0_60, %c0_61] : memref<1x256xf32, #tpu.memory_space<vmem>>, vector<1x256xf32>
    %119 = vector.broadcast %118 : vector<1x256xf32> to vector<2x256xf32>
    %120 = arith.addf %117, %119 : vector<2x256xf32>
    %c0_62 = arith.constant 0 : index
    %c0_63 = arith.constant 0 : index
    %121 = vector.load %arg26[%c0_62, %c0_63] : memref<2x256xf32, #tpu.memory_space<vmem>>, vector<2x256xf32>
    tpu.vector_store %arg26[%c0_62, %c0_63], %115 {strides = array<i32>} : memref<2x256xf32, #tpu.memory_space<vmem>>, vector<2x256xf32>,
    %c0_64 = arith.constant 0 : index
    %c0_65 = arith.constant 0 : index
    %122 = vector.load %arg27[%c0_64, %c0_65] : memref<2x256xf32, #tpu.memory_space<vmem>>, vector<2x256xf32>
    tpu.vector_store %arg27[%c0_64, %c0_65], %120 {strides = array<i32>} : memref<2x256xf32, #tpu.memory_space<vmem>>, vector<2x256xf32>,
    %c0_66 = arith.constant 0 : index
    %c0_67 = arith.constant 0 : index
    %123 = vector.load %arg17[%c0_66, %c0_67] : memref<2x256xf32, #tpu.memory_space<vmem>>, vector<2x256xf32>
    %cst_68 = arith.constant 5.000000e-01 : f32
    %124 = vector.broadcast %cst_68 : f32 to vector<2x256xf32>
    %125 = arith.mulf %124, %120 : vector<2x256xf32>
    %126 = math.exp %125 : vector<2x256xf32>
    %127 = arith.mulf %123, %126 : vector<2x256xf32>
    %128 = arith.addf %115, %127 : vector<2x256xf32>
    %c0_69 = arith.constant 0 : index
    %c0_70 = arith.constant 0 : index
    %129 = vector.load %arg18[%c0_69, %c0_70] : memref<256x512xf32, #tpu.memory_space<vmem>>, vector<256x512xf32>
    %cst_71 = arith.constant dense<0.000000e+00> : vector<2x512xf32>
    %130 = tpu.matmul %128, %129, %cst_71 {dimension_numbers = #tpu.dot_dimension_numbers<[1], [0], [0], [1], [0, 0, 1, 1], [], []>} : vector<2x256xf32>, vector<256x512xf32>, vector<2x512xf32> -> vector<2x512xf32>
    %c0_72 = arith.constant 0 : index
    %c0_73 = arith.constant 0 : index
    %131 = vector.load %arg19[%c0_72, %c0_73] : memref<1x512xf32, #tpu.memory_space<vmem>>, vector<1x512xf32>
    %132 = vector.broadcast %131 : vector<1x512xf32> to vector<2x512xf32>
    %133 = arith.addf %130, %132 : vector<2x512xf32>
    %c0_74 = arith.constant 0 : index
    %c0_75 = arith.constant 0 : index
    %134 = vector.load %arg20[%c0_74, %c0_75] : memref<1x512xf32, #tpu.memory_space<vmem>>, vector<1x512xf32>
    %c0_76 = arith.constant 0 : index
    %c0_77 = arith.constant 0 : index
    %135 = vector.load %arg21[%c0_76, %c0_77] : memref<1x512xf32, #tpu.memory_space<vmem>>, vector<1x512xf32>
    %cst_78 = arith.constant dense<0.000000e+00> : vector<512xf32>
    %136 = vector.multi_reduction <add>, %133, %cst_78 [0] : vector<2x512xf32> to vector<512xf32>
    %137 = vector.shape_cast %136 : vector<512xf32> to vector<1x512xf32>
    %cst_79 = arith.constant 5.000000e-01 : f32
    %138 = vector.broadcast %cst_79 : f32 to vector<1x512xf32>
    %139 = arith.mulf %137, %138 : vector<1x512xf32>
    %140 = arith.mulf %133, %133 : vector<2x512xf32>
    %cst_80 = arith.constant dense<0.000000e+00> : vector<512xf32>
    %141 = vector.multi_reduction <add>, %140, %cst_80 [0] : vector<2x512xf32> to vector<512xf32>
    %142 = vector.shape_cast %141 : vector<512xf32> to vector<1x512xf32>
    %cst_81 = arith.constant 5.000000e-01 : f32
    %143 = vector.broadcast %cst_81 : f32 to vector<1x512xf32>
    %144 = arith.mulf %142, %143 : vector<1x512xf32>
    %145 = arith.mulf %139, %139 : vector<1x512xf32>
    %146 = arith.subf %144, %145 : vector<1x512xf32>
    %cst_82 = arith.constant 0.000000e+00 : f32
    %147 = vector.broadcast %cst_82 : f32 to vector<1x512xf32>
    %148 = arith.maximumf %146, %147 : vector<1x512xf32>
    %149 = vector.broadcast %139 : vector<1x512xf32> to vector<2x512xf32>
    %150 = arith.subf %133, %149 : vector<2x512xf32>
    %cst_83 = arith.constant 9.99999974E-6 : f32
    %151 = vector.broadcast %cst_83 : f32 to vector<1x512xf32>
    %152 = arith.addf %148, %151 : vector<1x512xf32>
    %153 = math.rsqrt %152 : vector<1x512xf32>
    %154 = vector.broadcast %153 : vector<1x512xf32> to vector<2x512xf32>
    %155 = arith.mulf %150, %154 : vector<2x512xf32>
    %156 = vector.broadcast %134 : vector<1x512xf32> to vector<2x512xf32>
    %157 = arith.mulf %155, %156 : vector<2x512xf32>
    %158 = vector.broadcast %135 : vector<1x512xf32> to vector<2x512xf32>
    %159 = arith.addf %157, %158 : vector<2x512xf32>
    %cst_84 = arith.constant 0.000000e+00 : f32
    %160 = vector.broadcast %cst_84 : f32 to vector<2x512xf32>
    %161 = arith.cmpf oge, %159, %160 : vector<2x512xf32>
    %cst_85 = arith.constant 2.000000e-01 : f32
    %162 = vector.broadcast %cst_85 : f32 to vector<2x512xf32>
    %163 = arith.mulf %162, %159 : vector<2x512xf32>
    %164 = arith.select %161, %159, %163 : vector<2x512xi1>, vector<2x512xf32>
    %c0_86 = arith.constant 0 : index
    %c0_87 = arith.constant 0 : index
    %165 = vector.load %arg22[%c0_86, %c0_87] : memref<512x1024xf32, #tpu.memory_space<vmem>>, vector<512x1024xf32>
    %cst_88 = arith.constant dense<0.000000e+00> : vector<2x1024xf32>
    %166 = tpu.matmul %164, %165, %cst_88 {dimension_numbers = #tpu.dot_dimension_numbers<[1], [0], [0], [1], [0, 0, 1, 1], [], []>} : vector<2x512xf32>, vector<512x1024xf32>, vector<2x1024xf32> -> vector<2x1024xf32>
    %c0_89 = arith.constant 0 : index
    %c0_90 = arith.constant 0 : index
    %167 = vector.load %arg23[%c0_89, %c0_90] : memref<1x1024xf32, #tpu.memory_space<vmem>>, vector<1x1024xf32>
    %168 = vector.broadcast %167 : vector<1x1024xf32> to vector<2x1024xf32>
    %169 = arith.addf %166, %168 : vector<2x1024xf32>
    %c0_91 = arith.constant 0 : index
    %c0_92 = arith.constant 0 : index
    %170 = vector.load %arg24[%c0_91, %c0_92] : memref<1x1024xf32, #tpu.memory_space<vmem>>, vector<1x1024xf32>
    %c0_93 = arith.constant 0 : index
    %c0_94 = arith.constant 0 : index
    %171 = vector.load %arg25[%c0_93, %c0_94] : memref<1x1024xf32, #tpu.memory_space<vmem>>, vector<1x1024xf32>
    %cst_95 = arith.constant dense<0.000000e+00> : vector<1024xf32>
    %172 = vector.multi_reduction <add>, %169, %cst_95 [0] : vector<2x1024xf32> to vector<1024xf32>
    %173 = vector.shape_cast %172 : vector<1024xf32> to vector<1x1024xf32>
    %cst_96 = arith.constant 5.000000e-01 : f32
    %174 = vector.broadcast %cst_96 : f32 to vector<1x1024xf32>
    %175 = arith.mulf %173, %174 : vector<1x1024xf32>
    %176 = arith.mulf %169, %169 : vector<2x1024xf32>
    %cst_97 = arith.constant dense<0.000000e+00> : vector<1024xf32>
    %177 = vector.multi_reduction <add>, %176, %cst_97 [0] : vector<2x1024xf32> to vector<1024xf32>
    %178 = vector.shape_cast %177 : vector<1024xf32> to vector<1x1024xf32>
    %cst_98 = arith.constant 5.000000e-01 : f32
    %179 = vector.broadcast %cst_98 : f32 to vector<1x1024xf32>
    %180 = arith.mulf %178, %179 : vector<1x1024xf32>
    %181 = arith.mulf %175, %175 : vector<1x1024xf32>
    %182 = arith.subf %180, %181 : vector<1x1024xf32>
    %cst_99 = arith.constant 0.000000e+00 : f32
    %183 = vector.broadcast %cst_99 : f32 to vector<1x1024xf32>
    %184 = arith.maximumf %182, %183 : vector<1x1024xf32>
    %185 = vector.broadcast %175 : vector<1x1024xf32> to vector<2x1024xf32>
    %186 = arith.subf %169, %185 : vector<2x1024xf32>
    %cst_100 = arith.constant 9.99999974E-6 : f32
    %187 = vector.broadcast %cst_100 : f32 to vector<1x1024xf32>
    %188 = arith.addf %184, %187 : vector<1x1024xf32>
    %189 = math.rsqrt %188 : vector<1x1024xf32>
    %190 = vector.broadcast %189 : vector<1x1024xf32> to vector<2x1024xf32>
    %191 = arith.mulf %186, %190 : vector<2x1024xf32>
    %192 = vector.broadcast %170 : vector<1x1024xf32> to vector<2x1024xf32>
    %193 = arith.mulf %191, %192 : vector<2x1024xf32>
    %194 = vector.broadcast %171 : vector<1x1024xf32> to vector<2x1024xf32>
    %195 = arith.addf %193, %194 : vector<2x1024xf32>
    %cst_101 = arith.constant 0.000000e+00 : f32
    %196 = vector.broadcast %cst_101 : f32 to vector<2x1024xf32>
    %197 = arith.cmpf oge, %195, %196 : vector<2x1024xf32>
    %cst_102 = arith.constant 2.000000e-01 : f32
    %198 = vector.broadcast %cst_102 : f32 to vector<2x1024xf32>
    %199 = arith.mulf %198, %195 : vector<2x1024xf32>
    %200 = arith.select %197, %195, %199 : vector<2x1024xi1>, vector<2x1024xf32>
    %201 = arith.truncf %200 : vector<2x1024xf32> to vector<2x1024xbf16>
    %c0_103 = arith.constant 0 : index
    %c0_104 = arith.constant 0 : index
    %202 = vector.load %arg28[%c0_103, %c0_104] : memref<2x1024xbf16, #tpu.memory_space<vmem>>, vector<2x1024xbf16>
    tpu.vector_store %arg28[%c0_103, %c0_104], %201 {strides = array<i32>} : memref<2x1024xbf16, #tpu.memory_space<vmem>>, vector<2x1024xbf16>,
    return
  }
}

module attributes {stable_mosaic.version = 11 : i64} {
  func.func @final_linear_kernel(%arg0: i32, %arg1: memref<8x1024xbf16, #tpu.memory_space<vmem>>, %arg2: memref<1024x1024xbf16, #tpu.memory_space<vmem>>, %arg3: memref<1x1024xf32, #tpu.memory_space<vmem>>, %arg4: memref<8x1024xf32, #tpu.memory_space<vmem>>) attributes {dimension_semantics = [#tpu.dimension_semantics<parallel>], iteration_bounds = array<i64: 6>, scalar_prefetch = 0 : i64, scratch_operands = 0 : i64, tpu.core_type = #tpu.core_type<tc>, window_params = [{pipeline_mode = #tpu.pipeline_mode<synchronous>, transform_indices = @transform_0, window_bounds = array<i64: 8, 1024>}, {transform_indices = @transform_1, window_bounds = array<i64: 1024, 1024>}, {transform_indices = @transform_2, window_bounds = array<i64: 1, 1024>}, {transform_indices = @transform_3, window_bounds = array<i64: 8, 1024>}]} {
    %c0 = arith.constant 0 : index
    %c0_0 = arith.constant 0 : index
    %0 = vector.load %arg1[%c0, %c0_0] : memref<8x1024xbf16, #tpu.memory_space<vmem>>, vector<8x1024xbf16>
    %c0_1 = arith.constant 0 : index
    %c0_2 = arith.constant 0 : index
    %1 = vector.load %arg2[%c0_1, %c0_2] : memref<1024x1024xbf16, #tpu.memory_space<vmem>>, vector<1024x1024xbf16>
    %cst = arith.constant dense<0.000000e+00> : vector<8x1024xf32>
    %2 = tpu.matmul %0, %1, %cst {dimension_numbers = #tpu.dot_dimension_numbers<[1], [0], [0], [1], [0, 0, 1, 1], [], []>} : vector<8x1024xbf16>, vector<1024x1024xbf16>, vector<8x1024xf32> -> vector<8x1024xf32>
    %c0_3 = arith.constant 0 : index
    %c0_4 = arith.constant 0 : index
    %3 = vector.load %arg3[%c0_3, %c0_4] : memref<1x1024xf32, #tpu.memory_space<vmem>>, vector<1x1024xf32>
    %4 = vector.broadcast %3 : vector<1x1024xf32> to vector<8x1024xf32>
    %5 = arith.addf %2, %4 : vector<8x1024xf32>
    %c0_5 = arith.constant 0 : index
    %c0_6 = arith.constant 0 : index
    %6 = vector.load %arg4[%c0_5, %c0_6] : memref<8x1024xf32, #tpu.memory_space<vmem>>, vector<8x1024xf32>
    tpu.vector_store %arg4[%c0_5, %c0_6], %5 {strides = array<i32>} : memref<8x1024xf32, #tpu.memory_space<vmem>>, vector<8x1024xf32>,
    return
  }
  func.func @transform_0(%arg0: i32) -> (i32, i32) {
    %c0_i32 = arith.constant 0 : i32
    %c0_i32_0 = arith.constant 0 : i32
    %c0_i32_1 = arith.constant 0 : i32
    return %c0_i32, %c0_i32_0 : i32, i32
  }
  func.func @transform_1(%arg0: i32) -> (i32, i32) {
    %c0_i32 = arith.constant 0 : i32
    %c0_i32_0 = arith.constant 0 : i32
    return %c0_i32, %arg0 : i32, i32
  }
  func.func @transform_2(%arg0: i32) -> (i32, i32) {
    %c0_i32 = arith.constant 0 : i32
    %c0_i32_0 = arith.constant 0 : i32
    return %c0_i32, %arg0 : i32, i32
  }
  func.func @transform_3(%arg0: i32) -> (i32, i32) {
    %c0_i32 = arith.constant 0 : i32
    %c0_i32_0 = arith.constant 0 : i32
    return %c0_i32, %arg0 : i32, i32
  }
}

</mosaic_0001>

<llo_original>
// kernel: pointvae_forward.2
$region0: #{pointvae_forward.2}
  #allocation0 [shape = 'u32[]', space=smem, size = 0x4, offset = 0x4, fixed_abs, tag = 'smem constant byte address 0x4 - core index']
  #allocation1 [shape = 'u32[144,128]{1,0:T(1,128)}', space=vmem, size = 0x12000, scoped, tag = 'internal scratch']
  %s0 = inlined_call_operand.vmem [shape: f32[128,8], index: 0, kind: input, shape index: {}]
  %s1 = inlined_call_operand.hbm [shape: f32[8,64], index: 1, kind: input, shape index: {}]
  %s2 = inlined_call_operand.hbm [shape: f32[1,64], index: 2, kind: input, shape index: {}]
  %s3 = inlined_call_operand.hbm [shape: f32[1,64], index: 3, kind: input, shape index: {}]
  %s4 = inlined_call_operand.hbm [shape: f32[1,64], index: 4, kind: input, shape index: {}]
  %s5 = inlined_call_operand.hbm [shape: f32[64,128], index: 5, kind: input, shape index: {}]
  %s6 = inlined_call_operand.hbm [shape: f32[1,128], index: 6, kind: input, shape index: {}]
  %s7 = inlined_call_operand.hbm [shape: f32[1,128], index: 7, kind: input, shape index: {}]
  %s8 = inlined_call_operand.hbm [shape: f32[1,128], index: 8, kind: input, shape index: {}]
  %s9 = inlined_call_operand.hbm [shape: f32[128,256], index: 9, kind: input, shape index: {}]
  %s10 = inlined_call_operand.hbm [shape: f32[1,256], index: 10, kind: input, shape index: {}]
  %s11 = inlined_call_operand.hbm [shape: f32[1,256], index: 11, kind: input, shape index: {}]
  %s12 = inlined_call_operand.hbm [shape: f32[1,256], index: 12, kind: input, shape index: {}]
  %s13 = inlined_call_operand.hbm [shape: f32[256,256], index: 13, kind: input, shape index: {}]
  %s14 = inlined_call_operand.hbm [shape: f32[1,256], index: 14, kind: input, shape index: {}]
  %s15 = inlined_call_operand.hbm [shape: f32[256,256], index: 15, kind: input, shape index: {}]
  %s16 = inlined_call_operand.hbm [shape: f32[1,256], index: 16, kind: input, shape index: {}]
  %s17 = inlined_call_operand.hbm [shape: f32[2,256], index: 17, kind: input, shape index: {}]
  %s18 = inlined_call_operand.hbm [shape: f32[256,512], index: 18, kind: input, shape index: {}]
  %s19 = inlined_call_operand.hbm [shape: f32[1,512], index: 19, kind: input, shape index: {}]
  %s20 = inlined_call_operand.hbm [shape: f32[1,512], index: 20, kind: input, shape index: {}]
  %s21 = inlined_call_operand.hbm [shape: f32[1,512], index: 21, kind: input, shape index: {}]
  %s22 = inlined_call_operand.hbm [shape: f32[512,1024], index: 22, kind: input, shape index: {}]
  %s23 = inlined_call_operand.hbm [shape: f32[1,1024], index: 23, kind: input, shape index: {}]
  %s24 = inlined_call_operand.hbm [shape: f32[1,1024], index: 24, kind: input, shape index: {}]
  %s25 = inlined_call_operand.hbm [shape: f32[1,1024], index: 25, kind: input, shape index: {}]
  %s26 = inlined_call_operand.hbm [shape: f32[2,256], index: 26, kind: output, shape index: {0}]
  %s27 = inlined_call_operand.hbm [shape: f32[2,256], index: 27, kind: output, shape index: {1}]
  %s28 = inlined_call_operand.vmem [shape: bf16[2,1024], index: 28, kind: output, shape index: {2}]
  %29 = xla_tuple %s26, %s27, %s28
  %s30 = sld [smem:[#allocation0]]
  $region230: #{pointvae_forward.2} parent=0
    _
  %s32 = ssub.s32 1, %s30
  %s33 = scalar_select 0, %s32, %s30
  $region1: #{pointvae_forward.2} parent=0
    #allocation2 [shape = 'u8[4096]{0}', space=vmem, size = 0x1000, scoped, tag = 'input window, operand 1, single buffered']
    #allocation3 [shape = 's32[1]{0}', space=sflag, size = 0x4, scoped, tag = 'scoped memory for pointvae_forward.2']
    #allocation4 [shape = 's32[1]{0}', space=sflag, size = 0x4, scoped, tag = 'scoped memory for pointvae_forward.2']
    #allocation5 [shape = 'u8[512]{0}', space=vmem, size = 0x400, scoped, tag = 'input window, operand 2, single buffered']
    #allocation6 [shape = 's32[1]{0}', space=sflag, size = 0x4, scoped, tag = 'scoped memory for pointvae_forward.2']
    #allocation7 [shape = 'u8[512]{0}', space=vmem, size = 0x400, scoped, tag = 'input window, operand 3, single buffered']
    #allocation8 [shape = 'u8[512]{0}', space=vmem, size = 0x400, scoped, tag = 'input window, operand 4, single buffered']
    #allocation9 [shape = 's32[1]{0}', space=sflag, size = 0x4, scoped, tag = 'scoped memory for pointvae_forward.2']
    #allocation10 [shape = 'u8[32768]{0}', space=vmem, size = 0x8000, scoped, tag = 'input window, operand 5, single buffered']
    #allocation11 [shape = 'u8[512]{0}', space=vmem, size = 0x400, scoped, tag = 'input window, operand 6, single buffered']
    #allocation12 [shape = 's32[1]{0}', space=sflag, size = 0x4, scoped, tag = 'scoped memory for pointvae_forward.2']
    #allocation13 [shape = 'u8[512]{0}', space=vmem, size = 0x400, scoped, tag = 'input window, operand 7, single buffered']
    #allocation14 [shape = 'u8[512]{0}', space=vmem, size = 0x400, scoped, tag = 'input window, operand 8, single buffered']
    #allocation15 [shape = 's32[1]{0}', space=sflag, size = 0x4, scoped, tag = 'scoped memory for pointvae_forward.2']
    #allocation16 [shape = 'u8[131072]{0}', space=vmem, size = 0x20000, scoped, tag = 'input window, operand 9, single buffered']
    #allocation17 [shape = 'u8[1024]{0}', space=vmem, size = 0x400, scoped, tag = 'input window, operand 10, single buffered']
    #allocation18 [shape = 's32[1]{0}', space=sflag, size = 0x4, scoped, tag = 'scoped memory for pointvae_forward.2']
    #allocation19 [shape = 'u8[1024]{0}', space=vmem, size = 0x400, scoped, tag = 'input window, operand 11, single buffered']
    #allocation20 [shape = 'u8[1024]{0}', space=vmem, size = 0x400, scoped, tag = 'input window, operand 12, single buffered']
    #allocation21 [shape = 's32[1]{0}', space=sflag, size = 0x4, scoped, tag = 'scoped memory for pointvae_forward.2']
    #allocation22 [shape = 'u8[262144]{0}', space=vmem, size = 0x40000, scoped, tag = 'input window, operand 13, single buffered']
    #allocation23 [shape = 'u8[1024]{0}', space=vmem, size = 0x400, scoped, tag = 'input window, operand 14, single buffered']
    #allocation24 [shape = 's32[1]{0}', space=sflag, size = 0x4, scoped, tag = 'scoped memory for pointvae_forward.2']
    #allocation25 [shape = 'u8[262144]{0}', space=vmem, size = 0x40000, scoped, tag = 'input window, operand 15, single buffered']
    #allocation26 [shape = 'u8[1024]{0}', space=vmem, size = 0x400, scoped, tag = 'input window, operand 16, single buffered']
    #allocation27 [shape = 's32[1]{0}', space=sflag, size = 0x4, scoped, tag = 'scoped memory for pointvae_forward.2']
    #allocation28 [shape = 'u8[2048]{0}', space=vmem, size = 0x800, scoped, tag = 'input window, operand 17, single buffered']
    #allocation29 [shape = 'u8[524288]{0}', space=vmem, size = 0x80000, scoped, tag = 'input window, operand 18, single buffered']
    #allocation30 [shape = 's32[1]{0}', space=sflag, size = 0x4, scoped, tag = 'scoped memory for pointvae_forward.2']
    #allocation31 [shape = 'u8[2048]{0}', space=vmem, size = 0x800, scoped, tag = 'input window, operand 19, single buffered']
    #allocation32 [shape = 'u8[2048]{0}', space=vmem, size = 0x800, scoped, tag = 'input window, operand 20, single buffered']
    #allocation33 [shape = 's32[1]{0}', space=sflag, size = 0x4, scoped, tag = 'scoped memory for pointvae_forward.2']
    #allocation34 [shape = 'u8[2048]{0}', space=vmem, size = 0x800, scoped, tag = 'input window, operand 21, single buffered']
    #allocation35 [shape = 'u8[2097152]{0}', space=vmem, size = 0x200000, scoped, tag = 'input window, operand 22, single buffered']
    #allocation36 [shape = 's32[1]{0}', space=sflag, size = 0x4, scoped, tag = 'scoped memory for pointvae_forward.2']
    #allocation37 [shape = 'u8[4096]{0}', space=vmem, size = 0x1000, scoped, tag = 'input window, operand 23, single buffered']
    #allocation38 [shape = 'u8[4096]{0}', space=vmem, size = 0x1000, scoped, tag = 'input window, operand 24, single buffered']
    #allocation39 [shape = 's32[1]{0}', space=sflag, size = 0x4, scoped, tag = 'scoped memory for pointvae_forward.2']
    #allocation40 [shape = 'u8[4096]{0}', space=vmem, size = 0x1000, scoped, tag = 'input window, operand 25, single buffered']
    #allocation41 [shape = 'u8[2048]{0}', space=vmem, size = 0x800, scoped, tag = 'output window, operand 0, single buffered']
    #allocation42 [shape = 'u8[2048]{0}', space=vmem, size = 0x800, scoped, tag = 'output window, operand 1, single buffered']
    #allocation43 [shape = 's32[1]{0}', space=sflag, size = 0x4, scoped, tag = 'scoped memory for pointvae_forward.2']
    %34 = vsyncpa [#allocation3], 0
    %35 = vsyncpa [#allocation6], 0
    %36 = vsyncpa [#allocation9], 0
    %37 = vsyncpa [#allocation12], 0
    %38 = vsyncpa [#allocation15], 0
    %39 = vsyncpa [#allocation18], 0
    %40 = vsyncpa [#allocation21], 0
    %41 = vsyncpa [#allocation24], 0
    %42 = vsyncpa [#allocation27], 0
    %43 = vsyncpa [#allocation30], 0
    %44 = vsyncpa [#allocation33], 0
    %45 = vsyncpa [#allocation36], 0
    %46 = vsyncpa [#allocation39], 0
    %47 = vsyncpa [#allocation4], 0
    %48 = vsyncpa [#allocation43], 0
    // Predicated region
    $region2: #{pointvae_forward.2} parent=1 // pred_check
      _
    $region3: #{pointvae_forward.2} parent=1 // pred_check_branch
      %50 = sbr.rel (0) target = $region5
    $region4: #{pointvae_forward.2} parent=1 // pred_region
      _
    $region5: #{pointvae_forward.2} parent=1 // pred_fallthru
      _
    // Predicated region
    $region6: #{pointvae_forward.2} parent=1 // pred_check
      _
    $region7: #{pointvae_forward.2} parent=1 // pred_check_branch
      %52 = sbr.rel (0) target = $region9
    $region8: #{pointvae_forward.2} parent=1 // pred_region
      %s54 = ssub.s32 128, 128
      %55 = vsyncadd [#allocation3], %s54
      %s57 = sshll.u32 [#allocation2], 4
      %s58 = int_to_ptr.vmem [resolvable:$true] %s57
      %60 = dma.hbm_to_vmem [thread:$0]  %s1, 128, %s58, [#allocation3]
    $region9: #{pointvae_forward.2} parent=1 // pred_fallthru
      _
    // Predicated region
    $region10: #{pointvae_forward.2} parent=1 // pred_check
      _
    $region11: #{pointvae_forward.2} parent=1 // pred_check_branch
      %62 = sbr.rel (0) target = $region13
    $region12: #{pointvae_forward.2} parent=1 // pred_region
      %s64 = ssub.s32 16, 16
      %65 = vsyncadd [#allocation6], %s64
      %s67 = sshll.u32 [#allocation5], 4
      %s68 = int_to_ptr.vmem [resolvable:$true] %s67
      %70 = dma.hbm_to_vmem [thread:$0]  %s2, 16, %s68, [#allocation6]
    $region13: #{pointvae_forward.2} parent=1 // pred_fallthru
      _
    // Predicated region
    $region14: #{pointvae_forward.2} parent=1 // pred_check
      _
    $region15: #{pointvae_forward.2} parent=1 // pred_check_branch
      %72 = sbr.rel (0) target = $region17
    $region16: #{pointvae_forward.2} parent=1 // pred_region
      %s74 = ssub.s32 16, 16
      %75 = vsyncadd [#allocation6], %s74
      %s77 = sshll.u32 [#allocation7], 4
      %s78 = int_to_ptr.vmem [resolvable:$true] %s77
      %80 = dma.hbm_to_vmem [thread:$0]  %s3, 16, %s78, [#allocation6]
    $region17: #{pointvae_forward.2} parent=1 // pred_fallthru
      _
    // Predicated region
    $region18: #{pointvae_forward.2} parent=1 // pred_check
      _
    $region19: #{pointvae_forward.2} parent=1 // pred_check_branch
      %82 = sbr.rel (0) target = $region21
    $region20: #{pointvae_forward.2} parent=1 // pred_region
      %s84 = ssub.s32 16, 16
      %85 = vsyncadd [#allocation9], %s84
      %s87 = sshll.u32 [#allocation8], 4
      %s88 = int_to_ptr.vmem [resolvable:$true] %s87
      %90 = dma.hbm_to_vmem [thread:$0]  %s4, 16, %s88, [#allocation9]
    $region21: #{pointvae_forward.2} parent=1 // pred_fallthru
      _
    // Predicated region
    $region22: #{pointvae_forward.2} parent=1 // pred_check
      _
    $region23: #{pointvae_forward.2} parent=1 // pred_check_branch
      %92 = sbr.rel (0) target = $region25
    $region24: #{pointvae_forward.2} parent=1 // pred_region
      %s94 = ssub.s32 1024, 1024
      %95 = vsyncadd [#allocation9], %s94
      %s96 = sshll.u32 [#allocation10], 4
      %s97 = int_to_ptr.vmem [resolvable:$true] %s96
      %102 = dma.hbm_to_vmem [thread:$0]  %s5, 1024, %s97, [#allocation9], 128, 128, 8
    $region25: #{pointvae_forward.2} parent=1 // pred_fallthru
      _
    // Predicated region
    $region26: #{pointvae_forward.2} parent=1 // pred_check
      _
    $region27: #{pointvae_forward.2} parent=1 // pred_check_branch
      %104 = sbr.rel (0) target = $region29
    $region28: #{pointvae_forward.2} parent=1 // pred_region
      %s106 = ssub.s32 16, 16
      %107 = vsyncadd [#allocation12], %s106
      %s109 = sshll.u32 [#allocation11], 4
      %s110 = int_to_ptr.vmem [resolvable:$true] %s109
      %112 = dma.hbm_to_vmem [thread:$0]  %s6, 16, %s110, [#allocation12]
    $region29: #{pointvae_forward.2} parent=1 // pred_fallthru
      _
    // Predicated region
    $region30: #{pointvae_forward.2} parent=1 // pred_check
      _
    $region31: #{pointvae_forward.2} parent=1 // pred_check_branch
      %114 = sbr.rel (0) target = $region33
    $region32: #{pointvae_forward.2} parent=1 // pred_region
      %s116 = ssub.s32 16, 16
      %117 = vsyncadd [#allocation12], %s116
      %s119 = sshll.u32 [#allocation13], 4
      %s120 = int_to_ptr.vmem [resolvable:$true] %s119
      %122 = dma.hbm_to_vmem [thread:$0]  %s7, 16, %s120, [#allocation12]
    $region33: #{pointvae_forward.2} parent=1 // pred_fallthru
      _
    // Predicated region
    $region34: #{pointvae_forward.2} parent=1 // pred_check
      _
    $region35: #{pointvae_forward.2} parent=1 // pred_check_branch
      %124 = sbr.rel (0) target = $region37
    $region36: #{pointvae_forward.2} parent=1 // pred_region
      %s126 = ssub.s32 16, 16
      %127 = vsyncadd [#allocation15], %s126
      %s129 = sshll.u32 [#allocation14], 4
      %s130 = int_to_ptr.vmem [resolvable:$true] %s129
      %132 = dma.hbm_to_vmem [thread:$0]  %s8, 16, %s130, [#allocation15]
    $region37: #{pointvae_forward.2} parent=1 // pred_fallthru
      _
    // Predicated region
    $region38: #{pointvae_forward.2} parent=1 // pred_check
      _
    $region39: #{pointvae_forward.2} parent=1 // pred_check_branch
      %134 = sbr.rel (0) target = $region41
    $region40: #{pointvae_forward.2} parent=1 // pred_region
      %s136 = ssub.s32 4096, 4096
      %137 = vsyncadd [#allocation15], %s136
      %s138 = sshll.u32 [#allocation16], 4
      %s139 = int_to_ptr.vmem [resolvable:$true] %s138
      %144 = dma.hbm_to_vmem [thread:$0]  %s9, 4096, %s139, [#allocation15], 256, 256, 16
    $region41: #{pointvae_forward.2} parent=1 // pred_fallthru
      _
    // Predicated region
    $region42: #{pointvae_forward.2} parent=1 // pred_check
      _
    $region43: #{pointvae_forward.2} parent=1 // pred_check_branch
      %146 = sbr.rel (0) target = $region45
    $region44: #{pointvae_forward.2} parent=1 // pred_region
      %s148 = ssub.s32 32, 32
      %149 = vsyncadd [#allocation18], %s148
      %s151 = sshll.u32 [#allocation17], 4
      %s152 = int_to_ptr.vmem [resolvable:$true] %s151
      %154 = dma.hbm_to_vmem [thread:$0]  %s10, 32, %s152, [#allocation18]
    $region45: #{pointvae_forward.2} parent=1 // pred_fallthru
      _
    // Predicated region
    $region46: #{pointvae_forward.2} parent=1 // pred_check
      _
    $region47: #{pointvae_forward.2} parent=1 // pred_check_branch
      %156 = sbr.rel (0) target = $region49
    $region48: #{pointvae_forward.2} parent=1 // pred_region
      %s158 = ssub.s32 32, 32
      %159 = vsyncadd [#allocation18], %s158
      %s161 = sshll.u32 [#allocation19], 4
      %s162 = int_to_ptr.vmem [resolvable:$true] %s161
      %164 = dma.hbm_to_vmem [thread:$0]  %s11, 32, %s162, [#allocation18]
    $region49: #{pointvae_forward.2} parent=1 // pred_fallthru
      _
    // Predicated region
    $region50: #{pointvae_forward.2} parent=1 // pred_check
      _
    $region51: #{pointvae_forward.2} parent=1 // pred_check_branch
      %166 = sbr.rel (0) target = $region53
    $region52: #{pointvae_forward.2} parent=1 // pred_region
      %s168 = ssub.s32 32, 32
      %169 = vsyncadd [#allocation21], %s168
      %s171 = sshll.u32 [#allocation20], 4
      %s172 = int_to_ptr.vmem [resolvable:$true] %s171
      %174 = dma.hbm_to_vmem [thread:$0]  %s12, 32, %s172, [#allocation21]
    $region53: #{pointvae_forward.2} parent=1 // pred_fallthru
      _
    // Predicated region
    $region54: #{pointvae_forward.2} parent=1 // pred_check
      _
    $region55: #{pointvae_forward.2} parent=1 // pred_check_branch
      %176 = sbr.rel (0) target = $region57
    $region56: #{pointvae_forward.2} parent=1 // pred_region
      %s178 = ssub.s32 8192, 8192
      %179 = vsyncadd [#allocation21], %s178
      %s180 = sshll.u32 [#allocation22], 4
      %s181 = int_to_ptr.vmem [resolvable:$true] %s180
      %186 = dma.hbm_to_vmem [thread:$0]  %s13, 8192, %s181, [#allocation21], 256, 256, 16
    $region57: #{pointvae_forward.2} parent=1 // pred_fallthru
      _
    // Predicated region
    $region58: #{pointvae_forward.2} parent=1 // pred_check
      _
    $region59: #{pointvae_forward.2} parent=1 // pred_check_branch
      %188 = sbr.rel (0) target = $region61
    $region60: #{pointvae_forward.2} parent=1 // pred_region
      %s190 = ssub.s32 32, 32
      %191 = vsyncadd [#allocation24], %s190
      %s193 = sshll.u32 [#allocation23], 4
      %s194 = int_to_ptr.vmem [resolvable:$true] %s193
      %196 = dma.hbm_to_vmem [thread:$0]  %s14, 32, %s194, [#allocation24]
    $region61: #{pointvae_forward.2} parent=1 // pred_fallthru
      _
    // Predicated region
    $region62: #{pointvae_forward.2} parent=1 // pred_check
      _
    $region63: #{pointvae_forward.2} parent=1 // pred_check_branch
      %198 = sbr.rel (0) target = $region65
    $region64: #{pointvae_forward.2} parent=1 // pred_region
      %s200 = ssub.s32 8192, 8192
      %201 = vsyncadd [#allocation24], %s200
      %s202 = sshll.u32 [#allocation25], 4
      %s203 = int_to_ptr.vmem [resolvable:$true] %s202
      %208 = dma.hbm_to_vmem [thread:$0]  %s15, 8192, %s203, [#allocation24], 256, 256, 16
    $region65: #{pointvae_forward.2} parent=1 // pred_fallthru
      _
    // Predicated region
    $region66: #{pointvae_forward.2} parent=1 // pred_check
      _
    $region67: #{pointvae_forward.2} parent=1 // pred_check_branch
      %210 = sbr.rel (0) target = $region69
    $region68: #{pointvae_forward.2} parent=1 // pred_region
      %s212 = ssub.s32 32, 32
      %213 = vsyncadd [#allocation27], %s212
      %s215 = sshll.u32 [#allocation26], 4
      %s216 = int_to_ptr.vmem [resolvable:$true] %s215
      %218 = dma.hbm_to_vmem [thread:$0]  %s16, 32, %s216, [#allocation27]
    $region69: #{pointvae_forward.2} parent=1 // pred_fallthru
      _
    // Predicated region
    $region70: #{pointvae_forward.2} parent=1 // pred_check
      _
    $region71: #{pointvae_forward.2} parent=1 // pred_check_branch
      %220 = sbr.rel (0) target = $region73
    $region72: #{pointvae_forward.2} parent=1 // pred_region
      %s222 = ssub.s32 64, 64
      %223 = vsyncadd [#allocation27], %s222
      %s225 = sshll.u32 [#allocation28], 4
      %s226 = int_to_ptr.vmem [resolvable:$true] %s225
      %228 = dma.hbm_to_vmem [thread:$0]  %s17, 64, %s226, [#allocation27]
    $region73: #{pointvae_forward.2} parent=1 // pred_fallthru
      _
    // Predicated region
    $region74: #{pointvae_forward.2} parent=1 // pred_check
      _
    $region75: #{pointvae_forward.2} parent=1 // pred_check_branch
      %230 = sbr.rel (0) target = $region77
    $region76: #{pointvae_forward.2} parent=1 // pred_region
      %s232 = ssub.s32 16384, 16384
      %233 = vsyncadd [#allocation30], %s232
      %s234 = sshll.u32 [#allocation29], 4
      %s235 = int_to_ptr.vmem [resolvable:$true] %s234
      %240 = dma.hbm_to_vmem [thread:$0]  %s18, 16384, %s235, [#allocation30], 512, 512, 32
    $region77: #{pointvae_forward.2} parent=1 // pred_fallthru
      _
    // Predicated region
    $region78: #{pointvae_forward.2} parent=1 // pred_check
      _
    $region79: #{pointvae_forward.2} parent=1 // pred_check_branch
      %242 = sbr.rel (0) target = $region81
    $region80: #{pointvae_forward.2} parent=1 // pred_region
      %s244 = ssub.s32 64, 64
      %245 = vsyncadd [#allocation30], %s244
      %s247 = sshll.u32 [#allocation31], 4
      %s248 = int_to_ptr.vmem [resolvable:$true] %s247
      %250 = dma.hbm_to_vmem [thread:$0]  %s19, 64, %s248, [#allocation30]
    $region81: #{pointvae_forward.2} parent=1 // pred_fallthru
      _
    // Predicated region
    $region82: #{pointvae_forward.2} parent=1 // pred_check
      _
    $region83: #{pointvae_forward.2} parent=1 // pred_check_branch
      %252 = sbr.rel (0) target = $region85
    $region84: #{pointvae_forward.2} parent=1 // pred_region
      %s254 = ssub.s32 64, 64
      %255 = vsyncadd [#allocation33], %s254
      %s257 = sshll.u32 [#allocation32], 4
      %s258 = int_to_ptr.vmem [resolvable:$true] %s257
      %260 = dma.hbm_to_vmem [thread:$0]  %s20, 64, %s258, [#allocation33]
    $region85: #{pointvae_forward.2} parent=1 // pred_fallthru
      _
    // Predicated region
    $region86: #{pointvae_forward.2} parent=1 // pred_check
      _
    $region87: #{pointvae_forward.2} parent=1 // pred_check_branch
      %262 = sbr.rel (0) target = $region89
    $region88: #{pointvae_forward.2} parent=1 // pred_region
      %s264 = ssub.s32 64, 64
      %265 = vsyncadd [#allocation33], %s264
      %s267 = sshll.u32 [#allocation34], 4
      %s268 = int_to_ptr.vmem [resolvable:$true] %s267
      %270 = dma.hbm_to_vmem [thread:$0]  %s21, 64, %s268, [#allocation33]
    $region89: #{pointvae_forward.2} parent=1 // pred_fallthru
      _
    // Predicated region
    $region90: #{pointvae_forward.2} parent=1 // pred_check
      _
    $region91: #{pointvae_forward.2} parent=1 // pred_check_branch
      %272 = sbr.rel (0) target = $region93
    $region92: #{pointvae_forward.2} parent=1 // pred_region
      %s274 = ssub.s32 65536, 65536
      %275 = vsyncadd [#allocation36], %s274
      %s276 = sshll.u32 [#allocation35], 4
      %s277 = int_to_ptr.vmem [resolvable:$true] %s276
      %282 = dma.hbm_to_vmem [thread:$0]  %s22, 65536, %s277, [#allocation36], 1024, 1024, 64
    $region93: #{pointvae_forward.2} parent=1 // pred_fallthru
      _
    // Predicated region
    $region94: #{pointvae_forward.2} parent=1 // pred_check
      _
    $region95: #{pointvae_forward.2} parent=1 // pred_check_branch
      %284 = sbr.rel (0) target = $region97
    $region96: #{pointvae_forward.2} parent=1 // pred_region
      %s286 = ssub.s32 128, 128
      %287 = vsyncadd [#allocation36], %s286
      %s289 = sshll.u32 [#allocation37], 4
      %s290 = int_to_ptr.vmem [resolvable:$true] %s289
      %292 = dma.hbm_to_vmem [thread:$0]  %s23, 128, %s290, [#allocation36]
    $region97: #{pointvae_forward.2} parent=1 // pred_fallthru
      _
    // Predicated region
    $region98: #{pointvae_forward.2} parent=1 // pred_check
      _
    $region99: #{pointvae_forward.2} parent=1 // pred_check_branch
      %294 = sbr.rel (0) target = $region101
    $region100: #{pointvae_forward.2} parent=1 // pred_region
      %s296 = ssub.s32 128, 128
      %297 = vsyncadd [#allocation39], %s296
      %s299 = sshll.u32 [#allocation38], 4
      %s300 = int_to_ptr.vmem [resolvable:$true] %s299
      %302 = dma.hbm_to_vmem [thread:$0]  %s24, 128, %s300, [#allocation39]
    $region101: #{pointvae_forward.2} parent=1 // pred_fallthru
      _
    // Predicated region
    $region102: #{pointvae_forward.2} parent=1 // pred_check
      _
    $region103: #{pointvae_forward.2} parent=1 // pred_check_branch
      %304 = sbr.rel (0) target = $region105
    $region104: #{pointvae_forward.2} parent=1 // pred_region
      %s306 = ssub.s32 128, 128
      %307 = vsyncadd [#allocation39], %s306
      %s309 = sshll.u32 [#allocation40], 4
      %s310 = int_to_ptr.vmem [resolvable:$true] %s309
      %312 = dma.hbm_to_vmem [thread:$0]  %s25, 128, %s310, [#allocation39]
    $region105: #{pointvae_forward.2} parent=1 // pred_fallthru
      _
    // Predicated region
    $region106: #{pointvae_forward.2} parent=1 // pred_check
      _
    $region107: #{pointvae_forward.2} parent=1 // pred_check_branch
      %314 = sbr.rel (0) target = $region109
    $region108: #{pointvae_forward.2} parent=1 // pred_region
      %315 = dma.done [#allocation3], 128
    $region109: #{pointvae_forward.2} parent=1 // pred_fallthru
      _
    // Predicated region
    $region110: #{pointvae_forward.2} parent=1 // pred_check
      _
    $region111: #{pointvae_forward.2} parent=1 // pred_check_branch
      %317 = sbr.rel (0) target = $region113
    $region112: #{pointvae_forward.2} parent=1 // pred_region
      %318 = dma.done [#allocation6], 16
    $region113: #{pointvae_forward.2} parent=1 // pred_fallthru
      _
    // Predicated region
    $region114: #{pointvae_forward.2} parent=1 // pred_check
      _
    $region115: #{pointvae_forward.2} parent=1 // pred_check_branch
      %320 = sbr.rel (0) target = $region117
    $region116: #{pointvae_forward.2} parent=1 // pred_region
      %321 = dma.done [#allocation6], 16
    $region117: #{pointvae_forward.2} parent=1 // pred_fallthru
      _
    // Predicated region
    $region118: #{pointvae_forward.2} parent=1 // pred_check
      _
    $region119: #{pointvae_forward.2} parent=1 // pred_check_branch
      %323 = sbr.rel (0) target = $region121
    $region120: #{pointvae_forward.2} parent=1 // pred_region
      %324 = dma.done [#allocation9], 16
    $region121: #{pointvae_forward.2} parent=1 // pred_fallthru
      _
    // Predicated region
    $region122: #{pointvae_forward.2} parent=1 // pred_check
      _
    $region123: #{pointvae_forward.2} parent=1 // pred_check_branch
      %326 = sbr.rel (0) target = $region125
    $region124: #{pointvae_forward.2} parent=1 // pred_region
      %327 = dma.done [#allocation9], 1024
    $region125: #{pointvae_forward.2} parent=1 // pred_fallthru
      _
    // Predicated region
    $region126: #{pointvae_forward.2} parent=1 // pred_check
      _
    $region127: #{pointvae_forward.2} parent=1 // pred_check_branch
      %329 = sbr.rel (0) target = $region129
    $region128: #{pointvae_forward.2} parent=1 // pred_region
      %330 = dma.done [#allocation12], 16
    $region129: #{pointvae_forward.2} parent=1 // pred_fallthru
      _
    // Predicated region
    $region130: #{pointvae_forward.2} parent=1 // pred_check
      _
    $region131: #{pointvae_forward.2} parent=1 // pred_check_branch
      %332 = sbr.rel (0) target = $region133
    $region132: #{pointvae_forward.2} parent=1 // pred_region
      %333 = dma.done [#allocation12], 16
    $region133: #{pointvae_forward.2} parent=1 // pred_fallthru
      _
    // Predicated region
    $region134: #{pointvae_forward.2} parent=1 // pred_check
      _
    $region135: #{pointvae_forward.2} parent=1 // pred_check_branch
      %335 = sbr.rel (0) target = $region137
    $region136: #{pointvae_forward.2} parent=1 // pred_region
      %336 = dma.done [#allocation15], 16
    $region137: #{pointvae_forward.2} parent=1 // pred_fallthru
      _
    // Predicated region
    $region138: #{pointvae_forward.2} parent=1 // pred_check
      _
    $region139: #{pointvae_forward.2} parent=1 // pred_check_branch
      %338 = sbr.rel (0) target = $region141
    $region140: #{pointvae_forward.2} parent=1 // pred_region
      %339 = dma.done [#allocation15], 4096
    $region141: #{pointvae_forward.2} parent=1 // pred_fallthru
      _
    // Predicated region
    $region142: #{pointvae_forward.2} parent=1 // pred_check
      _
    $region143: #{pointvae_forward.2} parent=1 // pred_check_branch
      %341 = sbr.rel (0) target = $region145
    $region144: #{pointvae_forward.2} parent=1 // pred_region
      %342 = dma.done [#allocation18], 32
    $region145: #{pointvae_forward.2} parent=1 // pred_fallthru
      _
    // Predicated region
    $region146: #{pointvae_forward.2} parent=1 // pred_check
      _
    $region147: #{pointvae_forward.2} parent=1 // pred_check_branch
      %344 = sbr.rel (0) target = $region149
    $region148: #{pointvae_forward.2} parent=1 // pred_region
      %345 = dma.done [#allocation18], 32
    $region149: #{pointvae_forward.2} parent=1 // pred_fallthru
      _
    // Predicated region
    $region150: #{pointvae_forward.2} parent=1 // pred_check
      _
    $region151: #{pointvae_forward.2} parent=1 // pred_check_branch
      %347 = sbr.rel (0) target = $region153
    $region152: #{pointvae_forward.2} parent=1 // pred_region
      %348 = dma.done [#allocation21], 32
    $region153: #{pointvae_forward.2} parent=1 // pred_fallthru
      _
    // Predicated region
    $region154: #{pointvae_forward.2} parent=1 // pred_check
      _
    $region155: #{pointvae_forward.2} parent=1 // pred_check_branch
      %350 = sbr.rel (0) target = $region157
    $region156: #{pointvae_forward.2} parent=1 // pred_region
      %351 = dma.done [#allocation21], 8192
    $region157: #{pointvae_forward.2} parent=1 // pred_fallthru
      _
    // Predicated region
    $region158: #{pointvae_forward.2} parent=1 // pred_check
      _
    $region159: #{pointvae_forward.2} parent=1 // pred_check_branch
      %353 = sbr.rel (0) target = $region161
    $region160: #{pointvae_forward.2} parent=1 // pred_region
      %354 = dma.done [#allocation24], 32
    $region161: #{pointvae_forward.2} parent=1 // pred_fallthru
      _
    // Predicated region
    $region162: #{pointvae_forward.2} parent=1 // pred_check
      _
    $region163: #{pointvae_forward.2} parent=1 // pred_check_branch
      %356 = sbr.rel (0) target = $region165
    $region164: #{pointvae_forward.2} parent=1 // pred_region
      %357 = dma.done [#allocation24], 8192
    $region165: #{pointvae_forward.2} parent=1 // pred_fallthru
      _
    // Predicated region
    $region166: #{pointvae_forward.2} parent=1 // pred_check
      _
    $region167: #{pointvae_forward.2} parent=1 // pred_check_branch
      %359 = sbr.rel (0) target = $region169
    $region168: #{pointvae_forward.2} parent=1 // pred_region
      %360 = dma.done [#allocation27], 32
    $region169: #{pointvae_forward.2} parent=1 // pred_fallthru
      _
    // Predicated region
    $region170: #{pointvae_forward.2} parent=1 // pred_check
      _
    $region171: #{pointvae_forward.2} parent=1 // pred_check_branch
      %362 = sbr.rel (0) target = $region173
    $region172: #{pointvae_forward.2} parent=1 // pred_region
      %363 = dma.done [#allocation27], 64
    $region173: #{pointvae_forward.2} parent=1 // pred_fallthru
      _
    // Predicated region
    $region174: #{pointvae_forward.2} parent=1 // pred_check
      _
    $region175: #{pointvae_forward.2} parent=1 // pred_check_branch
      %365 = sbr.rel (0) target = $region177
    $region176: #{pointvae_forward.2} parent=1 // pred_region
      %366 = dma.done [#allocation30], 16384
    $region177: #{pointvae_forward.2} parent=1 // pred_fallthru
      _
    // Predicated region
    $region178: #{pointvae_forward.2} parent=1 // pred_check
      _
    $region179: #{pointvae_forward.2} parent=1 // pred_check_branch
      %368 = sbr.rel (0) target = $region181
    $region180: #{pointvae_forward.2} parent=1 // pred_region
      %369 = dma.done [#allocation30], 64
    $region181: #{pointvae_forward.2} parent=1 // pred_fallthru
      _
    // Predicated region
    $region182: #{pointvae_forward.2} parent=1 // pred_check
      _
    $region183: #{pointvae_forward.2} parent=1 // pred_check_branch
      %371 = sbr.rel (0) target = $region185
    $region184: #{pointvae_forward.2} parent=1 // pred_region
      %372 = dma.done [#allocation33], 64
    $region185: #{pointvae_forward.2} parent=1 // pred_fallthru
      _
    // Predicated region
    $region186: #{pointvae_forward.2} parent=1 // pred_check
      _
    $region187: #{pointvae_forward.2} parent=1 // pred_check_branch
      %374 = sbr.rel (0) target = $region189
    $region188: #{pointvae_forward.2} parent=1 // pred_region
      %375 = dma.done [#allocation33], 64
    $region189: #{pointvae_forward.2} parent=1 // pred_fallthru
      _
    // Predicated region
    $region190: #{pointvae_forward.2} parent=1 // pred_check
      _
    $region191: #{pointvae_forward.2} parent=1 // pred_check_branch
      %377 = sbr.rel (0) target = $region193
    $region192: #{pointvae_forward.2} parent=1 // pred_region
      %378 = dma.done [#allocation36], 65536
    $region193: #{pointvae_forward.2} parent=1 // pred_fallthru
      _
    // Predicated region
    $region194: #{pointvae_forward.2} parent=1 // pred_check
      _
    $region195: #{pointvae_forward.2} parent=1 // pred_check_branch
      %380 = sbr.rel (0) target = $region197
    $region196: #{pointvae_forward.2} parent=1 // pred_region
      %381 = dma.done [#allocation36], 128
    $region197: #{pointvae_forward.2} parent=1 // pred_fallthru
      _
    // Predicated region
    $region198: #{pointvae_forward.2} parent=1 // pred_check
      _
    $region199: #{pointvae_forward.2} parent=1 // pred_check_branch
      %383 = sbr.rel (0) target = $region201
    $region200: #{pointvae_forward.2} parent=1 // pred_region
      %384 = dma.done [#allocation39], 128
    $region201: #{pointvae_forward.2} parent=1 // pred_fallthru
      _
    // Predicated region
    $region202: #{pointvae_forward.2} parent=1 // pred_check
      _
    $region203: #{pointvae_forward.2} parent=1 // pred_check_branch
      %386 = sbr.rel (0) target = $region205
    $region204: #{pointvae_forward.2} parent=1 // pred_region
      %387 = dma.done [#allocation39], 128
    $region205: #{pointvae_forward.2} parent=1 // pred_fallthru
      _
    %v388 = vld [vmem:[%s0] sm:$0xff]
    %v389 = vld [vmem:[%s0 + $0x8] sm:$0xff]
    %v390 = vld [vmem:[%s0 + $0x10] sm:$0xff]
    %v391 = vld [vmem:[%s0 + $0x18] sm:$0xff]
    %v392 = vld [vmem:[%s0 + $0x20] sm:$0xff]
    %v393 = vld [vmem:[%s0 + $0x28] sm:$0xff]
    %v394 = vld [vmem:[%s0 + $0x30] sm:$0xff]
    %v395 = vld [vmem:[%s0 + $0x38] sm:$0xff]
    %v396 = vld [vmem:[%s0 + $0x40] sm:$0xff]
    %v397 = vld [vmem:[%s0 + $0x48] sm:$0xff]
    %v398 = vld [vmem:[%s0 + $0x50] sm:$0xff]
    %v399 = vld [vmem:[%s0 + $0x58] sm:$0xff]
    %v400 = vld [vmem:[%s0 + $0x60] sm:$0xff]
    %v401 = vld [vmem:[%s0 + $0x68] sm:$0xff]
    %v402 = vld [vmem:[%s0 + $0x70] sm:$0xff]
    %v403 = vld [vmem:[%s0 + $0x78] sm:$0xff]
    %v404 = vld [vmem:[#allocation2] sm:$0xff]
    %v405 = vld [vmem:[#allocation5] sm:$0x1]
    %v407 = vlaneseq
    %v408 = vshrl.u32 %v407, 7
    %v409 = vsub.s32 0, %v408
    %v410 = vrot.slane %v405, %v409
    %vm412 = vcmask 64512
    %v414 = vsel %vm412, %v388, 0
    %v417 = vsel %vm412, %v389, 0
    %v420 = vsel %vm412, %v390, 0
    %v423 = vsel %vm412, %v391, 0
    %v426 = vsel %vm412, %v392, 0
    %v429 = vsel %vm412, %v393, 0
    %v432 = vsel %vm412, %v394, 0
    %v435 = vsel %vm412, %v395, 0
    %v438 = vsel %vm412, %v396, 0
    %v441 = vsel %vm412, %v397, 0
    %v444 = vsel %vm412, %v398, 0
    %v447 = vsel %vm412, %v399, 0
    %v450 = vsel %vm412, %v400, 0
    %v453 = vsel %vm412, %v401, 0
    %v456 = vsel %vm412, %v402, 0
    %v459 = vsel %vm412, %v403, 0
    %461 = vmatprep.subr.mxu0 0.0
    %462 = vmatpush1.msra.mxu0 %v404
    %463 = vmatprep.subr.mxu0 0.0
    %464 = vmatpush1.msra.mxu0 0.0
    %465 = vmatprep.subr.mxu0 0.0
    %466 = vmatpush1.msra.mxu0 0.0
    %467 = vmatprep.subr.mxu0 0.0
    %468 = vmatpush1.msra.mxu0 0.0
    %469 = vmatprep.subr.mxu0 0.0
    %470 = vmatpush1.msra.mxu0 0.0
    %471 = vmatprep.subr.mxu0 0.0
    %472 = vmatpush1.msra.mxu0 0.0
    %473 = vmatprep.subr.mxu0 0.0
    %474 = vmatpush1.msra.mxu0 0.0
    %475 = vmatprep.subr.mxu0 0.0
    %476 = vmatpush1.msra.mxu0 0.0
    %477 = vmatprep.subr.mxu0 0.0
    %478 = vmatpush1.msra.mxu0 0.0
    %479 = vmatprep.subr.mxu0 0.0
    %480 = vmatpush1.msra.mxu0 0.0
    %481 = vmatprep.subr.mxu0 0.0
    %482 = vmatpush1.msra.mxu0 0.0
    %483 = vmatprep.subr.mxu0 0.0
    %484 = vmatpush1.msra.mxu0 0.0
    %485 = vmatprep.subr.mxu0 0.0
    %486 = vmatpush1.msra.mxu0 0.0
    %487 = vmatprep.subr.mxu0 0.0
    %488 = vmatpush1.msra.mxu0 0.0
    %489 = vmatprep.subr.mxu0 0.0
    %490 = vmatpush1.msra.mxu0 0.0
    %491 = vmatprep.subr.mxu0 0.0
    %492 = vmatpush1.msra.mxu0 0.0
    %493 = vmatprep.subr.mxu0 0.0
    %494 = vmatpush1.msra.mxu0 0.0
    %495 = vmatprep.subr.mxu0 0.0
    %496 = vmatpush1.msra.mxu0 0.0
    %497 = vmatprep.subr.mxu0 0.0
    %498 = vmatpush1.msra.mxu0 0.0
    %499 = vmatprep.subr.mxu0 0.0
    %500 = vmatpush1.msra.mxu0 0.0
    %501 = vmatprep.subr.mxu0 0.0
    %502 = vmatpush1.msra.mxu0 0.0
    %503 = vmatprep.subr.mxu0 0.0
    %504 = vmatpush1.msra.mxu0 0.0
    %505 = vmatprep.subr.mxu0 0.0
    %506 = vmatpush1.msra.mxu0 0.0
    %507 = vmatprep.subr.mxu0 0.0
    %508 = vmatpush1.msra.mxu0 0.0
    %509 = vmatprep.subr.mxu0 0.0
    %510 = vmatpush1.msra.mxu0 0.0
    %511 = vmatprep.subr.mxu0 0.0
    %512 = vmatpush1.msra.mxu0 0.0
    %513 = vmatprep.subr.mxu0 0.0
    %514 = vmatpush1.msra.mxu0 0.0
    %515 = vmatprep.subr.mxu0 0.0
    %516 = vmatpush1.msra.mxu0 0.0
    %517 = vmatprep.subr.mxu0 0.0
    %518 = vmatpush1.msra.mxu0 0.0
    %519 = vmatprep.subr.mxu0 0.0
    %520 = vmatpush1.msra.mxu0 0.0
    %521 = vmatprep.subr.mxu0 0.0
    %522 = vmatpush1.msra.mxu0 0.0
    %523 = vmatprep.subr.mxu0 0.0
    %524 = vmatpush1.msra.mxu0 0.0
    %525 = vmatprep.mubr.f32.mxu0 0.0
    %526 = vmatmul.mubr.f32.gmra.mrb[0].mxu0 %v414
    %v527 = vpop.f32.mrb[0].mxu0
    %v528 = vadd.f32 %v410, %v527
    %v529 = vpop.f32.mrb[0].mxu0
    %530 = vmatprep.mubr.f32.mxu0 0.0
    %531 = vmatmul.mubr.f32.gmra.mrb[0].mxu0 %v417
    %v532 = vpop.f32.mrb[0].mxu0
    %v533 = vadd.f32 %v410, %v532
    %v534 = vpop.f32.mrb[0].mxu0
    %535 = vmatprep.mubr.f32.mxu0 0.0
    %536 = vmatmul.mubr.f32.gmra.mrb[0].mxu0 %v420
    %v537 = vpop.f32.mrb[0].mxu0
    %v538 = vadd.f32 %v410, %v537
    %v539 = vpop.f32.mrb[0].mxu0
    %540 = vmatprep.mubr.f32.mxu0 0.0
    %541 = vmatmul.mubr.f32.gmra.mrb[0].mxu0 %v423
    %v542 = vpop.f32.mrb[0].mxu0
    %v543 = vadd.f32 %v410, %v542
    %v544 = vpop.f32.mrb[0].mxu0
    %545 = vmatprep.mubr.f32.mxu0 0.0
    %546 = vmatmul.mubr.f32.gmra.mrb[0].mxu0 %v426
    %v547 = vpop.f32.mrb[0].mxu0
    %v548 = vadd.f32 %v410, %v547
    %v549 = vpop.f32.mrb[0].mxu0
    %550 = vmatprep.mubr.f32.mxu0 0.0
    %551 = vmatmul.mubr.f32.gmra.mrb[0].mxu0 %v429
    %v552 = vpop.f32.mrb[0].mxu0
    %v553 = vadd.f32 %v410, %v552
    %v554 = vpop.f32.mrb[0].mxu0
    %555 = vmatprep.mubr.f32.mxu0 0.0
    %556 = vmatmul.mubr.f32.gmra.mrb[0].mxu0 %v432
    %v557 = vpop.f32.mrb[0].mxu0
    %v558 = vadd.f32 %v410, %v557
    %v559 = vpop.f32.mrb[0].mxu0
    %560 = vmatprep.mubr.f32.mxu0 0.0
    %561 = vmatmul.mubr.f32.gmra.mrb[0].mxu0 %v435
    %v562 = vpop.f32.mrb[0].mxu0
    %v563 = vadd.f32 %v410, %v562
    %v564 = vpop.f32.mrb[0].mxu0
    %565 = vmatprep.mubr.f32.mxu0 0.0
    %566 = vmatmul.mubr.f32.gmra.mrb[0].mxu0 %v438
    %v567 = vpop.f32.mrb[0].mxu0
    %v568 = vadd.f32 %v410, %v567
    %v569 = vpop.f32.mrb[0].mxu0
    %570 = vmatprep.mubr.f32.mxu0 0.0
    %571 = vmatmul.mubr.f32.gmra.mrb[0].mxu0 %v441
    %v572 = vpop.f32.mrb[0].mxu0
    %v573 = vadd.f32 %v410, %v572
    %v574 = vpop.f32.mrb[0].mxu0
    %575 = vmatprep.mubr.f32.mxu0 0.0
    %576 = vmatmul.mubr.f32.gmra.mrb[0].mxu0 %v444
    %v577 = vpop.f32.mrb[0].mxu0
    %v578 = vadd.f32 %v410, %v577
    %v579 = vpop.f32.mrb[0].mxu0
    %580 = vmatprep.mubr.f32.mxu0 0.0
    %581 = vmatmul.mubr.f32.gmra.mrb[0].mxu0 %v447
    %v582 = vpop.f32.mrb[0].mxu0
    %v583 = vadd.f32 %v410, %v582
    %v584 = vpop.f32.mrb[0].mxu0
    %585 = vmatprep.mubr.f32.mxu0 0.0
    %586 = vmatmul.mubr.f32.gmra.mrb[0].mxu0 %v450
    %v587 = vpop.f32.mrb[0].mxu0
    %v588 = vadd.f32 %v410, %v587
    %v589 = vpop.f32.mrb[0].mxu0
    %590 = vmatprep.mubr.f32.mxu0 0.0
    %591 = vmatmul.mubr.f32.gmra.mrb[0].mxu0 %v453
    %v592 = vpop.f32.mrb[0].mxu0
    %v593 = vadd.f32 %v410, %v592
    %v594 = vpop.f32.mrb[0].mxu0
    %595 = vmatprep.mubr.f32.mxu0 0.0
    %596 = vmatmul.mubr.f32.gmra.mrb[0].mxu0 %v456
    %v597 = vpop.f32.mrb[0].mxu0
    %v598 = vadd.f32 %v410, %v597
    %v599 = vpop.f32.mrb[0].mxu0
    %600 = vmatprep.mubr.f32.mxu0 0.0
    %601 = vmatmul.mubr.f32.gmra.mrb[0].mxu0 %v459
    %v602 = vpop.f32.mrb[0].mxu0
    %v603 = vadd.f32 %v410, %v602
    %v604 = vpop.f32.mrb[0].mxu0
    %605 = vdwg.mxu0
    %v606 = vld [vmem:[#allocation7] sm:$0x1]
    %v607 = vld [vmem:[#allocation8] sm:$0x1]
    %vm608 = vcmask 523264
    %v609 = vsel %vm608, %v528, 0.0
    %v610 = vsel %vm608, %v533, 0.0
    %v611 = vadd.f32 %v609, %v610
    %v612 = vsel %vm608, %v538, 0.0
    %v613 = vadd.f32 %v611, %v612
    %v614 = vsel %vm608, %v543, 0.0
    %v615 = vadd.f32 %v613, %v614
    %v616 = vsel %vm608, %v548, 0.0
    %v617 = vadd.f32 %v615, %v616
    %v618 = vsel %vm608, %v553, 0.0
    %v619 = vadd.f32 %v617, %v618
    %v620 = vsel %vm608, %v558, 0.0
    %v621 = vadd.f32 %v619, %v620
    %v622 = vsel %vm608, %v563, 0.0
    %v623 = vadd.f32 %v621, %v622
    %v624 = vsel %vm608, %v568, 0.0
    %v625 = vadd.f32 %v623, %v624
    %v626 = vsel %vm608, %v573, 0.0
    %v627 = vadd.f32 %v625, %v626
    %v628 = vsel %vm608, %v578, 0.0
    %v629 = vadd.f32 %v627, %v628
    %v630 = vsel %vm608, %v583, 0.0
    %v631 = vadd.f32 %v629, %v630
    %v632 = vsel %vm608, %v588, 0.0
    %v633 = vadd.f32 %v631, %v632
    %v634 = vsel %vm608, %v593, 0.0
    %v635 = vadd.f32 %v633, %v634
    %v636 = vsel %vm608, %v598, 0.0
    %v637 = vadd.f32 %v635, %v636
    %v638 = vsel %vm608, %v603, 0.0
    %v639 = vadd.f32 %v637, %v638
    %v640 = vrot.slane %v639, 4
    %v641 = vadd.f32 %v639, %v640
    %v642 = vrot.slane %v641, 2
    %v643 = vadd.f32 %v641, %v642
    %v644 = vrot.slane %v643, 1
    %v645 = vadd.f32 %v643, %v644
    %v646 = vmul.f32 %v645, 0.0078125
    %v647 = vmul.f32 %v528, %v528
    %v648 = vmul.f32 %v533, %v533
    %v649 = vmul.f32 %v538, %v538
    %v650 = vmul.f32 %v543, %v543
    %v651 = vmul.f32 %v548, %v548
    %v652 = vmul.f32 %v553, %v553
    %v653 = vmul.f32 %v558, %v558
    %v654 = vmul.f32 %v563, %v563
    %v655 = vmul.f32 %v568, %v568
    %v656 = vmul.f32 %v573, %v573
    %v657 = vmul.f32 %v578, %v578
    %v658 = vmul.f32 %v583, %v583
    %v659 = vmul.f32 %v588, %v588
    %v660 = vmul.f32 %v593, %v593
    %v661 = vmul.f32 %v598, %v598
    %v662 = vmul.f32 %v603, %v603
    %v663 = vsel %vm608, %v647, 0.0
    %v664 = vsel %vm608, %v648, 0.0
    %v665 = vadd.f32 %v663, %v664
    %v666 = vsel %vm608, %v649, 0.0
    %v667 = vadd.f32 %v665, %v666
    %v668 = vsel %vm608, %v650, 0.0
    %v669 = vadd.f32 %v667, %v668
    %v670 = vsel %vm608, %v651, 0.0
    %v671 = vadd.f32 %v669, %v670
    %v672 = vsel %vm608, %v652, 0.0
    %v673 = vadd.f32 %v671, %v672
    %v674 = vsel %vm608, %v653, 0.0
    %v675 = vadd.f32 %v673, %v674
    %v676 = vsel %vm608, %v654, 0.0
    %v677 = vadd.f32 %v675, %v676
    %v678 = vsel %vm608, %v655, 0.0
    %v679 = vadd.f32 %v677, %v678
    %v680 = vsel %vm608, %v656, 0.0
    %v681 = vadd.f32 %v679, %v680
    %v682 = vsel %vm608, %v657, 0.0
    %v683 = vadd.f32 %v681, %v682
    %v684 = vsel %vm608, %v658, 0.0
    %v685 = vadd.f32 %v683, %v684
    %v686 = vsel %vm608, %v659, 0.0
    %v687 = vadd.f32 %v685, %v686
    %v688 = vsel %vm608, %v660, 0.0
    %v689 = vadd.f32 %v687, %v688
    %v690 = vsel %vm608, %v661, 0.0
    %v691 = vadd.f32 %v689, %v690
    %v692 = vsel %vm608, %v662, 0.0
    %v693 = vadd.f32 %v691, %v692
    %v694 = vrot.slane %v693, 4
    %v695 = vadd.f32 %v693, %v694
    %v696 = vrot.slane %v695, 2
    %v697 = vadd.f32 %v695, %v696
    %v698 = vrot.slane %v697, 1
    %v699 = vadd.f32 %v697, %v698
    %v700 = vmul.f32 %v699, 0.0078125
    %v701 = vmul.f32 %v646, %v646
    %v702 = vsub.f32 %v700, %v701
    %v703 = vmax.f32 %v702, 0.0
    %v704 = vsub.f32 %v528, %v646
    %v705 = vsub.f32 %v533, %v646
    %v706 = vsub.f32 %v538, %v646
    %v707 = vsub.f32 %v543, %v646
    %v708 = vsub.f32 %v548, %v646
    %v709 = vsub.f32 %v553, %v646
    %v710 = vsub.f32 %v558, %v646
    %v711 = vsub.f32 %v563, %v646
    %v712 = vsub.f32 %v568, %v646
    %v713 = vsub.f32 %v573, %v646
    %v714 = vsub.f32 %v578, %v646
    %v715 = vsub.f32 %v583, %v646
    %v716 = vsub.f32 %v588, %v646
    %v717 = vsub.f32 %v593, %v646
    %v718 = vsub.f32 %v598, %v646
    %v719 = vsub.f32 %v603, %v646
    %v720 = vadd.f32 %v703, 1e-05
    %v721 = vrsqrt.pop %v720
    %v722 = vmul.f32 %v704, %v721
    %v723 = vmul.f32 %v705, %v721
    %v724 = vmul.f32 %v706, %v721
    %v725 = vmul.f32 %v707, %v721
    %v726 = vmul.f32 %v708, %v721
    %v727 = vmul.f32 %v709, %v721
    %v728 = vmul.f32 %v710, %v721
    %v729 = vmul.f32 %v711, %v721
    %v730 = vmul.f32 %v712, %v721
    %v731 = vmul.f32 %v713, %v721
    %v732 = vmul.f32 %v714, %v721
    %v733 = vmul.f32 %v715, %v721
    %v734 = vmul.f32 %v716, %v721
    %v735 = vmul.f32 %v717, %v721
    %v736 = vmul.f32 %v718, %v721
    %v737 = vmul.f32 %v719, %v721
    %v739 = vlaneseq
    %v740 = vshrl.u32 %v739, 7
    %v741 = vsub.s32 0, %v740
    %v742 = vrot.slane %v606, %v741
    %v744 = vmul.f32 %v722, %v742
    %v745 = vmul.f32 %v723, %v742
    %v746 = vmul.f32 %v724, %v742
    %v747 = vmul.f32 %v725, %v742
    %v748 = vmul.f32 %v726, %v742
    %v749 = vmul.f32 %v727, %v742
    %v750 = vmul.f32 %v728, %v742
    %v751 = vmul.f32 %v729, %v742
    %v752 = vmul.f32 %v730, %v742
    %v753 = vmul.f32 %v731, %v742
    %v754 = vmul.f32 %v732, %v742
    %v755 = vmul.f32 %v733, %v742
    %v756 = vmul.f32 %v734, %v742
    %v757 = vmul.f32 %v735, %v742
    %v758 = vmul.f32 %v736, %v742
    %v759 = vmul.f32 %v737, %v742
    %v761 = vlaneseq
    %v762 = vshrl.u32 %v761, 7
    %v763 = vsub.s32 0, %v762
    %v764 = vrot.slane %v607, %v763
    %v766 = vadd.f32 %v744, %v764
    %v767 = vadd.f32 %v745, %v764
    %v768 = vadd.f32 %v746, %v764
    %v769 = vadd.f32 %v747, %v764
    %v770 = vadd.f32 %v748, %v764
    %v771 = vadd.f32 %v749, %v764
    %v772 = vadd.f32 %v750, %v764
    %v773 = vadd.f32 %v751, %v764
    %v774 = vadd.f32 %v752, %v764
    %v775 = vadd.f32 %v753, %v764
    %v776 = vadd.f32 %v754, %v764
    %v777 = vadd.f32 %v755, %v764
    %v778 = vadd.f32 %v756, %v764
    %v779 = vadd.f32 %v757, %v764
    %v780 = vadd.f32 %v758, %v764
    %v781 = vadd.f32 %v759, %v764
    %vm782 = vcmp.ge.f32.partialorder %v766, 0.0
    %vm783 = vcmp.ge.f32.partialorder %v767, 0.0
    %vm784 = vcmp.ge.f32.partialorder %v768, 0.0
    %vm785 = vcmp.ge.f32.partialorder %v769, 0.0
    %vm786 = vcmp.ge.f32.partialorder %v770, 0.0
    %vm787 = vcmp.ge.f32.partialorder %v771, 0.0
    %vm788 = vcmp.ge.f32.partialorder %v772, 0.0
    %vm789 = vcmp.ge.f32.partialorder %v773, 0.0
    %vm790 = vcmp.ge.f32.partialorder %v774, 0.0
    %vm791 = vcmp.ge.f32.partialorder %v775, 0.0
    %vm792 = vcmp.ge.f32.partialorder %v776, 0.0
    %vm793 = vcmp.ge.f32.partialorder %v777, 0.0
    %vm794 = vcmp.ge.f32.partialorder %v778, 0.0
    %vm795 = vcmp.ge.f32.partialorder %v779, 0.0
    %vm796 = vcmp.ge.f32.partialorder %v780, 0.0
    %vm797 = vcmp.ge.f32.partialorder %v781, 0.0
    %v798 = vmul.f32 %v766, 0.2
    %v799 = vmul.f32 %v767, 0.2
    %v800 = vmul.f32 %v768, 0.2
    %v801 = vmul.f32 %v769, 0.2
    %v802 = vmul.f32 %v770, 0.2
    %v803 = vmul.f32 %v771, 0.2
    %v804 = vmul.f32 %v772, 0.2
    %v805 = vmul.f32 %v773, 0.2
    %v806 = vmul.f32 %v774, 0.2
    %v807 = vmul.f32 %v775, 0.2
    %v808 = vmul.f32 %v776, 0.2
    %v809 = vmul.f32 %v777, 0.2
    %v810 = vmul.f32 %v778, 0.2
    %v811 = vmul.f32 %v779, 0.2
    %v812 = vmul.f32 %v780, 0.2
    %v813 = vmul.f32 %v781, 0.2
    %v814 = vsel %vm782, %v766, %v798
    %v815 = vsel %vm783, %v767, %v799
    %v816 = vsel %vm784, %v768, %v800
    %v817 = vsel %vm785, %v769, %v801
    %v818 = vsel %vm786, %v770, %v802
    %v819 = vsel %vm787, %v771, %v803
    %v820 = vsel %vm788, %v772, %v804
    %v821 = vsel %vm789, %v773, %v805
    %v822 = vsel %vm790, %v774, %v806
    %v823 = vsel %vm791, %v775, %v807
    %v824 = vsel %vm792, %v776, %v808
    %v825 = vsel %vm793, %v777, %v809
    %v826 = vsel %vm794, %v778, %v810
    %v827 = vsel %vm795, %v779, %v811
    %v828 = vsel %vm796, %v780, %v812
    %v829 = vsel %vm797, %v781, %v813
    %v830 = vld [vmem:[#allocation10] sm:$0xff]
    %v831 = vld [vmem:[#allocation10 + $0x8] sm:$0xff]
    %v832 = vld [vmem:[#allocation10 + $0x10] sm:$0xff]
    %v833 = vld [vmem:[#allocation10 + $0x18] sm:$0xff]
    %v834 = vld [vmem:[#allocation10 + $0x20] sm:$0xff]
    %v835 = vld [vmem:[#allocation10 + $0x28] sm:$0xff]
    %v836 = vld [vmem:[#allocation10 + $0x30] sm:$0xff]
    %v837 = vld [vmem:[#allocation10 + $0x38] sm:$0xff]
    %v838 = vld [vmem:[#allocation11] sm:$0x1]
    %v840 = vlaneseq
    %v841 = vshrl.u32 %v840, 7
    %v842 = vsub.s32 0, %v841
    %v843 = vrot.slane %v838, %v842
    %v846 = vsel %vm608, %v814, 0
    %v849 = vsel %vm608, %v815, 0
    %v852 = vsel %vm608, %v816, 0
    %v855 = vsel %vm608, %v817, 0
    %v858 = vsel %vm608, %v818, 0
    %v861 = vsel %vm608, %v819, 0
    %v864 = vsel %vm608, %v820, 0
    %v867 = vsel %vm608, %v821, 0
    %v870 = vsel %vm608, %v822, 0
    %v873 = vsel %vm608, %v823, 0
    %v876 = vsel %vm608, %v824, 0
    %v879 = vsel %vm608, %v825, 0
    %v882 = vsel %vm608, %v826, 0
    %v885 = vsel %vm608, %v827, 0
    %v888 = vsel %vm608, %v828, 0
    %v891 = vsel %vm608, %v829, 0
    %893 = vmatprep.subr.mxu0 0.0
    %894 = vmatpush1.msra.mxu0 %v830
    %895 = vmatprep.subr.mxu0 0.0
    %896 = vmatpush1.msra.mxu0 %v831
    %897 = vmatprep.subr.mxu0 0.0
    %898 = vmatpush1.msra.mxu0 %v832
    %899 = vmatprep.subr.mxu0 0.0
    %900 = vmatpush1.msra.mxu0 %v833
    %901 = vmatprep.subr.mxu0 0.0
    %902 = vmatpush1.msra.mxu0 %v834
    %903 = vmatprep.subr.mxu0 0.0
    %904 = vmatpush1.msra.mxu0 %v835
    %905 = vmatprep.subr.mxu0 0.0
    %906 = vmatpush1.msra.mxu0 %v836
    %907 = vmatprep.subr.mxu0 0.0
    %908 = vmatpush1.msra.mxu0 %v837
    %909 = vmatprep.subr.mxu0 0.0
    %910 = vmatpush1.msra.mxu0 0.0
    %911 = vmatprep.subr.mxu0 0.0
    %912 = vmatpush1.msra.mxu0 0.0
    %913 = vmatprep.subr.mxu0 0.0
    %914 = vmatpush1.msra.mxu0 0.0
    %915 = vmatprep.subr.mxu0 0.0
    %916 = vmatpush1.msra.mxu0 0.0
    %917 = vmatprep.subr.mxu0 0.0
    %918 = vmatpush1.msra.mxu0 0.0
    %919 = vmatprep.subr.mxu0 0.0
    %920 = vmatpush1.msra.mxu0 0.0
    %921 = vmatprep.subr.mxu0 0.0
    %922 = vmatpush1.msra.mxu0 0.0
    %923 = vmatprep.subr.mxu0 0.0
    %924 = vmatpush1.msra.mxu0 0.0
    %925 = vmatprep.subr.mxu0 0.0
    %926 = vmatpush1.msra.mxu0 0.0
    %927 = vmatprep.subr.mxu0 0.0
    %928 = vmatpush1.msra.mxu0 0.0
    %929 = vmatprep.subr.mxu0 0.0
    %930 = vmatpush1.msra.mxu0 0.0
    %931 = vmatprep.subr.mxu0 0.0
    %932 = vmatpush1.msra.mxu0 0.0
    %933 = vmatprep.subr.mxu0 0.0
    %934 = vmatpush1.msra.mxu0 0.0
    %935 = vmatprep.subr.mxu0 0.0
    %936 = vmatpush1.msra.mxu0 0.0
    %937 = vmatprep.subr.mxu0 0.0
    %938 = vmatpush1.msra.mxu0 0.0
    %939 = vmatprep.subr.mxu0 0.0
    %940 = vmatpush1.msra.mxu0 0.0
    %941 = vmatprep.subr.mxu0 0.0
    %942 = vmatpush1.msra.mxu0 0.0
    %943 = vmatprep.subr.mxu0 0.0
    %944 = vmatpush1.msra.mxu0 0.0
    %945 = vmatprep.subr.mxu0 0.0
    %946 = vmatpush1.msra.mxu0 0.0
    %947 = vmatprep.subr.mxu0 0.0
    %948 = vmatpush1.msra.mxu0 0.0
    %949 = vmatprep.subr.mxu0 0.0
    %950 = vmatpush1.msra.mxu0 0.0
    %951 = vmatprep.subr.mxu0 0.0
    %952 = vmatpush1.msra.mxu0 0.0
    %953 = vmatprep.subr.mxu0 0.0
    %954 = vmatpush1.msra.mxu0 0.0
    %955 = vmatprep.subr.mxu0 0.0
    %956 = vmatpush1.msra.mxu0 0.0
    %957 = vmatprep.mubr.f32.mxu0 0.0
    %958 = vmatmul.mubr.f32.gmra.mrb[0].mxu0 %v846
    %v959 = vpop.f32.mrb[0].mxu0
    %v960 = vadd.f32 %v843, %v959
    %v961 = vpop.f32.mrb[0].mxu0
    %962 = vmatprep.mubr.f32.mxu0 0.0
    %963 = vmatmul.mubr.f32.gmra.mrb[0].mxu0 %v849
    %v964 = vpop.f32.mrb[0].mxu0
    %v965 = vadd.f32 %v843, %v964
    %v966 = vpop.f32.mrb[0].mxu0
    %967 = vmatprep.mubr.f32.mxu0 0.0
    %968 = vmatmul.mubr.f32.gmra.mrb[0].mxu0 %v852
    %v969 = vpop.f32.mrb[0].mxu0
    %v970 = vadd.f32 %v843, %v969
    %v971 = vpop.f32.mrb[0].mxu0
    %972 = vmatprep.mubr.f32.mxu0 0.0
    %973 = vmatmul.mubr.f32.gmra.mrb[0].mxu0 %v855
    %v974 = vpop.f32.mrb[0].mxu0
    %v975 = vadd.f32 %v843, %v974
    %v976 = vpop.f32.mrb[0].mxu0
    %977 = vmatprep.mubr.f32.mxu0 0.0
    %978 = vmatmul.mubr.f32.gmra.mrb[0].mxu0 %v858
    %v979 = vpop.f32.mrb[0].mxu0
    %v980 = vadd.f32 %v843, %v979
    %v981 = vpop.f32.mrb[0].mxu0
    %982 = vmatprep.mubr.f32.mxu0 0.0
    %983 = vmatmul.mubr.f32.gmra.mrb[0].mxu0 %v861
    %v984 = vpop.f32.mrb[0].mxu0
    %v985 = vadd.f32 %v843, %v984
    %v986 = vpop.f32.mrb[0].mxu0
    %987 = vmatprep.mubr.f32.mxu0 0.0
    %988 = vmatmul.mubr.f32.gmra.mrb[0].mxu0 %v864
    %v989 = vpop.f32.mrb[0].mxu0
    %v990 = vadd.f32 %v843, %v989
    %v991 = vpop.f32.mrb[0].mxu0
    %992 = vmatprep.mubr.f32.mxu0 0.0
    %993 = vmatmul.mubr.f32.gmra.mrb[0].mxu0 %v867
    %v994 = vpop.f32.mrb[0].mxu0
    %v995 = vadd.f32 %v843, %v994
    %v996 = vpop.f32.mrb[0].mxu0
    %997 = vmatprep.mubr.f32.mxu0 0.0
    %998 = vmatmul.mubr.f32.gmra.mrb[0].mxu0 %v870
    %v999 = vpop.f32.mrb[0].mxu0
    %v1000 = vadd.f32 %v843, %v999
    %v1001 = vpop.f32.mrb[0].mxu0
    %1002 = vmatprep.mubr.f32.mxu0 0.0
    %1003 = vmatmul.mubr.f32.gmra.mrb[0].mxu0 %v873
    %v1004 = vpop.f32.mrb[0].mxu0
    %v1005 = vadd.f32 %v843, %v1004
    %v1006 = vpop.f32.mrb[0].mxu0
    %1007 = vmatprep.mubr.f32.mxu0 0.0
    %1008 = vmatmul.mubr.f32.gmra.mrb[0].mxu0 %v876
    %v1009 = vpop.f32.mrb[0].mxu0
    %v1010 = vadd.f32 %v843, %v1009
    %v1011 = vpop.f32.mrb[0].mxu0
    %1012 = vmatprep.mubr.f32.mxu0 0.0
    %1013 = vmatmul.mubr.f32.gmra.mrb[0].mxu0 %v879
    %v1014 = vpop.f32.mrb[0].mxu0
    %v1015 = vadd.f32 %v843, %v1014
    %v1016 = vpop.f32.mrb[0].mxu0
    %1017 = vmatprep.mubr.f32.mxu0 0.0
    %1018 = vmatmul.mubr.f32.gmra.mrb[0].mxu0 %v882
    %v1019 = vpop.f32.mrb[0].mxu0
    %v1020 = vadd.f32 %v843, %v1019
    %v1021 = vpop.f32.mrb[0].mxu0
    %1022 = vmatprep.mubr.f32.mxu0 0.0
    %1023 = vmatmul.mubr.f32.gmra.mrb[0].mxu0 %v885
    %v1024 = vpop.f32.mrb[0].mxu0
    %v1025 = vadd.f32 %v843, %v1024
    %v1026 = vpop.f32.mrb[0].mxu0
    %1027 = vmatprep.mubr.f32.mxu0 0.0
    %1028 = vmatmul.mubr.f32.gmra.mrb[0].mxu0 %v888
    %v1029 = vpop.f32.mrb[0].mxu0
    %v1030 = vadd.f32 %v843, %v1029
    %v1031 = vpop.f32.mrb[0].mxu0
    %1032 = vmatprep.mubr.f32.mxu0 0.0
    %1033 = vmatmul.mubr.f32.gmra.mrb[0].mxu0 %v891
    %v1034 = vpop.f32.mrb[0].mxu0
    %v1035 = vadd.f32 %v843, %v1034
    %v1036 = vpop.f32.mrb[0].mxu0
    %1037 = vdwg.mxu0
    %v1038 = vld [vmem:[#allocation13] sm:$0x1]
    %v1039 = vld [vmem:[#allocation14] sm:$0x1]
    %v1040 = vadd.f32 %v960, %v965
    %v1041 = vadd.f32 %v1040, %v970
    %v1042 = vadd.f32 %v1041, %v975
    %v1043 = vadd.f32 %v1042, %v980
    %v1044 = vadd.f32 %v1043, %v985
    %v1045 = vadd.f32 %v1044, %v990
    %v1046 = vadd.f32 %v1045, %v995
    %v1047 = vadd.f32 %v1046, %v1000
    %v1048 = vadd.f32 %v1047, %v1005
    %v1049 = vadd.f32 %v1048, %v1010
    %v1050 = vadd.f32 %v1049, %v1015
    %v1051 = vadd.f32 %v1050, %v1020
    %v1052 = vadd.f32 %v1051, %v1025
    %v1053 = vadd.f32 %v1052, %v1030
    %v1054 = vadd.f32 %v1053, %v1035
    %v1055 = vrot.slane %v1054, 4
    %v1056 = vadd.f32 %v1054, %v1055
    %v1057 = vrot.slane %v1056, 2
    %v1058 = vadd.f32 %v1056, %v1057
    %v1059 = vrot.slane %v1058, 1
    %v1060 = vadd.f32 %v1058, %v1059
    %v1061 = vmul.f32 %v1060, 0.0078125
    %v1062 = vmul.f32 %v960, %v960
    %v1063 = vmul.f32 %v965, %v965
    %v1064 = vmul.f32 %v970, %v970
    %v1065 = vmul.f32 %v975, %v975
    %v1066 = vmul.f32 %v980, %v980
    %v1067 = vmul.f32 %v985, %v985
    %v1068 = vmul.f32 %v990, %v990
    %v1069 = vmul.f32 %v995, %v995
    %v1070 = vmul.f32 %v1000, %v1000
    %v1071 = vmul.f32 %v1005, %v1005
    %v1072 = vmul.f32 %v1010, %v1010
    %v1073 = vmul.f32 %v1015, %v1015
    %v1074 = vmul.f32 %v1020, %v1020
    %v1075 = vmul.f32 %v1025, %v1025
    %v1076 = vmul.f32 %v1030, %v1030
    %v1077 = vmul.f32 %v1035, %v1035
    %v1078 = vadd.f32 %v1062, %v1063
    %v1079 = vadd.f32 %v1078, %v1064
    %v1080 = vadd.f32 %v1079, %v1065
    %v1081 = vadd.f32 %v1080, %v1066
    %v1082 = vadd.f32 %v1081, %v1067
    %v1083 = vadd.f32 %v1082, %v1068
    %v1084 = vadd.f32 %v1083, %v1069
    %v1085 = vadd.f32 %v1084, %v1070
    %v1086 = vadd.f32 %v1085, %v1071
    %v1087 = vadd.f32 %v1086, %v1072
    %v1088 = vadd.f32 %v1087, %v1073
    %v1089 = vadd.f32 %v1088, %v1074
    %v1090 = vadd.f32 %v1089, %v1075
    %v1091 = vadd.f32 %v1090, %v1076
    %v1092 = vadd.f32 %v1091, %v1077
    %v1093 = vrot.slane %v1092, 4
    %v1094 = vadd.f32 %v1092, %v1093
    %v1095 = vrot.slane %v1094, 2
    %v1096 = vadd.f32 %v1094, %v1095
    %v1097 = vrot.slane %v1096, 1
    %v1098 = vadd.f32 %v1096, %v1097
    %v1099 = vmul.f32 %v1098, 0.0078125
    %v1100 = vmul.f32 %v1061, %v1061
    %v1101 = vsub.f32 %v1099, %v1100
    %v1102 = vmax.f32 %v1101, 0.0
    %v1103 = vsub.f32 %v960, %v1061
    %v1104 = vsub.f32 %v965, %v1061
    %v1105 = vsub.f32 %v970, %v1061
    %v1106 = vsub.f32 %v975, %v1061
    %v1107 = vsub.f32 %v980, %v1061
    %v1108 = vsub.f32 %v985, %v1061
    %v1109 = vsub.f32 %v990, %v1061
    %v1110 = vsub.f32 %v995, %v1061
    %v1111 = vsub.f32 %v1000, %v1061
    %v1112 = vsub.f32 %v1005, %v1061
    %v1113 = vsub.f32 %v1010, %v1061
    %v1114 = vsub.f32 %v1015, %v1061
    %v1115 = vsub.f32 %v1020, %v1061
    %v1116 = vsub.f32 %v1025, %v1061
    %v1117 = vsub.f32 %v1030, %v1061
    %v1118 = vsub.f32 %v1035, %v1061
    %v1119 = vadd.f32 %v1102, 1e-05
    %v1120 = vrsqrt.pop %v1119
    %v1121 = vmul.f32 %v1103, %v1120
    %v1122 = vmul.f32 %v1104, %v1120
    %v1123 = vmul.f32 %v1105, %v1120
    %v1124 = vmul.f32 %v1106, %v1120
    %v1125 = vmul.f32 %v1107, %v1120
    %v1126 = vmul.f32 %v1108, %v1120
    %v1127 = vmul.f32 %v1109, %v1120
    %v1128 = vmul.f32 %v1110, %v1120
    %v1129 = vmul.f32 %v1111, %v1120
    %v1130 = vmul.f32 %v1112, %v1120
    %v1131 = vmul.f32 %v1113, %v1120
    %v1132 = vmul.f32 %v1114, %v1120
    %v1133 = vmul.f32 %v1115, %v1120
    %v1134 = vmul.f32 %v1116, %v1120
    %v1135 = vmul.f32 %v1117, %v1120
    %v1136 = vmul.f32 %v1118, %v1120
    %v1138 = vlaneseq
    %v1139 = vshrl.u32 %v1138, 7
    %v1140 = vsub.s32 0, %v1139
    %v1141 = vrot.slane %v1038, %v1140
    %v1143 = vmul.f32 %v1121, %v1141
    %v1144 = vmul.f32 %v1122, %v1141
    %v1145 = vmul.f32 %v1123, %v1141
    %v1146 = vmul.f32 %v1124, %v1141
    %v1147 = vmul.f32 %v1125, %v1141
    %v1148 = vmul.f32 %v1126, %v1141
    %v1149 = vmul.f32 %v1127, %v1141
    %v1150 = vmul.f32 %v1128, %v1141
    %v1151 = vmul.f32 %v1129, %v1141
    %v1152 = vmul.f32 %v1130, %v1141
    %v1153 = vmul.f32 %v1131, %v1141
    %v1154 = vmul.f32 %v1132, %v1141
    %v1155 = vmul.f32 %v1133, %v1141
    %v1156 = vmul.f32 %v1134, %v1141
    %v1157 = vmul.f32 %v1135, %v1141
    %v1158 = vmul.f32 %v1136, %v1141
    %v1160 = vlaneseq
    %v1161 = vshrl.u32 %v1160, 7
    %v1162 = vsub.s32 0, %v1161
    %v1163 = vrot.slane %v1039, %v1162
    %v1165 = vadd.f32 %v1143, %v1163
    %v1166 = vadd.f32 %v1144, %v1163
    %v1167 = vadd.f32 %v1145, %v1163
    %v1168 = vadd.f32 %v1146, %v1163
    %v1169 = vadd.f32 %v1147, %v1163
    %v1170 = vadd.f32 %v1148, %v1163
    %v1171 = vadd.f32 %v1149, %v1163
    %v1172 = vadd.f32 %v1150, %v1163
    %v1173 = vadd.f32 %v1151, %v1163
    %v1174 = vadd.f32 %v1152, %v1163
    %v1175 = vadd.f32 %v1153, %v1163
    %v1176 = vadd.f32 %v1154, %v1163
    %v1177 = vadd.f32 %v1155, %v1163
    %v1178 = vadd.f32 %v1156, %v1163
    %v1179 = vadd.f32 %v1157, %v1163
    %v1180 = vadd.f32 %v1158, %v1163
    %vm1181 = vcmp.ge.f32.partialorder %v1165, 0.0
    %vm1182 = vcmp.ge.f32.partialorder %v1166, 0.0
    %vm1183 = vcmp.ge.f32.partialorder %v1167, 0.0
    %vm1184 = vcmp.ge.f32.partialorder %v1168, 0.0
    %vm1185 = vcmp.ge.f32.partialorder %v1169, 0.0
    %vm1186 = vcmp.ge.f32.partialorder %v1170, 0.0
    %vm1187 = vcmp.ge.f32.partialorder %v1171, 0.0
    %vm1188 = vcmp.ge.f32.partialorder %v1172, 0.0
    %vm1189 = vcmp.ge.f32.partialorder %v1173, 0.0
    %vm1190 = vcmp.ge.f32.partialorder %v1174, 0.0
    %vm1191 = vcmp.ge.f32.partialorder %v1175, 0.0
    %vm1192 = vcmp.ge.f32.partialorder %v1176, 0.0
    %vm1193 = vcmp.ge.f32.partialorder %v1177, 0.0
    %vm1194 = vcmp.ge.f32.partialorder %v1178, 0.0
    %vm1195 = vcmp.ge.f32.partialorder %v1179, 0.0
    %vm1196 = vcmp.ge.f32.partialorder %v1180, 0.0
    %v1197 = vmul.f32 %v1165, 0.2
    %v1198 = vmul.f32 %v1166, 0.2
    %v1199 = vmul.f32 %v1167, 0.2
    %v1200 = vmul.f32 %v1168, 0.2
    %v1201 = vmul.f32 %v1169, 0.2
    %v1202 = vmul.f32 %v1170, 0.2
    %v1203 = vmul.f32 %v1171, 0.2
    %v1204 = vmul.f32 %v1172, 0.2
    %v1205 = vmul.f32 %v1173, 0.2
    %v1206 = vmul.f32 %v1174, 0.2
    %v1207 = vmul.f32 %v1175, 0.2
    %v1208 = vmul.f32 %v1176, 0.2
    %v1209 = vmul.f32 %v1177, 0.2
    %v1210 = vmul.f32 %v1178, 0.2
    %v1211 = vmul.f32 %v1179, 0.2
    %v1212 = vmul.f32 %v1180, 0.2
    %v1213 = vsel %vm1181, %v1165, %v1197
    %v1214 = vsel %vm1182, %v1166, %v1198
    %v1215 = vsel %vm1183, %v1167, %v1199
    %v1216 = vsel %vm1184, %v1168, %v1200
    %v1217 = vsel %vm1185, %v1169, %v1201
    %v1218 = vsel %vm1186, %v1170, %v1202
    %v1219 = vsel %vm1187, %v1171, %v1203
    %v1220 = vsel %vm1188, %v1172, %v1204
    %v1221 = vsel %vm1189, %v1173, %v1205
    %v1222 = vsel %vm1190, %v1174, %v1206
    %v1223 = vsel %vm1191, %v1175, %v1207
    %v1224 = vsel %vm1192, %v1176, %v1208
    %v1225 = vsel %vm1193, %v1177, %v1209
    %v1226 = vsel %vm1194, %v1178, %v1210
    %v1227 = vsel %vm1195, %v1179, %v1211
    %v1228 = vsel %vm1196, %v1180, %v1212
    %v1229 = vld [vmem:[#allocation16] sm:$0xff]
    %v1230 = vld [vmem:[#allocation16 + $0x8] sm:$0xff]
    %v1231 = vld [vmem:[#allocation16 + $0x10] sm:$0xff]
    %v1232 = vld [vmem:[#allocation16 + $0x18] sm:$0xff]
    %v1233 = vld [vmem:[#allocation16 + $0x20] sm:$0xff]
    %v1234 = vld [vmem:[#allocation16 + $0x28] sm:$0xff]
    %v1235 = vld [vmem:[#allocation16 + $0x30] sm:$0xff]
    %v1236 = vld [vmem:[#allocation16 + $0x38] sm:$0xff]
    %v1237 = vld [vmem:[#allocation16 + $0x40] sm:$0xff]
    %v1238 = vld [vmem:[#allocation16 + $0x48] sm:$0xff]
    %v1239 = vld [vmem:[#allocation16 + $0x50] sm:$0xff]
    %v1240 = vld [vmem:[#allocation16 + $0x58] sm:$0xff]
    %v1241 = vld [vmem:[#allocation16 + $0x60] sm:$0xff]
    %v1242 = vld [vmem:[#allocation16 + $0x68] sm:$0xff]
    %v1243 = vld [vmem:[#allocation16 + $0x70] sm:$0xff]
    %v1244 = vld [vmem:[#allocation16 + $0x78] sm:$0xff]
    %v1245 = vld [vmem:[#allocation16 + $0x80] sm:$0xff]
    %v1246 = vld [vmem:[#allocation16 + $0x88] sm:$0xff]
    %v1247 = vld [vmem:[#allocation16 + $0x90] sm:$0xff]
    %v1248 = vld [vmem:[#allocation16 + $0x98] sm:$0xff]
    %v1249 = vld [vmem:[#allocation16 + $0xa0] sm:$0xff]
    %v1250 = vld [vmem:[#allocation16 + $0xa8] sm:$0xff]
    %v1251 = vld [vmem:[#allocation16 + $0xb0] sm:$0xff]
    %v1252 = vld [vmem:[#allocation16 + $0xb8] sm:$0xff]
    %v1253 = vld [vmem:[#allocation16 + $0xc0] sm:$0xff]
    %v1254 = vld [vmem:[#allocation16 + $0xc8] sm:$0xff]
    %v1255 = vld [vmem:[#allocation16 + $0xd0] sm:$0xff]
    %v1256 = vld [vmem:[#allocation16 + $0xd8] sm:$0xff]
    %v1257 = vld [vmem:[#allocation16 + $0xe0] sm:$0xff]
    %v1258 = vld [vmem:[#allocation16 + $0xe8] sm:$0xff]
    %v1259 = vld [vmem:[#allocation16 + $0xf0] sm:$0xff]
    %v1260 = vld [vmem:[#allocation16 + $0xf8] sm:$0xff]
    %v1261 = vld [vmem:[#allocation17] sm:$0x3]
    %v1263 = vlaneseq
    %v1264 = vshrl.u32 %v1263, 7
    %v1265 = vsub.s32 0, %v1264
    %v1266 = vrot.slane %v1261, %v1265
    %v1267 = vlaneseq
    %v1268 = vshrl.u32 %v1267, 7
    %v1269 = vsub.s32 1, %v1268
    %v1270 = vrot.slane %v1261, %v1269
    %1273 = vmatprep.subr.mxu0 %v1230
    %1274 = vmatpush1.msra.mxu0 %v1229
    %1275 = vmatprep.subr.mxu0 %v1232
    %1276 = vmatpush1.msra.mxu0 %v1231
    %1277 = vmatprep.subr.mxu0 %v1234
    %1278 = vmatpush1.msra.mxu0 %v1233
    %1279 = vmatprep.subr.mxu0 %v1236
    %1280 = vmatpush1.msra.mxu0 %v1235
    %1281 = vmatprep.subr.mxu0 %v1238
    %1282 = vmatpush1.msra.mxu0 %v1237
    %1283 = vmatprep.subr.mxu0 %v1240
    %1284 = vmatpush1.msra.mxu0 %v1239
    %1285 = vmatprep.subr.mxu0 %v1242
    %1286 = vmatpush1.msra.mxu0 %v1241
    %1287 = vmatprep.subr.mxu0 %v1244
    %1288 = vmatpush1.msra.mxu0 %v1243
    %1289 = vmatprep.subr.mxu0 %v1246
    %1290 = vmatpush1.msra.mxu0 %v1245
    %1291 = vmatprep.subr.mxu0 %v1248
    %1292 = vmatpush1.msra.mxu0 %v1247
    %1293 = vmatprep.subr.mxu0 %v1250
    %1294 = vmatpush1.msra.mxu0 %v1249
    %1295 = vmatprep.subr.mxu0 %v1252
    %1296 = vmatpush1.msra.mxu0 %v1251
    %1297 = vmatprep.subr.mxu0 %v1254
    %1298 = vmatpush1.msra.mxu0 %v1253
    %1299 = vmatprep.subr.mxu0 %v1256
    %1300 = vmatpush1.msra.mxu0 %v1255
    %1301 = vmatprep.subr.mxu0 %v1258
    %1302 = vmatpush1.msra.mxu0 %v1257
    %1303 = vmatprep.subr.mxu0 %v1260
    %1304 = vmatpush1.msra.mxu0 %v1259
    %1305 = vmatprep.subr.mxu0 0.0
    %1306 = vmatpush1.msra.mxu0 0.0
    %1307 = vmatprep.subr.mxu0 0.0
    %1308 = vmatpush1.msra.mxu0 0.0
    %1309 = vmatprep.subr.mxu0 0.0
    %1310 = vmatpush1.msra.mxu0 0.0
    %1311 = vmatprep.subr.mxu0 0.0
    %1312 = vmatpush1.msra.mxu0 0.0
    %1313 = vmatprep.subr.mxu0 0.0
    %1314 = vmatpush1.msra.mxu0 0.0
    %1315 = vmatprep.subr.mxu0 0.0
    %1316 = vmatpush1.msra.mxu0 0.0
    %1317 = vmatprep.subr.mxu0 0.0
    %1318 = vmatpush1.msra.mxu0 0.0
    %1319 = vmatprep.subr.mxu0 0.0
    %1320 = vmatpush1.msra.mxu0 0.0
    %1321 = vmatprep.subr.mxu0 0.0
    %1322 = vmatpush1.msra.mxu0 0.0
    %1323 = vmatprep.subr.mxu0 0.0
    %1324 = vmatpush1.msra.mxu0 0.0
    %1325 = vmatprep.subr.mxu0 0.0
    %1326 = vmatpush1.msra.mxu0 0.0
    %1327 = vmatprep.subr.mxu0 0.0
    %1328 = vmatpush1.msra.mxu0 0.0
    %1329 = vmatprep.subr.mxu0 0.0
    %1330 = vmatpush1.msra.mxu0 0.0
    %1331 = vmatprep.subr.mxu0 0.0
    %1332 = vmatpush1.msra.mxu0 0.0
    %1333 = vmatprep.subr.mxu0 0.0
    %1334 = vmatpush1.msra.mxu0 0.0
    %1335 = vmatprep.subr.mxu0 0.0
    %1336 = vmatpush1.msra.mxu0 0.0
    %1337 = vmatprep.mubr.f32.mxu0 0.0
    %1338 = vmatmul.mubr.f32.gmra.mrb[0].mxu0 %v1213
    %v1339 = vpop.f32.mrb[0].mxu0
    %v1340 = vadd.f32 %v1266, %v1339
    %v1341 = vpop.f32.mrb[0].mxu0
    %v1342 = vadd.f32 %v1270, %v1341
    %1343 = vmatprep.mubr.f32.mxu0 0.0
    %1344 = vmatmul.mubr.f32.gmra.mrb[0].mxu0 %v1214
    %v1345 = vpop.f32.mrb[0].mxu0
    %v1346 = vadd.f32 %v1266, %v1345
    %v1347 = vpop.f32.mrb[0].mxu0
    %v1348 = vadd.f32 %v1270, %v1347
    %1349 = vmatprep.mubr.f32.mxu0 0.0
    %1350 = vmatmul.mubr.f32.gmra.mrb[0].mxu0 %v1215
    %v1351 = vpop.f32.mrb[0].mxu0
    %v1352 = vadd.f32 %v1266, %v1351
    %v1353 = vpop.f32.mrb[0].mxu0
    %v1354 = vadd.f32 %v1270, %v1353
    %1355 = vmatprep.mubr.f32.mxu0 0.0
    %1356 = vmatmul.mubr.f32.gmra.mrb[0].mxu0 %v1216
    %v1357 = vpop.f32.mrb[0].mxu0
    %v1358 = vadd.f32 %v1266, %v1357
    %v1359 = vpop.f32.mrb[0].mxu0
    %v1360 = vadd.f32 %v1270, %v1359
    %1361 = vmatprep.mubr.f32.mxu0 0.0
    %1362 = vmatmul.mubr.f32.gmra.mrb[0].mxu0 %v1217
    %v1363 = vpop.f32.mrb[0].mxu0
    %v1364 = vadd.f32 %v1266, %v1363
    %v1365 = vpop.f32.mrb[0].mxu0
    %v1366 = vadd.f32 %v1270, %v1365
    %1367 = vmatprep.mubr.f32.mxu0 0.0
    %1368 = vmatmul.mubr.f32.gmra.mrb[0].mxu0 %v1218
    %v1369 = vpop.f32.mrb[0].mxu0
    %v1370 = vadd.f32 %v1266, %v1369
    %v1371 = vpop.f32.mrb[0].mxu0
    %v1372 = vadd.f32 %v1270, %v1371
    %1373 = vmatprep.mubr.f32.mxu0 0.0
    %1374 = vmatmul.mubr.f32.gmra.mrb[0].mxu0 %v1219
    %v1375 = vpop.f32.mrb[0].mxu0
    %v1376 = vadd.f32 %v1266, %v1375
    %v1377 = vpop.f32.mrb[0].mxu0
    %v1378 = vadd.f32 %v1270, %v1377
    %1379 = vmatprep.mubr.f32.mxu0 0.0
    %1380 = vmatmul.mubr.f32.gmra.mrb[0].mxu0 %v1220
    %v1381 = vpop.f32.mrb[0].mxu0
    %v1382 = vadd.f32 %v1266, %v1381
    %v1383 = vpop.f32.mrb[0].mxu0
    %v1384 = vadd.f32 %v1270, %v1383
    %1385 = vmatprep.mubr.f32.mxu0 0.0
    %1386 = vmatmul.mubr.f32.gmra.mrb[0].mxu0 %v1221
    %v1387 = vpop.f32.mrb[0].mxu0
    %v1388 = vadd.f32 %v1266, %v1387
    %v1389 = vpop.f32.mrb[0].mxu0
    %v1390 = vadd.f32 %v1270, %v1389
    %1391 = vmatprep.mubr.f32.mxu0 0.0
    %1392 = vmatmul.mubr.f32.gmra.mrb[0].mxu0 %v1222
    %v1393 = vpop.f32.mrb[0].mxu0
    %v1394 = vadd.f32 %v1266, %v1393
    %v1395 = vpop.f32.mrb[0].mxu0
    %v1396 = vadd.f32 %v1270, %v1395
    %1397 = vmatprep.mubr.f32.mxu0 0.0
    %1398 = vmatmul.mubr.f32.gmra.mrb[0].mxu0 %v1223
    %v1399 = vpop.f32.mrb[0].mxu0
    %v1400 = vadd.f32 %v1266, %v1399
    %v1401 = vpop.f32.mrb[0].mxu0
    %v1402 = vadd.f32 %v1270, %v1401
    %1403 = vmatprep.mubr.f32.mxu0 0.0
    %1404 = vmatmul.mubr.f32.gmra.mrb[0].mxu0 %v1224
    %v1405 = vpop.f32.mrb[0].mxu0
    %v1406 = vadd.f32 %v1266, %v1405
    %v1407 = vpop.f32.mrb[0].mxu0
    %v1408 = vadd.f32 %v1270, %v1407
    %1409 = vmatprep.mubr.f32.mxu0 0.0
    %1410 = vmatmul.mubr.f32.gmra.mrb[0].mxu0 %v1225
    %v1411 = vpop.f32.mrb[0].mxu0
    %v1412 = vadd.f32 %v1266, %v1411
    %v1413 = vpop.f32.mrb[0].mxu0
    %v1414 = vadd.f32 %v1270, %v1413
    %1415 = vmatprep.mubr.f32.mxu0 0.0
    %1416 = vmatmul.mubr.f32.gmra.mrb[0].mxu0 %v1226
    %v1417 = vpop.f32.mrb[0].mxu0
    %v1418 = vadd.f32 %v1266, %v1417
    %v1419 = vpop.f32.mrb[0].mxu0
    %v1420 = vadd.f32 %v1270, %v1419
    %1421 = vmatprep.mubr.f32.mxu0 0.0
    %1422 = vmatmul.mubr.f32.gmra.mrb[0].mxu0 %v1227
    %v1423 = vpop.f32.mrb[0].mxu0
    %v1424 = vadd.f32 %v1266, %v1423
    %v1425 = vpop.f32.mrb[0].mxu0
    %v1426 = vadd.f32 %v1270, %v1425
    %1427 = vmatprep.mubr.f32.mxu0 0.0
    %1428 = vmatmul.mubr.f32.gmra.mrb[0].mxu0 %v1228
    %v1429 = vpop.f32.mrb[0].mxu0
    %v1430 = vadd.f32 %v1266, %v1429
    %v1431 = vpop.f32.mrb[0].mxu0
    %v1432 = vadd.f32 %v1270, %v1431
    %1433 = vdwg.mxu0
    %v1434 = vld [vmem:[#allocation19] sm:$0x3]
    %v1435 = vld [vmem:[#allocation20] sm:$0x3]
    %v1436 = vadd.f32 %v1340, %v1346
    %v1437 = vadd.f32 %v1436, %v1352
    %v1438 = vadd.f32 %v1437, %v1358
    %v1439 = vadd.f32 %v1438, %v1364
    %v1440 = vadd.f32 %v1439, %v1370
    %v1441 = vadd.f32 %v1440, %v1376
    %v1442 = vadd.f32 %v1441, %v1382
    %v1443 = vadd.f32 %v1442, %v1388
    %v1444 = vadd.f32 %v1443, %v1394
    %v1445 = vadd.f32 %v1444, %v1400
    %v1446 = vadd.f32 %v1445, %v1406
    %v1447 = vadd.f32 %v1446, %v1412
    %v1448 = vadd.f32 %v1447, %v1418
    %v1449 = vadd.f32 %v1448, %v1424
    %v1450 = vadd.f32 %v1449, %v1430
    %v1451 = vrot.slane %v1450, 4
    %v1452 = vadd.f32 %v1450, %v1451
    %v1453 = vrot.slane %v1452, 2
    %v1454 = vadd.f32 %v1452, %v1453
    %v1455 = vrot.slane %v1454, 1
    %v1456 = vadd.f32 %v1454, %v1455
    %v1457 = vadd.f32 %v1342, %v1348
    %v1458 = vadd.f32 %v1457, %v1354
    %v1459 = vadd.f32 %v1458, %v1360
    %v1460 = vadd.f32 %v1459, %v1366
    %v1461 = vadd.f32 %v1460, %v1372
    %v1462 = vadd.f32 %v1461, %v1378
    %v1463 = vadd.f32 %v1462, %v1384
    %v1464 = vadd.f32 %v1463, %v1390
    %v1465 = vadd.f32 %v1464, %v1396
    %v1466 = vadd.f32 %v1465, %v1402
    %v1467 = vadd.f32 %v1466, %v1408
    %v1468 = vadd.f32 %v1467, %v1414
    %v1469 = vadd.f32 %v1468, %v1420
    %v1470 = vadd.f32 %v1469, %v1426
    %v1471 = vadd.f32 %v1470, %v1432
    %v1472 = vrot.slane %v1471, 4
    %v1473 = vadd.f32 %v1471, %v1472
    %v1474 = vrot.slane %v1473, 2
    %v1475 = vadd.f32 %v1473, %v1474
    %v1476 = vrot.slane %v1475, 1
    %v1477 = vadd.f32 %v1475, %v1476
    %v1478 = vmul.f32 %v1456, 0.0078125
    %v1479 = vmul.f32 %v1477, 0.0078125
    %v1480 = vmul.f32 %v1340, %v1340
    %v1481 = vmul.f32 %v1342, %v1342
    %v1482 = vmul.f32 %v1346, %v1346
    %v1483 = vmul.f32 %v1348, %v1348
    %v1484 = vmul.f32 %v1352, %v1352
    %v1485 = vmul.f32 %v1354, %v1354
    %v1486 = vmul.f32 %v1358, %v1358
    %v1487 = vmul.f32 %v1360, %v1360
    %v1488 = vmul.f32 %v1364, %v1364
    %v1489 = vmul.f32 %v1366, %v1366
    %v1490 = vmul.f32 %v1370, %v1370
    %v1491 = vmul.f32 %v1372, %v1372
    %v1492 = vmul.f32 %v1376, %v1376
    %v1493 = vmul.f32 %v1378, %v1378
    %v1494 = vmul.f32 %v1382, %v1382
    %v1495 = vmul.f32 %v1384, %v1384
    %v1496 = vmul.f32 %v1388, %v1388
    %v1497 = vmul.f32 %v1390, %v1390
    %v1498 = vmul.f32 %v1394, %v1394
    %v1499 = vmul.f32 %v1396, %v1396
    %v1500 = vmul.f32 %v1400, %v1400
    %v1501 = vmul.f32 %v1402, %v1402
    %v1502 = vmul.f32 %v1406, %v1406
    %v1503 = vmul.f32 %v1408, %v1408
    %v1504 = vmul.f32 %v1412, %v1412
    %v1505 = vmul.f32 %v1414, %v1414
    %v1506 = vmul.f32 %v1418, %v1418
    %v1507 = vmul.f32 %v1420, %v1420
    %v1508 = vmul.f32 %v1424, %v1424
    %v1509 = vmul.f32 %v1426, %v1426
    %v1510 = vmul.f32 %v1430, %v1430
    %v1511 = vmul.f32 %v1432, %v1432
    %v1512 = vadd.f32 %v1480, %v1482
    %v1513 = vadd.f32 %v1512, %v1484
    %v1514 = vadd.f32 %v1513, %v1486
    %v1515 = vadd.f32 %v1514, %v1488
    %v1516 = vadd.f32 %v1515, %v1490
    %v1517 = vadd.f32 %v1516, %v1492
    %v1518 = vadd.f32 %v1517, %v1494
    %v1519 = vadd.f32 %v1518, %v1496
    %v1520 = vadd.f32 %v1519, %v1498
    %v1521 = vadd.f32 %v1520, %v1500
    %v1522 = vadd.f32 %v1521, %v1502
    %v1523 = vadd.f32 %v1522, %v1504
    %v1524 = vadd.f32 %v1523, %v1506
    %v1525 = vadd.f32 %v1524, %v1508
    %v1526 = vadd.f32 %v1525, %v1510
    %v1527 = vrot.slane %v1526, 4
    %v1528 = vadd.f32 %v1526, %v1527
    %v1529 = vrot.slane %v1528, 2
    %v1530 = vadd.f32 %v1528, %v1529
    %v1531 = vrot.slane %v1530, 1
    %v1532 = vadd.f32 %v1530, %v1531
    %v1533 = vadd.f32 %v1481, %v1483
    %v1534 = vadd.f32 %v1533, %v1485
    %v1535 = vadd.f32 %v1534, %v1487
    %v1536 = vadd.f32 %v1535, %v1489
    %v1537 = vadd.f32 %v1536, %v1491
    %v1538 = vadd.f32 %v1537, %v1493
    %v1539 = vadd.f32 %v1538, %v1495
    %v1540 = vadd.f32 %v1539, %v1497
    %v1541 = vadd.f32 %v1540, %v1499
    %v1542 = vadd.f32 %v1541, %v1501
    %v1543 = vadd.f32 %v1542, %v1503
    %v1544 = vadd.f32 %v1543, %v1505
    %v1545 = vadd.f32 %v1544, %v1507
    %v1546 = vadd.f32 %v1545, %v1509
    %v1547 = vadd.f32 %v1546, %v1511
    %v1548 = vrot.slane %v1547, 4
    %v1549 = vadd.f32 %v1547, %v1548
    %v1550 = vrot.slane %v1549, 2
    %v1551 = vadd.f32 %v1549, %v1550
    %v1552 = vrot.slane %v1551, 1
    %v1553 = vadd.f32 %v1551, %v1552
    %v1554 = vmul.f32 %v1532, 0.0078125
    %v1555 = vmul.f32 %v1553, 0.0078125
    %v1556 = vmul.f32 %v1478, %v1478
    %v1557 = vmul.f32 %v1479, %v1479
    %v1558 = vsub.f32 %v1554, %v1556
    %v1559 = vsub.f32 %v1555, %v1557
    %v1560 = vmax.f32 %v1558, 0.0
    %v1561 = vmax.f32 %v1559, 0.0
    %v1562 = vsub.f32 %v1340, %v1478
    %v1563 = vsub.f32 %v1342, %v1479
    %v1564 = vsub.f32 %v1346, %v1478
    %v1565 = vsub.f32 %v1348, %v1479
    %v1566 = vsub.f32 %v1352, %v1478
    %v1567 = vsub.f32 %v1354, %v1479
    %v1568 = vsub.f32 %v1358, %v1478
    %v1569 = vsub.f32 %v1360, %v1479
    %v1570 = vsub.f32 %v1364, %v1478
    %v1571 = vsub.f32 %v1366, %v1479
    %v1572 = vsub.f32 %v1370, %v1478
    %v1573 = vsub.f32 %v1372, %v1479
    %v1574 = vsub.f32 %v1376, %v1478
    %v1575 = vsub.f32 %v1378, %v1479
    %v1576 = vsub.f32 %v1382, %v1478
    %v1577 = vsub.f32 %v1384, %v1479
    %v1578 = vsub.f32 %v1388, %v1478
    %v1579 = vsub.f32 %v1390, %v1479
    %v1580 = vsub.f32 %v1394, %v1478
    %v1581 = vsub.f32 %v1396, %v1479
    %v1582 = vsub.f32 %v1400, %v1478
    %v1583 = vsub.f32 %v1402, %v1479
    %v1584 = vsub.f32 %v1406, %v1478
    %v1585 = vsub.f32 %v1408, %v1479
    %v1586 = vsub.f32 %v1412, %v1478
    %v1587 = vsub.f32 %v1414, %v1479
    %v1588 = vsub.f32 %v1418, %v1478
    %v1589 = vsub.f32 %v1420, %v1479
    %v1590 = vsub.f32 %v1424, %v1478
    %v1591 = vsub.f32 %v1426, %v1479
    %v1592 = vsub.f32 %v1430, %v1478
    %v1593 = vsub.f32 %v1432, %v1479
    %v1594 = vadd.f32 %v1560, 1e-05
    %v1595 = vadd.f32 %v1561, 1e-05
    %v1596 = vrsqrt.pop %v1594
    %v1597 = vrsqrt.pop %v1595
    %v1598 = vmul.f32 %v1562, %v1596
    %v1599 = vmul.f32 %v1563, %v1597
    %v1600 = vmul.f32 %v1564, %v1596
    %v1601 = vmul.f32 %v1565, %v1597
    %v1602 = vmul.f32 %v1566, %v1596
    %v1603 = vmul.f32 %v1567, %v1597
    %v1604 = vmul.f32 %v1568, %v1596
    %v1605 = vmul.f32 %v1569, %v1597
    %v1606 = vmul.f32 %v1570, %v1596
    %v1607 = vmul.f32 %v1571, %v1597
    %v1608 = vmul.f32 %v1572, %v1596
    %v1609 = vmul.f32 %v1573, %v1597
    %v1610 = vmul.f32 %v1574, %v1596
    %v1611 = vmul.f32 %v1575, %v1597
    %v1612 = vmul.f32 %v1576, %v1596
    %v1613 = vmul.f32 %v1577, %v1597
    %v1614 = vmul.f32 %v1578, %v1596
    %v1615 = vmul.f32 %v1579, %v1597
    %v1616 = vmul.f32 %v1580, %v1596
    %v1617 = vmul.f32 %v1581, %v1597
    %v1618 = vmul.f32 %v1582, %v1596
    %v1619 = vmul.f32 %v1583, %v1597
    %v1620 = vmul.f32 %v1584, %v1596
    %v1621 = vmul.f32 %v1585, %v1597
    %v1622 = vmul.f32 %v1586, %v1596
    %v1623 = vmul.f32 %v1587, %v1597
    %v1624 = vmul.f32 %v1588, %v1596
    %v1625 = vmul.f32 %v1589, %v1597
    %v1626 = vmul.f32 %v1590, %v1596
    %v1627 = vmul.f32 %v1591, %v1597
    %v1628 = vmul.f32 %v1592, %v1596
    %v1629 = vmul.f32 %v1593, %v1597
    %v1631 = vlaneseq
    %v1632 = vshrl.u32 %v1631, 7
    %v1633 = vsub.s32 0, %v1632
    %v1634 = vrot.slane %v1434, %v1633
    %v1635 = vlaneseq
    %v1636 = vshrl.u32 %v1635, 7
    %v1637 = vsub.s32 1, %v1636
    %v1638 = vrot.slane %v1434, %v1637
    %v1641 = vmul.f32 %v1598, %v1634
    %v1642 = vmul.f32 %v1599, %v1638
    %v1643 = vmul.f32 %v1600, %v1634
    %v1644 = vmul.f32 %v1601, %v1638
    %v1645 = vmul.f32 %v1602, %v1634
    %v1646 = vmul.f32 %v1603, %v1638
    %v1647 = vmul.f32 %v1604, %v1634
    %v1648 = vmul.f32 %v1605, %v1638
    %v1649 = vmul.f32 %v1606, %v1634
    %v1650 = vmul.f32 %v1607, %v1638
    %v1651 = vmul.f32 %v1608, %v1634
    %v1652 = vmul.f32 %v1609, %v1638
    %v1653 = vmul.f32 %v1610, %v1634
    %v1654 = vmul.f32 %v1611, %v1638
    %v1655 = vmul.f32 %v1612, %v1634
    %v1656 = vmul.f32 %v1613, %v1638
    %v1657 = vmul.f32 %v1614, %v1634
    %v1658 = vmul.f32 %v1615, %v1638
    %v1659 = vmul.f32 %v1616, %v1634
    %v1660 = vmul.f32 %v1617, %v1638
    %v1661 = vmul.f32 %v1618, %v1634
    %v1662 = vmul.f32 %v1619, %v1638
    %v1663 = vmul.f32 %v1620, %v1634
    %v1664 = vmul.f32 %v1621, %v1638
    %v1665 = vmul.f32 %v1622, %v1634
    %v1666 = vmul.f32 %v1623, %v1638
    %v1667 = vmul.f32 %v1624, %v1634
    %v1668 = vmul.f32 %v1625, %v1638
    %v1669 = vmul.f32 %v1626, %v1634
    %v1670 = vmul.f32 %v1627, %v1638
    %v1671 = vmul.f32 %v1628, %v1634
    %v1672 = vmul.f32 %v1629, %v1638
    %v1674 = vlaneseq
    %v1675 = vshrl.u32 %v1674, 7
    %v1676 = vsub.s32 0, %v1675
    %v1677 = vrot.slane %v1435, %v1676
    %v1678 = vlaneseq
    %v1679 = vshrl.u32 %v1678, 7
    %v1680 = vsub.s32 1, %v1679
    %v1681 = vrot.slane %v1435, %v1680
    %v1684 = vadd.f32 %v1641, %v1677
    %v1685 = vadd.f32 %v1642, %v1681
    %v1686 = vadd.f32 %v1643, %v1677
    %v1687 = vadd.f32 %v1644, %v1681
    %v1688 = vadd.f32 %v1645, %v1677
    %v1689 = vadd.f32 %v1646, %v1681
    %v1690 = vadd.f32 %v1647, %v1677
    %v1691 = vadd.f32 %v1648, %v1681
    %v1692 = vadd.f32 %v1649, %v1677
    %v1693 = vadd.f32 %v1650, %v1681
    %v1694 = vadd.f32 %v1651, %v1677
    %v1695 = vadd.f32 %v1652, %v1681
    %v1696 = vadd.f32 %v1653, %v1677
    %v1697 = vadd.f32 %v1654, %v1681
    %v1698 = vadd.f32 %v1655, %v1677
    %v1699 = vadd.f32 %v1656, %v1681
    %v1700 = vadd.f32 %v1657, %v1677
    %v1701 = vadd.f32 %v1658, %v1681
    %v1702 = vadd.f32 %v1659, %v1677
    %v1703 = vadd.f32 %v1660, %v1681
    %v1704 = vadd.f32 %v1661, %v1677
    %v1705 = vadd.f32 %v1662, %v1681
    %v1706 = vadd.f32 %v1663, %v1677
    %v1707 = vadd.f32 %v1664, %v1681
    %v1708 = vadd.f32 %v1665, %v1677
    %v1709 = vadd.f32 %v1666, %v1681
    %v1710 = vadd.f32 %v1667, %v1677
    %v1711 = vadd.f32 %v1668, %v1681
    %v1712 = vadd.f32 %v1669, %v1677
    %v1713 = vadd.f32 %v1670, %v1681
    %v1714 = vadd.f32 %v1671, %v1677
    %v1715 = vadd.f32 %v1672, %v1681
    %vm1716 = vcmp.ge.f32.partialorder %v1684, 0.0
    %vm1717 = vcmp.ge.f32.partialorder %v1685, 0.0
    %vm1718 = vcmp.ge.f32.partialorder %v1686, 0.0
    %vm1719 = vcmp.ge.f32.partialorder %v1687, 0.0
    %vm1720 = vcmp.ge.f32.partialorder %v1688, 0.0
    %vm1721 = vcmp.ge.f32.partialorder %v1689, 0.0
    %vm1722 = vcmp.ge.f32.partialorder %v1690, 0.0
    %vm1723 = vcmp.ge.f32.partialorder %v1691, 0.0
    %vm1724 = vcmp.ge.f32.partialorder %v1692, 0.0
    %vm1725 = vcmp.ge.f32.partialorder %v1693, 0.0
    %vm1726 = vcmp.ge.f32.partialorder %v1694, 0.0
    %vm1727 = vcmp.ge.f32.partialorder %v1695, 0.0
    %vm1728 = vcmp.ge.f32.partialorder %v1696, 0.0
    %vm1729 = vcmp.ge.f32.partialorder %v1697, 0.0
    %vm1730 = vcmp.ge.f32.partialorder %v1698, 0.0
    %vm1731 = vcmp.ge.f32.partialorder %v1699, 0.0
    %vm1732 = vcmp.ge.f32.partialorder %v1700, 0.0
    %vm1733 = vcmp.ge.f32.partialorder %v1701, 0.0
    %vm1734 = vcmp.ge.f32.partialorder %v1702, 0.0
    %vm1735 = vcmp.ge.f32.partialorder %v1703, 0.0
    %vm1736 = vcmp.ge.f32.partialorder %v1704, 0.0
    %vm1737 = vcmp.ge.f32.partialorder %v1705, 0.0
    %vm1738 = vcmp.ge.f32.partialorder %v1706, 0.0
    %vm1739 = vcmp.ge.f32.partialorder %v1707, 0.0
    %vm1740 = vcmp.ge.f32.partialorder %v1708, 0.0
    %vm1741 = vcmp.ge.f32.partialorder %v1709, 0.0
    %vm1742 = vcmp.ge.f32.partialorder %v1710, 0.0
    %vm1743 = vcmp.ge.f32.partialorder %v1711, 0.0
    %vm1744 = vcmp.ge.f32.partialorder %v1712, 0.0
    %vm1745 = vcmp.ge.f32.partialorder %v1713, 0.0
    %vm1746 = vcmp.ge.f32.partialorder %v1714, 0.0
    %vm1747 = vcmp.ge.f32.partialorder %v1715, 0.0
    %v1748 = vmul.f32 %v1684, 0.2
    %v1749 = vmul.f32 %v1685, 0.2
    %v1750 = vmul.f32 %v1686, 0.2
    %v1751 = vmul.f32 %v1687, 0.2
    %v1752 = vmul.f32 %v1688, 0.2
    %v1753 = vmul.f32 %v1689, 0.2
    %v1754 = vmul.f32 %v1690, 0.2
    %v1755 = vmul.f32 %v1691, 0.2
    %v1756 = vmul.f32 %v1692, 0.2
    %v1757 = vmul.f32 %v1693, 0.2
    %v1758 = vmul.f32 %v1694, 0.2
    %v1759 = vmul.f32 %v1695, 0.2
    %v1760 = vmul.f32 %v1696, 0.2
    %v1761 = vmul.f32 %v1697, 0.2
    %v1762 = vmul.f32 %v1698, 0.2
    %v1763 = vmul.f32 %v1699, 0.2
    %v1764 = vmul.f32 %v1700, 0.2
    %v1765 = vmul.f32 %v1701, 0.2
    %v1766 = vmul.f32 %v1702, 0.2
    %v1767 = vmul.f32 %v1703, 0.2
    %v1768 = vmul.f32 %v1704, 0.2
    %v1769 = vmul.f32 %v1705, 0.2
    %v1770 = vmul.f32 %v1706, 0.2
    %v1771 = vmul.f32 %v1707, 0.2
    %v1772 = vmul.f32 %v1708, 0.2
    %v1773 = vmul.f32 %v1709, 0.2
    %v1774 = vmul.f32 %v1710, 0.2
    %v1775 = vmul.f32 %v1711, 0.2
    %v1776 = vmul.f32 %v1712, 0.2
    %v1777 = vmul.f32 %v1713, 0.2
    %v1778 = vmul.f32 %v1714, 0.2
    %v1779 = vmul.f32 %v1715, 0.2
    %v1780 = vsel %vm1716, %v1684, %v1748
    %v1781 = vsel %vm1717, %v1685, %v1749
    %v1782 = vsel %vm1718, %v1686, %v1750
    %v1783 = vsel %vm1719, %v1687, %v1751
    %v1784 = vsel %vm1720, %v1688, %v1752
    %v1785 = vsel %vm1721, %v1689, %v1753
    %v1786 = vsel %vm1722, %v1690, %v1754
    %v1787 = vsel %vm1723, %v1691, %v1755
    %v1788 = vsel %vm1724, %v1692, %v1756
    %v1789 = vsel %vm1725, %v1693, %v1757
    %v1790 = vsel %vm1726, %v1694, %v1758
    %v1791 = vsel %vm1727, %v1695, %v1759
    %v1792 = vsel %vm1728, %v1696, %v1760
    %v1793 = vsel %vm1729, %v1697, %v1761
    %v1794 = vsel %vm1730, %v1698, %v1762
    %v1795 = vsel %vm1731, %v1699, %v1763
    %v1796 = vsel %vm1732, %v1700, %v1764
    %v1797 = vsel %vm1733, %v1701, %v1765
    %v1798 = vsel %vm1734, %v1702, %v1766
    %v1799 = vsel %vm1735, %v1703, %v1767
    %v1800 = vsel %vm1736, %v1704, %v1768
    %v1801 = vsel %vm1737, %v1705, %v1769
    %v1802 = vsel %vm1738, %v1706, %v1770
    %v1803 = vsel %vm1739, %v1707, %v1771
    %v1804 = vsel %vm1740, %v1708, %v1772
    %v1805 = vsel %vm1741, %v1709, %v1773
    %v1806 = vsel %vm1742, %v1710, %v1774
    %v1807 = vsel %vm1743, %v1711, %v1775
    %v1808 = vsel %vm1744, %v1712, %v1776
    %v1809 = vsel %vm1745, %v1713, %v1777
    %v1810 = vsel %vm1746, %v1714, %v1778
    %v1811 = vsel %vm1747, %v1715, %v1779
    %v1812 = vmax.f32 %v1780, %v1782
    %v1813 = vmax.f32 %v1812, %v1784
    %v1814 = vmax.f32 %v1813, %v1786
    %v1815 = vmax.f32 %v1814, %v1788
    %v1816 = vmax.f32 %v1815, %v1790
    %v1817 = vmax.f32 %v1816, %v1792
    %v1818 = vmax.f32 %v1817, %v1794
    %v1819 = vrot.slane %v1818, 4
    %v1820 = vmax.f32 %v1818, %v1819
    %v1821 = vrot.slane %v1820, 2
    %v1822 = vmax.f32 %v1820, %v1821
    %v1823 = vrot.slane %v1822, 1
    %v1824 = vmax.f32 %v1822, %v1823
    %v1825 = vmax.f32 %v1781, %v1783
    %v1826 = vmax.f32 %v1825, %v1785
    %v1827 = vmax.f32 %v1826, %v1787
    %v1828 = vmax.f32 %v1827, %v1789
    %v1829 = vmax.f32 %v1828, %v1791
    %v1830 = vmax.f32 %v1829, %v1793
    %v1831 = vmax.f32 %v1830, %v1795
    %v1832 = vrot.slane %v1831, 4
    %v1833 = vmax.f32 %v1831, %v1832
    %v1834 = vrot.slane %v1833, 2
    %v1835 = vmax.f32 %v1833, %v1834
    %v1836 = vrot.slane %v1835, 1
    %v1837 = vmax.f32 %v1835, %v1836
    %v1838 = vmax.f32 %v1796, %v1798
    %v1839 = vmax.f32 %v1838, %v1800
    %v1840 = vmax.f32 %v1839, %v1802
    %v1841 = vmax.f32 %v1840, %v1804
    %v1842 = vmax.f32 %v1841, %v1806
    %v1843 = vmax.f32 %v1842, %v1808
    %v1844 = vmax.f32 %v1843, %v1810
    %v1845 = vrot.slane %v1844, 4
    %v1846 = vmax.f32 %v1844, %v1845
    %v1847 = vrot.slane %v1846, 2
    %v1848 = vmax.f32 %v1846, %v1847
    %v1849 = vrot.slane %v1848, 1
    %v1850 = vmax.f32 %v1848, %v1849
    %v1851 = vmax.f32 %v1797, %v1799
    %v1852 = vmax.f32 %v1851, %v1801
    %v1853 = vmax.f32 %v1852, %v1803
    %v1854 = vmax.f32 %v1853, %v1805
    %v1855 = vmax.f32 %v1854, %v1807
    %v1856 = vmax.f32 %v1855, %v1809
    %v1857 = vmax.f32 %v1856, %v1811
    %v1858 = vrot.slane %v1857, 4
    %v1859 = vmax.f32 %v1857, %v1858
    %v1860 = vrot.slane %v1859, 2
    %v1861 = vmax.f32 %v1859, %v1860
    %v1862 = vrot.slane %v1861, 1
    %v1863 = vmax.f32 %v1861, %v1862
    %v1864 = vld [vmem:[#allocation22] sm:$0xff]
    %v1865 = vld [vmem:[#allocation22 + $0x8] sm:$0xff]
    %v1866 = vld [vmem:[#allocation22 + $0x10] sm:$0xff]
    %v1867 = vld [vmem:[#allocation22 + $0x18] sm:$0xff]
    %v1868 = vld [vmem:[#allocation22 + $0x20] sm:$0xff]
    %v1869 = vld [vmem:[#allocation22 + $0x28] sm:$0xff]
    %v1870 = vld [vmem:[#allocation22 + $0x30] sm:$0xff]
    %v1871 = vld [vmem:[#allocation22 + $0x38] sm:$0xff]
    %v1872 = vld [vmem:[#allocation22 + $0x40] sm:$0xff]
    %v1873 = vld [vmem:[#allocation22 + $0x48] sm:$0xff]
    %v1874 = vld [vmem:[#allocation22 + $0x50] sm:$0xff]
    %v1875 = vld [vmem:[#allocation22 + $0x58] sm:$0xff]
    %v1876 = vld [vmem:[#allocation22 + $0x60] sm:$0xff]
    %v1877 = vld [vmem:[#allocation22 + $0x68] sm:$0xff]
    %v1878 = vld [vmem:[#allocation22 + $0x70] sm:$0xff]
    %v1879 = vld [vmem:[#allocation22 + $0x78] sm:$0xff]
    %v1880 = vld [vmem:[#allocation22 + $0x80] sm:$0xff]
    %v1881 = vld [vmem:[#allocation22 + $0x88] sm:$0xff]
    %v1882 = vld [vmem:[#allocation22 + $0x90] sm:$0xff]
    %v1883 = vld [vmem:[#allocation22 + $0x98] sm:$0xff]
    %v1884 = vld [vmem:[#allocation22 + $0xa0] sm:$0xff]
    %v1885 = vld [vmem:[#allocation22 + $0xa8] sm:$0xff]
    %v1886 = vld [vmem:[#allocation22 + $0xb0] sm:$0xff]
    %v1887 = vld [vmem:[#allocation22 + $0xb8] sm:$0xff]
    %v1888 = vld [vmem:[#allocation22 + $0xc0] sm:$0xff]
    %v1889 = vld [vmem:[#allocation22 + $0xc8] sm:$0xff]
    %v1890 = vld [vmem:[#allocation22 + $0xd0] sm:$0xff]
    %v1891 = vld [vmem:[#allocation22 + $0xd8] sm:$0xff]
    %v1892 = vld [vmem:[#allocation22 + $0xe0] sm:$0xff]
    %v1893 = vld [vmem:[#allocation22 + $0xe8] sm:$0xff]
    %v1894 = vld [vmem:[#allocation22 + $0xf0] sm:$0xff]
    %v1895 = vld [vmem:[#allocation22 + $0xf8] sm:$0xff]
    %v1896 = vld [vmem:[#allocation22 + $0x100] sm:$0xff]
    %v1897 = vld [vmem:[#allocation22 + $0x108] sm:$0xff]
    %v1898 = vld [vmem:[#allocation22 + $0x110] sm:$0xff]
    %v1899 = vld [vmem:[#allocation22 + $0x118] sm:$0xff]
    %v1900 = vld [vmem:[#allocation22 + $0x120] sm:$0xff]
    %v1901 = vld [vmem:[#allocation22 + $0x128] sm:$0xff]
    %v1902 = vld [vmem:[#allocation22 + $0x130] sm:$0xff]
    %v1903 = vld [vmem:[#allocation22 + $0x138] sm:$0xff]
    %v1904 = vld [vmem:[#allocation22 + $0x140] sm:$0xff]
    %v1905 = vld [vmem:[#allocation22 + $0x148] sm:$0xff]
    %v1906 = vld [vmem:[#allocation22 + $0x150] sm:$0xff]
    %v1907 = vld [vmem:[#allocation22 + $0x158] sm:$0xff]
    %v1908 = vld [vmem:[#allocation22 + $0x160] sm:$0xff]
    %v1909 = vld [vmem:[#allocation22 + $0x168] sm:$0xff]
    %v1910 = vld [vmem:[#allocation22 + $0x170] sm:$0xff]
    %v1911 = vld [vmem:[#allocation22 + $0x178] sm:$0xff]
    %v1912 = vld [vmem:[#allocation22 + $0x180] sm:$0xff]
    %v1913 = vld [vmem:[#allocation22 + $0x188] sm:$0xff]
    %v1914 = vld [vmem:[#allocation22 + $0x190] sm:$0xff]
    %v1915 = vld [vmem:[#allocation22 + $0x198] sm:$0xff]
    %v1916 = vld [vmem:[#allocation22 + $0x1a0] sm:$0xff]
    %v1917 = vld [vmem:[#allocation22 + $0x1a8] sm:$0xff]
    %v1918 = vld [vmem:[#allocation22 + $0x1b0] sm:$0xff]
    %v1919 = vld [vmem:[#allocation22 + $0x1b8] sm:$0xff]
    %v1920 = vld [vmem:[#allocation22 + $0x1c0] sm:$0xff]
    %v1921 = vld [vmem:[#allocation22 + $0x1c8] sm:$0xff]
    %v1922 = vld [vmem:[#allocation22 + $0x1d0] sm:$0xff]
    %v1923 = vld [vmem:[#allocation22 + $0x1d8] sm:$0xff]
    %v1924 = vld [vmem:[#allocation22 + $0x1e0] sm:$0xff]
    %v1925 = vld [vmem:[#allocation22 + $0x1e8] sm:$0xff]
    %v1926 = vld [vmem:[#allocation22 + $0x1f0] sm:$0xff]
    %v1927 = vld [vmem:[#allocation22 + $0x1f8] sm:$0xff]
    %v1928 = vld [vmem:[#allocation23] sm:$0x3]
    %v1930 = vlaneseq
    %v1931 = vshrl.u32 %v1930, 7
    %v1932 = vsub.s32 0, %v1931
    %v1933 = vrot.slane %v1928, %v1932
    %v1934 = vlaneseq
    %v1935 = vshrl.u32 %v1934, 7
    %v1936 = vsub.s32 1, %v1935
    %v1937 = vrot.slane %v1928, %v1936
    %vm1944 = vcmask 1041409
    %v1945 = vsel %vm1944, %v1850, %v1824
    %v1946 = vsel %vm1944, %v1863, %v1837
    %1949 = vmatprep.subr.mxu0 %v1865
    %1950 = vmatpush1.msra.mxu0 %v1864
    %1951 = vmatprep.subr.mxu0 %v1867
    %1952 = vmatpush1.msra.mxu0 %v1866
    %1953 = vmatprep.subr.mxu0 %v1869
    %1954 = vmatpush1.msra.mxu0 %v1868
    %1955 = vmatprep.subr.mxu0 %v1871
    %1956 = vmatpush1.msra.mxu0 %v1870
    %1957 = vmatprep.subr.mxu0 %v1873
    %1958 = vmatpush1.msra.mxu0 %v1872
    %1959 = vmatprep.subr.mxu0 %v1875
    %1960 = vmatpush1.msra.mxu0 %v1874
    %1961 = vmatprep.subr.mxu0 %v1877
    %1962 = vmatpush1.msra.mxu0 %v1876
    %1963 = vmatprep.subr.mxu0 %v1879
    %1964 = vmatpush1.msra.mxu0 %v1878
    %1965 = vmatprep.subr.mxu0 %v1881
    %1966 = vmatpush1.msra.mxu0 %v1880
    %1967 = vmatprep.subr.mxu0 %v1883
    %1968 = vmatpush1.msra.mxu0 %v1882
    %1969 = vmatprep.subr.mxu0 %v1885
    %1970 = vmatpush1.msra.mxu0 %v1884
    %1971 = vmatprep.subr.mxu0 %v1887
    %1972 = vmatpush1.msra.mxu0 %v1886
    %1973 = vmatprep.subr.mxu0 %v1889
    %1974 = vmatpush1.msra.mxu0 %v1888
    %1975 = vmatprep.subr.mxu0 %v1891
    %1976 = vmatpush1.msra.mxu0 %v1890
    %1977 = vmatprep.subr.mxu0 %v1893
    %1978 = vmatpush1.msra.mxu0 %v1892
    %1979 = vmatprep.subr.mxu0 %v1895
    %1980 = vmatpush1.msra.mxu0 %v1894
    %1981 = vmatprep.subr.mxu0 %v1897
    %1982 = vmatpush1.msra.mxu0 %v1896
    %1983 = vmatprep.subr.mxu0 %v1899
    %1984 = vmatpush1.msra.mxu0 %v1898
    %1985 = vmatprep.subr.mxu0 %v1901
    %1986 = vmatpush1.msra.mxu0 %v1900
    %1987 = vmatprep.subr.mxu0 %v1903
    %1988 = vmatpush1.msra.mxu0 %v1902
    %1989 = vmatprep.subr.mxu0 %v1905
    %1990 = vmatpush1.msra.mxu0 %v1904
    %1991 = vmatprep.subr.mxu0 %v1907
    %1992 = vmatpush1.msra.mxu0 %v1906
    %1993 = vmatprep.subr.mxu0 %v1909
    %1994 = vmatpush1.msra.mxu0 %v1908
    %1995 = vmatprep.subr.mxu0 %v1911
    %1996 = vmatpush1.msra.mxu0 %v1910
    %1997 = vmatprep.subr.mxu0 %v1913
    %1998 = vmatpush1.msra.mxu0 %v1912
    %1999 = vmatprep.subr.mxu0 %v1915
    %2000 = vmatpush1.msra.mxu0 %v1914
    %2001 = vmatprep.subr.mxu0 %v1917
    %2002 = vmatpush1.msra.mxu0 %v1916
    %2003 = vmatprep.subr.mxu0 %v1919
    %2004 = vmatpush1.msra.mxu0 %v1918
    %2005 = vmatprep.subr.mxu0 %v1921
    %2006 = vmatpush1.msra.mxu0 %v1920
    %2007 = vmatprep.subr.mxu0 %v1923
    %2008 = vmatpush1.msra.mxu0 %v1922
    %2009 = vmatprep.subr.mxu0 %v1925
    %2010 = vmatpush1.msra.mxu0 %v1924
    %2011 = vmatprep.subr.mxu0 %v1927
    %2012 = vmatpush1.msra.mxu0 %v1926
    %2013 = vmatprep.mubr.f32.mxu0 %v1946
    %2014 = vmatmul.mubr.f32.gmra.mrb[0].mxu0 %v1945
    %v2015 = vpop.f32.mrb[0].mxu0
    %v2016 = vadd.f32 %v1933, %v2015
    %v2017 = vpop.f32.mrb[0].mxu0
    %v2018 = vadd.f32 %v1937, %v2017
    %2019 = vdwg.mxu0
    %v2020 = vld [vmem:[#allocation25] sm:$0xff]
    %v2021 = vld [vmem:[#allocation25 + $0x8] sm:$0xff]
    %v2022 = vld [vmem:[#allocation25 + $0x10] sm:$0xff]
    %v2023 = vld [vmem:[#allocation25 + $0x18] sm:$0xff]
    %v2024 = vld [vmem:[#allocation25 + $0x20] sm:$0xff]
    %v2025 = vld [vmem:[#allocation25 + $0x28] sm:$0xff]
    %v2026 = vld [vmem:[#allocation25 + $0x30] sm:$0xff]
    %v2027 = vld [vmem:[#allocation25 + $0x38] sm:$0xff]
    %v2028 = vld [vmem:[#allocation25 + $0x40] sm:$0xff]
    %v2029 = vld [vmem:[#allocation25 + $0x48] sm:$0xff]
    %v2030 = vld [vmem:[#allocation25 + $0x50] sm:$0xff]
    %v2031 = vld [vmem:[#allocation25 + $0x58] sm:$0xff]
    %v2032 = vld [vmem:[#allocation25 + $0x60] sm:$0xff]
    %v2033 = vld [vmem:[#allocation25 + $0x68] sm:$0xff]
    %v2034 = vld [vmem:[#allocation25 + $0x70] sm:$0xff]
    %v2035 = vld [vmem:[#allocation25 + $0x78] sm:$0xff]
    %v2036 = vld [vmem:[#allocation25 + $0x80] sm:$0xff]
    %v2037 = vld [vmem:[#allocation25 + $0x88] sm:$0xff]
    %v2038 = vld [vmem:[#allocation25 + $0x90] sm:$0xff]
    %v2039 = vld [vmem:[#allocation25 + $0x98] sm:$0xff]
    %v2040 = vld [vmem:[#allocation25 + $0xa0] sm:$0xff]
    %v2041 = vld [vmem:[#allocation25 + $0xa8] sm:$0xff]
    %v2042 = vld [vmem:[#allocation25 + $0xb0] sm:$0xff]
    %v2043 = vld [vmem:[#allocation25 + $0xb8] sm:$0xff]
    %v2044 = vld [vmem:[#allocation25 + $0xc0] sm:$0xff]
    %v2045 = vld [vmem:[#allocation25 + $0xc8] sm:$0xff]
    %v2046 = vld [vmem:[#allocation25 + $0xd0] sm:$0xff]
    %v2047 = vld [vmem:[#allocation25 + $0xd8] sm:$0xff]
    %v2048 = vld [vmem:[#allocation25 + $0xe0] sm:$0xff]
    %v2049 = vld [vmem:[#allocation25 + $0xe8] sm:$0xff]
    %v2050 = vld [vmem:[#allocation25 + $0xf0] sm:$0xff]
    %v2051 = vld [vmem:[#allocation25 + $0xf8] sm:$0xff]
    %v2052 = vld [vmem:[#allocation25 + $0x100] sm:$0xff]
    %v2053 = vld [vmem:[#allocation25 + $0x108] sm:$0xff]
    %v2054 = vld [vmem:[#allocation25 + $0x110] sm:$0xff]
    %v2055 = vld [vmem:[#allocation25 + $0x118] sm:$0xff]
    %v2056 = vld [vmem:[#allocation25 + $0x120] sm:$0xff]
    %v2057 = vld [vmem:[#allocation25 + $0x128] sm:$0xff]
    %v2058 = vld [vmem:[#allocation25 + $0x130] sm:$0xff]
    %v2059 = vld [vmem:[#allocation25 + $0x138] sm:$0xff]
    %v2060 = vld [vmem:[#allocation25 + $0x140] sm:$0xff]
    %v2061 = vld [vmem:[#allocation25 + $0x148] sm:$0xff]
    %v2062 = vld [vmem:[#allocation25 + $0x150] sm:$0xff]
    %v2063 = vld [vmem:[#allocation25 + $0x158] sm:$0xff]
    %v2064 = vld [vmem:[#allocation25 + $0x160] sm:$0xff]
    %v2065 = vld [vmem:[#allocation25 + $0x168] sm:$0xff]
    %v2066 = vld [vmem:[#allocation25 + $0x170] sm:$0xff]
    %v2067 = vld [vmem:[#allocation25 + $0x178] sm:$0xff]
    %v2068 = vld [vmem:[#allocation25 + $0x180] sm:$0xff]
    %v2069 = vld [vmem:[#allocation25 + $0x188] sm:$0xff]
    %v2070 = vld [vmem:[#allocation25 + $0x190] sm:$0xff]
    %v2071 = vld [vmem:[#allocation25 + $0x198] sm:$0xff]
    %v2072 = vld [vmem:[#allocation25 + $0x1a0] sm:$0xff]
    %v2073 = vld [vmem:[#allocation25 + $0x1a8] sm:$0xff]
    %v2074 = vld [vmem:[#allocation25 + $0x1b0] sm:$0xff]
    %v2075 = vld [vmem:[#allocation25 + $0x1b8] sm:$0xff]
    %v2076 = vld [vmem:[#allocation25 + $0x1c0] sm:$0xff]
    %v2077 = vld [vmem:[#allocation25 + $0x1c8] sm:$0xff]
    %v2078 = vld [vmem:[#allocation25 + $0x1d0] sm:$0xff]
    %v2079 = vld [vmem:[#allocation25 + $0x1d8] sm:$0xff]
    %v2080 = vld [vmem:[#allocation25 + $0x1e0] sm:$0xff]
    %v2081 = vld [vmem:[#allocation25 + $0x1e8] sm:$0xff]
    %v2082 = vld [vmem:[#allocation25 + $0x1f0] sm:$0xff]
    %v2083 = vld [vmem:[#allocation25 + $0x1f8] sm:$0xff]
    %v2084 = vld [vmem:[#allocation26] sm:$0x3]
    %v2086 = vlaneseq
    %v2087 = vshrl.u32 %v2086, 7
    %v2088 = vsub.s32 0, %v2087
    %v2089 = vrot.slane %v2084, %v2088
    %v2090 = vlaneseq
    %v2091 = vshrl.u32 %v2090, 7
    %v2092 = vsub.s32 1, %v2091
    %v2093 = vrot.slane %v2084, %v2092
    %2096 = vmatprep.subr.mxu0 %v2021
    %2097 = vmatpush1.msra.mxu0 %v2020
    %2098 = vmatprep.subr.mxu0 %v2023
    %2099 = vmatpush1.msra.mxu0 %v2022
    %2100 = vmatprep.subr.mxu0 %v2025
    %2101 = vmatpush1.msra.mxu0 %v2024
    %2102 = vmatprep.subr.mxu0 %v2027
    %2103 = vmatpush1.msra.mxu0 %v2026
    %2104 = vmatprep.subr.mxu0 %v2029
    %2105 = vmatpush1.msra.mxu0 %v2028
    %2106 = vmatprep.subr.mxu0 %v2031
    %2107 = vmatpush1.msra.mxu0 %v2030
    %2108 = vmatprep.subr.mxu0 %v2033
    %2109 = vmatpush1.msra.mxu0 %v2032
    %2110 = vmatprep.subr.mxu0 %v2035
    %2111 = vmatpush1.msra.mxu0 %v2034
    %2112 = vmatprep.subr.mxu0 %v2037
    %2113 = vmatpush1.msra.mxu0 %v2036
    %2114 = vmatprep.subr.mxu0 %v2039
    %2115 = vmatpush1.msra.mxu0 %v2038
    %2116 = vmatprep.subr.mxu0 %v2041
    %2117 = vmatpush1.msra.mxu0 %v2040
    %2118 = vmatprep.subr.mxu0 %v2043
    %2119 = vmatpush1.msra.mxu0 %v2042
    %2120 = vmatprep.subr.mxu0 %v2045
    %2121 = vmatpush1.msra.mxu0 %v2044
    %2122 = vmatprep.subr.mxu0 %v2047
    %2123 = vmatpush1.msra.mxu0 %v2046
    %2124 = vmatprep.subr.mxu0 %v2049
    %2125 = vmatpush1.msra.mxu0 %v2048
    %2126 = vmatprep.subr.mxu0 %v2051
    %2127 = vmatpush1.msra.mxu0 %v2050
    %2128 = vmatprep.subr.mxu0 %v2053
    %2129 = vmatpush1.msra.mxu0 %v2052
    %2130 = vmatprep.subr.mxu0 %v2055
    %2131 = vmatpush1.msra.mxu0 %v2054
    %2132 = vmatprep.subr.mxu0 %v2057
    %2133 = vmatpush1.msra.mxu0 %v2056
    %2134 = vmatprep.subr.mxu0 %v2059
    %2135 = vmatpush1.msra.mxu0 %v2058
    %2136 = vmatprep.subr.mxu0 %v2061
    %2137 = vmatpush1.msra.mxu0 %v2060
    %2138 = vmatprep.subr.mxu0 %v2063
    %2139 = vmatpush1.msra.mxu0 %v2062
    %2140 = vmatprep.subr.mxu0 %v2065
    %2141 = vmatpush1.msra.mxu0 %v2064
    %2142 = vmatprep.subr.mxu0 %v2067
    %2143 = vmatpush1.msra.mxu0 %v2066
    %2144 = vmatprep.subr.mxu0 %v2069
    %2145 = vmatpush1.msra.mxu0 %v2068
    %2146 = vmatprep.subr.mxu0 %v2071
    %2147 = vmatpush1.msra.mxu0 %v2070
    %2148 = vmatprep.subr.mxu0 %v2073
    %2149 = vmatpush1.msra.mxu0 %v2072
    %2150 = vmatprep.subr.mxu0 %v2075
    %2151 = vmatpush1.msra.mxu0 %v2074
    %2152 = vmatprep.subr.mxu0 %v2077
    %2153 = vmatpush1.msra.mxu0 %v2076
    %2154 = vmatprep.subr.mxu0 %v2079
    %2155 = vmatpush1.msra.mxu0 %v2078
    %2156 = vmatprep.subr.mxu0 %v2081
    %2157 = vmatpush1.msra.mxu0 %v2080
    %2158 = vmatprep.subr.mxu0 %v2083
    %2159 = vmatpush1.msra.mxu0 %v2082
    %2160 = vmatprep.mubr.f32.mxu0 %v1946
    %2161 = vmatmul.mubr.f32.gmra.mrb[0].mxu0 %v1945
    %v2162 = vpop.f32.mrb[0].mxu0
    %v2163 = vadd.f32 %v2089, %v2162
    %v2164 = vpop.f32.mrb[0].mxu0
    %v2165 = vadd.f32 %v2093, %v2164
    %2166 = vdwg.mxu0
    %v2169 = vcombine.low %v2016, %v2018
    %v2171 = vunpack.c.l.s4 1983009808
    %v2172 = vunpack.c.0.s8 %v2171
    %v2173 = vlaneseq
    %v2174 = vshrl.u32 %v2173, 7
    %v2175 = vsub.s32 %v2172, %v2174
    %v2176 = vrot.slane %v2169, %v2175
    %2178 = vst [vmem:[#allocation41] sm:$0xf] %v2176
    %v2181 = vcombine.low %v2163, %v2165
    %v2183 = vunpack.c.l.s4 1983009808
    %v2184 = vunpack.c.0.s8 %v2183
    %v2185 = vlaneseq
    %v2186 = vshrl.u32 %v2185, 7
    %v2187 = vsub.s32 %v2184, %v2186
    %v2188 = vrot.slane %v2181, %v2187
    %2190 = vst [vmem:[#allocation42] sm:$0xf] %v2188
    %v2191 = vld [vmem:[#allocation28] sm:$0xf]
    %v2192 = vmul.f32 %v2163, 0.5
    %v2193 = vmul.f32 %v2165, 0.5
    %v2194 = vmul.f32 %v2192, 1.442695
    %v2195 = vpow.pop %v2194
    %v2196 = vmul.f32 %v2193, 1.442695
    %v2197 = vpow.pop %v2196
    %v2200 = vcombine.low %v2195, %v2197
    %v2202 = vunpack.c.l.s4 1983009808
    %v2203 = vunpack.c.0.s8 %v2202
    %v2204 = vlaneseq
    %v2205 = vshrl.u32 %v2204, 7
    %v2206 = vsub.s32 %v2203, %v2205
    %v2207 = vrot.slane %v2200, %v2206
    %v2209 = vmul.f32 %v2191, %v2207
    %v2212 = vunpack.c.l.s4 1983009808
    %v2213 = vunpack.c.0.s8 %v2212
    %v2214 = vlaneseq
    %v2215 = vshrl.u32 %v2214, 7
    %v2216 = vsub.s32 %v2213, %v2215
    %v2217 = vrot.slane %v2209, %v2216
    %v2218 = vcombine.high %v2217, %v2217
    %v2221 = vadd.f32 %v2016, %v2217
    %v2222 = vadd.f32 %v2018, %v2218
    %v2223 = vld [vmem:[#allocation29] sm:$0xff]
    %v2224 = vld [vmem:[#allocation29 + $0x8] sm:$0xff]
    %v2225 = vld [vmem:[#allocation29 + $0x10] sm:$0xff]
    %v2226 = vld [vmem:[#allocation29 + $0x18] sm:$0xff]
    %v2227 = vld [vmem:[#allocation29 + $0x20] sm:$0xff]
    %v2228 = vld [vmem:[#allocation29 + $0x28] sm:$0xff]
    %v2229 = vld [vmem:[#allocation29 + $0x30] sm:$0xff]
    %v2230 = vld [vmem:[#allocation29 + $0x38] sm:$0xff]
    %v2231 = vld [vmem:[#allocation29 + $0x40] sm:$0xff]
    %v2232 = vld [vmem:[#allocation29 + $0x48] sm:$0xff]
    %v2233 = vld [vmem:[#allocation29 + $0x50] sm:$0xff]
    %v2234 = vld [vmem:[#allocation29 + $0x58] sm:$0xff]
    %v2235 = vld [vmem:[#allocation29 + $0x60] sm:$0xff]
    %v2236 = vld [vmem:[#allocation29 + $0x68] sm:$0xff]
    %v2237 = vld [vmem:[#allocation29 + $0x70] sm:$0xff]
    %v2238 = vld [vmem:[#allocation29 + $0x78] sm:$0xff]
    %v2239 = vld [vmem:[#allocation29 + $0x80] sm:$0xff]
    %v2240 = vld [vmem:[#allocation29 + $0x88] sm:$0xff]
    %v2241 = vld [vmem:[#allocation29 + $0x90] sm:$0xff]
    %v2242 = vld [vmem:[#allocation29 + $0x98] sm:$0xff]
    %v2243 = vld [vmem:[#allocation29 + $0xa0] sm:$0xff]
    %v2244 = vld [vmem:[#allocation29 + $0xa8] sm:$0xff]
    %v2245 = vld [vmem:[#allocation29 + $0xb0] sm:$0xff]
    %v2246 = vld [vmem:[#allocation29 + $0xb8] sm:$0xff]
    %v2247 = vld [vmem:[#allocation29 + $0xc0] sm:$0xff]
    %v2248 = vld [vmem:[#allocation29 + $0xc8] sm:$0xff]
    %v2249 = vld [vmem:[#allocation29 + $0xd0] sm:$0xff]
    %v2250 = vld [vmem:[#allocation29 + $0xd8] sm:$0xff]
    %v2251 = vld [vmem:[#allocation29 + $0xe0] sm:$0xff]
    %v2252 = vld [vmem:[#allocation29 + $0xe8] sm:$0xff]
    %v2253 = vld [vmem:[#allocation29 + $0xf0] sm:$0xff]
    %v2254 = vld [vmem:[#allocation29 + $0xf8] sm:$0xff]
    %v2255 = vld [vmem:[#allocation29 + $0x100] sm:$0xff]
    %v2256 = vld [vmem:[#allocation29 + $0x108] sm:$0xff]
    %v2257 = vld [vmem:[#allocation29 + $0x110] sm:$0xff]
    %v2258 = vld [vmem:[#allocation29 + $0x118] sm:$0xff]
    %v2259 = vld [vmem:[#allocation29 + $0x120] sm:$0xff]
    %v2260 = vld [vmem:[#allocation29 + $0x128] sm:$0xff]
    %v2261 = vld [vmem:[#allocation29 + $0x130] sm:$0xff]
    %v2262 = vld [vmem:[#allocation29 + $0x138] sm:$0xff]
    %v2263 = vld [vmem:[#allocation29 + $0x140] sm:$0xff]
    %v2264 = vld [vmem:[#allocation29 + $0x148] sm:$0xff]
    %v2265 = vld [vmem:[#allocation29 + $0x150] sm:$0xff]
    %v2266 = vld [vmem:[#allocation29 + $0x158] sm:$0xff]
    %v2267 = vld [vmem:[#allocation29 + $0x160] sm:$0xff]
    %v2268 = vld [vmem:[#allocation29 + $0x168] sm:$0xff]
    %v2269 = vld [vmem:[#allocation29 + $0x170] sm:$0xff]
    %v2270 = vld [vmem:[#allocation29 + $0x178] sm:$0xff]
    %v2271 = vld [vmem:[#allocation29 + $0x180] sm:$0xff]
    %v2272 = vld [vmem:[#allocation29 + $0x188] sm:$0xff]
    %v2273 = vld [vmem:[#allocation29 + $0x190] sm:$0xff]
    %v2274 = vld [vmem:[#allocation29 + $0x198] sm:$0xff]
    %v2275 = vld [vmem:[#allocation29 + $0x1a0] sm:$0xff]
    %v2276 = vld [vmem:[#allocation29 + $0x1a8] sm:$0xff]
    %v2277 = vld [vmem:[#allocation29 + $0x1b0] sm:$0xff]
    %v2278 = vld [vmem:[#allocation29 + $0x1b8] sm:$0xff]
    %v2279 = vld [vmem:[#allocation29 + $0x1c0] sm:$0xff]
    %v2280 = vld [vmem:[#allocation29 + $0x1c8] sm:$0xff]
    %v2281 = vld [vmem:[#allocation29 + $0x1d0] sm:$0xff]
    %v2282 = vld [vmem:[#allocation29 + $0x1d8] sm:$0xff]
    %v2283 = vld [vmem:[#allocation29 + $0x1e0] sm:$0xff]
    %v2284 = vld [vmem:[#allocation29 + $0x1e8] sm:$0xff]
    %v2285 = vld [vmem:[#allocation29 + $0x1f0] sm:$0xff]
    %v2286 = vld [vmem:[#allocation29 + $0x1f8] sm:$0xff]
    %v2287 = vld [vmem:[#allocation29 + $0x200] sm:$0xff]
    %v2288 = vld [vmem:[#allocation29 + $0x208] sm:$0xff]
    %v2289 = vld [vmem:[#allocation29 + $0x210] sm:$0xff]
    %v2290 = vld [vmem:[#allocation29 + $0x218] sm:$0xff]
    %v2291 = vld [vmem:[#allocation29 + $0x220] sm:$0xff]
    %v2292 = vld [vmem:[#allocation29 + $0x228] sm:$0xff]
    %v2293 = vld [vmem:[#allocation29 + $0x230] sm:$0xff]
    %v2294 = vld [vmem:[#allocation29 + $0x238] sm:$0xff]
    %v2295 = vld [vmem:[#allocation29 + $0x240] sm:$0xff]
    %v2296 = vld [vmem:[#allocation29 + $0x248] sm:$0xff]
    %v2297 = vld [vmem:[#allocation29 + $0x250] sm:$0xff]
    %v2298 = vld [vmem:[#allocation29 + $0x258] sm:$0xff]
    %v2299 = vld [vmem:[#allocation29 + $0x260] sm:$0xff]
    %v2300 = vld [vmem:[#allocation29 + $0x268] sm:$0xff]
    %v2301 = vld [vmem:[#allocation29 + $0x270] sm:$0xff]
    %v2302 = vld [vmem:[#allocation29 + $0x278] sm:$0xff]
    %v2303 = vld [vmem:[#allocation29 + $0x280] sm:$0xff]
    %v2304 = vld [vmem:[#allocation29 + $0x288] sm:$0xff]
    %v2305 = vld [vmem:[#allocation29 + $0x290] sm:$0xff]
    %v2306 = vld [vmem:[#allocation29 + $0x298] sm:$0xff]
    %v2307 = vld [vmem:[#allocation29 + $0x2a0] sm:$0xff]
    %v2308 = vld [vmem:[#allocation29 + $0x2a8] sm:$0xff]
    %v2309 = vld [vmem:[#allocation29 + $0x2b0] sm:$0xff]
    %v2310 = vld [vmem:[#allocation29 + $0x2b8] sm:$0xff]
    %v2311 = vld [vmem:[#allocation29 + $0x2c0] sm:$0xff]
    %v2312 = vld [vmem:[#allocation29 + $0x2c8] sm:$0xff]
    %v2313 = vld [vmem:[#allocation29 + $0x2d0] sm:$0xff]
    %v2314 = vld [vmem:[#allocation29 + $0x2d8] sm:$0xff]
    %v2315 = vld [vmem:[#allocation29 + $0x2e0] sm:$0xff]
    %v2316 = vld [vmem:[#allocation29 + $0x2e8] sm:$0xff]
    %v2317 = vld [vmem:[#allocation29 + $0x2f0] sm:$0xff]
    %v2318 = vld [vmem:[#allocation29 + $0x2f8] sm:$0xff]
    %v2319 = vld [vmem:[#allocation29 + $0x300] sm:$0xff]
    %v2320 = vld [vmem:[#allocation29 + $0x308] sm:$0xff]
    %v2321 = vld [vmem:[#allocation29 + $0x310] sm:$0xff]
    %v2322 = vld [vmem:[#allocation29 + $0x318] sm:$0xff]
    %v2323 = vld [vmem:[#allocation29 + $0x320] sm:$0xff]
    %v2324 = vld [vmem:[#allocation29 + $0x328] sm:$0xff]
    %v2325 = vld [vmem:[#allocation29 + $0x330] sm:$0xff]
    %v2326 = vld [vmem:[#allocation29 + $0x338] sm:$0xff]
    %v2327 = vld [vmem:[#allocation29 + $0x340] sm:$0xff]
    %v2328 = vld [vmem:[#allocation29 + $0x348] sm:$0xff]
    %v2329 = vld [vmem:[#allocation29 + $0x350] sm:$0xff]
    %v2330 = vld [vmem:[#allocation29 + $0x358] sm:$0xff]
    %v2331 = vld [vmem:[#allocation29 + $0x360] sm:$0xff]
    %v2332 = vld [vmem:[#allocation29 + $0x368] sm:$0xff]
    %v2333 = vld [vmem:[#allocation29 + $0x370] sm:$0xff]
    %v2334 = vld [vmem:[#allocation29 + $0x378] sm:$0xff]
    %v2335 = vld [vmem:[#allocation29 + $0x380] sm:$0xff]
    %v2336 = vld [vmem:[#allocation29 + $0x388] sm:$0xff]
    %v2337 = vld [vmem:[#allocation29 + $0x390] sm:$0xff]
    %v2338 = vld [vmem:[#allocation29 + $0x398] sm:$0xff]
    %v2339 = vld [vmem:[#allocation29 + $0x3a0] sm:$0xff]
    %v2340 = vld [vmem:[#allocation29 + $0x3a8] sm:$0xff]
    %v2341 = vld [vmem:[#allocation29 + $0x3b0] sm:$0xff]
    %v2342 = vld [vmem:[#allocation29 + $0x3b8] sm:$0xff]
    %v2343 = vld [vmem:[#allocation29 + $0x3c0] sm:$0xff]
    %v2344 = vld [vmem:[#allocation29 + $0x3c8] sm:$0xff]
    %v2345 = vld [vmem:[#allocation29 + $0x3d0] sm:$0xff]
    %v2346 = vld [vmem:[#allocation29 + $0x3d8] sm:$0xff]
    %v2347 = vld [vmem:[#allocation29 + $0x3e0] sm:$0xff]
    %v2348 = vld [vmem:[#allocation29 + $0x3e8] sm:$0xff]
    %v2349 = vld [vmem:[#allocation29 + $0x3f0] sm:$0xff]
    %v2350 = vld [vmem:[#allocation29 + $0x3f8] sm:$0xff]
    %v2351 = vld [vmem:[#allocation31] sm:$0xf]
    %v2353 = vlaneseq
    %v2354 = vshrl.u32 %v2353, 7
    %v2355 = vsub.s32 0, %v2354
    %v2356 = vrot.slane %v2351, %v2355
    %v2357 = vlaneseq
    %v2358 = vshrl.u32 %v2357, 7
    %v2359 = vsub.s32 1, %v2358
    %v2360 = vrot.slane %v2351, %v2359
    %v2361 = vlaneseq
    %v2362 = vshrl.u32 %v2361, 7
    %v2363 = vsub.s32 2, %v2362
    %v2364 = vrot.slane %v2351, %v2363
    %v2365 = vlaneseq
    %v2366 = vshrl.u32 %v2365, 7
    %v2367 = vsub.s32 3, %v2366
    %v2368 = vrot.slane %v2351, %v2367
    %2373 = vmatprep.subr.mxu0 %v2224
    %2374 = vmatpush1.msra.mxu0 %v2223
    %2375 = vmatprep.subr.mxu0 %v2228
    %2376 = vmatpush1.msra.mxu0 %v2227
    %2377 = vmatprep.subr.mxu0 %v2232
    %2378 = vmatpush1.msra.mxu0 %v2231
    %2379 = vmatprep.subr.mxu0 %v2236
    %2380 = vmatpush1.msra.mxu0 %v2235
    %2381 = vmatprep.subr.mxu0 %v2240
    %2382 = vmatpush1.msra.mxu0 %v2239
    %2383 = vmatprep.subr.mxu0 %v2244
    %2384 = vmatpush1.msra.mxu0 %v2243
    %2385 = vmatprep.subr.mxu0 %v2248
    %2386 = vmatpush1.msra.mxu0 %v2247
    %2387 = vmatprep.subr.mxu0 %v2252
    %2388 = vmatpush1.msra.mxu0 %v2251
    %2389 = vmatprep.subr.mxu0 %v2256
    %2390 = vmatpush1.msra.mxu0 %v2255
    %2391 = vmatprep.subr.mxu0 %v2260
    %2392 = vmatpush1.msra.mxu0 %v2259
    %2393 = vmatprep.subr.mxu0 %v2264
    %2394 = vmatpush1.msra.mxu0 %v2263
    %2395 = vmatprep.subr.mxu0 %v2268
    %2396 = vmatpush1.msra.mxu0 %v2267
    %2397 = vmatprep.subr.mxu0 %v2272
    %2398 = vmatpush1.msra.mxu0 %v2271
    %2399 = vmatprep.subr.mxu0 %v2276
    %2400 = vmatpush1.msra.mxu0 %v2275
    %2401 = vmatprep.subr.mxu0 %v2280
    %2402 = vmatpush1.msra.mxu0 %v2279
    %2403 = vmatprep.subr.mxu0 %v2284
    %2404 = vmatpush1.msra.mxu0 %v2283
    %2405 = vmatprep.subr.mxu0 %v2288
    %2406 = vmatpush1.msra.mxu0 %v2287
    %2407 = vmatprep.subr.mxu0 %v2292
    %2408 = vmatpush1.msra.mxu0 %v2291
    %2409 = vmatprep.subr.mxu0 %v2296
    %2410 = vmatpush1.msra.mxu0 %v2295
    %2411 = vmatprep.subr.mxu0 %v2300
    %2412 = vmatpush1.msra.mxu0 %v2299
    %2413 = vmatprep.subr.mxu0 %v2304
    %2414 = vmatpush1.msra.mxu0 %v2303
    %2415 = vmatprep.subr.mxu0 %v2308
    %2416 = vmatpush1.msra.mxu0 %v2307
    %2417 = vmatprep.subr.mxu0 %v2312
    %2418 = vmatpush1.msra.mxu0 %v2311
    %2419 = vmatprep.subr.mxu0 %v2316
    %2420 = vmatpush1.msra.mxu0 %v2315
    %2421 = vmatprep.subr.mxu0 %v2320
    %2422 = vmatpush1.msra.mxu0 %v2319
    %2423 = vmatprep.subr.mxu0 %v2324
    %2424 = vmatpush1.msra.mxu0 %v2323
    %2425 = vmatprep.subr.mxu0 %v2328
    %2426 = vmatpush1.msra.mxu0 %v2327
    %2427 = vmatprep.subr.mxu0 %v2332
    %2428 = vmatpush1.msra.mxu0 %v2331
    %2429 = vmatprep.subr.mxu0 %v2336
    %2430 = vmatpush1.msra.mxu0 %v2335
    %2431 = vmatprep.subr.mxu0 %v2340
    %2432 = vmatpush1.msra.mxu0 %v2339
    %2433 = vmatprep.subr.mxu0 %v2344
    %2434 = vmatpush1.msra.mxu0 %v2343
    %2435 = vmatprep.subr.mxu0 %v2348
    %2436 = vmatpush1.msra.mxu0 %v2347
    %2437 = vmatprep.mubr.f32.mxu0 %v2222
    %2438 = vmatmul.mubr.f32.gmra.mrb[0].mxu0 %v2221
    %v2439 = vpop.f32.mrb[0].mxu0
    %v2440 = vadd.f32 %v2356, %v2439
    %v2441 = vpop.f32.mrb[0].mxu0
    %v2442 = vadd.f32 %v2360, %v2441
    %2443 = vdwg.mxu0
    %2444 = vmatprep.subr.mxu0 %v2226
    %2445 = vmatpush1.msra.mxu0 %v2225
    %2446 = vmatprep.subr.mxu0 %v2230
    %2447 = vmatpush1.msra.mxu0 %v2229
    %2448 = vmatprep.subr.mxu0 %v2234
    %2449 = vmatpush1.msra.mxu0 %v2233
    %2450 = vmatprep.subr.mxu0 %v2238
    %2451 = vmatpush1.msra.mxu0 %v2237
    %2452 = vmatprep.subr.mxu0 %v2242
    %2453 = vmatpush1.msra.mxu0 %v2241
    %2454 = vmatprep.subr.mxu0 %v2246
    %2455 = vmatpush1.msra.mxu0 %v2245
    %2456 = vmatprep.subr.mxu0 %v2250
    %2457 = vmatpush1.msra.mxu0 %v2249
    %2458 = vmatprep.subr.mxu0 %v2254
    %2459 = vmatpush1.msra.mxu0 %v2253
    %2460 = vmatprep.subr.mxu0 %v2258
    %2461 = vmatpush1.msra.mxu0 %v2257
    %2462 = vmatprep.subr.mxu0 %v2262
    %2463 = vmatpush1.msra.mxu0 %v2261
    %2464 = vmatprep.subr.mxu0 %v2266
    %2465 = vmatpush1.msra.mxu0 %v2265
    %2466 = vmatprep.subr.mxu0 %v2270
    %2467 = vmatpush1.msra.mxu0 %v2269
    %2468 = vmatprep.subr.mxu0 %v2274
    %2469 = vmatpush1.msra.mxu0 %v2273
    %2470 = vmatprep.subr.mxu0 %v2278
    %2471 = vmatpush1.msra.mxu0 %v2277
    %2472 = vmatprep.subr.mxu0 %v2282
    %2473 = vmatpush1.msra.mxu0 %v2281
    %2474 = vmatprep.subr.mxu0 %v2286
    %2475 = vmatpush1.msra.mxu0 %v2285
    %2476 = vmatprep.subr.mxu0 %v2290
    %2477 = vmatpush1.msra.mxu0 %v2289
    %2478 = vmatprep.subr.mxu0 %v2294
    %2479 = vmatpush1.msra.mxu0 %v2293
    %2480 = vmatprep.subr.mxu0 %v2298
    %2481 = vmatpush1.msra.mxu0 %v2297
    %2482 = vmatprep.subr.mxu0 %v2302
    %2483 = vmatpush1.msra.mxu0 %v2301
    %2484 = vmatprep.subr.mxu0 %v2306
    %2485 = vmatpush1.msra.mxu0 %v2305
    %2486 = vmatprep.subr.mxu0 %v2310
    %2487 = vmatpush1.msra.mxu0 %v2309
    %2488 = vmatprep.subr.mxu0 %v2314
    %2489 = vmatpush1.msra.mxu0 %v2313
    %2490 = vmatprep.subr.mxu0 %v2318
    %2491 = vmatpush1.msra.mxu0 %v2317
    %2492 = vmatprep.subr.mxu0 %v2322
    %2493 = vmatpush1.msra.mxu0 %v2321
    %2494 = vmatprep.subr.mxu0 %v2326
    %2495 = vmatpush1.msra.mxu0 %v2325
    %2496 = vmatprep.subr.mxu0 %v2330
    %2497 = vmatpush1.msra.mxu0 %v2329
    %2498 = vmatprep.subr.mxu0 %v2334
    %2499 = vmatpush1.msra.mxu0 %v2333
    %2500 = vmatprep.subr.mxu0 %v2338
    %2501 = vmatpush1.msra.mxu0 %v2337
    %2502 = vmatprep.subr.mxu0 %v2342
    %2503 = vmatpush1.msra.mxu0 %v2341
    %2504 = vmatprep.subr.mxu0 %v2346
    %2505 = vmatpush1.msra.mxu0 %v2345
    %2506 = vmatprep.subr.mxu0 %v2350
    %2507 = vmatpush1.msra.mxu0 %v2349
    %2508 = vmatprep.mubr.f32.mxu0 %v2222
    %2509 = vmatmul.mubr.f32.gmra.mrb[0].mxu0 %v2221
    %v2510 = vpop.f32.mrb[0].mxu0
    %v2511 = vadd.f32 %v2364, %v2510
    %v2512 = vpop.f32.mrb[0].mxu0
    %v2513 = vadd.f32 %v2368, %v2512
    %2514 = vdwg.mxu0
    %v2515 = vld [vmem:[#allocation32] sm:$0xf]
    %v2516 = vld [vmem:[#allocation34] sm:$0xf]
    %vm2517 = vcmask 1041408
    %v2518 = vsel %vm2517, %v2440, 0.0
    %v2519 = vrot.slane %v2518, 4
    %v2520 = vadd.f32 %v2518, %v2519
    %v2521 = vrot.slane %v2520, 2
    %v2522 = vadd.f32 %v2520, %v2521
    %v2523 = vrot.slane %v2522, 1
    %v2524 = vadd.f32 %v2522, %v2523
    %v2525 = vsel %vm2517, %v2442, 0.0
    %v2526 = vrot.slane %v2525, 4
    %v2527 = vadd.f32 %v2525, %v2526
    %v2528 = vrot.slane %v2527, 2
    %v2529 = vadd.f32 %v2527, %v2528
    %v2530 = vrot.slane %v2529, 1
    %v2531 = vadd.f32 %v2529, %v2530
    %v2532 = vsel %vm2517, %v2511, 0.0
    %v2533 = vrot.slane %v2532, 4
    %v2534 = vadd.f32 %v2532, %v2533
    %v2535 = vrot.slane %v2534, 2
    %v2536 = vadd.f32 %v2534, %v2535
    %v2537 = vrot.slane %v2536, 1
    %v2538 = vadd.f32 %v2536, %v2537
    %v2539 = vsel %vm2517, %v2513, 0.0
    %v2540 = vrot.slane %v2539, 4
    %v2541 = vadd.f32 %v2539, %v2540
    %v2542 = vrot.slane %v2541, 2
    %v2543 = vadd.f32 %v2541, %v2542
    %v2544 = vrot.slane %v2543, 1
    %v2545 = vadd.f32 %v2543, %v2544
    %v2546 = vmul.f32 %v2524, 0.5
    %v2547 = vmul.f32 %v2531, 0.5
    %v2548 = vmul.f32 %v2538, 0.5
    %v2549 = vmul.f32 %v2545, 0.5
    %v2550 = vmul.f32 %v2440, %v2440
    %v2551 = vmul.f32 %v2442, %v2442
    %v2552 = vmul.f32 %v2511, %v2511
    %v2553 = vmul.f32 %v2513, %v2513
    %v2554 = vsel %vm2517, %v2550, 0.0
    %v2555 = vrot.slane %v2554, 4
    %v2556 = vadd.f32 %v2554, %v2555
    %v2557 = vrot.slane %v2556, 2
    %v2558 = vadd.f32 %v2556, %v2557
    %v2559 = vrot.slane %v2558, 1
    %v2560 = vadd.f32 %v2558, %v2559
    %v2561 = vsel %vm2517, %v2551, 0.0
    %v2562 = vrot.slane %v2561, 4
    %v2563 = vadd.f32 %v2561, %v2562
    %v2564 = vrot.slane %v2563, 2
    %v2565 = vadd.f32 %v2563, %v2564
    %v2566 = vrot.slane %v2565, 1
    %v2567 = vadd.f32 %v2565, %v2566
    %v2568 = vsel %vm2517, %v2552, 0.0
    %v2569 = vrot.slane %v2568, 4
    %v2570 = vadd.f32 %v2568, %v2569
    %v2571 = vrot.slane %v2570, 2
    %v2572 = vadd.f32 %v2570, %v2571
    %v2573 = vrot.slane %v2572, 1
    %v2574 = vadd.f32 %v2572, %v2573
    %v2575 = vsel %vm2517, %v2553, 0.0
    %v2576 = vrot.slane %v2575, 4
    %v2577 = vadd.f32 %v2575, %v2576
    %v2578 = vrot.slane %v2577, 2
    %v2579 = vadd.f32 %v2577, %v2578
    %v2580 = vrot.slane %v2579, 1
    %v2581 = vadd.f32 %v2579, %v2580
    %v2582 = vmul.f32 %v2560, 0.5
    %v2583 = vmul.f32 %v2567, 0.5
    %v2584 = vmul.f32 %v2574, 0.5
    %v2585 = vmul.f32 %v2581, 0.5
    %v2586 = vmul.f32 %v2546, %v2546
    %v2587 = vmul.f32 %v2547, %v2547
    %v2588 = vmul.f32 %v2548, %v2548
    %v2589 = vmul.f32 %v2549, %v2549
    %v2590 = vsub.f32 %v2582, %v2586
    %v2591 = vsub.f32 %v2583, %v2587
    %v2592 = vsub.f32 %v2584, %v2588
    %v2593 = vsub.f32 %v2585, %v2589
    %v2594 = vmax.f32 %v2590, 0.0
    %v2595 = vmax.f32 %v2591, 0.0
    %v2596 = vmax.f32 %v2592, 0.0
    %v2597 = vmax.f32 %v2593, 0.0
    %v2598 = vsub.f32 %v2440, %v2546
    %v2599 = vsub.f32 %v2442, %v2547
    %v2600 = vsub.f32 %v2511, %v2548
    %v2601 = vsub.f32 %v2513, %v2549
    %v2602 = vadd.f32 %v2594, 1e-05
    %v2603 = vadd.f32 %v2595, 1e-05
    %v2604 = vadd.f32 %v2596, 1e-05
    %v2605 = vadd.f32 %v2597, 1e-05
    %v2606 = vrsqrt.pop %v2602
    %v2607 = vrsqrt.pop %v2603
    %v2608 = vrsqrt.pop %v2604
    %v2609 = vrsqrt.pop %v2605
    %v2610 = vmul.f32 %v2598, %v2606
    %v2611 = vmul.f32 %v2599, %v2607
    %v2612 = vmul.f32 %v2600, %v2608
    %v2613 = vmul.f32 %v2601, %v2609
    %v2615 = vlaneseq
    %v2616 = vshrl.u32 %v2615, 7
    %v2617 = vsub.s32 0, %v2616
    %v2618 = vrot.slane %v2515, %v2617
    %v2619 = vlaneseq
    %v2620 = vshrl.u32 %v2619, 7
    %v2621 = vsub.s32 1, %v2620
    %v2622 = vrot.slane %v2515, %v2621
    %v2623 = vlaneseq
    %v2624 = vshrl.u32 %v2623, 7
    %v2625 = vsub.s32 2, %v2624
    %v2626 = vrot.slane %v2515, %v2625
    %v2627 = vlaneseq
    %v2628 = vshrl.u32 %v2627, 7
    %v2629 = vsub.s32 3, %v2628
    %v2630 = vrot.slane %v2515, %v2629
    %v2635 = vmul.f32 %v2610, %v2618
    %v2636 = vmul.f32 %v2611, %v2622
    %v2637 = vmul.f32 %v2612, %v2626
    %v2638 = vmul.f32 %v2613, %v2630
    %v2640 = vlaneseq
    %v2641 = vshrl.u32 %v2640, 7
    %v2642 = vsub.s32 0, %v2641
    %v2643 = vrot.slane %v2516, %v2642
    %v2644 = vlaneseq
    %v2645 = vshrl.u32 %v2644, 7
    %v2646 = vsub.s32 1, %v2645
    %v2647 = vrot.slane %v2516, %v2646
    %v2648 = vlaneseq
    %v2649 = vshrl.u32 %v2648, 7
    %v2650 = vsub.s32 2, %v2649
    %v2651 = vrot.slane %v2516, %v2650
    %v2652 = vlaneseq
    %v2653 = vshrl.u32 %v2652, 7
    %v2654 = vsub.s32 3, %v2653
    %v2655 = vrot.slane %v2516, %v2654
    %v2660 = vadd.f32 %v2635, %v2643
    %v2661 = vadd.f32 %v2636, %v2647
    %v2662 = vadd.f32 %v2637, %v2651
    %v2663 = vadd.f32 %v2638, %v2655
    %vm2664 = vcmp.ge.f32.partialorder %v2660, 0.0
    %vm2665 = vcmp.ge.f32.partialorder %v2661, 0.0
    %vm2666 = vcmp.ge.f32.partialorder %v2662, 0.0
    %vm2667 = vcmp.ge.f32.partialorder %v2663, 0.0
    %v2668 = vmul.f32 %v2660, 0.2
    %v2669 = vmul.f32 %v2661, 0.2
    %v2670 = vmul.f32 %v2662, 0.2
    %v2671 = vmul.f32 %v2663, 0.2
    %v2672 = vsel %vm2664, %v2660, %v2668
    %v2673 = vsel %vm2665, %v2661, %v2669
    %v2674 = vsel %vm2666, %v2662, %v2670
    %v2675 = vsel %vm2667, %v2663, %v2671
    %v2676 = vld [vmem:[#allocation35] sm:$0xff]
    %v2677 = vld [vmem:[#allocation35 + $0x8] sm:$0xff]
    %v2678 = vld [vmem:[#allocation35 + $0x10] sm:$0xff]
    %v2679 = vld [vmem:[#allocation35 + $0x18] sm:$0xff]
    %v2680 = vld [vmem:[#allocation35 + $0x20] sm:$0xff]
    %v2681 = vld [vmem:[#allocation35 + $0x28] sm:$0xff]
    %v2682 = vld [vmem:[#allocation35 + $0x30] sm:$0xff]
    %v2683 = vld [vmem:[#allocation35 + $0x38] sm:$0xff]
    %v2684 = vld [vmem:[#allocation35 + $0x40] sm:$0xff]
    %v2685 = vld [vmem:[#allocation35 + $0x48] sm:$0xff]
    %v2686 = vld [vmem:[#allocation35 + $0x50] sm:$0xff]
    %v2687 = vld [vmem:[#allocation35 + $0x58] sm:$0xff]
    %v2688 = vld [vmem:[#allocation35 + $0x60] sm:$0xff]
    %v2689 = vld [vmem:[#allocation35 + $0x68] sm:$0xff]
    %v2690 = vld [vmem:[#allocation35 + $0x70] sm:$0xff]
    %v2691 = vld [vmem:[#allocation35 + $0x78] sm:$0xff]
    %v2692 = vld [vmem:[#allocation35 + $0x80] sm:$0xff]
    %v2693 = vld [vmem:[#allocation35 + $0x88] sm:$0xff]
    %v2694 = vld [vmem:[#allocation35 + $0x90] sm:$0xff]
    %v2695 = vld [vmem:[#allocation35 + $0x98] sm:$0xff]
    %v2696 = vld [vmem:[#allocation35 + $0xa0] sm:$0xff]
    %v2697 = vld [vmem:[#allocation35 + $0xa8] sm:$0xff]
    %v2698 = vld [vmem:[#allocation35 + $0xb0] sm:$0xff]
    %v2699 = vld [vmem:[#allocation35 + $0xb8] sm:$0xff]
    %v2700 = vld [vmem:[#allocation35 + $0xc0] sm:$0xff]
    %v2701 = vld [vmem:[#allocation35 + $0xc8] sm:$0xff]
    %v2702 = vld [vmem:[#allocation35 + $0xd0] sm:$0xff]
    %v2703 = vld [vmem:[#allocation35 + $0xd8] sm:$0xff]
    %v2704 = vld [vmem:[#allocation35 + $0xe0] sm:$0xff]
    %v2705 = vld [vmem:[#allocation35 + $0xe8] sm:$0xff]
    %v2706 = vld [vmem:[#allocation35 + $0xf0] sm:$0xff]
    %v2707 = vld [vmem:[#allocation35 + $0xf8] sm:$0xff]
    %v2708 = vld [vmem:[#allocation35 + $0x100] sm:$0xff]
    %v2709 = vld [vmem:[#allocation35 + $0x108] sm:$0xff]
    %v2710 = vld [vmem:[#allocation35 + $0x110] sm:$0xff]
    %v2711 = vld [vmem:[#allocation35 + $0x118] sm:$0xff]
    %v2712 = vld [vmem:[#allocation35 + $0x120] sm:$0xff]
    %v2713 = vld [vmem:[#allocation35 + $0x128] sm:$0xff]
    %v2714 = vld [vmem:[#allocation35 + $0x130] sm:$0xff]
    %v2715 = vld [vmem:[#allocation35 + $0x138] sm:$0xff]
    %v2716 = vld [vmem:[#allocation35 + $0x140] sm:$0xff]
    %v2717 = vld [vmem:[#allocation35 + $0x148] sm:$0xff]
    %v2718 = vld [vmem:[#allocation35 + $0x150] sm:$0xff]
    %v2719 = vld [vmem:[#allocation35 + $0x158] sm:$0xff]
    %v2720 = vld [vmem:[#allocation35 + $0x160] sm:$0xff]
    %v2721 = vld [vmem:[#allocation35 + $0x168] sm:$0xff]
    %v2722 = vld [vmem:[#allocation35 + $0x170] sm:$0xff]
    %v2723 = vld [vmem:[#allocation35 + $0x178] sm:$0xff]
    %v2724 = vld [vmem:[#allocation35 + $0x180] sm:$0xff]
    %v2725 = vld [vmem:[#allocation35 + $0x188] sm:$0xff]
    %v2726 = vld [vmem:[#allocation35 + $0x190] sm:$0xff]
    %v2727 = vld [vmem:[#allocation35 + $0x198] sm:$0xff]
    %v2728 = vld [vmem:[#allocation35 + $0x1a0] sm:$0xff]
    %v2729 = vld [vmem:[#allocation35 + $0x1a8] sm:$0xff]
    %v2730 = vld [vmem:[#allocation35 + $0x1b0] sm:$0xff]
    %v2731 = vld [vmem:[#allocation35 + $0x1b8] sm:$0xff]
    %v2732 = vld [vmem:[#allocation35 + $0x1c0] sm:$0xff]
    %v2733 = vld [vmem:[#allocation35 + $0x1c8] sm:$0xff]
    %v2734 = vld [vmem:[#allocation35 + $0x1d0] sm:$0xff]
    %v2735 = vld [vmem:[#allocation35 + $0x1d8] sm:$0xff]
    %v2736 = vld [vmem:[#allocation35 + $0x1e0] sm:$0xff]
    %v2737 = vld [vmem:[#allocation35 + $0x1e8] sm:$0xff]
    %v2738 = vld [vmem:[#allocation35 + $0x1f0] sm:$0xff]
    %v2739 = vld [vmem:[#allocation35 + $0x1f8] sm:$0xff]
    %v2740 = vld [vmem:[#allocation35 + $0x200] sm:$0xff]
    %v2741 = vld [vmem:[#allocation35 + $0x208] sm:$0xff]
    %v2742 = vld [vmem:[#allocation35 + $0x210] sm:$0xff]
    %v2743 = vld [vmem:[#allocation35 + $0x218] sm:$0xff]
    %v2744 = vld [vmem:[#allocation35 + $0x220] sm:$0xff]
    %v2745 = vld [vmem:[#allocation35 + $0x228] sm:$0xff]
    %v2746 = vld [vmem:[#allocation35 + $0x230] sm:$0xff]
    %v2747 = vld [vmem:[#allocation35 + $0x238] sm:$0xff]
    %v2748 = vld [vmem:[#allocation35 + $0x240] sm:$0xff]
    %v2749 = vld [vmem:[#allocation35 + $0x248] sm:$0xff]
    %v2750 = vld [vmem:[#allocation35 + $0x250] sm:$0xff]
    %v2751 = vld [vmem:[#allocation35 + $0x258] sm:$0xff]
    %v2752 = vld [vmem:[#allocation35 + $0x260] sm:$0xff]
    %v2753 = vld [vmem:[#allocation35 + $0x268] sm:$0xff]
    %v2754 = vld [vmem:[#allocation35 + $0x270] sm:$0xff]
    %v2755 = vld [vmem:[#allocation35 + $0x278] sm:$0xff]
    %v2756 = vld [vmem:[#allocation35 + $0x280] sm:$0xff]
    %v2757 = vld [vmem:[#allocation35 + $0x288] sm:$0xff]
    %v2758 = vld [vmem:[#allocation35 + $0x290] sm:$0xff]
    %v2759 = vld [vmem:[#allocation35 + $0x298] sm:$0xff]
    %v2760 = vld [vmem:[#allocation35 + $0x2a0] sm:$0xff]
    %v2761 = vld [vmem:[#allocation35 + $0x2a8] sm:$0xff]
    %v2762 = vld [vmem:[#allocation35 + $0x2b0] sm:$0xff]
    %v2763 = vld [vmem:[#allocation35 + $0x2b8] sm:$0xff]
    %v2764 = vld [vmem:[#allocation35 + $0x2c0] sm:$0xff]
    %v2765 = vld [vmem:[#allocation35 + $0x2c8] sm:$0xff]
    %v2766 = vld [vmem:[#allocation35 + $0x2d0] sm:$0xff]
    %v2767 = vld [vmem:[#allocation35 + $0x2d8] sm:$0xff]
    %v2768 = vld [vmem:[#allocation35 + $0x2e0] sm:$0xff]
    %v2769 = vld [vmem:[#allocation35 + $0x2e8] sm:$0xff]
    %v2770 = vld [vmem:[#allocation35 + $0x2f0] sm:$0xff]
    %v2771 = vld [vmem:[#allocation35 + $0x2f8] sm:$0xff]
    %v2772 = vld [vmem:[#allocation35 + $0x300] sm:$0xff]
    %v2773 = vld [vmem:[#allocation35 + $0x308] sm:$0xff]
    %v2774 = vld [vmem:[#allocation35 + $0x310] sm:$0xff]
    %v2775 = vld [vmem:[#allocation35 + $0x318] sm:$0xff]
    %v2776 = vld [vmem:[#allocation35 + $0x320] sm:$0xff]
    %v2777 = vld [vmem:[#allocation35 + $0x328] sm:$0xff]
    %v2778 = vld [vmem:[#allocation35 + $0x330] sm:$0xff]
    %v2779 = vld [vmem:[#allocation35 + $0x338] sm:$0xff]
    %v2780 = vld [vmem:[#allocation35 + $0x340] sm:$0xff]
    %v2781 = vld [vmem:[#allocation35 + $0x348] sm:$0xff]
    %v2782 = vld [vmem:[#allocation35 + $0x350] sm:$0xff]
    %v2783 = vld [vmem:[#allocation35 + $0x358] sm:$0xff]
    %v2784 = vld [vmem:[#allocation35 + $0x360] sm:$0xff]
    %v2785 = vld [vmem:[#allocation35 + $0x368] sm:$0xff]
    %v2786 = vld [vmem:[#allocation35 + $0x370] sm:$0xff]
    %v2787 = vld [vmem:[#allocation35 + $0x378] sm:$0xff]
    %v2788 = vld [vmem:[#allocation35 + $0x380] sm:$0xff]
    %v2789 = vld [vmem:[#allocation35 + $0x388] sm:$0xff]
    %v2790 = vld [vmem:[#allocation35 + $0x390] sm:$0xff]
    %v2791 = vld [vmem:[#allocation35 + $0x398] sm:$0xff]
    %v2792 = vld [vmem:[#allocation35 + $0x3a0] sm:$0xff]
    %v2793 = vld [vmem:[#allocation35 + $0x3a8] sm:$0xff]
    %v2794 = vld [vmem:[#allocation35 + $0x3b0] sm:$0xff]
    %v2795 = vld [vmem:[#allocation35 + $0x3b8] sm:$0xff]
    %v2796 = vld [vmem:[#allocation35 + $0x3c0] sm:$0xff]
    %v2797 = vld [vmem:[#allocation35 + $0x3c8] sm:$0xff]
    %v2798 = vld [vmem:[#allocation35 + $0x3d0] sm:$0xff]
    %v2799 = vld [vmem:[#allocation35 + $0x3d8] sm:$0xff]
    %v2800 = vld [vmem:[#allocation35 + $0x3e0] sm:$0xff]
    %v2801 = vld [vmem:[#allocation35 + $0x3e8] sm:$0xff]
    %v2802 = vld [vmem:[#allocation35 + $0x3f0] sm:$0xff]
    %v2803 = vld [vmem:[#allocation35 + $0x3f8] sm:$0xff]
    %v2804 = vld [vmem:[#allocation35 + $0x400] sm:$0xff]
    %v2805 = vld [vmem:[#allocation35 + $0x408] sm:$0xff]
    %v2806 = vld [vmem:[#allocation35 + $0x410] sm:$0xff]
    %v2807 = vld [vmem:[#allocation35 + $0x418] sm:$0xff]
    %v2808 = vld [vmem:[#allocation35 + $0x420] sm:$0xff]
    %v2809 = vld [vmem:[#allocation35 + $0x428] sm:$0xff]
    %v2810 = vld [vmem:[#allocation35 + $0x430] sm:$0xff]
    %v2811 = vld [vmem:[#allocation35 + $0x438] sm:$0xff]
    %v2812 = vld [vmem:[#allocation35 + $0x440] sm:$0xff]
    %v2813 = vld [vmem:[#allocation35 + $0x448] sm:$0xff]
    %v2814 = vld [vmem:[#allocation35 + $0x450] sm:$0xff]
    %v2815 = vld [vmem:[#allocation35 + $0x458] sm:$0xff]
    %v2816 = vld [vmem:[#allocation35 + $0x460] sm:$0xff]
    %v2817 = vld [vmem:[#allocation35 + $0x468] sm:$0xff]
    %v2818 = vld [vmem:[#allocation35 + $0x470] sm:$0xff]
    %v2819 = vld [vmem:[#allocation35 + $0x478] sm:$0xff]
    %v2820 = vld [vmem:[#allocation35 + $0x480] sm:$0xff]
    %v2821 = vld [vmem:[#allocation35 + $0x488] sm:$0xff]
    %v2822 = vld [vmem:[#allocation35 + $0x490] sm:$0xff]
    %v2823 = vld [vmem:[#allocation35 + $0x498] sm:$0xff]
    %v2824 = vld [vmem:[#allocation35 + $0x4a0] sm:$0xff]
    %v2825 = vld [vmem:[#allocation35 + $0x4a8] sm:$0xff]
    %v2826 = vld [vmem:[#allocation35 + $0x4b0] sm:$0xff]
    %v2827 = vld [vmem:[#allocation35 + $0x4b8] sm:$0xff]
    %v2828 = vld [vmem:[#allocation35 + $0x4c0] sm:$0xff]
    %v2829 = vld [vmem:[#allocation35 + $0x4c8] sm:$0xff]
    %v2830 = vld [vmem:[#allocation35 + $0x4d0] sm:$0xff]
    %v2831 = vld [vmem:[#allocation35 + $0x4d8] sm:$0xff]
    %v2832 = vld [vmem:[#allocation35 + $0x4e0] sm:$0xff]
    %v2833 = vld [vmem:[#allocation35 + $0x4e8] sm:$0xff]
    %v2834 = vld [vmem:[#allocation35 + $0x4f0] sm:$0xff]
    %v2835 = vld [vmem:[#allocation35 + $0x4f8] sm:$0xff]
    %v2836 = vld [vmem:[#allocation35 + $0x500] sm:$0xff]
    %v2837 = vld [vmem:[#allocation35 + $0x508] sm:$0xff]
    %v2838 = vld [vmem:[#allocation35 + $0x510] sm:$0xff]
    %v2839 = vld [vmem:[#allocation35 + $0x518] sm:$0xff]
    %v2840 = vld [vmem:[#allocation35 + $0x520] sm:$0xff]
    %v2841 = vld [vmem:[#allocation35 + $0x528] sm:$0xff]
    %v2842 = vld [vmem:[#allocation35 + $0x530] sm:$0xff]
    %v2843 = vld [vmem:[#allocation35 + $0x538] sm:$0xff]
    %v2844 = vld [vmem:[#allocation35 + $0x540] sm:$0xff]
    %v2845 = vld [vmem:[#allocation35 + $0x548] sm:$0xff]
    %v2846 = vld [vmem:[#allocation35 + $0x550] sm:$0xff]
    %v2847 = vld [vmem:[#allocation35 + $0x558] sm:$0xff]
    %v2848 = vld [vmem:[#allocation35 + $0x560] sm:$0xff]
    %v2849 = vld [vmem:[#allocation35 + $0x568] sm:$0xff]
    %v2850 = vld [vmem:[#allocation35 + $0x570] sm:$0xff]
    %v2851 = vld [vmem:[#allocation35 + $0x578] sm:$0xff]
    %v2852 = vld [vmem:[#allocation35 + $0x580] sm:$0xff]
    %v2853 = vld [vmem:[#allocation35 + $0x588] sm:$0xff]
    %v2854 = vld [vmem:[#allocation35 + $0x590] sm:$0xff]
    %v2855 = vld [vmem:[#allocation35 + $0x598] sm:$0xff]
    %v2856 = vld [vmem:[#allocation35 + $0x5a0] sm:$0xff]
    %v2857 = vld [vmem:[#allocation35 + $0x5a8] sm:$0xff]
    %v2858 = vld [vmem:[#allocation35 + $0x5b0] sm:$0xff]
    %v2859 = vld [vmem:[#allocation35 + $0x5b8] sm:$0xff]
    %v2860 = vld [vmem:[#allocation35 + $0x5c0] sm:$0xff]
    %v2861 = vld [vmem:[#allocation35 + $0x5c8] sm:$0xff]
    %v2862 = vld [vmem:[#allocation35 + $0x5d0] sm:$0xff]
    %v2863 = vld [vmem:[#allocation35 + $0x5d8] sm:$0xff]
    %v2864 = vld [vmem:[#allocation35 + $0x5e0] sm:$0xff]
    %v2865 = vld [vmem:[#allocation35 + $0x5e8] sm:$0xff]
    %v2866 = vld [vmem:[#allocation35 + $0x5f0] sm:$0xff]
    %v2867 = vld [vmem:[#allocation35 + $0x5f8] sm:$0xff]
    %v2868 = vld [vmem:[#allocation35 + $0x600] sm:$0xff]
    %v2869 = vld [vmem:[#allocation35 + $0x608] sm:$0xff]
    %v2870 = vld [vmem:[#allocation35 + $0x610] sm:$0xff]
    %v2871 = vld [vmem:[#allocation35 + $0x618] sm:$0xff]
    %v2872 = vld [vmem:[#allocation35 + $0x620] sm:$0xff]
    %v2873 = vld [vmem:[#allocation35 + $0x628] sm:$0xff]
    %v2874 = vld [vmem:[#allocation35 + $0x630] sm:$0xff]
    %v2875 = vld [vmem:[#allocation35 + $0x638] sm:$0xff]
    %v2876 = vld [vmem:[#allocation35 + $0x640] sm:$0xff]
    %v2877 = vld [vmem:[#allocation35 + $0x648] sm:$0xff]
    %v2878 = vld [vmem:[#allocation35 + $0x650] sm:$0xff]
    %v2879 = vld [vmem:[#allocation35 + $0x658] sm:$0xff]
    %v2880 = vld [vmem:[#allocation35 + $0x660] sm:$0xff]
    %v2881 = vld [vmem:[#allocation35 + $0x668] sm:$0xff]
    %v2882 = vld [vmem:[#allocation35 + $0x670] sm:$0xff]
    %v2883 = vld [vmem:[#allocation35 + $0x678] sm:$0xff]
    %v2884 = vld [vmem:[#allocation35 + $0x680] sm:$0xff]
    %v2885 = vld [vmem:[#allocation35 + $0x688] sm:$0xff]
    %v2886 = vld [vmem:[#allocation35 + $0x690] sm:$0xff]
    %v2887 = vld [vmem:[#allocation35 + $0x698] sm:$0xff]
    %v2888 = vld [vmem:[#allocation35 + $0x6a0] sm:$0xff]
    %v2889 = vld [vmem:[#allocation35 + $0x6a8] sm:$0xff]
    %v2890 = vld [vmem:[#allocation35 + $0x6b0] sm:$0xff]
    %v2891 = vld [vmem:[#allocation35 + $0x6b8] sm:$0xff]
    %v2892 = vld [vmem:[#allocation35 + $0x6c0] sm:$0xff]
    %v2893 = vld [vmem:[#allocation35 + $0x6c8] sm:$0xff]
    %v2894 = vld [vmem:[#allocation35 + $0x6d0] sm:$0xff]
    %v2895 = vld [vmem:[#allocation35 + $0x6d8] sm:$0xff]
    %v2896 = vld [vmem:[#allocation35 + $0x6e0] sm:$0xff]
    %v2897 = vld [vmem:[#allocation35 + $0x6e8] sm:$0xff]
    %v2898 = vld [vmem:[#allocation35 + $0x6f0] sm:$0xff]
    %v2899 = vld [vmem:[#allocation35 + $0x6f8] sm:$0xff]
    %v2900 = vld [vmem:[#allocation35 + $0x700] sm:$0xff]
    %v2901 = vld [vmem:[#allocation35 + $0x708] sm:$0xff]
    %v2902 = vld [vmem:[#allocation35 + $0x710] sm:$0xff]
    %v2903 = vld [vmem:[#allocation35 + $0x718] sm:$0xff]
    %v2904 = vld [vmem:[#allocation35 + $0x720] sm:$0xff]
    %v2905 = vld [vmem:[#allocation35 + $0x728] sm:$0xff]
    %v2906 = vld [vmem:[#allocation35 + $0x730] sm:$0xff]
    %v2907 = vld [vmem:[#allocation35 + $0x738] sm:$0xff]
    %v2908 = vld [vmem:[#allocation35 + $0x740] sm:$0xff]
    %v2909 = vld [vmem:[#allocation35 + $0x748] sm:$0xff]
    %v2910 = vld [vmem:[#allocation35 + $0x750] sm:$0xff]
    %v2911 = vld [vmem:[#allocation35 + $0x758] sm:$0xff]
    %v2912 = vld [vmem:[#allocation35 + $0x760] sm:$0xff]
    %v2913 = vld [vmem:[#allocation35 + $0x768] sm:$0xff]
    %v2914 = vld [vmem:[#allocation35 + $0x770] sm:$0xff]
    %v2915 = vld [vmem:[#allocation35 + $0x778] sm:$0xff]
    %v2916 = vld [vmem:[#allocation35 + $0x780] sm:$0xff]
    %v2917 = vld [vmem:[#allocation35 + $0x788] sm:$0xff]
    %v2918 = vld [vmem:[#allocation35 + $0x790] sm:$0xff]
    %v2919 = vld [vmem:[#allocation35 + $0x798] sm:$0xff]
    %v2920 = vld [vmem:[#allocation35 + $0x7a0] sm:$0xff]
    %v2921 = vld [vmem:[#allocation35 + $0x7a8] sm:$0xff]
    %v2922 = vld [vmem:[#allocation35 + $0x7b0] sm:$0xff]
    %v2923 = vld [vmem:[#allocation35 + $0x7b8] sm:$0xff]
    %v2924 = vld [vmem:[#allocation35 + $0x7c0] sm:$0xff]
    %v2925 = vld [vmem:[#allocation35 + $0x7c8] sm:$0xff]
    %v2926 = vld [vmem:[#allocation35 + $0x7d0] sm:$0xff]
    %v2927 = vld [vmem:[#allocation35 + $0x7d8] sm:$0xff]
    %v2928 = vld [vmem:[#allocation35 + $0x7e0] sm:$0xff]
    %v2929 = vld [vmem:[#allocation35 + $0x7e8] sm:$0xff]
    %v2930 = vld [vmem:[#allocation35 + $0x7f0] sm:$0xff]
    %v2931 = vld [vmem:[#allocation35 + $0x7f8] sm:$0xff]
    %v2932 = vld [vmem:[#allocation35 + $0x800] sm:$0xff]
    %v2933 = vld [vmem:[#allocation35 + $0x808] sm:$0xff]
    %v2934 = vld [vmem:[#allocation35 + $0x810] sm:$0xff]
    %v2935 = vld [vmem:[#allocation35 + $0x818] sm:$0xff]
    %v2936 = vld [vmem:[#allocation35 + $0x820] sm:$0xff]
    %v2937 = vld [vmem:[#allocation35 + $0x828] sm:$0xff]
    %v2938 = vld [vmem:[#allocation35 + $0x830] sm:$0xff]
    %v2939 = vld [vmem:[#allocation35 + $0x838] sm:$0xff]
    %v2940 = vld [vmem:[#allocation35 + $0x840] sm:$0xff]
    %v2941 = vld [vmem:[#allocation35 + $0x848] sm:$0xff]
    %v2942 = vld [vmem:[#allocation35 + $0x850] sm:$0xff]
    %v2943 = vld [vmem:[#allocation35 + $0x858] sm:$0xff]
    %v2944 = vld [vmem:[#allocation35 + $0x860] sm:$0xff]
    %v2945 = vld [vmem:[#allocation35 + $0x868] sm:$0xff]
    %v2946 = vld [vmem:[#allocation35 + $0x870] sm:$0xff]
    %v2947 = vld [vmem:[#allocation35 + $0x878] sm:$0xff]
    %v2948 = vld [vmem:[#allocation35 + $0x880] sm:$0xff]
    %v2949 = vld [vmem:[#allocation35 + $0x888] sm:$0xff]
    %v2950 = vld [vmem:[#allocation35 + $0x890] sm:$0xff]
    %v2951 = vld [vmem:[#allocation35 + $0x898] sm:$0xff]
    %v2952 = vld [vmem:[#allocation35 + $0x8a0] sm:$0xff]
    %v2953 = vld [vmem:[#allocation35 + $0x8a8] sm:$0xff]
    %v2954 = vld [vmem:[#allocation35 + $0x8b0] sm:$0xff]
    %v2955 = vld [vmem:[#allocation35 + $0x8b8] sm:$0xff]
    %v2956 = vld [vmem:[#allocation35 + $0x8c0] sm:$0xff]
    %v2957 = vld [vmem:[#allocation35 + $0x8c8] sm:$0xff]
    %v2958 = vld [vmem:[#allocation35 + $0x8d0] sm:$0xff]
    %v2959 = vld [vmem:[#allocation35 + $0x8d8] sm:$0xff]
    %v2960 = vld [vmem:[#allocation35 + $0x8e0] sm:$0xff]
    %v2961 = vld [vmem:[#allocation35 + $0x8e8] sm:$0xff]
    %v2962 = vld [vmem:[#allocation35 + $0x8f0] sm:$0xff]
    %v2963 = vld [vmem:[#allocation35 + $0x8f8] sm:$0xff]
    %v2964 = vld [vmem:[#allocation35 + $0x900] sm:$0xff]
    %v2965 = vld [vmem:[#allocation35 + $0x908] sm:$0xff]
    %v2966 = vld [vmem:[#allocation35 + $0x910] sm:$0xff]
    %v2967 = vld [vmem:[#allocation35 + $0x918] sm:$0xff]
    %v2968 = vld [vmem:[#allocation35 + $0x920] sm:$0xff]
    %v2969 = vld [vmem:[#allocation35 + $0x928] sm:$0xff]
    %v2970 = vld [vmem:[#allocation35 + $0x930] sm:$0xff]
    %v2971 = vld [vmem:[#allocation35 + $0x938] sm:$0xff]
    %v2972 = vld [vmem:[#allocation35 + $0x940] sm:$0xff]
    %v2973 = vld [vmem:[#allocation35 + $0x948] sm:$0xff]
    %v2974 = vld [vmem:[#allocation35 + $0x950] sm:$0xff]
    %v2975 = vld [vmem:[#allocation35 + $0x958] sm:$0xff]
    %v2976 = vld [vmem:[#allocation35 + $0x960] sm:$0xff]
    %v2977 = vld [vmem:[#allocation35 + $0x968] sm:$0xff]
    %v2978 = vld [vmem:[#allocation35 + $0x970] sm:$0xff]
    %v2979 = vld [vmem:[#allocation35 + $0x978] sm:$0xff]
    %v2980 = vld [vmem:[#allocation35 + $0x980] sm:$0xff]
    %v2981 = vld [vmem:[#allocation35 + $0x988] sm:$0xff]
    %v2982 = vld [vmem:[#allocation35 + $0x990] sm:$0xff]
    %v2983 = vld [vmem:[#allocation35 + $0x998] sm:$0xff]
    %v2984 = vld [vmem:[#allocation35 + $0x9a0] sm:$0xff]
    %v2985 = vld [vmem:[#allocation35 + $0x9a8] sm:$0xff]
    %v2986 = vld [vmem:[#allocation35 + $0x9b0] sm:$0xff]
    %v2987 = vld [vmem:[#allocation35 + $0x9b8] sm:$0xff]
    %v2988 = vld [vmem:[#allocation35 + $0x9c0] sm:$0xff]
    %v2989 = vld [vmem:[#allocation35 + $0x9c8] sm:$0xff]
    %v2990 = vld [vmem:[#allocation35 + $0x9d0] sm:$0xff]
    %v2991 = vld [vmem:[#allocation35 + $0x9d8] sm:$0xff]
    %v2992 = vld [vmem:[#allocation35 + $0x9e0] sm:$0xff]
    %v2993 = vld [vmem:[#allocation35 + $0x9e8] sm:$0xff]
    %v2994 = vld [vmem:[#allocation35 + $0x9f0] sm:$0xff]
    %v2995 = vld [vmem:[#allocation35 + $0x9f8] sm:$0xff]
    %v2996 = vld [vmem:[#allocation35 + $0xa00] sm:$0xff]
    %v2997 = vld [vmem:[#allocation35 + $0xa08] sm:$0xff]
    %v2998 = vld [vmem:[#allocation35 + $0xa10] sm:$0xff]
    %v2999 = vld [vmem:[#allocation35 + $0xa18] sm:$0xff]
    %v3000 = vld [vmem:[#allocation35 + $0xa20] sm:$0xff]
    %v3001 = vld [vmem:[#allocation35 + $0xa28] sm:$0xff]
    %v3002 = vld [vmem:[#allocation35 + $0xa30] sm:$0xff]
    %v3003 = vld [vmem:[#allocation35 + $0xa38] sm:$0xff]
    %v3004 = vld [vmem:[#allocation35 + $0xa40] sm:$0xff]
    %v3005 = vld [vmem:[#allocation35 + $0xa48] sm:$0xff]
    %v3006 = vld [vmem:[#allocation35 + $0xa50] sm:$0xff]
    %v3007 = vld [vmem:[#allocation35 + $0xa58] sm:$0xff]
    %v3008 = vld [vmem:[#allocation35 + $0xa60] sm:$0xff]
    %v3009 = vld [vmem:[#allocation35 + $0xa68] sm:$0xff]
    %v3010 = vld [vmem:[#allocation35 + $0xa70] sm:$0xff]
    %v3011 = vld [vmem:[#allocation35 + $0xa78] sm:$0xff]
    %v3012 = vld [vmem:[#allocation35 + $0xa80] sm:$0xff]
    %v3013 = vld [vmem:[#allocation35 + $0xa88] sm:$0xff]
    %v3014 = vld [vmem:[#allocation35 + $0xa90] sm:$0xff]
    %v3015 = vld [vmem:[#allocation35 + $0xa98] sm:$0xff]
    %v3016 = vld [vmem:[#allocation35 + $0xaa0] sm:$0xff]
    %v3017 = vld [vmem:[#allocation35 + $0xaa8] sm:$0xff]
    %v3018 = vld [vmem:[#allocation35 + $0xab0] sm:$0xff]
    %v3019 = vld [vmem:[#allocation35 + $0xab8] sm:$0xff]
    %v3020 = vld [vmem:[#allocation35 + $0xac0] sm:$0xff]
    %v3021 = vld [vmem:[#allocation35 + $0xac8] sm:$0xff]
    %v3022 = vld [vmem:[#allocation35 + $0xad0] sm:$0xff]
    %v3023 = vld [vmem:[#allocation35 + $0xad8] sm:$0xff]
    %v3024 = vld [vmem:[#allocation35 + $0xae0] sm:$0xff]
    %v3025 = vld [vmem:[#allocation35 + $0xae8] sm:$0xff]
    %v3026 = vld [vmem:[#allocation35 + $0xaf0] sm:$0xff]
    %v3027 = vld [vmem:[#allocation35 + $0xaf8] sm:$0xff]
    %v3028 = vld [vmem:[#allocation35 + $0xb00] sm:$0xff]
    %v3029 = vld [vmem:[#allocation35 + $0xb08] sm:$0xff]
    %v3030 = vld [vmem:[#allocation35 + $0xb10] sm:$0xff]
    %v3031 = vld [vmem:[#allocation35 + $0xb18] sm:$0xff]
    %v3032 = vld [vmem:[#allocation35 + $0xb20] sm:$0xff]
    %v3033 = vld [vmem:[#allocation35 + $0xb28] sm:$0xff]
    %v3034 = vld [vmem:[#allocation35 + $0xb30] sm:$0xff]
    %v3035 = vld [vmem:[#allocation35 + $0xb38] sm:$0xff]
    %v3036 = vld [vmem:[#allocation35 + $0xb40] sm:$0xff]
    %v3037 = vld [vmem:[#allocation35 + $0xb48] sm:$0xff]
    %v3038 = vld [vmem:[#allocation35 + $0xb50] sm:$0xff]
    %v3039 = vld [vmem:[#allocation35 + $0xb58] sm:$0xff]
    %v3040 = vld [vmem:[#allocation35 + $0xb60] sm:$0xff]
    %v3041 = vld [vmem:[#allocation35 + $0xb68] sm:$0xff]
    %v3042 = vld [vmem:[#allocation35 + $0xb70] sm:$0xff]
    %v3043 = vld [vmem:[#allocation35 + $0xb78] sm:$0xff]
    %v3044 = vld [vmem:[#allocation35 + $0xb80] sm:$0xff]
    %v3045 = vld [vmem:[#allocation35 + $0xb88] sm:$0xff]
    %v3046 = vld [vmem:[#allocation35 + $0xb90] sm:$0xff]
    %v3047 = vld [vmem:[#allocation35 + $0xb98] sm:$0xff]
    %v3048 = vld [vmem:[#allocation35 + $0xba0] sm:$0xff]
    %v3049 = vld [vmem:[#allocation35 + $0xba8] sm:$0xff]
    %v3050 = vld [vmem:[#allocation35 + $0xbb0] sm:$0xff]
    %v3051 = vld [vmem:[#allocation35 + $0xbb8] sm:$0xff]
    %v3052 = vld [vmem:[#allocation35 + $0xbc0] sm:$0xff]
    %v3053 = vld [vmem:[#allocation35 + $0xbc8] sm:$0xff]
    %v3054 = vld [vmem:[#allocation35 + $0xbd0] sm:$0xff]
    %v3055 = vld [vmem:[#allocation35 + $0xbd8] sm:$0xff]
    %v3056 = vld [vmem:[#allocation35 + $0xbe0] sm:$0xff]
    %v3057 = vld [vmem:[#allocation35 + $0xbe8] sm:$0xff]
    %v3058 = vld [vmem:[#allocation35 + $0xbf0] sm:$0xff]
    %v3059 = vld [vmem:[#allocation35 + $0xbf8] sm:$0xff]
    %v3060 = vld [vmem:[#allocation35 + $0xc00] sm:$0xff]
    %v3061 = vld [vmem:[#allocation35 + $0xc08] sm:$0xff]
    %v3062 = vld [vmem:[#allocation35 + $0xc10] sm:$0xff]
    %v3063 = vld [vmem:[#allocation35 + $0xc18] sm:$0xff]
    %v3064 = vld [vmem:[#allocation35 + $0xc20] sm:$0xff]
    %v3065 = vld [vmem:[#allocation35 + $0xc28] sm:$0xff]
    %v3066 = vld [vmem:[#allocation35 + $0xc30] sm:$0xff]
    %v3067 = vld [vmem:[#allocation35 + $0xc38] sm:$0xff]
    %v3068 = vld [vmem:[#allocation35 + $0xc40] sm:$0xff]
    %v3069 = vld [vmem:[#allocation35 + $0xc48] sm:$0xff]
    %v3070 = vld [vmem:[#allocation35 + $0xc50] sm:$0xff]
    %v3071 = vld [vmem:[#allocation35 + $0xc58] sm:$0xff]
    %v3072 = vld [vmem:[#allocation35 + $0xc60] sm:$0xff]
    %v3073 = vld [vmem:[#allocation35 + $0xc68] sm:$0xff]
    %v3074 = vld [vmem:[#allocation35 + $0xc70] sm:$0xff]
    %v3075 = vld [vmem:[#allocation35 + $0xc78] sm:$0xff]
    %v3076 = vld [vmem:[#allocation35 + $0xc80] sm:$0xff]
    %v3077 = vld [vmem:[#allocation35 + $0xc88] sm:$0xff]
    %v3078 = vld [vmem:[#allocation35 + $0xc90] sm:$0xff]
    %v3079 = vld [vmem:[#allocation35 + $0xc98] sm:$0xff]
    %v3080 = vld [vmem:[#allocation35 + $0xca0] sm:$0xff]
    %v3081 = vld [vmem:[#allocation35 + $0xca8] sm:$0xff]
    %v3082 = vld [vmem:[#allocation35 + $0xcb0] sm:$0xff]
    %v3083 = vld [vmem:[#allocation35 + $0xcb8] sm:$0xff]
    %v3084 = vld [vmem:[#allocation35 + $0xcc0] sm:$0xff]
    %v3085 = vld [vmem:[#allocation35 + $0xcc8] sm:$0xff]
    %v3086 = vld [vmem:[#allocation35 + $0xcd0] sm:$0xff]
    %v3087 = vld [vmem:[#allocation35 + $0xcd8] sm:$0xff]
    %v3088 = vld [vmem:[#allocation35 + $0xce0] sm:$0xff]
    %v3089 = vld [vmem:[#allocation35 + $0xce8] sm:$0xff]
    %v3090 = vld [vmem:[#allocation35 + $0xcf0] sm:$0xff]
    %v3091 = vld [vmem:[#allocation35 + $0xcf8] sm:$0xff]
    %v3092 = vld [vmem:[#allocation35 + $0xd00] sm:$0xff]
    %v3093 = vld [vmem:[#allocation35 + $0xd08] sm:$0xff]
    %v3094 = vld [vmem:[#allocation35 + $0xd10] sm:$0xff]
    %v3095 = vld [vmem:[#allocation35 + $0xd18] sm:$0xff]
    %v3096 = vld [vmem:[#allocation35 + $0xd20] sm:$0xff]
    %v3097 = vld [vmem:[#allocation35 + $0xd28] sm:$0xff]
    %v3098 = vld [vmem:[#allocation35 + $0xd30] sm:$0xff]
    %v3099 = vld [vmem:[#allocation35 + $0xd38] sm:$0xff]
    %v3100 = vld [vmem:[#allocation35 + $0xd40] sm:$0xff]
    %v3101 = vld [vmem:[#allocation35 + $0xd48] sm:$0xff]
    %v3102 = vld [vmem:[#allocation35 + $0xd50] sm:$0xff]
    %v3103 = vld [vmem:[#allocation35 + $0xd58] sm:$0xff]
    %v3104 = vld [vmem:[#allocation35 + $0xd60] sm:$0xff]
    %v3105 = vld [vmem:[#allocation35 + $0xd68] sm:$0xff]
    %v3106 = vld [vmem:[#allocation35 + $0xd70] sm:$0xff]
    %v3107 = vld [vmem:[#allocation35 + $0xd78] sm:$0xff]
    %v3108 = vld [vmem:[#allocation35 + $0xd80] sm:$0xff]
    %v3109 = vld [vmem:[#allocation35 + $0xd88] sm:$0xff]
    %v3110 = vld [vmem:[#allocation35 + $0xd90] sm:$0xff]
    %v3111 = vld [vmem:[#allocation35 + $0xd98] sm:$0xff]
    %v3112 = vld [vmem:[#allocation35 + $0xda0] sm:$0xff]
    %v3113 = vld [vmem:[#allocation35 + $0xda8] sm:$0xff]
    %v3114 = vld [vmem:[#allocation35 + $0xdb0] sm:$0xff]
    %v3115 = vld [vmem:[#allocation35 + $0xdb8] sm:$0xff]
    %v3116 = vld [vmem:[#allocation35 + $0xdc0] sm:$0xff]
    %v3117 = vld [vmem:[#allocation35 + $0xdc8] sm:$0xff]
    %v3118 = vld [vmem:[#allocation35 + $0xdd0] sm:$0xff]
    %v3119 = vld [vmem:[#allocation35 + $0xdd8] sm:$0xff]
    %v3120 = vld [vmem:[#allocation35 + $0xde0] sm:$0xff]
    %v3121 = vld [vmem:[#allocation35 + $0xde8] sm:$0xff]
    %v3122 = vld [vmem:[#allocation35 + $0xdf0] sm:$0xff]
    %v3123 = vld [vmem:[#allocation35 + $0xdf8] sm:$0xff]
    %v3124 = vld [vmem:[#allocation35 + $0xe00] sm:$0xff]
    %v3125 = vld [vmem:[#allocation35 + $0xe08] sm:$0xff]
    %v3126 = vld [vmem:[#allocation35 + $0xe10] sm:$0xff]
    %v3127 = vld [vmem:[#allocation35 + $0xe18] sm:$0xff]
    %v3128 = vld [vmem:[#allocation35 + $0xe20] sm:$0xff]
    %v3129 = vld [vmem:[#allocation35 + $0xe28] sm:$0xff]
    %v3130 = vld [vmem:[#allocation35 + $0xe30] sm:$0xff]
    %v3131 = vld [vmem:[#allocation35 + $0xe38] sm:$0xff]
    %v3132 = vld [vmem:[#allocation35 + $0xe40] sm:$0xff]
    %v3133 = vld [vmem:[#allocation35 + $0xe48] sm:$0xff]
    %v3134 = vld [vmem:[#allocation35 + $0xe50] sm:$0xff]
    %v3135 = vld [vmem:[#allocation35 + $0xe58] sm:$0xff]
    %v3136 = vld [vmem:[#allocation35 + $0xe60] sm:$0xff]
    %v3137 = vld [vmem:[#allocation35 + $0xe68] sm:$0xff]
    %v3138 = vld [vmem:[#allocation35 + $0xe70] sm:$0xff]
    %v3139 = vld [vmem:[#allocation35 + $0xe78] sm:$0xff]
    %v3140 = vld [vmem:[#allocation35 + $0xe80] sm:$0xff]
    %v3141 = vld [vmem:[#allocation35 + $0xe88] sm:$0xff]
    %v3142 = vld [vmem:[#allocation35 + $0xe90] sm:$0xff]
    %v3143 = vld [vmem:[#allocation35 + $0xe98] sm:$0xff]
    %v3144 = vld [vmem:[#allocation35 + $0xea0] sm:$0xff]
    %v3145 = vld [vmem:[#allocation35 + $0xea8] sm:$0xff]
    %v3146 = vld [vmem:[#allocation35 + $0xeb0] sm:$0xff]
    %v3147 = vld [vmem:[#allocation35 + $0xeb8] sm:$0xff]
    %v3148 = vld [vmem:[#allocation35 + $0xec0] sm:$0xff]
    %v3149 = vld [vmem:[#allocation35 + $0xec8] sm:$0xff]
    %v3150 = vld [vmem:[#allocation35 + $0xed0] sm:$0xff]
    %v3151 = vld [vmem:[#allocation35 + $0xed8] sm:$0xff]
    %v3152 = vld [vmem:[#allocation35 + $0xee0] sm:$0xff]
    %v3153 = vld [vmem:[#allocation35 + $0xee8] sm:$0xff]
    %v3154 = vld [vmem:[#allocation35 + $0xef0] sm:$0xff]
    %v3155 = vld [vmem:[#allocation35 + $0xef8] sm:$0xff]
    %v3156 = vld [vmem:[#allocation35 + $0xf00] sm:$0xff]
    %v3157 = vld [vmem:[#allocation35 + $0xf08] sm:$0xff]
    %v3158 = vld [vmem:[#allocation35 + $0xf10] sm:$0xff]
    %v3159 = vld [vmem:[#allocation35 + $0xf18] sm:$0xff]
    %v3160 = vld [vmem:[#allocation35 + $0xf20] sm:$0xff]
    %v3161 = vld [vmem:[#allocation35 + $0xf28] sm:$0xff]
    %v3162 = vld [vmem:[#allocation35 + $0xf30] sm:$0xff]
    %v3163 = vld [vmem:[#allocation35 + $0xf38] sm:$0xff]
    %v3164 = vld [vmem:[#allocation35 + $0xf40] sm:$0xff]
    %v3165 = vld [vmem:[#allocation35 + $0xf48] sm:$0xff]
    %v3166 = vld [vmem:[#allocation35 + $0xf50] sm:$0xff]
    %v3167 = vld [vmem:[#allocation35 + $0xf58] sm:$0xff]
    %v3168 = vld [vmem:[#allocation35 + $0xf60] sm:$0xff]
    %v3169 = vld [vmem:[#allocation35 + $0xf68] sm:$0xff]
    %v3170 = vld [vmem:[#allocation35 + $0xf70] sm:$0xff]
    %v3171 = vld [vmem:[#allocation35 + $0xf78] sm:$0xff]
    %v3172 = vld [vmem:[#allocation35 + $0xf80] sm:$0xff]
    %v3173 = vld [vmem:[#allocation35 + $0xf88] sm:$0xff]
    %v3174 = vld [vmem:[#allocation35 + $0xf90] sm:$0xff]
    %v3175 = vld [vmem:[#allocation35 + $0xf98] sm:$0xff]
    %v3176 = vld [vmem:[#allocation35 + $0xfa0] sm:$0xff]
    %v3177 = vld [vmem:[#allocation35 + $0xfa8] sm:$0xff]
    %v3178 = vld [vmem:[#allocation35 + $0xfb0] sm:$0xff]
    %v3179 = vld [vmem:[#allocation35 + $0xfb8] sm:$0xff]
    %v3180 = vld [vmem:[#allocation35 + $0xfc0] sm:$0xff]
    %v3181 = vld [vmem:[#allocation35 + $0xfc8] sm:$0xff]
    %v3182 = vld [vmem:[#allocation35 + $0xfd0] sm:$0xff]
    %v3183 = vld [vmem:[#allocation35 + $0xfd8] sm:$0xff]
    %v3184 = vld [vmem:[#allocation35 + $0xfe0] sm:$0xff]
    %v3185 = vld [vmem:[#allocation35 + $0xfe8] sm:$0xff]
    %v3186 = vld [vmem:[#allocation35 + $0xff0] sm:$0xff]
    %v3187 = vld [vmem:[#allocation35 + $0xff8] sm:$0xff]
    %v3188 = vld [vmem:[#allocation37] sm:$0xff]
    %v3190 = vlaneseq
    %v3191 = vshrl.u32 %v3190, 7
    %v3192 = vsub.s32 0, %v3191
    %v3193 = vrot.slane %v3188, %v3192
    %v3194 = vlaneseq
    %v3195 = vshrl.u32 %v3194, 7
    %v3196 = vsub.s32 1, %v3195
    %v3197 = vrot.slane %v3188, %v3196
    %v3198 = vlaneseq
    %v3199 = vshrl.u32 %v3198, 7
    %v3200 = vsub.s32 2, %v3199
    %v3201 = vrot.slane %v3188, %v3200
    %v3202 = vlaneseq
    %v3203 = vshrl.u32 %v3202, 7
    %v3204 = vsub.s32 3, %v3203
    %v3205 = vrot.slane %v3188, %v3204
    %v3206 = vlaneseq
    %v3207 = vshrl.u32 %v3206, 7
    %v3208 = vsub.s32 4, %v3207
    %v3209 = vrot.slane %v3188, %v3208
    %v3210 = vlaneseq
    %v3211 = vshrl.u32 %v3210, 7
    %v3212 = vsub.s32 5, %v3211
    %v3213 = vrot.slane %v3188, %v3212
    %v3214 = vlaneseq
    %v3215 = vshrl.u32 %v3214, 7
    %v3216 = vsub.s32 6, %v3215
    %v3217 = vrot.slane %v3188, %v3216
    %v3218 = vlaneseq
    %v3219 = vshrl.u32 %v3218, 7
    %v3220 = vsub.s32 7, %v3219
    %v3221 = vrot.slane %v3188, %v3220
    %3230 = vmatprep.subr.mxu0 %v2677
    %3231 = vmatpush1.msra.mxu0 %v2676
    %3232 = vmatprep.subr.mxu0 %v2685
    %3233 = vmatpush1.msra.mxu0 %v2684
    %3234 = vmatprep.subr.mxu0 %v2693
    %3235 = vmatpush1.msra.mxu0 %v2692
    %3236 = vmatprep.subr.mxu0 %v2701
    %3237 = vmatpush1.msra.mxu0 %v2700
    %3238 = vmatprep.subr.mxu0 %v2709
    %3239 = vmatpush1.msra.mxu0 %v2708
    %3240 = vmatprep.subr.mxu0 %v2717
    %3241 = vmatpush1.msra.mxu0 %v2716
    %3242 = vmatprep.subr.mxu0 %v2725
    %3243 = vmatpush1.msra.mxu0 %v2724
    %3244 = vmatprep.subr.mxu0 %v2733
    %3245 = vmatpush1.msra.mxu0 %v2732
    %3246 = vmatprep.subr.mxu0 %v2741
    %3247 = vmatpush1.msra.mxu0 %v2740
    %3248 = vmatprep.subr.mxu0 %v2749
    %3249 = vmatpush1.msra.mxu0 %v2748
    %3250 = vmatprep.subr.mxu0 %v2757
    %3251 = vmatpush1.msra.mxu0 %v2756
    %3252 = vmatprep.subr.mxu0 %v2765
    %3253 = vmatpush1.msra.mxu0 %v2764
    %3254 = vmatprep.subr.mxu0 %v2773
    %3255 = vmatpush1.msra.mxu0 %v2772
    %3256 = vmatprep.subr.mxu0 %v2781
    %3257 = vmatpush1.msra.mxu0 %v2780
    %3258 = vmatprep.subr.mxu0 %v2789
    %3259 = vmatpush1.msra.mxu0 %v2788
    %3260 = vmatprep.subr.mxu0 %v2797
    %3261 = vmatpush1.msra.mxu0 %v2796
    %3262 = vmatprep.subr.mxu0 %v2805
    %3263 = vmatpush1.msra.mxu0 %v2804
    %3264 = vmatprep.subr.mxu0 %v2813
    %3265 = vmatpush1.msra.mxu0 %v2812
    %3266 = vmatprep.subr.mxu0 %v2821
    %3267 = vmatpush1.msra.mxu0 %v2820
    %3268 = vmatprep.subr.mxu0 %v2829
    %3269 = vmatpush1.msra.mxu0 %v2828
    %3270 = vmatprep.subr.mxu0 %v2837
    %3271 = vmatpush1.msra.mxu0 %v2836
    %3272 = vmatprep.subr.mxu0 %v2845
    %3273 = vmatpush1.msra.mxu0 %v2844
    %3274 = vmatprep.subr.mxu0 %v2853
    %3275 = vmatpush1.msra.mxu0 %v2852
    %3276 = vmatprep.subr.mxu0 %v2861
    %3277 = vmatpush1.msra.mxu0 %v2860
    %3278 = vmatprep.subr.mxu0 %v2869
    %3279 = vmatpush1.msra.mxu0 %v2868
    %3280 = vmatprep.subr.mxu0 %v2877
    %3281 = vmatpush1.msra.mxu0 %v2876
    %3282 = vmatprep.subr.mxu0 %v2885
    %3283 = vmatpush1.msra.mxu0 %v2884
    %3284 = vmatprep.subr.mxu0 %v2893
    %3285 = vmatpush1.msra.mxu0 %v2892
    %3286 = vmatprep.subr.mxu0 %v2901
    %3287 = vmatpush1.msra.mxu0 %v2900
    %3288 = vmatprep.subr.mxu0 %v2909
    %3289 = vmatpush1.msra.mxu0 %v2908
    %3290 = vmatprep.subr.mxu0 %v2917
    %3291 = vmatpush1.msra.mxu0 %v2916
    %3292 = vmatprep.subr.mxu0 %v2925
    %3293 = vmatpush1.msra.mxu0 %v2924
    %3294 = vmatprep.mubr.f32.mxu0 %v2673
    %3295 = vmatmul.mubr.f32.gmra.mrb[0].mxu0 %v2672
    %v3296 = vpop.f32.mrb[0].mxu0
    %v3297 = vadd.f32 %v3193, %v3296
    %v3298 = vpop.f32.mrb[0].mxu0
    %v3299 = vadd.f32 %v3197, %v3298
    %3300 = vdwg.mxu0
    %3301 = vmatprep.subr.mxu0 %v2933
    %3302 = vmatpush1.msra.mxu0 %v2932
    %3303 = vmatprep.subr.mxu0 %v2941
    %3304 = vmatpush1.msra.mxu0 %v2940
    %3305 = vmatprep.subr.mxu0 %v2949
    %3306 = vmatpush1.msra.mxu0 %v2948
    %3307 = vmatprep.subr.mxu0 %v2957
    %3308 = vmatpush1.msra.mxu0 %v2956
    %3309 = vmatprep.subr.mxu0 %v2965
    %3310 = vmatpush1.msra.mxu0 %v2964
    %3311 = vmatprep.subr.mxu0 %v2973
    %3312 = vmatpush1.msra.mxu0 %v2972
    %3313 = vmatprep.subr.mxu0 %v2981
    %3314 = vmatpush1.msra.mxu0 %v2980
    %3315 = vmatprep.subr.mxu0 %v2989
    %3316 = vmatpush1.msra.mxu0 %v2988
    %3317 = vmatprep.subr.mxu0 %v2997
    %3318 = vmatpush1.msra.mxu0 %v2996
    %3319 = vmatprep.subr.mxu0 %v3005
    %3320 = vmatpush1.msra.mxu0 %v3004
    %3321 = vmatprep.subr.mxu0 %v3013
    %3322 = vmatpush1.msra.mxu0 %v3012
    %3323 = vmatprep.subr.mxu0 %v3021
    %3324 = vmatpush1.msra.mxu0 %v3020
    %3325 = vmatprep.subr.mxu0 %v3029
    %3326 = vmatpush1.msra.mxu0 %v3028
    %3327 = vmatprep.subr.mxu0 %v3037
    %3328 = vmatpush1.msra.mxu0 %v3036
    %3329 = vmatprep.subr.mxu0 %v3045
    %3330 = vmatpush1.msra.mxu0 %v3044
    %3331 = vmatprep.subr.mxu0 %v3053
    %3332 = vmatpush1.msra.mxu0 %v3052
    %3333 = vmatprep.subr.mxu0 %v3061
    %3334 = vmatpush1.msra.mxu0 %v3060
    %3335 = vmatprep.subr.mxu0 %v3069
    %3336 = vmatpush1.msra.mxu0 %v3068
    %3337 = vmatprep.subr.mxu0 %v3077
    %3338 = vmatpush1.msra.mxu0 %v3076
    %3339 = vmatprep.subr.mxu0 %v3085
    %3340 = vmatpush1.msra.mxu0 %v3084
    %3341 = vmatprep.subr.mxu0 %v3093
    %3342 = vmatpush1.msra.mxu0 %v3092
    %3343 = vmatprep.subr.mxu0 %v3101
    %3344 = vmatpush1.msra.mxu0 %v3100
    %3345 = vmatprep.subr.mxu0 %v3109
    %3346 = vmatpush1.msra.mxu0 %v3108
    %3347 = vmatprep.subr.mxu0 %v3117
    %3348 = vmatpush1.msra.mxu0 %v3116
    %3349 = vmatprep.subr.mxu0 %v3125
    %3350 = vmatpush1.msra.mxu0 %v3124
    %3351 = vmatprep.subr.mxu0 %v3133
    %3352 = vmatpush1.msra.mxu0 %v3132
    %3353 = vmatprep.subr.mxu0 %v3141
    %3354 = vmatpush1.msra.mxu0 %v3140
    %3355 = vmatprep.subr.mxu0 %v3149
    %3356 = vmatpush1.msra.mxu0 %v3148
    %3357 = vmatprep.subr.mxu0 %v3157
    %3358 = vmatpush1.msra.mxu0 %v3156
    %3359 = vmatprep.subr.mxu0 %v3165
    %3360 = vmatpush1.msra.mxu0 %v3164
    %3361 = vmatprep.subr.mxu0 %v3173
    %3362 = vmatpush1.msra.mxu0 %v3172
    %3363 = vmatprep.subr.mxu0 %v3181
    %3364 = vmatpush1.msra.mxu0 %v3180
    %3365 = vmatprep.mubr.f32.mxu0 %v2675
    %3366 = vmatmul.mubr.f32.gmra.mrb[0].mxu0 %v2674
    %v3367 = vpop.f32.mrb[0].mxu0
    %v3368 = vadd.f32 %v3297, %v3367
    %v3369 = vpop.f32.mrb[0].mxu0
    %v3370 = vadd.f32 %v3299, %v3369
    %3371 = vdwg.mxu0
    %3372 = vmatprep.subr.mxu0 %v2679
    %3373 = vmatpush1.msra.mxu0 %v2678
    %3374 = vmatprep.subr.mxu0 %v2687
    %3375 = vmatpush1.msra.mxu0 %v2686
    %3376 = vmatprep.subr.mxu0 %v2695
    %3377 = vmatpush1.msra.mxu0 %v2694
    %3378 = vmatprep.subr.mxu0 %v2703
    %3379 = vmatpush1.msra.mxu0 %v2702
    %3380 = vmatprep.subr.mxu0 %v2711
    %3381 = vmatpush1.msra.mxu0 %v2710
    %3382 = vmatprep.subr.mxu0 %v2719
    %3383 = vmatpush1.msra.mxu0 %v2718
    %3384 = vmatprep.subr.mxu0 %v2727
    %3385 = vmatpush1.msra.mxu0 %v2726
    %3386 = vmatprep.subr.mxu0 %v2735
    %3387 = vmatpush1.msra.mxu0 %v2734
    %3388 = vmatprep.subr.mxu0 %v2743
    %3389 = vmatpush1.msra.mxu0 %v2742
    %3390 = vmatprep.subr.mxu0 %v2751
    %3391 = vmatpush1.msra.mxu0 %v2750
    %3392 = vmatprep.subr.mxu0 %v2759
    %3393 = vmatpush1.msra.mxu0 %v2758
    %3394 = vmatprep.subr.mxu0 %v2767
    %3395 = vmatpush1.msra.mxu0 %v2766
    %3396 = vmatprep.subr.mxu0 %v2775
    %3397 = vmatpush1.msra.mxu0 %v2774
    %3398 = vmatprep.subr.mxu0 %v2783
    %3399 = vmatpush1.msra.mxu0 %v2782
    %3400 = vmatprep.subr.mxu0 %v2791
    %3401 = vmatpush1.msra.mxu0 %v2790
    %3402 = vmatprep.subr.mxu0 %v2799
    %3403 = vmatpush1.msra.mxu0 %v2798
    %3404 = vmatprep.subr.mxu0 %v2807
    %3405 = vmatpush1.msra.mxu0 %v2806
    %3406 = vmatprep.subr.mxu0 %v2815
    %3407 = vmatpush1.msra.mxu0 %v2814
    %3408 = vmatprep.subr.mxu0 %v2823
    %3409 = vmatpush1.msra.mxu0 %v2822
    %3410 = vmatprep.subr.mxu0 %v2831
    %3411 = vmatpush1.msra.mxu0 %v2830
    %3412 = vmatprep.subr.mxu0 %v2839
    %3413 = vmatpush1.msra.mxu0 %v2838
    %3414 = vmatprep.subr.mxu0 %v2847
    %3415 = vmatpush1.msra.mxu0 %v2846
    %3416 = vmatprep.subr.mxu0 %v2855
    %3417 = vmatpush1.msra.mxu0 %v2854
    %3418 = vmatprep.subr.mxu0 %v2863
    %3419 = vmatpush1.msra.mxu0 %v2862
    %3420 = vmatprep.subr.mxu0 %v2871
    %3421 = vmatpush1.msra.mxu0 %v2870
    %3422 = vmatprep.subr.mxu0 %v2879
    %3423 = vmatpush1.msra.mxu0 %v2878
    %3424 = vmatprep.subr.mxu0 %v2887
    %3425 = vmatpush1.msra.mxu0 %v2886
    %3426 = vmatprep.subr.mxu0 %v2895
    %3427 = vmatpush1.msra.mxu0 %v2894
    %3428 = vmatprep.subr.mxu0 %v2903
    %3429 = vmatpush1.msra.mxu0 %v2902
    %3430 = vmatprep.subr.mxu0 %v2911
    %3431 = vmatpush1.msra.mxu0 %v2910
    %3432 = vmatprep.subr.mxu0 %v2919
    %3433 = vmatpush1.msra.mxu0 %v2918
    %3434 = vmatprep.subr.mxu0 %v2927
    %3435 = vmatpush1.msra.mxu0 %v2926
    %3436 = vmatprep.mubr.f32.mxu0 %v2673
    %3437 = vmatmul.mubr.f32.gmra.mrb[0].mxu0 %v2672
    %v3438 = vpop.f32.mrb[0].mxu0
    %v3439 = vadd.f32 %v3201, %v3438
    %v3440 = vpop.f32.mrb[0].mxu0
    %v3441 = vadd.f32 %v3205, %v3440
    %3442 = vdwg.mxu0
    %3443 = vmatprep.subr.mxu0 %v2935
    %3444 = vmatpush1.msra.mxu0 %v2934
    %3445 = vmatprep.subr.mxu0 %v2943
    %3446 = vmatpush1.msra.mxu0 %v2942
    %3447 = vmatprep.subr.mxu0 %v2951
    %3448 = vmatpush1.msra.mxu0 %v2950
    %3449 = vmatprep.subr.mxu0 %v2959
    %3450 = vmatpush1.msra.mxu0 %v2958
    %3451 = vmatprep.subr.mxu0 %v2967
    %3452 = vmatpush1.msra.mxu0 %v2966
    %3453 = vmatprep.subr.mxu0 %v2975
    %3454 = vmatpush1.msra.mxu0 %v2974
    %3455 = vmatprep.subr.mxu0 %v2983
    %3456 = vmatpush1.msra.mxu0 %v2982
    %3457 = vmatprep.subr.mxu0 %v2991
    %3458 = vmatpush1.msra.mxu0 %v2990
    %3459 = vmatprep.subr.mxu0 %v2999
    %3460 = vmatpush1.msra.mxu0 %v2998
    %3461 = vmatprep.subr.mxu0 %v3007
    %3462 = vmatpush1.msra.mxu0 %v3006
    %3463 = vmatprep.subr.mxu0 %v3015
    %3464 = vmatpush1.msra.mxu0 %v3014
    %3465 = vmatprep.subr.mxu0 %v3023
    %3466 = vmatpush1.msra.mxu0 %v3022
    %3467 = vmatprep.subr.mxu0 %v3031
    %3468 = vmatpush1.msra.mxu0 %v3030
    %3469 = vmatprep.subr.mxu0 %v3039
    %3470 = vmatpush1.msra.mxu0 %v3038
    %3471 = vmatprep.subr.mxu0 %v3047
    %3472 = vmatpush1.msra.mxu0 %v3046
    %3473 = vmatprep.subr.mxu0 %v3055
    %3474 = vmatpush1.msra.mxu0 %v3054
    %3475 = vmatprep.subr.mxu0 %v3063
    %3476 = vmatpush1.msra.mxu0 %v3062
    %3477 = vmatprep.subr.mxu0 %v3071
    %3478 = vmatpush1.msra.mxu0 %v3070
    %3479 = vmatprep.subr.mxu0 %v3079
    %3480 = vmatpush1.msra.mxu0 %v3078
    %3481 = vmatprep.subr.mxu0 %v3087
    %3482 = vmatpush1.msra.mxu0 %v3086
    %3483 = vmatprep.subr.mxu0 %v3095
    %3484 = vmatpush1.msra.mxu0 %v3094
    %3485 = vmatprep.subr.mxu0 %v3103
    %3486 = vmatpush1.msra.mxu0 %v3102
    %3487 = vmatprep.subr.mxu0 %v3111
    %3488 = vmatpush1.msra.mxu0 %v3110
    %3489 = vmatprep.subr.mxu0 %v3119
    %3490 = vmatpush1.msra.mxu0 %v3118
    %3491 = vmatprep.subr.mxu0 %v3127
    %3492 = vmatpush1.msra.mxu0 %v3126
    %3493 = vmatprep.subr.mxu0 %v3135
    %3494 = vmatpush1.msra.mxu0 %v3134
    %3495 = vmatprep.subr.mxu0 %v3143
    %3496 = vmatpush1.msra.mxu0 %v3142
    %3497 = vmatprep.subr.mxu0 %v3151
    %3498 = vmatpush1.msra.mxu0 %v3150
    %3499 = vmatprep.subr.mxu0 %v3159
    %3500 = vmatpush1.msra.mxu0 %v3158
    %3501 = vmatprep.subr.mxu0 %v3167
    %3502 = vmatpush1.msra.mxu0 %v3166
    %3503 = vmatprep.subr.mxu0 %v3175
    %3504 = vmatpush1.msra.mxu0 %v3174
    %3505 = vmatprep.subr.mxu0 %v3183
    %3506 = vmatpush1.msra.mxu0 %v3182
    %3507 = vmatprep.mubr.f32.mxu0 %v2675
    %3508 = vmatmul.mubr.f32.gmra.mrb[0].mxu0 %v2674
    %v3509 = vpop.f32.mrb[0].mxu0
    %v3510 = vadd.f32 %v3439, %v3509
    %v3511 = vpop.f32.mrb[0].mxu0
    %v3512 = vadd.f32 %v3441, %v3511
    %3513 = vdwg.mxu0
    %3514 = vmatprep.subr.mxu0 %v2681
    %3515 = vmatpush1.msra.mxu0 %v2680
    %3516 = vmatprep.subr.mxu0 %v2689
    %3517 = vmatpush1.msra.mxu0 %v2688
    %3518 = vmatprep.subr.mxu0 %v2697
    %3519 = vmatpush1.msra.mxu0 %v2696
    %3520 = vmatprep.subr.mxu0 %v2705
    %3521 = vmatpush1.msra.mxu0 %v2704
    %3522 = vmatprep.subr.mxu0 %v2713
    %3523 = vmatpush1.msra.mxu0 %v2712
    %3524 = vmatprep.subr.mxu0 %v2721
    %3525 = vmatpush1.msra.mxu0 %v2720
    %3526 = vmatprep.subr.mxu0 %v2729
    %3527 = vmatpush1.msra.mxu0 %v2728
    %3528 = vmatprep.subr.mxu0 %v2737
    %3529 = vmatpush1.msra.mxu0 %v2736
    %3530 = vmatprep.subr.mxu0 %v2745
    %3531 = vmatpush1.msra.mxu0 %v2744
    %3532 = vmatprep.subr.mxu0 %v2753
    %3533 = vmatpush1.msra.mxu0 %v2752
    %3534 = vmatprep.subr.mxu0 %v2761
    %3535 = vmatpush1.msra.mxu0 %v2760
    %3536 = vmatprep.subr.mxu0 %v2769
    %3537 = vmatpush1.msra.mxu0 %v2768
    %3538 = vmatprep.subr.mxu0 %v2777
    %3539 = vmatpush1.msra.mxu0 %v2776
    %3540 = vmatprep.subr.mxu0 %v2785
    %3541 = vmatpush1.msra.mxu0 %v2784
    %3542 = vmatprep.subr.mxu0 %v2793
    %3543 = vmatpush1.msra.mxu0 %v2792
    %3544 = vmatprep.subr.mxu0 %v2801
    %3545 = vmatpush1.msra.mxu0 %v2800
    %3546 = vmatprep.subr.mxu0 %v2809
    %3547 = vmatpush1.msra.mxu0 %v2808
    %3548 = vmatprep.subr.mxu0 %v2817
    %3549 = vmatpush1.msra.mxu0 %v2816
    %3550 = vmatprep.subr.mxu0 %v2825
    %3551 = vmatpush1.msra.mxu0 %v2824
    %3552 = vmatprep.subr.mxu0 %v2833
    %3553 = vmatpush1.msra.mxu0 %v2832
    %3554 = vmatprep.subr.mxu0 %v2841
    %3555 = vmatpush1.msra.mxu0 %v2840
    %3556 = vmatprep.subr.mxu0 %v2849
    %3557 = vmatpush1.msra.mxu0 %v2848
    %3558 = vmatprep.subr.mxu0 %v2857
    %3559 = vmatpush1.msra.mxu0 %v2856
    %3560 = vmatprep.subr.mxu0 %v2865
    %3561 = vmatpush1.msra.mxu0 %v2864
    %3562 = vmatprep.subr.mxu0 %v2873
    %3563 = vmatpush1.msra.mxu0 %v2872
    %3564 = vmatprep.subr.mxu0 %v2881
    %3565 = vmatpush1.msra.mxu0 %v2880
    %3566 = vmatprep.subr.mxu0 %v2889
    %3567 = vmatpush1.msra.mxu0 %v2888
    %3568 = vmatprep.subr.mxu0 %v2897
    %3569 = vmatpush1.msra.mxu0 %v2896
    %3570 = vmatprep.subr.mxu0 %v2905
    %3571 = vmatpush1.msra.mxu0 %v2904
    %3572 = vmatprep.subr.mxu0 %v2913
    %3573 = vmatpush1.msra.mxu0 %v2912
    %3574 = vmatprep.subr.mxu0 %v2921
    %3575 = vmatpush1.msra.mxu0 %v2920
    %3576 = vmatprep.subr.mxu0 %v2929
    %3577 = vmatpush1.msra.mxu0 %v2928
    %3578 = vmatprep.mubr.f32.mxu0 %v2673
    %3579 = vmatmul.mubr.f32.gmra.mrb[0].mxu0 %v2672
    %v3580 = vpop.f32.mrb[0].mxu0
    %v3581 = vadd.f32 %v3209, %v3580
    %v3582 = vpop.f32.mrb[0].mxu0
    %v3583 = vadd.f32 %v3213, %v3582
    %3584 = vdwg.mxu0
    %3585 = vmatprep.subr.mxu0 %v2937
    %3586 = vmatpush1.msra.mxu0 %v2936
    %3587 = vmatprep.subr.mxu0 %v2945
    %3588 = vmatpush1.msra.mxu0 %v2944
    %3589 = vmatprep.subr.mxu0 %v2953
    %3590 = vmatpush1.msra.mxu0 %v2952
    %3591 = vmatprep.subr.mxu0 %v2961
    %3592 = vmatpush1.msra.mxu0 %v2960
    %3593 = vmatprep.subr.mxu0 %v2969
    %3594 = vmatpush1.msra.mxu0 %v2968
    %3595 = vmatprep.subr.mxu0 %v2977
    %3596 = vmatpush1.msra.mxu0 %v2976
    %3597 = vmatprep.subr.mxu0 %v2985
    %3598 = vmatpush1.msra.mxu0 %v2984
    %3599 = vmatprep.subr.mxu0 %v2993
    %3600 = vmatpush1.msra.mxu0 %v2992
    %3601 = vmatprep.subr.mxu0 %v3001
    %3602 = vmatpush1.msra.mxu0 %v3000
    %3603 = vmatprep.subr.mxu0 %v3009
    %3604 = vmatpush1.msra.mxu0 %v3008
    %3605 = vmatprep.subr.mxu0 %v3017
    %3606 = vmatpush1.msra.mxu0 %v3016
    %3607 = vmatprep.subr.mxu0 %v3025
    %3608 = vmatpush1.msra.mxu0 %v3024
    %3609 = vmatprep.subr.mxu0 %v3033
    %3610 = vmatpush1.msra.mxu0 %v3032
    %3611 = vmatprep.subr.mxu0 %v3041
    %3612 = vmatpush1.msra.mxu0 %v3040
    %3613 = vmatprep.subr.mxu0 %v3049
    %3614 = vmatpush1.msra.mxu0 %v3048
    %3615 = vmatprep.subr.mxu0 %v3057
    %3616 = vmatpush1.msra.mxu0 %v3056
    %3617 = vmatprep.subr.mxu0 %v3065
    %3618 = vmatpush1.msra.mxu0 %v3064
    %3619 = vmatprep.subr.mxu0 %v3073
    %3620 = vmatpush1.msra.mxu0 %v3072
    %3621 = vmatprep.subr.mxu0 %v3081
    %3622 = vmatpush1.msra.mxu0 %v3080
    %3623 = vmatprep.subr.mxu0 %v3089
    %3624 = vmatpush1.msra.mxu0 %v3088
    %3625 = vmatprep.subr.mxu0 %v3097
    %3626 = vmatpush1.msra.mxu0 %v3096
    %3627 = vmatprep.subr.mxu0 %v3105
    %3628 = vmatpush1.msra.mxu0 %v3104
    %3629 = vmatprep.subr.mxu0 %v3113
    %3630 = vmatpush1.msra.mxu0 %v3112
    %3631 = vmatprep.subr.mxu0 %v3121
    %3632 = vmatpush1.msra.mxu0 %v3120
    %3633 = vmatprep.subr.mxu0 %v3129
    %3634 = vmatpush1.msra.mxu0 %v3128
    %3635 = vmatprep.subr.mxu0 %v3137
    %3636 = vmatpush1.msra.mxu0 %v3136
    %3637 = vmatprep.subr.mxu0 %v3145
    %3638 = vmatpush1.msra.mxu0 %v3144
    %3639 = vmatprep.subr.mxu0 %v3153
    %3640 = vmatpush1.msra.mxu0 %v3152
    %3641 = vmatprep.subr.mxu0 %v3161
    %3642 = vmatpush1.msra.mxu0 %v3160
    %3643 = vmatprep.subr.mxu0 %v3169
    %3644 = vmatpush1.msra.mxu0 %v3168
    %3645 = vmatprep.subr.mxu0 %v3177
    %3646 = vmatpush1.msra.mxu0 %v3176
    %3647 = vmatprep.subr.mxu0 %v3185
    %3648 = vmatpush1.msra.mxu0 %v3184
    %3649 = vmatprep.mubr.f32.mxu0 %v2675
    %3650 = vmatmul.mubr.f32.gmra.mrb[0].mxu0 %v2674
    %v3651 = vpop.f32.mrb[0].mxu0
    %v3652 = vadd.f32 %v3581, %v3651
    %v3653 = vpop.f32.mrb[0].mxu0
    %v3654 = vadd.f32 %v3583, %v3653
    %3655 = vdwg.mxu0
    %3656 = vmatprep.subr.mxu0 %v2683
    %3657 = vmatpush1.msra.mxu0 %v2682
    %3658 = vmatprep.subr.mxu0 %v2691
    %3659 = vmatpush1.msra.mxu0 %v2690
    %3660 = vmatprep.subr.mxu0 %v2699
    %3661 = vmatpush1.msra.mxu0 %v2698
    %3662 = vmatprep.subr.mxu0 %v2707
    %3663 = vmatpush1.msra.mxu0 %v2706
    %3664 = vmatprep.subr.mxu0 %v2715
    %3665 = vmatpush1.msra.mxu0 %v2714
    %3666 = vmatprep.subr.mxu0 %v2723
    %3667 = vmatpush1.msra.mxu0 %v2722
    %3668 = vmatprep.subr.mxu0 %v2731
    %3669 = vmatpush1.msra.mxu0 %v2730
    %3670 = vmatprep.subr.mxu0 %v2739
    %3671 = vmatpush1.msra.mxu0 %v2738
    %3672 = vmatprep.subr.mxu0 %v2747
    %3673 = vmatpush1.msra.mxu0 %v2746
    %3674 = vmatprep.subr.mxu0 %v2755
    %3675 = vmatpush1.msra.mxu0 %v2754
    %3676 = vmatprep.subr.mxu0 %v2763
    %3677 = vmatpush1.msra.mxu0 %v2762
    %3678 = vmatprep.subr.mxu0 %v2771
    %3679 = vmatpush1.msra.mxu0 %v2770
    %3680 = vmatprep.subr.mxu0 %v2779
    %3681 = vmatpush1.msra.mxu0 %v2778
    %3682 = vmatprep.subr.mxu0 %v2787
    %3683 = vmatpush1.msra.mxu0 %v2786
    %3684 = vmatprep.subr.mxu0 %v2795
    %3685 = vmatpush1.msra.mxu0 %v2794
    %3686 = vmatprep.subr.mxu0 %v2803
    %3687 = vmatpush1.msra.mxu0 %v2802
    %3688 = vmatprep.subr.mxu0 %v2811
    %3689 = vmatpush1.msra.mxu0 %v2810
    %3690 = vmatprep.subr.mxu0 %v2819
    %3691 = vmatpush1.msra.mxu0 %v2818
    %3692 = vmatprep.subr.mxu0 %v2827
    %3693 = vmatpush1.msra.mxu0 %v2826
    %3694 = vmatprep.subr.mxu0 %v2835
    %3695 = vmatpush1.msra.mxu0 %v2834
    %3696 = vmatprep.subr.mxu0 %v2843
    %3697 = vmatpush1.msra.mxu0 %v2842
    %3698 = vmatprep.subr.mxu0 %v2851
    %3699 = vmatpush1.msra.mxu0 %v2850
    %3700 = vmatprep.subr.mxu0 %v2859
    %3701 = vmatpush1.msra.mxu0 %v2858
    %3702 = vmatprep.subr.mxu0 %v2867
    %3703 = vmatpush1.msra.mxu0 %v2866
    %3704 = vmatprep.subr.mxu0 %v2875
    %3705 = vmatpush1.msra.mxu0 %v2874
    %3706 = vmatprep.subr.mxu0 %v2883
    %3707 = vmatpush1.msra.mxu0 %v2882
    %3708 = vmatprep.subr.mxu0 %v2891
    %3709 = vmatpush1.msra.mxu0 %v2890
    %3710 = vmatprep.subr.mxu0 %v2899
    %3711 = vmatpush1.msra.mxu0 %v2898
    %3712 = vmatprep.subr.mxu0 %v2907
    %3713 = vmatpush1.msra.mxu0 %v2906
    %3714 = vmatprep.subr.mxu0 %v2915
    %3715 = vmatpush1.msra.mxu0 %v2914
    %3716 = vmatprep.subr.mxu0 %v2923
    %3717 = vmatpush1.msra.mxu0 %v2922
    %3718 = vmatprep.subr.mxu0 %v2931
    %3719 = vmatpush1.msra.mxu0 %v2930
    %3720 = vmatprep.mubr.f32.mxu0 %v2673
    %3721 = vmatmul.mubr.f32.gmra.mrb[0].mxu0 %v2672
    %v3722 = vpop.f32.mrb[0].mxu0
    %v3723 = vadd.f32 %v3217, %v3722
    %v3724 = vpop.f32.mrb[0].mxu0
    %v3725 = vadd.f32 %v3221, %v3724
    %3726 = vdwg.mxu0
    %3727 = vmatprep.subr.mxu0 %v2939
    %3728 = vmatpush1.msra.mxu0 %v2938
    %3729 = vmatprep.subr.mxu0 %v2947
    %3730 = vmatpush1.msra.mxu0 %v2946
    %3731 = vmatprep.subr.mxu0 %v2955
    %3732 = vmatpush1.msra.mxu0 %v2954
    %3733 = vmatprep.subr.mxu0 %v2963
    %3734 = vmatpush1.msra.mxu0 %v2962
    %3735 = vmatprep.subr.mxu0 %v2971
    %3736 = vmatpush1.msra.mxu0 %v2970
    %3737 = vmatprep.subr.mxu0 %v2979
    %3738 = vmatpush1.msra.mxu0 %v2978
    %3739 = vmatprep.subr.mxu0 %v2987
    %3740 = vmatpush1.msra.mxu0 %v2986
    %3741 = vmatprep.subr.mxu0 %v2995
    %3742 = vmatpush1.msra.mxu0 %v2994
    %3743 = vmatprep.subr.mxu0 %v3003
    %3744 = vmatpush1.msra.mxu0 %v3002
    %3745 = vmatprep.subr.mxu0 %v3011
    %3746 = vmatpush1.msra.mxu0 %v3010
    %3747 = vmatprep.subr.mxu0 %v3019
    %3748 = vmatpush1.msra.mxu0 %v3018
    %3749 = vmatprep.subr.mxu0 %v3027
    %3750 = vmatpush1.msra.mxu0 %v3026
    %3751 = vmatprep.subr.mxu0 %v3035
    %3752 = vmatpush1.msra.mxu0 %v3034
    %3753 = vmatprep.subr.mxu0 %v3043
    %3754 = vmatpush1.msra.mxu0 %v3042
    %3755 = vmatprep.subr.mxu0 %v3051
    %3756 = vmatpush1.msra.mxu0 %v3050
    %3757 = vmatprep.subr.mxu0 %v3059
    %3758 = vmatpush1.msra.mxu0 %v3058
    %3759 = vmatprep.subr.mxu0 %v3067
    %3760 = vmatpush1.msra.mxu0 %v3066
    %3761 = vmatprep.subr.mxu0 %v3075
    %3762 = vmatpush1.msra.mxu0 %v3074
    %3763 = vmatprep.subr.mxu0 %v3083
    %3764 = vmatpush1.msra.mxu0 %v3082
    %3765 = vmatprep.subr.mxu0 %v3091
    %3766 = vmatpush1.msra.mxu0 %v3090
    %3767 = vmatprep.subr.mxu0 %v3099
    %3768 = vmatpush1.msra.mxu0 %v3098
    %3769 = vmatprep.subr.mxu0 %v3107
    %3770 = vmatpush1.msra.mxu0 %v3106
    %3771 = vmatprep.subr.mxu0 %v3115
    %3772 = vmatpush1.msra.mxu0 %v3114
    %3773 = vmatprep.subr.mxu0 %v3123
    %3774 = vmatpush1.msra.mxu0 %v3122
    %3775 = vmatprep.subr.mxu0 %v3131
    %3776 = vmatpush1.msra.mxu0 %v3130
    %3777 = vmatprep.subr.mxu0 %v3139
    %3778 = vmatpush1.msra.mxu0 %v3138
    %3779 = vmatprep.subr.mxu0 %v3147
    %3780 = vmatpush1.msra.mxu0 %v3146
    %3781 = vmatprep.subr.mxu0 %v3155
    %3782 = vmatpush1.msra.mxu0 %v3154
    %3783 = vmatprep.subr.mxu0 %v3163
    %3784 = vmatpush1.msra.mxu0 %v3162
    %3785 = vmatprep.subr.mxu0 %v3171
    %3786 = vmatpush1.msra.mxu0 %v3170
    %3787 = vmatprep.subr.mxu0 %v3179
    %3788 = vmatpush1.msra.mxu0 %v3178
    %3789 = vmatprep.subr.mxu0 %v3187
    %3790 = vmatpush1.msra.mxu0 %v3186
    %3791 = vmatprep.mubr.f32.mxu0 %v2675
    %3792 = vmatmul.mubr.f32.gmra.mrb[0].mxu0 %v2674
    %v3793 = vpop.f32.mrb[0].mxu0
    %v3794 = vadd.f32 %v3723, %v3793
    %v3795 = vpop.f32.mrb[0].mxu0
    %v3796 = vadd.f32 %v3725, %v3795
    %3797 = vdwg.mxu0
    %v3798 = vld [vmem:[#allocation38] sm:$0xff]
    %v3799 = vld [vmem:[#allocation40] sm:$0xff]
    %v3800 = vsel %vm2517, %v3368, 0.0
    %v3801 = vrot.slane %v3800, 4
    %v3802 = vadd.f32 %v3800, %v3801
    %v3803 = vrot.slane %v3802, 2
    %v3804 = vadd.f32 %v3802, %v3803
    %v3805 = vrot.slane %v3804, 1
    %v3806 = vadd.f32 %v3804, %v3805
    %v3807 = vsel %vm2517, %v3370, 0.0
    %v3808 = vrot.slane %v3807, 4
    %v3809 = vadd.f32 %v3807, %v3808
    %v3810 = vrot.slane %v3809, 2
    %v3811 = vadd.f32 %v3809, %v3810
    %v3812 = vrot.slane %v3811, 1
    %v3813 = vadd.f32 %v3811, %v3812
    %v3814 = vsel %vm2517, %v3510, 0.0
    %v3815 = vrot.slane %v3814, 4
    %v3816 = vadd.f32 %v3814, %v3815
    %v3817 = vrot.slane %v3816, 2
    %v3818 = vadd.f32 %v3816, %v3817
    %v3819 = vrot.slane %v3818, 1
    %v3820 = vadd.f32 %v3818, %v3819
    %v3821 = vsel %vm2517, %v3512, 0.0
    %v3822 = vrot.slane %v3821, 4
    %v3823 = vadd.f32 %v3821, %v3822
    %v3824 = vrot.slane %v3823, 2
    %v3825 = vadd.f32 %v3823, %v3824
    %v3826 = vrot.slane %v3825, 1
    %v3827 = vadd.f32 %v3825, %v3826
    %v3828 = vsel %vm2517, %v3652, 0.0
    %v3829 = vrot.slane %v3828, 4
    %v3830 = vadd.f32 %v3828, %v3829
    %v3831 = vrot.slane %v3830, 2
    %v3832 = vadd.f32 %v3830, %v3831
    %v3833 = vrot.slane %v3832, 1
    %v3834 = vadd.f32 %v3832, %v3833
    %v3835 = vsel %vm2517, %v3654, 0.0
    %v3836 = vrot.slane %v3835, 4
    %v3837 = vadd.f32 %v3835, %v3836
    %v3838 = vrot.slane %v3837, 2
    %v3839 = vadd.f32 %v3837, %v3838
    %v3840 = vrot.slane %v3839, 1
    %v3841 = vadd.f32 %v3839, %v3840
    %v3842 = vsel %vm2517, %v3794, 0.0
    %v3843 = vrot.slane %v3842, 4
    %v3844 = vadd.f32 %v3842, %v3843
    %v3845 = vrot.slane %v3844, 2
    %v3846 = vadd.f32 %v3844, %v3845
    %v3847 = vrot.slane %v3846, 1
    %v3848 = vadd.f32 %v3846, %v3847
    %v3849 = vsel %vm2517, %v3796, 0.0
    %v3850 = vrot.slane %v3849, 4
    %v3851 = vadd.f32 %v3849, %v3850
    %v3852 = vrot.slane %v3851, 2
    %v3853 = vadd.f32 %v3851, %v3852
    %v3854 = vrot.slane %v3853, 1
    %v3855 = vadd.f32 %v3853, %v3854
    %v3856 = vmul.f32 %v3806, 0.5
    %v3857 = vmul.f32 %v3813, 0.5
    %v3858 = vmul.f32 %v3820, 0.5
    %v3859 = vmul.f32 %v3827, 0.5
    %v3860 = vmul.f32 %v3834, 0.5
    %v3861 = vmul.f32 %v3841, 0.5
    %v3862 = vmul.f32 %v3848, 0.5
    %v3863 = vmul.f32 %v3855, 0.5
    %v3864 = vmul.f32 %v3368, %v3368
    %v3865 = vmul.f32 %v3370, %v3370
    %v3866 = vmul.f32 %v3510, %v3510
    %v3867 = vmul.f32 %v3512, %v3512
    %v3868 = vmul.f32 %v3652, %v3652
    %v3869 = vmul.f32 %v3654, %v3654
    %v3870 = vmul.f32 %v3794, %v3794
    %v3871 = vmul.f32 %v3796, %v3796
    %v3872 = vsel %vm2517, %v3864, 0.0
    %v3873 = vrot.slane %v3872, 4
    %v3874 = vadd.f32 %v3872, %v3873
    %v3875 = vrot.slane %v3874, 2
    %v3876 = vadd.f32 %v3874, %v3875
    %v3877 = vrot.slane %v3876, 1
    %v3878 = vadd.f32 %v3876, %v3877
    %v3879 = vsel %vm2517, %v3865, 0.0
    %v3880 = vrot.slane %v3879, 4
    %v3881 = vadd.f32 %v3879, %v3880
    %v3882 = vrot.slane %v3881, 2
    %v3883 = vadd.f32 %v3881, %v3882
    %v3884 = vrot.slane %v3883, 1
    %v3885 = vadd.f32 %v3883, %v3884
    %v3886 = vsel %vm2517, %v3866, 0.0
    %v3887 = vrot.slane %v3886, 4
    %v3888 = vadd.f32 %v3886, %v3887
    %v3889 = vrot.slane %v3888, 2
    %v3890 = vadd.f32 %v3888, %v3889
    %v3891 = vrot.slane %v3890, 1
    %v3892 = vadd.f32 %v3890, %v3891
    %v3893 = vsel %vm2517, %v3867, 0.0
    %v3894 = vrot.slane %v3893, 4
    %v3895 = vadd.f32 %v3893, %v3894
    %v3896 = vrot.slane %v3895, 2
    %v3897 = vadd.f32 %v3895, %v3896
    %v3898 = vrot.slane %v3897, 1
    %v3899 = vadd.f32 %v3897, %v3898
    %v3900 = vsel %vm2517, %v3868, 0.0
    %v3901 = vrot.slane %v3900, 4
    %v3902 = vadd.f32 %v3900, %v3901
    %v3903 = vrot.slane %v3902, 2
    %v3904 = vadd.f32 %v3902, %v3903
    %v3905 = vrot.slane %v3904, 1
    %v3906 = vadd.f32 %v3904, %v3905
    %v3907 = vsel %vm2517, %v3869, 0.0
    %v3908 = vrot.slane %v3907, 4
    %v3909 = vadd.f32 %v3907, %v3908
    %v3910 = vrot.slane %v3909, 2
    %v3911 = vadd.f32 %v3909, %v3910
    %v3912 = vrot.slane %v3911, 1
    %v3913 = vadd.f32 %v3911, %v3912
    %v3914 = vsel %vm2517, %v3870, 0.0
    %v3915 = vrot.slane %v3914, 4
    %v3916 = vadd.f32 %v3914, %v3915
    %v3917 = vrot.slane %v3916, 2
    %v3918 = vadd.f32 %v3916, %v3917
    %v3919 = vrot.slane %v3918, 1
    %v3920 = vadd.f32 %v3918, %v3919
    %v3921 = vsel %vm2517, %v3871, 0.0
    %v3922 = vrot.slane %v3921, 4
    %v3923 = vadd.f32 %v3921, %v3922
    %v3924 = vrot.slane %v3923, 2
    %v3925 = vadd.f32 %v3923, %v3924
    %v3926 = vrot.slane %v3925, 1
    %v3927 = vadd.f32 %v3925, %v3926
    %v3928 = vmul.f32 %v3878, 0.5
    %v3929 = vmul.f32 %v3885, 0.5
    %v3930 = vmul.f32 %v3892, 0.5
    %v3931 = vmul.f32 %v3899, 0.5
    %v3932 = vmul.f32 %v3906, 0.5
    %v3933 = vmul.f32 %v3913, 0.5
    %v3934 = vmul.f32 %v3920, 0.5
    %v3935 = vmul.f32 %v3927, 0.5
    %v3936 = vmul.f32 %v3856, %v3856
    %v3937 = vmul.f32 %v3857, %v3857
    %v3938 = vmul.f32 %v3858, %v3858
    %v3939 = vmul.f32 %v3859, %v3859
    %v3940 = vmul.f32 %v3860, %v3860
    %v3941 = vmul.f32 %v3861, %v3861
    %v3942 = vmul.f32 %v3862, %v3862
    %v3943 = vmul.f32 %v3863, %v3863
    %v3944 = vsub.f32 %v3928, %v3936
    %v3945 = vsub.f32 %v3929, %v3937
    %v3946 = vsub.f32 %v3930, %v3938
    %v3947 = vsub.f32 %v3931, %v3939
    %v3948 = vsub.f32 %v3932, %v3940
    %v3949 = vsub.f32 %v3933, %v3941
    %v3950 = vsub.f32 %v3934, %v3942
    %v3951 = vsub.f32 %v3935, %v3943
    %v3952 = vmax.f32 %v3944, 0.0
    %v3953 = vmax.f32 %v3945, 0.0
    %v3954 = vmax.f32 %v3946, 0.0
    %v3955 = vmax.f32 %v3947, 0.0
    %v3956 = vmax.f32 %v3948, 0.0
    %v3957 = vmax.f32 %v3949, 0.0
    %v3958 = vmax.f32 %v3950, 0.0
    %v3959 = vmax.f32 %v3951, 0.0
    %v3960 = vsub.f32 %v3368, %v3856
    %v3961 = vsub.f32 %v3370, %v3857
    %v3962 = vsub.f32 %v3510, %v3858
    %v3963 = vsub.f32 %v3512, %v3859
    %v3964 = vsub.f32 %v3652, %v3860
    %v3965 = vsub.f32 %v3654, %v3861
    %v3966 = vsub.f32 %v3794, %v3862
    %v3967 = vsub.f32 %v3796, %v3863
    %v3968 = vadd.f32 %v3952, 1e-05
    %v3969 = vadd.f32 %v3953, 1e-05
    %v3970 = vadd.f32 %v3954, 1e-05
    %v3971 = vadd.f32 %v3955, 1e-05
    %v3972 = vadd.f32 %v3956, 1e-05
    %v3973 = vadd.f32 %v3957, 1e-05
    %v3974 = vadd.f32 %v3958, 1e-05
    %v3975 = vadd.f32 %v3959, 1e-05
    %v3976 = vrsqrt.pop %v3968
    %v3977 = vrsqrt.pop %v3969
    %v3978 = vrsqrt.pop %v3970
    %v3979 = vrsqrt.pop %v3971
    %v3980 = vrsqrt.pop %v3972
    %v3981 = vrsqrt.pop %v3973
    %v3982 = vrsqrt.pop %v3974
    %v3983 = vrsqrt.pop %v3975
    %v3984 = vmul.f32 %v3960, %v3976
    %v3985 = vmul.f32 %v3961, %v3977
    %v3986 = vmul.f32 %v3962, %v3978
    %v3987 = vmul.f32 %v3963, %v3979
    %v3988 = vmul.f32 %v3964, %v3980
    %v3989 = vmul.f32 %v3965, %v3981
    %v3990 = vmul.f32 %v3966, %v3982
    %v3991 = vmul.f32 %v3967, %v3983
    %v3993 = vlaneseq
    %v3994 = vshrl.u32 %v3993, 7
    %v3995 = vsub.s32 0, %v3994
    %v3996 = vrot.slane %v3798, %v3995
    %v3997 = vlaneseq
    %v3998 = vshrl.u32 %v3997, 7
    %v3999 = vsub.s32 1, %v3998
    %v4000 = vrot.slane %v3798, %v3999
    %v4001 = vlaneseq
    %v4002 = vshrl.u32 %v4001, 7
    %v4003 = vsub.s32 2, %v4002
    %v4004 = vrot.slane %v3798, %v4003
    %v4005 = vlaneseq
    %v4006 = vshrl.u32 %v4005, 7
    %v4007 = vsub.s32 3, %v4006
    %v4008 = vrot.slane %v3798, %v4007
    %v4009 = vlaneseq
    %v4010 = vshrl.u32 %v4009, 7
    %v4011 = vsub.s32 4, %v4010
    %v4012 = vrot.slane %v3798, %v4011
    %v4013 = vlaneseq
    %v4014 = vshrl.u32 %v4013, 7
    %v4015 = vsub.s32 5, %v4014
    %v4016 = vrot.slane %v3798, %v4015
    %v4017 = vlaneseq
    %v4018 = vshrl.u32 %v4017, 7
    %v4019 = vsub.s32 6, %v4018
    %v4020 = vrot.slane %v3798, %v4019
    %v4021 = vlaneseq
    %v4022 = vshrl.u32 %v4021, 7
    %v4023 = vsub.s32 7, %v4022
    %v4024 = vrot.slane %v3798, %v4023
    %v4033 = vmul.f32 %v3984, %v3996
    %v4034 = vmul.f32 %v3985, %v4000
    %v4035 = vmul.f32 %v3986, %v4004
    %v4036 = vmul.f32 %v3987, %v4008
    %v4037 = vmul.f32 %v3988, %v4012
    %v4038 = vmul.f32 %v3989, %v4016
    %v4039 = vmul.f32 %v3990, %v4020
    %v4040 = vmul.f32 %v3991, %v4024
    %v4042 = vlaneseq
    %v4043 = vshrl.u32 %v4042, 7
    %v4044 = vsub.s32 0, %v4043
    %v4045 = vrot.slane %v3799, %v4044
    %v4046 = vlaneseq
    %v4047 = vshrl.u32 %v4046, 7
    %v4048 = vsub.s32 1, %v4047
    %v4049 = vrot.slane %v3799, %v4048
    %v4050 = vlaneseq
    %v4051 = vshrl.u32 %v4050, 7
    %v4052 = vsub.s32 2, %v4051
    %v4053 = vrot.slane %v3799, %v4052
    %v4054 = vlaneseq
    %v4055 = vshrl.u32 %v4054, 7
    %v4056 = vsub.s32 3, %v4055
    %v4057 = vrot.slane %v3799, %v4056
    %v4058 = vlaneseq
    %v4059 = vshrl.u32 %v4058, 7
    %v4060 = vsub.s32 4, %v4059
    %v4061 = vrot.slane %v3799, %v4060
    %v4062 = vlaneseq
    %v4063 = vshrl.u32 %v4062, 7
    %v4064 = vsub.s32 5, %v4063
    %v4065 = vrot.slane %v3799, %v4064
    %v4066 = vlaneseq
    %v4067 = vshrl.u32 %v4066, 7
    %v4068 = vsub.s32 6, %v4067
    %v4069 = vrot.slane %v3799, %v4068
    %v4070 = vlaneseq
    %v4071 = vshrl.u32 %v4070, 7
    %v4072 = vsub.s32 7, %v4071
    %v4073 = vrot.slane %v3799, %v4072
    %v4082 = vadd.f32 %v4033, %v4045
    %v4083 = vadd.f32 %v4034, %v4049
    %v4084 = vadd.f32 %v4035, %v4053
    %v4085 = vadd.f32 %v4036, %v4057
    %v4086 = vadd.f32 %v4037, %v4061
    %v4087 = vadd.f32 %v4038, %v4065
    %v4088 = vadd.f32 %v4039, %v4069
    %v4089 = vadd.f32 %v4040, %v4073
    %vm4090 = vcmp.ge.f32.partialorder %v4082, 0.0
    %vm4091 = vcmp.ge.f32.partialorder %v4083, 0.0
    %vm4092 = vcmp.ge.f32.partialorder %v4084, 0.0
    %vm4093 = vcmp.ge.f32.partialorder %v4085, 0.0
    %vm4094 = vcmp.ge.f32.partialorder %v4086, 0.0
    %vm4095 = vcmp.ge.f32.partialorder %v4087, 0.0
    %vm4096 = vcmp.ge.f32.partialorder %v4088, 0.0
    %vm4097 = vcmp.ge.f32.partialorder %v4089, 0.0
    %v4098 = vmul.f32 %v4082, 0.2
    %v4099 = vmul.f32 %v4083, 0.2
    %v4100 = vmul.f32 %v4084, 0.2
    %v4101 = vmul.f32 %v4085, 0.2
    %v4102 = vmul.f32 %v4086, 0.2
    %v4103 = vmul.f32 %v4087, 0.2
    %v4104 = vmul.f32 %v4088, 0.2
    %v4105 = vmul.f32 %v4089, 0.2
    %v4106 = vsel %vm4090, %v4082, %v4098
    %v4107 = vsel %vm4091, %v4083, %v4099
    %v4108 = vsel %vm4092, %v4084, %v4100
    %v4109 = vsel %vm4093, %v4085, %v4101
    %v4110 = vsel %vm4094, %v4086, %v4102
    %v4111 = vsel %vm4095, %v4087, %v4103
    %v4112 = vsel %vm4096, %v4088, %v4104
    %v4113 = vsel %vm4097, %v4089, %v4105
    %v4114 = vpack.c.bf16 %v4106, %v4106
    %v4115 = vpack.c.bf16 %v4107, %v4107
    %v4116 = vpack.c.bf16 %v4108, %v4108
    %v4117 = vpack.c.bf16 %v4109, %v4109
    %v4118 = vpack.c.bf16 %v4110, %v4110
    %v4119 = vpack.c.bf16 %v4111, %v4111
    %v4120 = vpack.c.bf16 %v4112, %v4112
    %v4121 = vpack.c.bf16 %v4113, %v4113
    %v4130 = vcombine.low %v4114, %v4115
    %v4131 = vcombine.low %v4116, %v4117
    %v4132 = vcombine.low %v4118, %v4119
    %v4133 = vcombine.low %v4120, %v4121
    %v4135 = vunpack.c.l.s4 1966171168
    %v4136 = vunpack.c.0.s8 %v4135
    %v4137 = vlaneseq
    %v4138 = vshrl.u32 %v4137, 7
    %v4139 = vsub.s32 %v4136, %v4138
    %v4140 = vrot.slane %v4130, %v4139
    %v4142 = vunpack.c.l.s4 1966171168
    %v4143 = vunpack.c.0.s8 %v4142
    %v4144 = vlaneseq
    %v4145 = vshrl.u32 %v4144, 7
    %v4146 = vsub.s32 %v4143, %v4145
    %v4147 = vrot.slane %v4131, %v4146
    %v4149 = vunpack.c.l.s4 1966171168
    %v4150 = vunpack.c.0.s8 %v4149
    %v4151 = vlaneseq
    %v4152 = vshrl.u32 %v4151, 7
    %v4153 = vsub.s32 %v4150, %v4152
    %v4154 = vrot.slane %v4132, %v4153
    %v4156 = vunpack.c.l.s4 1966171168
    %v4157 = vunpack.c.0.s8 %v4156
    %v4158 = vlaneseq
    %v4159 = vshrl.u32 %v4158, 7
    %v4160 = vsub.s32 %v4157, %v4159
    %v4161 = vrot.slane %v4133, %v4160
    %v4162 = vcombine.low %v4140, %v4147
    %v4163 = vcombine.low %v4154, %v4161
    %v4165 = vunpack.c.l.s4 1966171168
    %v4166 = vunpack.c.0.s8 %v4165
    %v4167 = vlaneseq
    %v4168 = vshrl.u32 %v4167, 7
    %v4169 = vsub.s32 %v4166, %v4168
    %v4170 = vrot.slane %v4162, %v4169
    %v4172 = vunpack.c.l.s4 1966171168
    %v4173 = vunpack.c.0.s8 %v4172
    %v4174 = vlaneseq
    %v4175 = vshrl.u32 %v4174, 7
    %v4176 = vsub.s32 %v4173, %v4175
    %v4177 = vrot.slane %v4163, %v4176
    %v4178 = vcombine.low %v4170, %v4177
    %4180 = vst [vmem:[%s28] sm:$0xff] %v4178
    // Predicated region
    $region206: #{pointvae_forward.2} parent=1 // pred_check
      _
    $region207: #{pointvae_forward.2} parent=1 // pred_check_branch
      %4182 = sbr.rel (0) target = $region209
    $region208: #{pointvae_forward.2} parent=1 // pred_region
      %s4184 = ssub.s32 64, 64
      %4185 = vsyncadd [#allocation4], %s4184
      %s4187 = sshll.u32 [#allocation41], 4
      %s4188 = int_to_ptr.vmem [resolvable:$true] %s4187
      %4190 = dma.vmem_to_hbm [thread:$0]  %s4188, 64, %s26, [#allocation4]
    $region209: #{pointvae_forward.2} parent=1 // pred_fallthru
      _
    // Predicated region
    $region210: #{pointvae_forward.2} parent=1 // pred_check
      _
    $region211: #{pointvae_forward.2} parent=1 // pred_check_branch
      %4192 = sbr.rel (0) target = $region213
    $region212: #{pointvae_forward.2} parent=1 // pred_region
      %s4194 = ssub.s32 64, 64
      %4195 = vsyncadd [#allocation43], %s4194
      %s4197 = sshll.u32 [#allocation42], 4
      %s4198 = int_to_ptr.vmem [resolvable:$true] %s4197
      %4200 = dma.vmem_to_hbm [thread:$0]  %s4198, 64, %s27, [#allocation43]
    $region213: #{pointvae_forward.2} parent=1 // pred_fallthru
      _
    // Predicated region
    $region214: #{pointvae_forward.2} parent=1 // pred_check
      _
    $region215: #{pointvae_forward.2} parent=1 // pred_check_branch
      %4202 = sbr.rel (0) target = $region217
    $region216: #{pointvae_forward.2} parent=1 // pred_region
      _
    $region217: #{pointvae_forward.2} parent=1 // pred_fallthru
      _
    // Predicated region
    $region218: #{pointvae_forward.2} parent=1 // pred_check
      _
    $region219: #{pointvae_forward.2} parent=1 // pred_check_branch
      %4204 = sbr.rel (0) target = $region221
    $region220: #{pointvae_forward.2} parent=1 // pred_region
      %4205 = dma.done [#allocation4], 64
    $region221: #{pointvae_forward.2} parent=1 // pred_fallthru
      _
    // Predicated region
    $region222: #{pointvae_forward.2} parent=1 // pred_check
      _
    $region223: #{pointvae_forward.2} parent=1 // pred_check_branch
      %4207 = sbr.rel (0) target = $region225
    $region224: #{pointvae_forward.2} parent=1 // pred_region
      %4208 = dma.done [#allocation43], 64
    $region225: #{pointvae_forward.2} parent=1 // pred_fallthru
      _
    // Predicated region
    $region226: #{pointvae_forward.2} parent=1 // pred_check
      _
    $region227: #{pointvae_forward.2} parent=1 // pred_check_branch
      %4210 = sbr.rel (0) target = $region229
    $region228: #{pointvae_forward.2} parent=1 // pred_region
      _
    $region229: #{pointvae_forward.2} parent=1 // pred_fallthru
      _
    %4211 = vsyncpa [#allocation3], 1
    %4212 = vsyncpa [#allocation6], 1
    %4213 = vsyncpa [#allocation9], 1
    %4214 = vsyncpa [#allocation12], 1
    %4215 = vsyncpa [#allocation15], 1
    %4216 = vsyncpa [#allocation18], 1
    %4217 = vsyncpa [#allocation21], 1
    %4218 = vsyncpa [#allocation24], 1
    %4219 = vsyncpa [#allocation27], 1
    %4220 = vsyncpa [#allocation30], 1
    %4221 = vsyncpa [#allocation33], 1
    %4222 = vsyncpa [#allocation36], 1
    %4223 = vsyncpa [#allocation39], 1
    %4224 = vsyncpa [#allocation4], 1
    %4225 = vsyncpa [#allocation43], 1

// kernel: pointvae_forward.3
$region0: #{pointvae_forward.3}
  #allocation0 [shape = 'u32[]', space=smem, size = 0x4, offset = 0x4, fixed_abs, tag = 'smem constant byte address 0x4 - core index']
  #allocation1 [shape = 'u32[144,128]{1,0:T(1,128)}', space=vmem, size = 0x12000, scoped, tag = 'internal scratch']
  %s0 = inlined_call_operand.vmem [shape: bf16[8,1024], index: 0, kind: input, shape index: {}]
  %s1 = inlined_call_operand.hbm [shape: bf16[1024,6144], index: 1, kind: input, shape index: {}]
  %s2 = inlined_call_operand.hbm [shape: f32[1,6144], index: 2, kind: input, shape index: {}]
  %s3 = inlined_call_operand.vmem [shape: f32[8,6144], index: 3, kind: output, shape index: {}]
  %s4 = sld [smem:[#allocation0]]
  $region53: #{pointvae_forward.3} parent=0
    _
  %s6 = ssub.s32 1, %s4
  %s7 = scalar_select 0, %s6, %s4
  $region1: #{pointvae_forward.3} parent=0
    #allocation2 [shape = 'u8[4194304]{0}', space=vmem, size = 0x400000, scoped, tag = 'input window, operand 1']
    #allocation3 [shape = 's32[2]{0}', space=sflag, size = 0x8, scoped, tag = 'scoped memory for pointvae_forward.3']
    #allocation4 [shape = 'u8[8192]{0}', space=vmem, size = 0x2000, scoped, tag = 'input window, operand 2']
    #allocation5 [shape = 's32[2]{0}', space=sflag, size = 0x8, scoped, tag = 'scoped memory for pointvae_forward.3']
    %8 = vsyncpa [#allocation3], 0
    %s9 = scalar_lea.sflag [#allocation3], 1
    %10 = vsyncpa %s9, 0
    %11 = vsyncpa [#allocation5], 0
    %s12 = scalar_lea.sflag [#allocation5], 1
    %13 = vsyncpa %s12, 0
    loop: start=0, step=1, limit=8
    $region2: #{pointvae_forward.3} parent=1 // loop_pre_header
      _
    $region3: #{pointvae_forward.3} parent=1 // loop_header
      %s15 = sphi 0, %s19
      %p16 = scmp.ge.s32.totalorder %s15, 8
      %s23 = sphi 0, %s23
      %s25 = sphi 0, %s23
      %s26 = sphi 0, %s25
      %s40 = sphi 0, %s26
      %s46 = sphi 0, %s48
      %s49 = sphi 0, %s46
      %s50 = sphi 0, %s49
      %s66 = sphi 0, %s50
      %s72 = sphi 0, %s74
      %s75 = sphi 0, %s72
      %s76 = sphi 0, %s75
      %s92 = sphi 0, %s76
      %s98 = sphi 0, %s100
      %s101 = sphi 0, %s98
      %s102 = sphi 0, %s101
      %s118 = sphi 0, %s102
    $region4: #{pointvae_forward.3} parent=1 // loop_header_branch
      %18 = sbr.rel (%p16) target = $region8
    $region5: #{pointvae_forward.3} parent=1 // loop_body
      %s20 = ssub.s32 %s15, 1
      %s21 = ssub.s32 %s15, 2
      %s22 = sadd.s32 %s15, 1
      %s24 = sadd.s32 %s23, 1
      %p27 = scmp.eq.s32.totalorder %s15, 5
      %p28 = scmp.ne.s32.totalorder %s23, %s25
      %p29 = scmp.eq.s32.totalorder %s15, 0
      %p30 = por %p28, %p29
      %p31 = scmp.ne.s32.totalorder %s23, %s25
      %p32 = scmp.eq.s32.totalorder %s20, 5
      %p33 = por %p31, %p32
      %p34 = scmp.ne.s32.totalorder %s25, %s26
      %p35 = scmp.eq.s32.totalorder %s20, 0
      %p36 = por %p34, %p35
      %p37 = scmp.ne.s32.totalorder %s25, %s26
      %p38 = scmp.eq.s32.totalorder %s21, 5
      %p39 = por %p37, %p38
      %p41 = scmp.ne.s32.totalorder %s26, %s40
      %p42 = scmp.eq.s32.totalorder %s21, 0
      %p43 = por %p41, %p42
      %s44 = ssub.s32 %s15, %s22
      %p45 = scmp.eq.s32.totalorder %s44, 0
      %s47 = sadd.s32 %s46, 1
      %s48 = scalar_select %p45, %s46, %s47
      %p51 = pneg %p45
      %p52 = scmp.eq.s32.totalorder %s15, 5
      %p53 = por %p51, %p52
      %p54 = scmp.ne.s32.totalorder %s46, %s49
      %p55 = scmp.eq.s32.totalorder %s15, 0
      %p56 = por %p54, %p55
      %p57 = scmp.ne.s32.totalorder %s46, %s49
      %p58 = scmp.eq.s32.totalorder %s20, 5
      %p59 = por %p57, %p58
      %p60 = scmp.ne.s32.totalorder %s49, %s50
      %p61 = scmp.eq.s32.totalorder %s20, 0
      %p62 = por %p60, %p61
      %p63 = scmp.ne.s32.totalorder %s49, %s50
      %p64 = scmp.eq.s32.totalorder %s21, 5
      %p65 = por %p63, %p64
      %p67 = scmp.ne.s32.totalorder %s50, %s66
      %p68 = scmp.eq.s32.totalorder %s21, 0
      %p69 = por %p67, %p68
      %s70 = ssub.s32 %s15, %s22
      %p71 = scmp.eq.s32.totalorder %s70, 0
      %s73 = sadd.s32 %s72, 1
      %s74 = scalar_select %p71, %s72, %s73
      %p77 = pneg %p71
      %p78 = scmp.eq.s32.totalorder %s15, 5
      %p79 = por %p77, %p78
      %p80 = scmp.ne.s32.totalorder %s72, %s75
      %p81 = scmp.eq.s32.totalorder %s15, 0
      %p82 = por %p80, %p81
      %p83 = scmp.ne.s32.totalorder %s72, %s75
      %p84 = scmp.eq.s32.totalorder %s20, 5
      %p85 = por %p83, %p84
      %p86 = scmp.ne.s32.totalorder %s75, %s76
      %p87 = scmp.eq.s32.totalorder %s20, 0
      %p88 = por %p86, %p87
      %p89 = scmp.ne.s32.totalorder %s75, %s76
      %p90 = scmp.eq.s32.totalorder %s21, 5
      %p91 = por %p89, %p90
      %p93 = scmp.ne.s32.totalorder %s76, %s92
      %p94 = scmp.eq.s32.totalorder %s21, 0
      %p95 = por %p93, %p94
      %s96 = ssub.s32 %s15, %s22
      %p97 = scmp.eq.s32.totalorder %s96, 0
      %s99 = sadd.s32 %s98, 1
      %s100 = scalar_select %p97, %s98, %s99
      %p103 = pneg %p97
      %p104 = scmp.eq.s32.totalorder %s15, 5
      %p105 = por %p103, %p104
      %p106 = scmp.ne.s32.totalorder %s98, %s101
      %p107 = scmp.eq.s32.totalorder %s15, 0
      %p108 = por %p106, %p107
      %p109 = scmp.ne.s32.totalorder %s98, %s101
      %p110 = scmp.eq.s32.totalorder %s20, 5
      %p111 = por %p109, %p110
      %p112 = scmp.ne.s32.totalorder %s101, %s102
      %p113 = scmp.eq.s32.totalorder %s20, 0
      %p114 = por %p112, %p113
      %p115 = scmp.ne.s32.totalorder %s101, %s102
      %p116 = scmp.eq.s32.totalorder %s21, 5
      %p117 = por %p115, %p116
      %p119 = scmp.ne.s32.totalorder %s102, %s118
      %p120 = scmp.eq.s32.totalorder %s21, 0
      %p121 = por %p119, %p120
      %p122 = scmp.le.s32.totalorder 1, %s15
      %p123 = scmp.lt.s32.totalorder %s15, 7
      %p124 = pnand %p122, %p123
      %p125 = pneg %p124
      // Predicated region
      $region9: #{pointvae_forward.3} parent=5 // pred_check
        _
      $region10: #{pointvae_forward.3} parent=5 // pred_check_branch
        %127 = sbr.rel (%p124) target = $region12
      $region11: #{pointvae_forward.3} parent=5 // pred_region
        %s128 = ssub.s32 %s15, 1
        // Predicated region
        $region13: #{pointvae_forward.3} parent=11 // pred_check
          %p129 = pneg %p36
        $region14: #{pointvae_forward.3} parent=11 // pred_check_branch
          %131 = sbr.rel (%p129) target = $region16
        $region15: #{pointvae_forward.3} parent=11 // pred_region
          _
        $region16: #{pointvae_forward.3} parent=11 // pred_fallthru
          _
      $region12: #{pointvae_forward.3} parent=5 // pred_fallthru
        _
      %p132 = scmp.lt.s32.totalorder %s15, 6
      // Predicated region
      $region17: #{pointvae_forward.3} parent=5 // pred_check
        %p133 = pneg %p132
      $region18: #{pointvae_forward.3} parent=5 // pred_check_branch
        %135 = sbr.rel (%p133) target = $region20
      $region19: #{pointvae_forward.3} parent=5 // pred_region
        // Predicated region
        $region21: #{pointvae_forward.3} parent=19 // pred_check
          %p136 = pneg %p56
        $region22: #{pointvae_forward.3} parent=19 // pred_check_branch
          %138 = sbr.rel (%p136) target = $region24
        $region23: #{pointvae_forward.3} parent=19 // pred_region
          %s139 = sand.u32 %s46, 1
          %s140 = scalar_lea.sflag [#allocation3], %s139
          %s141 = sand.u32 %s46, 1
          %s142 = smul.addr %s141, 4096
          %s143 = scalar_lea.vmem [#allocation2], %s142
          %s144 = smul.u32 8, %s15
          %s146 = ssub.s32 65536, 65536
          %147 = vsyncadd %s140, %s146
          %s148 = smul.addr %s144, 64
          %s149 = scalar_lea.hbm %s1, %s148
          %s150 = sshll.u32 %s143, 4
          %s151 = int_to_ptr.vmem [resolvable:$true] %s150
          %156 = dma.hbm_to_vmem [thread:$0]  %s149, 65536, %s151, %s140, 3072, 512, 32
        $region24: #{pointvae_forward.3} parent=19 // pred_fallthru
          _
        // Predicated region
        $region25: #{pointvae_forward.3} parent=19 // pred_check
          %p157 = pneg %p82
        $region26: #{pointvae_forward.3} parent=19 // pred_check_branch
          %159 = sbr.rel (%p157) target = $region28
        $region27: #{pointvae_forward.3} parent=19 // pred_region
          %s160 = sand.u32 %s72, 1
          %s161 = scalar_lea.sflag [#allocation5], %s160
          %s162 = sand.u32 %s72, 1
          %s163 = smul.addr %s162, 8
          %s164 = scalar_lea.vmem [#allocation4], %s163
          %s165 = smul.u32 8, %s15
          %s167 = ssub.s32 128, 128
          %168 = vsyncadd %s161, %s167
          %s169 = smul.addr %s165, 16
          %s170 = scalar_lea.hbm %s2, %s169
          %s172 = sshll.u32 %s164, 4
          %s173 = int_to_ptr.vmem [resolvable:$true] %s172
          %175 = dma.hbm_to_vmem [thread:$0]  %s170, 128, %s173, %s161
        $region28: #{pointvae_forward.3} parent=19 // pred_fallthru
          _
      $region20: #{pointvae_forward.3} parent=5 // pred_fallthru
        _
      %p176 = scmp.le.s32.totalorder 1, %s15
      %p177 = scmp.lt.s32.totalorder %s15, 7
      %p178 = pnand %p176, %p177
      %p179 = pneg %p178
      // Predicated region
      $region29: #{pointvae_forward.3} parent=5 // pred_check
        _
      $region30: #{pointvae_forward.3} parent=5 // pred_check_branch
        %181 = sbr.rel (%p178) target = $region32
      $region31: #{pointvae_forward.3} parent=5 // pred_region
        %s182 = ssub.s32 %s15, 1
        %s183 = sand.u32 %s49, 1
        %s184 = scalar_lea.sflag [#allocation3], %s183
        %s185 = sand.u32 %s49, 1
        %s186 = smul.addr %s185, 4096
        %s187 = scalar_lea.vmem [#allocation2], %s186
        // Predicated region
        $region33: #{pointvae_forward.3} parent=31 // pred_check
          %p188 = pneg %p62
        $region34: #{pointvae_forward.3} parent=31 // pred_check_branch
          %190 = sbr.rel (%p188) target = $region36
        $region35: #{pointvae_forward.3} parent=31 // pred_region
          %191 = dma.done %s184, 65536
        $region36: #{pointvae_forward.3} parent=31 // pred_fallthru
          _
        %s192 = sand.u32 %s75, 1
        %s193 = scalar_lea.sflag [#allocation5], %s192
        %s194 = sand.u32 %s75, 1
        %s195 = smul.addr %s194, 8
        %s196 = scalar_lea.vmem [#allocation4], %s195
        // Predicated region
        $region37: #{pointvae_forward.3} parent=31 // pred_check
          %p197 = pneg %p88
        $region38: #{pointvae_forward.3} parent=31 // pred_check_branch
          %199 = sbr.rel (%p197) target = $region40
        $region39: #{pointvae_forward.3} parent=31 // pred_region
          %200 = dma.done %s193, 128
        $region40: #{pointvae_forward.3} parent=31 // pred_fallthru
          _
        %p201 = pneg %p36
        %p202 = pneg %p33
        %s203 = sand.u32 %s49, 1
        %s204 = scalar_lea.sflag [#allocation3], %s203
        %s205 = sand.u32 %s49, 1
        %s206 = smul.addr %s205, 4096
        %s207 = scalar_lea.vmem [#allocation2], %s206
        %p208 = pneg %p62
        %p209 = pneg %p59
        %s210 = sand.u32 %s75, 1
        %s211 = scalar_lea.sflag [#allocation5], %s210
        %s212 = sand.u32 %s75, 1
        %s213 = smul.addr %s212, 8
        %s214 = scalar_lea.vmem [#allocation4], %s213
        %p215 = pneg %p88
        %p216 = pneg %p85
        %p217 = pneg %p114
        %p218 = pneg %p111
        %s219 = smul.u32 8, %s20
        %p220 = scmp.lt.s32.totalorder %s219, 47
        %s221 = scalar_select %p220, %s219, 47
        %s222 = smul.addr %s221, 8
        %s223 = scalar_lea.vmem %s3, %s222
        %s224 = smul.u32 8, %s20
        %s225 = smul.u32 8, %s20
        %s226 = smul.u32 8, %s20
        %p227 = scmp.lt.s32.totalorder %s226, 47
        %s228 = scalar_select %p227, %s226, 47
        %s229 = smul.addr %s228, 8
        %s230 = scalar_lea.vmem %s3, %s229
        %s231 = smul.u32 8, %s20
        %v232 = vld [vmem:[%s0] sm:$0xff]
        %v233 = vld [vmem:[%s0 + $0x8] sm:$0xff]
        %v234 = vld [vmem:[%s0 + $0x10] sm:$0xff]
        %v235 = vld [vmem:[%s0 + $0x18] sm:$0xff]
        %v236 = vld [vmem:[%s187] sm:$0xff]
        %v237 = vld [vmem:[%s187 + $0x8] sm:$0xff]
        %v238 = vld [vmem:[%s187 + $0x10] sm:$0xff]
        %v239 = vld [vmem:[%s187 + $0x18] sm:$0xff]
        %v240 = vld [vmem:[%s187 + $0x20] sm:$0xff]
        %v241 = vld [vmem:[%s187 + $0x28] sm:$0xff]
        %v242 = vld [vmem:[%s187 + $0x30] sm:$0xff]
        %v243 = vld [vmem:[%s187 + $0x38] sm:$0xff]
        %v244 = vld [vmem:[%s187 + $0x40] sm:$0xff]
        %v245 = vld [vmem:[%s187 + $0x48] sm:$0xff]
        %v246 = vld [vmem:[%s187 + $0x50] sm:$0xff]
        %v247 = vld [vmem:[%s187 + $0x58] sm:$0xff]
        %v248 = vld [vmem:[%s187 + $0x60] sm:$0xff]
        %v249 = vld [vmem:[%s187 + $0x68] sm:$0xff]
        %v250 = vld [vmem:[%s187 + $0x70] sm:$0xff]
        %v251 = vld [vmem:[%s187 + $0x78] sm:$0xff]
        %v252 = vld [vmem:[%s187 + $0x80] sm:$0xff]
        %v253 = vld [vmem:[%s187 + $0x88] sm:$0xff]
        %v254 = vld [vmem:[%s187 + $0x90] sm:$0xff]
        %v255 = vld [vmem:[%s187 + $0x98] sm:$0xff]
        %v256 = vld [vmem:[%s187 + $0xa0] sm:$0xff]
        %v257 = vld [vmem:[%s187 + $0xa8] sm:$0xff]
        %v258 = vld [vmem:[%s187 + $0xb0] sm:$0xff]
        %v259 = vld [vmem:[%s187 + $0xb8] sm:$0xff]
        %v260 = vld [vmem:[%s187 + $0xc0] sm:$0xff]
        %v261 = vld [vmem:[%s187 + $0xc8] sm:$0xff]
        %v262 = vld [vmem:[%s187 + $0xd0] sm:$0xff]
        %v263 = vld [vmem:[%s187 + $0xd8] sm:$0xff]
        %v264 = vld [vmem:[%s187 + $0xe0] sm:$0xff]
        %v265 = vld [vmem:[%s187 + $0xe8] sm:$0xff]
        %v266 = vld [vmem:[%s187 + $0xf0] sm:$0xff]
        %v267 = vld [vmem:[%s187 + $0xf8] sm:$0xff]
        %v268 = vld [vmem:[%s187 + $0x100] sm:$0xff]
        %v269 = vld [vmem:[%s187 + $0x108] sm:$0xff]
        %v270 = vld [vmem:[%s187 + $0x110] sm:$0xff]
        %v271 = vld [vmem:[%s187 + $0x118] sm:$0xff]
        %v272 = vld [vmem:[%s187 + $0x120] sm:$0xff]
        %v273 = vld [vmem:[%s187 + $0x128] sm:$0xff]
        %v274 = vld [vmem:[%s187 + $0x130] sm:$0xff]
        %v275 = vld [vmem:[%s187 + $0x138] sm:$0xff]
        %v276 = vld [vmem:[%s187 + $0x140] sm:$0xff]
        %v277 = vld [vmem:[%s187 + $0x148] sm:$0xff]
        %v278 = vld [vmem:[%s187 + $0x150] sm:$0xff]
        %v279 = vld [vmem:[%s187 + $0x158] sm:$0xff]
        %v280 = vld [vmem:[%s187 + $0x160] sm:$0xff]
        %v281 = vld [vmem:[%s187 + $0x168] sm:$0xff]
        %v282 = vld [vmem:[%s187 + $0x170] sm:$0xff]
        %v283 = vld [vmem:[%s187 + $0x178] sm:$0xff]
        %v284 = vld [vmem:[%s187 + $0x180] sm:$0xff]
        %v285 = vld [vmem:[%s187 + $0x188] sm:$0xff]
        %v286 = vld [vmem:[%s187 + $0x190] sm:$0xff]
        %v287 = vld [vmem:[%s187 + $0x198] sm:$0xff]
        %v288 = vld [vmem:[%s187 + $0x1a0] sm:$0xff]
        %v289 = vld [vmem:[%s187 + $0x1a8] sm:$0xff]
        %v290 = vld [vmem:[%s187 + $0x1b0] sm:$0xff]
        %v291 = vld [vmem:[%s187 + $0x1b8] sm:$0xff]
        %v292 = vld [vmem:[%s187 + $0x1c0] sm:$0xff]
        %v293 = vld [vmem:[%s187 + $0x1c8] sm:$0xff]
        %v294 = vld [vmem:[%s187 + $0x1d0] sm:$0xff]
        %v295 = vld [vmem:[%s187 + $0x1d8] sm:$0xff]
        %v296 = vld [vmem:[%s187 + $0x1e0] sm:$0xff]
        %v297 = vld [vmem:[%s187 + $0x1e8] sm:$0xff]
        %v298 = vld [vmem:[%s187 + $0x1f0] sm:$0xff]
        %v299 = vld [vmem:[%s187 + $0x1f8] sm:$0xff]
        %v300 = vld [vmem:[%s187 + $0x200] sm:$0xff]
        %v301 = vld [vmem:[%s187 + $0x208] sm:$0xff]
        %v302 = vld [vmem:[%s187 + $0x210] sm:$0xff]
        %v303 = vld [vmem:[%s187 + $0x218] sm:$0xff]
        %v304 = vld [vmem:[%s187 + $0x220] sm:$0xff]
        %v305 = vld [vmem:[%s187 + $0x228] sm:$0xff]
        %v306 = vld [vmem:[%s187 + $0x230] sm:$0xff]
        %v307 = vld [vmem:[%s187 + $0x238] sm:$0xff]
        %v308 = vld [vmem:[%s187 + $0x240] sm:$0xff]
        %v309 = vld [vmem:[%s187 + $0x248] sm:$0xff]
        %v310 = vld [vmem:[%s187 + $0x250] sm:$0xff]
        %v311 = vld [vmem:[%s187 + $0x258] sm:$0xff]
        %v312 = vld [vmem:[%s187 + $0x260] sm:$0xff]
        %v313 = vld [vmem:[%s187 + $0x268] sm:$0xff]
        %v314 = vld [vmem:[%s187 + $0x270] sm:$0xff]
        %v315 = vld [vmem:[%s187 + $0x278] sm:$0xff]
        %v316 = vld [vmem:[%s187 + $0x280] sm:$0xff]
        %v317 = vld [vmem:[%s187 + $0x288] sm:$0xff]
        %v318 = vld [vmem:[%s187 + $0x290] sm:$0xff]
        %v319 = vld [vmem:[%s187 + $0x298] sm:$0xff]
        %v320 = vld [vmem:[%s187 + $0x2a0] sm:$0xff]
        %v321 = vld [vmem:[%s187 + $0x2a8] sm:$0xff]
        %v322 = vld [vmem:[%s187 + $0x2b0] sm:$0xff]
        %v323 = vld [vmem:[%s187 + $0x2b8] sm:$0xff]
        %v324 = vld [vmem:[%s187 + $0x2c0] sm:$0xff]
        %v325 = vld [vmem:[%s187 + $0x2c8] sm:$0xff]
        %v326 = vld [vmem:[%s187 + $0x2d0] sm:$0xff]
        %v327 = vld [vmem:[%s187 + $0x2d8] sm:$0xff]
        %v328 = vld [vmem:[%s187 + $0x2e0] sm:$0xff]
        %v329 = vld [vmem:[%s187 + $0x2e8] sm:$0xff]
        %v330 = vld [vmem:[%s187 + $0x2f0] sm:$0xff]
        %v331 = vld [vmem:[%s187 + $0x2f8] sm:$0xff]
        %v332 = vld [vmem:[%s187 + $0x300] sm:$0xff]
        %v333 = vld [vmem:[%s187 + $0x308] sm:$0xff]
        %v334 = vld [vmem:[%s187 + $0x310] sm:$0xff]
        %v335 = vld [vmem:[%s187 + $0x318] sm:$0xff]
        %v336 = vld [vmem:[%s187 + $0x320] sm:$0xff]
        %v337 = vld [vmem:[%s187 + $0x328] sm:$0xff]
        %v338 = vld [vmem:[%s187 + $0x330] sm:$0xff]
        %v339 = vld [vmem:[%s187 + $0x338] sm:$0xff]
        %v340 = vld [vmem:[%s187 + $0x340] sm:$0xff]
        %v341 = vld [vmem:[%s187 + $0x348] sm:$0xff]
        %v342 = vld [vmem:[%s187 + $0x350] sm:$0xff]
        %v343 = vld [vmem:[%s187 + $0x358] sm:$0xff]
        %v344 = vld [vmem:[%s187 + $0x360] sm:$0xff]
        %v345 = vld [vmem:[%s187 + $0x368] sm:$0xff]
        %v346 = vld [vmem:[%s187 + $0x370] sm:$0xff]
        %v347 = vld [vmem:[%s187 + $0x378] sm:$0xff]
        %v348 = vld [vmem:[%s187 + $0x380] sm:$0xff]
        %v349 = vld [vmem:[%s187 + $0x388] sm:$0xff]
        %v350 = vld [vmem:[%s187 + $0x390] sm:$0xff]
        %v351 = vld [vmem:[%s187 + $0x398] sm:$0xff]
        %v352 = vld [vmem:[%s187 + $0x3a0] sm:$0xff]
        %v353 = vld [vmem:[%s187 + $0x3a8] sm:$0xff]
        %v354 = vld [vmem:[%s187 + $0x3b0] sm:$0xff]
        %v355 = vld [vmem:[%s187 + $0x3b8] sm:$0xff]
        %v356 = vld [vmem:[%s187 + $0x3c0] sm:$0xff]
        %v357 = vld [vmem:[%s187 + $0x3c8] sm:$0xff]
        %v358 = vld [vmem:[%s187 + $0x3d0] sm:$0xff]
        %v359 = vld [vmem:[%s187 + $0x3d8] sm:$0xff]
        %v360 = vld [vmem:[%s187 + $0x3e0] sm:$0xff]
        %v361 = vld [vmem:[%s187 + $0x3e8] sm:$0xff]
        %v362 = vld [vmem:[%s187 + $0x3f0] sm:$0xff]
        %v363 = vld [vmem:[%s187 + $0x3f8] sm:$0xff]
        %v364 = vld [vmem:[%s187 + $0x400] sm:$0xff]
        %v365 = vld [vmem:[%s187 + $0x408] sm:$0xff]
        %v366 = vld [vmem:[%s187 + $0x410] sm:$0xff]
        %v367 = vld [vmem:[%s187 + $0x418] sm:$0xff]
        %v368 = vld [vmem:[%s187 + $0x420] sm:$0xff]
        %v369 = vld [vmem:[%s187 + $0x428] sm:$0xff]
        %v370 = vld [vmem:[%s187 + $0x430] sm:$0xff]
        %v371 = vld [vmem:[%s187 + $0x438] sm:$0xff]
        %v372 = vld [vmem:[%s187 + $0x440] sm:$0xff]
        %v373 = vld [vmem:[%s187 + $0x448] sm:$0xff]
        %v374 = vld [vmem:[%s187 + $0x450] sm:$0xff]
        %v375 = vld [vmem:[%s187 + $0x458] sm:$0xff]
        %v376 = vld [vmem:[%s187 + $0x460] sm:$0xff]
        %v377 = vld [vmem:[%s187 + $0x468] sm:$0xff]
        %v378 = vld [vmem:[%s187 + $0x470] sm:$0xff]
        %v379 = vld [vmem:[%s187 + $0x478] sm:$0xff]
        %v380 = vld [vmem:[%s187 + $0x480] sm:$0xff]
        %v381 = vld [vmem:[%s187 + $0x488] sm:$0xff]
        %v382 = vld [vmem:[%s187 + $0x490] sm:$0xff]
        %v383 = vld [vmem:[%s187 + $0x498] sm:$0xff]
        %v384 = vld [vmem:[%s187 + $0x4a0] sm:$0xff]
        %v385 = vld [vmem:[%s187 + $0x4a8] sm:$0xff]
        %v386 = vld [vmem:[%s187 + $0x4b0] sm:$0xff]
        %v387 = vld [vmem:[%s187 + $0x4b8] sm:$0xff]
        %v388 = vld [vmem:[%s187 + $0x4c0] sm:$0xff]
        %v389 = vld [vmem:[%s187 + $0x4c8] sm:$0xff]
        %v390 = vld [vmem:[%s187 + $0x4d0] sm:$0xff]
        %v391 = vld [vmem:[%s187 + $0x4d8] sm:$0xff]
        %v392 = vld [vmem:[%s187 + $0x4e0] sm:$0xff]
        %v393 = vld [vmem:[%s187 + $0x4e8] sm:$0xff]
        %v394 = vld [vmem:[%s187 + $0x4f0] sm:$0xff]
        %v395 = vld [vmem:[%s187 + $0x4f8] sm:$0xff]
        %v396 = vld [vmem:[%s187 + $0x500] sm:$0xff]
        %v397 = vld [vmem:[%s187 + $0x508] sm:$0xff]
        %v398 = vld [vmem:[%s187 + $0x510] sm:$0xff]
        %v399 = vld [vmem:[%s187 + $0x518] sm:$0xff]
        %v400 = vld [vmem:[%s187 + $0x520] sm:$0xff]
        %v401 = vld [vmem:[%s187 + $0x528] sm:$0xff]
        %v402 = vld [vmem:[%s187 + $0x530] sm:$0xff]
        %v403 = vld [vmem:[%s187 + $0x538] sm:$0xff]
        %v404 = vld [vmem:[%s187 + $0x540] sm:$0xff]
        %v405 = vld [vmem:[%s187 + $0x548] sm:$0xff]
        %v406 = vld [vmem:[%s187 + $0x550] sm:$0xff]
        %v407 = vld [vmem:[%s187 + $0x558] sm:$0xff]
        %v408 = vld [vmem:[%s187 + $0x560] sm:$0xff]
        %v409 = vld [vmem:[%s187 + $0x568] sm:$0xff]
        %v410 = vld [vmem:[%s187 + $0x570] sm:$0xff]
        %v411 = vld [vmem:[%s187 + $0x578] sm:$0xff]
        %v412 = vld [vmem:[%s187 + $0x580] sm:$0xff]
        %v413 = vld [vmem:[%s187 + $0x588] sm:$0xff]
        %v414 = vld [vmem:[%s187 + $0x590] sm:$0xff]
        %v415 = vld [vmem:[%s187 + $0x598] sm:$0xff]
        %v416 = vld [vmem:[%s187 + $0x5a0] sm:$0xff]
        %v417 = vld [vmem:[%s187 + $0x5a8] sm:$0xff]
        %v418 = vld [vmem:[%s187 + $0x5b0] sm:$0xff]
        %v419 = vld [vmem:[%s187 + $0x5b8] sm:$0xff]
        %v420 = vld [vmem:[%s187 + $0x5c0] sm:$0xff]
        %v421 = vld [vmem:[%s187 + $0x5c8] sm:$0xff]
        %v422 = vld [vmem:[%s187 + $0x5d0] sm:$0xff]
        %v423 = vld [vmem:[%s187 + $0x5d8] sm:$0xff]
        %v424 = vld [vmem:[%s187 + $0x5e0] sm:$0xff]
        %v425 = vld [vmem:[%s187 + $0x5e8] sm:$0xff]
        %v426 = vld [vmem:[%s187 + $0x5f0] sm:$0xff]
        %v427 = vld [vmem:[%s187 + $0x5f8] sm:$0xff]
        %v428 = vld [vmem:[%s187 + $0x600] sm:$0xff]
        %v429 = vld [vmem:[%s187 + $0x608] sm:$0xff]
        %v430 = vld [vmem:[%s187 + $0x610] sm:$0xff]
        %v431 = vld [vmem:[%s187 + $0x618] sm:$0xff]
        %v432 = vld [vmem:[%s187 + $0x620] sm:$0xff]
        %v433 = vld [vmem:[%s187 + $0x628] sm:$0xff]
        %v434 = vld [vmem:[%s187 + $0x630] sm:$0xff]
        %v435 = vld [vmem:[%s187 + $0x638] sm:$0xff]
        %v436 = vld [vmem:[%s187 + $0x640] sm:$0xff]
        %v437 = vld [vmem:[%s187 + $0x648] sm:$0xff]
        %v438 = vld [vmem:[%s187 + $0x650] sm:$0xff]
        %v439 = vld [vmem:[%s187 + $0x658] sm:$0xff]
        %v440 = vld [vmem:[%s187 + $0x660] sm:$0xff]
        %v441 = vld [vmem:[%s187 + $0x668] sm:$0xff]
        %v442 = vld [vmem:[%s187 + $0x670] sm:$0xff]
        %v443 = vld [vmem:[%s187 + $0x678] sm:$0xff]
        %v444 = vld [vmem:[%s187 + $0x680] sm:$0xff]
        %v445 = vld [vmem:[%s187 + $0x688] sm:$0xff]
        %v446 = vld [vmem:[%s187 + $0x690] sm:$0xff]
        %v447 = vld [vmem:[%s187 + $0x698] sm:$0xff]
        %v448 = vld [vmem:[%s187 + $0x6a0] sm:$0xff]
        %v449 = vld [vmem:[%s187 + $0x6a8] sm:$0xff]
        %v450 = vld [vmem:[%s187 + $0x6b0] sm:$0xff]
        %v451 = vld [vmem:[%s187 + $0x6b8] sm:$0xff]
        %v452 = vld [vmem:[%s187 + $0x6c0] sm:$0xff]
        %v453 = vld [vmem:[%s187 + $0x6c8] sm:$0xff]
        %v454 = vld [vmem:[%s187 + $0x6d0] sm:$0xff]
        %v455 = vld [vmem:[%s187 + $0x6d8] sm:$0xff]
        %v456 = vld [vmem:[%s187 + $0x6e0] sm:$0xff]
        %v457 = vld [vmem:[%s187 + $0x6e8] sm:$0xff]
        %v458 = vld [vmem:[%s187 + $0x6f0] sm:$0xff]
        %v459 = vld [vmem:[%s187 + $0x6f8] sm:$0xff]
        %v460 = vld [vmem:[%s187 + $0x700] sm:$0xff]
        %v461 = vld [vmem:[%s187 + $0x708] sm:$0xff]
        %v462 = vld [vmem:[%s187 + $0x710] sm:$0xff]
        %v463 = vld [vmem:[%s187 + $0x718] sm:$0xff]
        %v464 = vld [vmem:[%s187 + $0x720] sm:$0xff]
        %v465 = vld [vmem:[%s187 + $0x728] sm:$0xff]
        %v466 = vld [vmem:[%s187 + $0x730] sm:$0xff]
        %v467 = vld [vmem:[%s187 + $0x738] sm:$0xff]
        %v468 = vld [vmem:[%s187 + $0x740] sm:$0xff]
        %v469 = vld [vmem:[%s187 + $0x748] sm:$0xff]
        %v470 = vld [vmem:[%s187 + $0x750] sm:$0xff]
        %v471 = vld [vmem:[%s187 + $0x758] sm:$0xff]
        %v472 = vld [vmem:[%s187 + $0x760] sm:$0xff]
        %v473 = vld [vmem:[%s187 + $0x768] sm:$0xff]
        %v474 = vld [vmem:[%s187 + $0x770] sm:$0xff]
        %v475 = vld [vmem:[%s187 + $0x778] sm:$0xff]
        %v476 = vld [vmem:[%s187 + $0x780] sm:$0xff]
        %v477 = vld [vmem:[%s187 + $0x788] sm:$0xff]
        %v478 = vld [vmem:[%s187 + $0x790] sm:$0xff]
        %v479 = vld [vmem:[%s187 + $0x798] sm:$0xff]
        %v480 = vld [vmem:[%s187 + $0x7a0] sm:$0xff]
        %v481 = vld [vmem:[%s187 + $0x7a8] sm:$0xff]
        %v482 = vld [vmem:[%s187 + $0x7b0] sm:$0xff]
        %v483 = vld [vmem:[%s187 + $0x7b8] sm:$0xff]
        %v484 = vld [vmem:[%s187 + $0x7c0] sm:$0xff]
        %v485 = vld [vmem:[%s187 + $0x7c8] sm:$0xff]
        %v486 = vld [vmem:[%s187 + $0x7d0] sm:$0xff]
        %v487 = vld [vmem:[%s187 + $0x7d8] sm:$0xff]
        %v488 = vld [vmem:[%s187 + $0x7e0] sm:$0xff]
        %v489 = vld [vmem:[%s187 + $0x7e8] sm:$0xff]
        %v490 = vld [vmem:[%s187 + $0x7f0] sm:$0xff]
        %v491 = vld [vmem:[%s187 + $0x7f8] sm:$0xff]
        %v492 = vld [vmem:[%s187 + $0x800] sm:$0xff]
        %v493 = vld [vmem:[%s187 + $0x808] sm:$0xff]
        %v494 = vld [vmem:[%s187 + $0x810] sm:$0xff]
        %v495 = vld [vmem:[%s187 + $0x818] sm:$0xff]
        %v496 = vld [vmem:[%s187 + $0x820] sm:$0xff]
        %v497 = vld [vmem:[%s187 + $0x828] sm:$0xff]
        %v498 = vld [vmem:[%s187 + $0x830] sm:$0xff]
        %v499 = vld [vmem:[%s187 + $0x838] sm:$0xff]
        %v500 = vld [vmem:[%s187 + $0x840] sm:$0xff]
        %v501 = vld [vmem:[%s187 + $0x848] sm:$0xff]
        %v502 = vld [vmem:[%s187 + $0x850] sm:$0xff]
        %v503 = vld [vmem:[%s187 + $0x858] sm:$0xff]
        %v504 = vld [vmem:[%s187 + $0x860] sm:$0xff]
        %v505 = vld [vmem:[%s187 + $0x868] sm:$0xff]
        %v506 = vld [vmem:[%s187 + $0x870] sm:$0xff]
        %v507 = vld [vmem:[%s187 + $0x878] sm:$0xff]
        %v508 = vld [vmem:[%s187 + $0x880] sm:$0xff]
        %v509 = vld [vmem:[%s187 + $0x888] sm:$0xff]
        %v510 = vld [vmem:[%s187 + $0x890] sm:$0xff]
        %v511 = vld [vmem:[%s187 + $0x898] sm:$0xff]
        %v512 = vld [vmem:[%s187 + $0x8a0] sm:$0xff]
        %v513 = vld [vmem:[%s187 + $0x8a8] sm:$0xff]
        %v514 = vld [vmem:[%s187 + $0x8b0] sm:$0xff]
        %v515 = vld [vmem:[%s187 + $0x8b8] sm:$0xff]
        %v516 = vld [vmem:[%s187 + $0x8c0] sm:$0xff]
        %v517 = vld [vmem:[%s187 + $0x8c8] sm:$0xff]
        %v518 = vld [vmem:[%s187 + $0x8d0] sm:$0xff]
        %v519 = vld [vmem:[%s187 + $0x8d8] sm:$0xff]
        %v520 = vld [vmem:[%s187 + $0x8e0] sm:$0xff]
        %v521 = vld [vmem:[%s187 + $0x8e8] sm:$0xff]
        %v522 = vld [vmem:[%s187 + $0x8f0] sm:$0xff]
        %v523 = vld [vmem:[%s187 + $0x8f8] sm:$0xff]
        %v524 = vld [vmem:[%s187 + $0x900] sm:$0xff]
        %v525 = vld [vmem:[%s187 + $0x908] sm:$0xff]
        %v526 = vld [vmem:[%s187 + $0x910] sm:$0xff]
        %v527 = vld [vmem:[%s187 + $0x918] sm:$0xff]
        %v528 = vld [vmem:[%s187 + $0x920] sm:$0xff]
        %v529 = vld [vmem:[%s187 + $0x928] sm:$0xff]
        %v530 = vld [vmem:[%s187 + $0x930] sm:$0xff]
        %v531 = vld [vmem:[%s187 + $0x938] sm:$0xff]
        %v532 = vld [vmem:[%s187 + $0x940] sm:$0xff]
        %v533 = vld [vmem:[%s187 + $0x948] sm:$0xff]
        %v534 = vld [vmem:[%s187 + $0x950] sm:$0xff]
        %v535 = vld [vmem:[%s187 + $0x958] sm:$0xff]
        %v536 = vld [vmem:[%s187 + $0x960] sm:$0xff]
        %v537 = vld [vmem:[%s187 + $0x968] sm:$0xff]
        %v538 = vld [vmem:[%s187 + $0x970] sm:$0xff]
        %v539 = vld [vmem:[%s187 + $0x978] sm:$0xff]
        %v540 = vld [vmem:[%s187 + $0x980] sm:$0xff]
        %v541 = vld [vmem:[%s187 + $0x988] sm:$0xff]
        %v542 = vld [vmem:[%s187 + $0x990] sm:$0xff]
        %v543 = vld [vmem:[%s187 + $0x998] sm:$0xff]
        %v544 = vld [vmem:[%s187 + $0x9a0] sm:$0xff]
        %v545 = vld [vmem:[%s187 + $0x9a8] sm:$0xff]
        %v546 = vld [vmem:[%s187 + $0x9b0] sm:$0xff]
        %v547 = vld [vmem:[%s187 + $0x9b8] sm:$0xff]
        %v548 = vld [vmem:[%s187 + $0x9c0] sm:$0xff]
        %v549 = vld [vmem:[%s187 + $0x9c8] sm:$0xff]
        %v550 = vld [vmem:[%s187 + $0x9d0] sm:$0xff]
        %v551 = vld [vmem:[%s187 + $0x9d8] sm:$0xff]
        %v552 = vld [vmem:[%s187 + $0x9e0] sm:$0xff]
        %v553 = vld [vmem:[%s187 + $0x9e8] sm:$0xff]
        %v554 = vld [vmem:[%s187 + $0x9f0] sm:$0xff]
        %v555 = vld [vmem:[%s187 + $0x9f8] sm:$0xff]
        %v556 = vld [vmem:[%s187 + $0xa00] sm:$0xff]
        %v557 = vld [vmem:[%s187 + $0xa08] sm:$0xff]
        %v558 = vld [vmem:[%s187 + $0xa10] sm:$0xff]
        %v559 = vld [vmem:[%s187 + $0xa18] sm:$0xff]
        %v560 = vld [vmem:[%s187 + $0xa20] sm:$0xff]
        %v561 = vld [vmem:[%s187 + $0xa28] sm:$0xff]
        %v562 = vld [vmem:[%s187 + $0xa30] sm:$0xff]
        %v563 = vld [vmem:[%s187 + $0xa38] sm:$0xff]
        %v564 = vld [vmem:[%s187 + $0xa40] sm:$0xff]
        %v565 = vld [vmem:[%s187 + $0xa48] sm:$0xff]
        %v566 = vld [vmem:[%s187 + $0xa50] sm:$0xff]
        %v567 = vld [vmem:[%s187 + $0xa58] sm:$0xff]
        %v568 = vld [vmem:[%s187 + $0xa60] sm:$0xff]
        %v569 = vld [vmem:[%s187 + $0xa68] sm:$0xff]
        %v570 = vld [vmem:[%s187 + $0xa70] sm:$0xff]
        %v571 = vld [vmem:[%s187 + $0xa78] sm:$0xff]
        %v572 = vld [vmem:[%s187 + $0xa80] sm:$0xff]
        %v573 = vld [vmem:[%s187 + $0xa88] sm:$0xff]
        %v574 = vld [vmem:[%s187 + $0xa90] sm:$0xff]
        %v575 = vld [vmem:[%s187 + $0xa98] sm:$0xff]
        %v576 = vld [vmem:[%s187 + $0xaa0] sm:$0xff]
        %v577 = vld [vmem:[%s187 + $0xaa8] sm:$0xff]
        %v578 = vld [vmem:[%s187 + $0xab0] sm:$0xff]
        %v579 = vld [vmem:[%s187 + $0xab8] sm:$0xff]
        %v580 = vld [vmem:[%s187 + $0xac0] sm:$0xff]
        %v581 = vld [vmem:[%s187 + $0xac8] sm:$0xff]
        %v582 = vld [vmem:[%s187 + $0xad0] sm:$0xff]
        %v583 = vld [vmem:[%s187 + $0xad8] sm:$0xff]
        %v584 = vld [vmem:[%s187 + $0xae0] sm:$0xff]
        %v585 = vld [vmem:[%s187 + $0xae8] sm:$0xff]
        %v586 = vld [vmem:[%s187 + $0xaf0] sm:$0xff]
        %v587 = vld [vmem:[%s187 + $0xaf8] sm:$0xff]
        %v588 = vld [vmem:[%s187 + $0xb00] sm:$0xff]
        %v589 = vld [vmem:[%s187 + $0xb08] sm:$0xff]
        %v590 = vld [vmem:[%s187 + $0xb10] sm:$0xff]
        %v591 = vld [vmem:[%s187 + $0xb18] sm:$0xff]
        %v592 = vld [vmem:[%s187 + $0xb20] sm:$0xff]
        %v593 = vld [vmem:[%s187 + $0xb28] sm:$0xff]
        %v594 = vld [vmem:[%s187 + $0xb30] sm:$0xff]
        %v595 = vld [vmem:[%s187 + $0xb38] sm:$0xff]
        %v596 = vld [vmem:[%s187 + $0xb40] sm:$0xff]
        %v597 = vld [vmem:[%s187 + $0xb48] sm:$0xff]
        %v598 = vld [vmem:[%s187 + $0xb50] sm:$0xff]
        %v599 = vld [vmem:[%s187 + $0xb58] sm:$0xff]
        %v600 = vld [vmem:[%s187 + $0xb60] sm:$0xff]
        %v601 = vld [vmem:[%s187 + $0xb68] sm:$0xff]
        %v602 = vld [vmem:[%s187 + $0xb70] sm:$0xff]
        %v603 = vld [vmem:[%s187 + $0xb78] sm:$0xff]
        %v604 = vld [vmem:[%s187 + $0xb80] sm:$0xff]
        %v605 = vld [vmem:[%s187 + $0xb88] sm:$0xff]
        %v606 = vld [vmem:[%s187 + $0xb90] sm:$0xff]
        %v607 = vld [vmem:[%s187 + $0xb98] sm:$0xff]
        %v608 = vld [vmem:[%s187 + $0xba0] sm:$0xff]
        %v609 = vld [vmem:[%s187 + $0xba8] sm:$0xff]
        %v610 = vld [vmem:[%s187 + $0xbb0] sm:$0xff]
        %v611 = vld [vmem:[%s187 + $0xbb8] sm:$0xff]
        %v612 = vld [vmem:[%s187 + $0xbc0] sm:$0xff]
        %v613 = vld [vmem:[%s187 + $0xbc8] sm:$0xff]
        %v614 = vld [vmem:[%s187 + $0xbd0] sm:$0xff]
        %v615 = vld [vmem:[%s187 + $0xbd8] sm:$0xff]
        %v616 = vld [vmem:[%s187 + $0xbe0] sm:$0xff]
        %v617 = vld [vmem:[%s187 + $0xbe8] sm:$0xff]
        %v618 = vld [vmem:[%s187 + $0xbf0] sm:$0xff]
        %v619 = vld [vmem:[%s187 + $0xbf8] sm:$0xff]
        %v620 = vld [vmem:[%s187 + $0xc00] sm:$0xff]
        %v621 = vld [vmem:[%s187 + $0xc08] sm:$0xff]
        %v622 = vld [vmem:[%s187 + $0xc10] sm:$0xff]
        %v623 = vld [vmem:[%s187 + $0xc18] sm:$0xff]
        %v624 = vld [vmem:[%s187 + $0xc20] sm:$0xff]
        %v625 = vld [vmem:[%s187 + $0xc28] sm:$0xff]
        %v626 = vld [vmem:[%s187 + $0xc30] sm:$0xff]
        %v627 = vld [vmem:[%s187 + $0xc38] sm:$0xff]
        %v628 = vld [vmem:[%s187 + $0xc40] sm:$0xff]
        %v629 = vld [vmem:[%s187 + $0xc48] sm:$0xff]
        %v630 = vld [vmem:[%s187 + $0xc50] sm:$0xff]
        %v631 = vld [vmem:[%s187 + $0xc58] sm:$0xff]
        %v632 = vld [vmem:[%s187 + $0xc60] sm:$0xff]
        %v633 = vld [vmem:[%s187 + $0xc68] sm:$0xff]
        %v634 = vld [vmem:[%s187 + $0xc70] sm:$0xff]
        %v635 = vld [vmem:[%s187 + $0xc78] sm:$0xff]
        %v636 = vld [vmem:[%s187 + $0xc80] sm:$0xff]
        %v637 = vld [vmem:[%s187 + $0xc88] sm:$0xff]
        %v638 = vld [vmem:[%s187 + $0xc90] sm:$0xff]
        %v639 = vld [vmem:[%s187 + $0xc98] sm:$0xff]
        %v640 = vld [vmem:[%s187 + $0xca0] sm:$0xff]
        %v641 = vld [vmem:[%s187 + $0xca8] sm:$0xff]
        %v642 = vld [vmem:[%s187 + $0xcb0] sm:$0xff]
        %v643 = vld [vmem:[%s187 + $0xcb8] sm:$0xff]
        %v644 = vld [vmem:[%s187 + $0xcc0] sm:$0xff]
        %v645 = vld [vmem:[%s187 + $0xcc8] sm:$0xff]
        %v646 = vld [vmem:[%s187 + $0xcd0] sm:$0xff]
        %v647 = vld [vmem:[%s187 + $0xcd8] sm:$0xff]
        %v648 = vld [vmem:[%s187 + $0xce0] sm:$0xff]
        %v649 = vld [vmem:[%s187 + $0xce8] sm:$0xff]
        %v650 = vld [vmem:[%s187 + $0xcf0] sm:$0xff]
        %v651 = vld [vmem:[%s187 + $0xcf8] sm:$0xff]
        %v652 = vld [vmem:[%s187 + $0xd00] sm:$0xff]
        %v653 = vld [vmem:[%s187 + $0xd08] sm:$0xff]
        %v654 = vld [vmem:[%s187 + $0xd10] sm:$0xff]
        %v655 = vld [vmem:[%s187 + $0xd18] sm:$0xff]
        %v656 = vld [vmem:[%s187 + $0xd20] sm:$0xff]
        %v657 = vld [vmem:[%s187 + $0xd28] sm:$0xff]
        %v658 = vld [vmem:[%s187 + $0xd30] sm:$0xff]
        %v659 = vld [vmem:[%s187 + $0xd38] sm:$0xff]
        %v660 = vld [vmem:[%s187 + $0xd40] sm:$0xff]
        %v661 = vld [vmem:[%s187 + $0xd48] sm:$0xff]
        %v662 = vld [vmem:[%s187 + $0xd50] sm:$0xff]
        %v663 = vld [vmem:[%s187 + $0xd58] sm:$0xff]
        %v664 = vld [vmem:[%s187 + $0xd60] sm:$0xff]
        %v665 = vld [vmem:[%s187 + $0xd68] sm:$0xff]
        %v666 = vld [vmem:[%s187 + $0xd70] sm:$0xff]
        %v667 = vld [vmem:[%s187 + $0xd78] sm:$0xff]
        %v668 = vld [vmem:[%s187 + $0xd80] sm:$0xff]
        %v669 = vld [vmem:[%s187 + $0xd88] sm:$0xff]
        %v670 = vld [vmem:[%s187 + $0xd90] sm:$0xff]
        %v671 = vld [vmem:[%s187 + $0xd98] sm:$0xff]
        %v672 = vld [vmem:[%s187 + $0xda0] sm:$0xff]
        %v673 = vld [vmem:[%s187 + $0xda8] sm:$0xff]
        %v674 = vld [vmem:[%s187 + $0xdb0] sm:$0xff]
        %v675 = vld [vmem:[%s187 + $0xdb8] sm:$0xff]
        %v676 = vld [vmem:[%s187 + $0xdc0] sm:$0xff]
        %v677 = vld [vmem:[%s187 + $0xdc8] sm:$0xff]
        %v678 = vld [vmem:[%s187 + $0xdd0] sm:$0xff]
        %v679 = vld [vmem:[%s187 + $0xdd8] sm:$0xff]
        %v680 = vld [vmem:[%s187 + $0xde0] sm:$0xff]
        %v681 = vld [vmem:[%s187 + $0xde8] sm:$0xff]
        %v682 = vld [vmem:[%s187 + $0xdf0] sm:$0xff]
        %v683 = vld [vmem:[%s187 + $0xdf8] sm:$0xff]
        %v684 = vld [vmem:[%s187 + $0xe00] sm:$0xff]
        %v685 = vld [vmem:[%s187 + $0xe08] sm:$0xff]
        %v686 = vld [vmem:[%s187 + $0xe10] sm:$0xff]
        %v687 = vld [vmem:[%s187 + $0xe18] sm:$0xff]
        %v688 = vld [vmem:[%s187 + $0xe20] sm:$0xff]
        %v689 = vld [vmem:[%s187 + $0xe28] sm:$0xff]
        %v690 = vld [vmem:[%s187 + $0xe30] sm:$0xff]
        %v691 = vld [vmem:[%s187 + $0xe38] sm:$0xff]
        %v692 = vld [vmem:[%s187 + $0xe40] sm:$0xff]
        %v693 = vld [vmem:[%s187 + $0xe48] sm:$0xff]
        %v694 = vld [vmem:[%s187 + $0xe50] sm:$0xff]
        %v695 = vld [vmem:[%s187 + $0xe58] sm:$0xff]
        %v696 = vld [vmem:[%s187 + $0xe60] sm:$0xff]
        %v697 = vld [vmem:[%s187 + $0xe68] sm:$0xff]
        %v698 = vld [vmem:[%s187 + $0xe70] sm:$0xff]
        %v699 = vld [vmem:[%s187 + $0xe78] sm:$0xff]
        %v700 = vld [vmem:[%s187 + $0xe80] sm:$0xff]
        %v701 = vld [vmem:[%s187 + $0xe88] sm:$0xff]
        %v702 = vld [vmem:[%s187 + $0xe90] sm:$0xff]
        %v703 = vld [vmem:[%s187 + $0xe98] sm:$0xff]
        %v704 = vld [vmem:[%s187 + $0xea0] sm:$0xff]
        %v705 = vld [vmem:[%s187 + $0xea8] sm:$0xff]
        %v706 = vld [vmem:[%s187 + $0xeb0] sm:$0xff]
        %v707 = vld [vmem:[%s187 + $0xeb8] sm:$0xff]
        %v708 = vld [vmem:[%s187 + $0xec0] sm:$0xff]
        %v709 = vld [vmem:[%s187 + $0xec8] sm:$0xff]
        %v710 = vld [vmem:[%s187 + $0xed0] sm:$0xff]
        %v711 = vld [vmem:[%s187 + $0xed8] sm:$0xff]
        %v712 = vld [vmem:[%s187 + $0xee0] sm:$0xff]
        %v713 = vld [vmem:[%s187 + $0xee8] sm:$0xff]
        %v714 = vld [vmem:[%s187 + $0xef0] sm:$0xff]
        %v715 = vld [vmem:[%s187 + $0xef8] sm:$0xff]
        %v716 = vld [vmem:[%s187 + $0xf00] sm:$0xff]
        %v717 = vld [vmem:[%s187 + $0xf08] sm:$0xff]
        %v718 = vld [vmem:[%s187 + $0xf10] sm:$0xff]
        %v719 = vld [vmem:[%s187 + $0xf18] sm:$0xff]
        %v720 = vld [vmem:[%s187 + $0xf20] sm:$0xff]
        %v721 = vld [vmem:[%s187 + $0xf28] sm:$0xff]
        %v722 = vld [vmem:[%s187 + $0xf30] sm:$0xff]
        %v723 = vld [vmem:[%s187 + $0xf38] sm:$0xff]
        %v724 = vld [vmem:[%s187 + $0xf40] sm:$0xff]
        %v725 = vld [vmem:[%s187 + $0xf48] sm:$0xff]
        %v726 = vld [vmem:[%s187 + $0xf50] sm:$0xff]
        %v727 = vld [vmem:[%s187 + $0xf58] sm:$0xff]
        %v728 = vld [vmem:[%s187 + $0xf60] sm:$0xff]
        %v729 = vld [vmem:[%s187 + $0xf68] sm:$0xff]
        %v730 = vld [vmem:[%s187 + $0xf70] sm:$0xff]
        %v731 = vld [vmem:[%s187 + $0xf78] sm:$0xff]
        %v732 = vld [vmem:[%s187 + $0xf80] sm:$0xff]
        %v733 = vld [vmem:[%s187 + $0xf88] sm:$0xff]
        %v734 = vld [vmem:[%s187 + $0xf90] sm:$0xff]
        %v735 = vld [vmem:[%s187 + $0xf98] sm:$0xff]
        %v736 = vld [vmem:[%s187 + $0xfa0] sm:$0xff]
        %v737 = vld [vmem:[%s187 + $0xfa8] sm:$0xff]
        %v738 = vld [vmem:[%s187 + $0xfb0] sm:$0xff]
        %v739 = vld [vmem:[%s187 + $0xfb8] sm:$0xff]
        %v740 = vld [vmem:[%s187 + $0xfc0] sm:$0xff]
        %v741 = vld [vmem:[%s187 + $0xfc8] sm:$0xff]
        %v742 = vld [vmem:[%s187 + $0xfd0] sm:$0xff]
        %v743 = vld [vmem:[%s187 + $0xfd8] sm:$0xff]
        %v744 = vld [vmem:[%s187 + $0xfe0] sm:$0xff]
        %v745 = vld [vmem:[%s187 + $0xfe8] sm:$0xff]
        %v746 = vld [vmem:[%s187 + $0xff0] sm:$0xff]
        %v747 = vld [vmem:[%s187 + $0xff8] sm:$0xff]
        %v748 = vld [vmem:[%s196] sm:$0xff]
        %v750 = vlaneseq
        %v751 = vshrl.u32 %v750, 7
        %v752 = vsub.s32 0, %v751
        %v753 = vrot.slane %v748, %v752
        %v754 = vlaneseq
        %v755 = vshrl.u32 %v754, 7
        %v756 = vsub.s32 1, %v755
        %v757 = vrot.slane %v748, %v756
        %v758 = vlaneseq
        %v759 = vshrl.u32 %v758, 7
        %v760 = vsub.s32 2, %v759
        %v761 = vrot.slane %v748, %v760
        %v762 = vlaneseq
        %v763 = vshrl.u32 %v762, 7
        %v764 = vsub.s32 3, %v763
        %v765 = vrot.slane %v748, %v764
        %v766 = vlaneseq
        %v767 = vshrl.u32 %v766, 7
        %v768 = vsub.s32 4, %v767
        %v769 = vrot.slane %v748, %v768
        %v770 = vlaneseq
        %v771 = vshrl.u32 %v770, 7
        %v772 = vsub.s32 5, %v771
        %v773 = vrot.slane %v748, %v772
        %v774 = vlaneseq
        %v775 = vshrl.u32 %v774, 7
        %v776 = vsub.s32 6, %v775
        %v777 = vrot.slane %v748, %v776
        %v778 = vlaneseq
        %v779 = vshrl.u32 %v778, 7
        %v780 = vsub.s32 7, %v779
        %v781 = vrot.slane %v748, %v780
        %v794 = vunpack.c.l.b16 %v232
        %v795 = vunpack.c.h.b16 %v232
        %v796 = vunpack.c.l.b16 %v233
        %v797 = vunpack.c.h.b16 %v233
        %v798 = vunpack.c.l.b16 %v234
        %v799 = vunpack.c.h.b16 %v234
        %v800 = vunpack.c.l.b16 %v235
        %v801 = vunpack.c.h.b16 %v235
        %v802 = vpack.c.b16 %v794, %v794
        %v803 = vpack.c.b16 %v795, %v795
        %v804 = vpack.c.b16 %v796, %v796
        %v805 = vpack.c.b16 %v797, %v797
        %v806 = vpack.c.b16 %v798, %v798
        %v807 = vpack.c.b16 %v799, %v799
        %v808 = vpack.c.b16 %v800, %v800
        %v809 = vpack.c.b16 %v801, %v801
        %v1330 = vunpack.c.l.b16 %v236
        %v1331 = vunpack.c.h.b16 %v236
        %v1332 = vunpack.c.l.b16 %v237
        %v1333 = vunpack.c.h.b16 %v237
        %v1334 = vunpack.c.l.b16 %v238
        %v1335 = vunpack.c.h.b16 %v238
        %v1336 = vunpack.c.l.b16 %v239
        %v1337 = vunpack.c.h.b16 %v239
        %v1338 = vunpack.c.l.b16 %v240
        %v1339 = vunpack.c.h.b16 %v240
        %v1340 = vunpack.c.l.b16 %v241
        %v1341 = vunpack.c.h.b16 %v241
        %v1342 = vunpack.c.l.b16 %v242
        %v1343 = vunpack.c.h.b16 %v242
        %v1344 = vunpack.c.l.b16 %v243
        %v1345 = vunpack.c.h.b16 %v243
        %v1346 = vunpack.c.l.b16 %v244
        %v1347 = vunpack.c.h.b16 %v244
        %v1348 = vunpack.c.l.b16 %v245
        %v1349 = vunpack.c.h.b16 %v245
        %v1350 = vunpack.c.l.b16 %v246
        %v1351 = vunpack.c.h.b16 %v246
        %v1352 = vunpack.c.l.b16 %v247
        %v1353 = vunpack.c.h.b16 %v247
        %v1354 = vunpack.c.l.b16 %v248
        %v1355 = vunpack.c.h.b16 %v248
        %v1356 = vunpack.c.l.b16 %v249
        %v1357 = vunpack.c.h.b16 %v249
        %v1358 = vunpack.c.l.b16 %v250
        %v1359 = vunpack.c.h.b16 %v250
        %v1360 = vunpack.c.l.b16 %v251
        %v1361 = vunpack.c.h.b16 %v251
        %v1362 = vunpack.c.l.b16 %v252
        %v1363 = vunpack.c.h.b16 %v252
        %v1364 = vunpack.c.l.b16 %v253
        %v1365 = vunpack.c.h.b16 %v253
        %v1366 = vunpack.c.l.b16 %v254
        %v1367 = vunpack.c.h.b16 %v254
        %v1368 = vunpack.c.l.b16 %v255
        %v1369 = vunpack.c.h.b16 %v255
        %v1370 = vunpack.c.l.b16 %v256
        %v1371 = vunpack.c.h.b16 %v256
        %v1372 = vunpack.c.l.b16 %v257
        %v1373 = vunpack.c.h.b16 %v257
        %v1374 = vunpack.c.l.b16 %v258
        %v1375 = vunpack.c.h.b16 %v258
        %v1376 = vunpack.c.l.b16 %v259
        %v1377 = vunpack.c.h.b16 %v259
        %v1378 = vunpack.c.l.b16 %v260
        %v1379 = vunpack.c.h.b16 %v260
        %v1380 = vunpack.c.l.b16 %v261
        %v1381 = vunpack.c.h.b16 %v261
        %v1382 = vunpack.c.l.b16 %v262
        %v1383 = vunpack.c.h.b16 %v262
        %v1384 = vunpack.c.l.b16 %v263
        %v1385 = vunpack.c.h.b16 %v263
        %v1386 = vunpack.c.l.b16 %v264
        %v1387 = vunpack.c.h.b16 %v264
        %v1388 = vunpack.c.l.b16 %v265
        %v1389 = vunpack.c.h.b16 %v265
        %v1390 = vunpack.c.l.b16 %v266
        %v1391 = vunpack.c.h.b16 %v266
        %v1392 = vunpack.c.l.b16 %v267
        %v1393 = vunpack.c.h.b16 %v267
        %v1394 = vunpack.c.l.b16 %v268
        %v1395 = vunpack.c.h.b16 %v268
        %v1396 = vunpack.c.l.b16 %v269
        %v1397 = vunpack.c.h.b16 %v269
        %v1398 = vunpack.c.l.b16 %v270
        %v1399 = vunpack.c.h.b16 %v270
        %v1400 = vunpack.c.l.b16 %v271
        %v1401 = vunpack.c.h.b16 %v271
        %v1402 = vunpack.c.l.b16 %v272
        %v1403 = vunpack.c.h.b16 %v272
        %v1404 = vunpack.c.l.b16 %v273
        %v1405 = vunpack.c.h.b16 %v273
        %v1406 = vunpack.c.l.b16 %v274
        %v1407 = vunpack.c.h.b16 %v274
        %v1408 = vunpack.c.l.b16 %v275
        %v1409 = vunpack.c.h.b16 %v275
        %v1410 = vunpack.c.l.b16 %v276
        %v1411 = vunpack.c.h.b16 %v276
        %v1412 = vunpack.c.l.b16 %v277
        %v1413 = vunpack.c.h.b16 %v277
        %v1414 = vunpack.c.l.b16 %v278
        %v1415 = vunpack.c.h.b16 %v278
        %v1416 = vunpack.c.l.b16 %v279
        %v1417 = vunpack.c.h.b16 %v279
        %v1418 = vunpack.c.l.b16 %v280
        %v1419 = vunpack.c.h.b16 %v280
        %v1420 = vunpack.c.l.b16 %v281
        %v1421 = vunpack.c.h.b16 %v281
        %v1422 = vunpack.c.l.b16 %v282
        %v1423 = vunpack.c.h.b16 %v282
        %v1424 = vunpack.c.l.b16 %v283
        %v1425 = vunpack.c.h.b16 %v283
        %v1426 = vunpack.c.l.b16 %v284
        %v1427 = vunpack.c.h.b16 %v284
        %v1428 = vunpack.c.l.b16 %v285
        %v1429 = vunpack.c.h.b16 %v285
        %v1430 = vunpack.c.l.b16 %v286
        %v1431 = vunpack.c.h.b16 %v286
        %v1432 = vunpack.c.l.b16 %v287
        %v1433 = vunpack.c.h.b16 %v287
        %v1434 = vunpack.c.l.b16 %v288
        %v1435 = vunpack.c.h.b16 %v288
        %v1436 = vunpack.c.l.b16 %v289
        %v1437 = vunpack.c.h.b16 %v289
        %v1438 = vunpack.c.l.b16 %v290
        %v1439 = vunpack.c.h.b16 %v290
        %v1440 = vunpack.c.l.b16 %v291
        %v1441 = vunpack.c.h.b16 %v291
        %v1442 = vunpack.c.l.b16 %v292
        %v1443 = vunpack.c.h.b16 %v292
        %v1444 = vunpack.c.l.b16 %v293
        %v1445 = vunpack.c.h.b16 %v293
        %v1446 = vunpack.c.l.b16 %v294
        %v1447 = vunpack.c.h.b16 %v294
        %v1448 = vunpack.c.l.b16 %v295
        %v1449 = vunpack.c.h.b16 %v295
        %v1450 = vunpack.c.l.b16 %v296
        %v1451 = vunpack.c.h.b16 %v296
        %v1452 = vunpack.c.l.b16 %v297
        %v1453 = vunpack.c.h.b16 %v297
        %v1454 = vunpack.c.l.b16 %v298
        %v1455 = vunpack.c.h.b16 %v298
        %v1456 = vunpack.c.l.b16 %v299
        %v1457 = vunpack.c.h.b16 %v299
        %v1458 = vunpack.c.l.b16 %v300
        %v1459 = vunpack.c.h.b16 %v300
        %v1460 = vunpack.c.l.b16 %v301
        %v1461 = vunpack.c.h.b16 %v301
        %v1462 = vunpack.c.l.b16 %v302
        %v1463 = vunpack.c.h.b16 %v302
        %v1464 = vunpack.c.l.b16 %v303
        %v1465 = vunpack.c.h.b16 %v303
        %v1466 = vunpack.c.l.b16 %v304
        %v1467 = vunpack.c.h.b16 %v304
        %v1468 = vunpack.c.l.b16 %v305
        %v1469 = vunpack.c.h.b16 %v305
        %v1470 = vunpack.c.l.b16 %v306
        %v1471 = vunpack.c.h.b16 %v306
        %v1472 = vunpack.c.l.b16 %v307
        %v1473 = vunpack.c.h.b16 %v307
        %v1474 = vunpack.c.l.b16 %v308
        %v1475 = vunpack.c.h.b16 %v308
        %v1476 = vunpack.c.l.b16 %v309
        %v1477 = vunpack.c.h.b16 %v309
        %v1478 = vunpack.c.l.b16 %v310
        %v1479 = vunpack.c.h.b16 %v310
        %v1480 = vunpack.c.l.b16 %v311
        %v1481 = vunpack.c.h.b16 %v311
        %v1482 = vunpack.c.l.b16 %v312
        %v1483 = vunpack.c.h.b16 %v312
        %v1484 = vunpack.c.l.b16 %v313
        %v1485 = vunpack.c.h.b16 %v313
        %v1486 = vunpack.c.l.b16 %v314
        %v1487 = vunpack.c.h.b16 %v314
        %v1488 = vunpack.c.l.b16 %v315
        %v1489 = vunpack.c.h.b16 %v315
        %v1490 = vunpack.c.l.b16 %v316
        %v1491 = vunpack.c.h.b16 %v316
        %v1492 = vunpack.c.l.b16 %v317
        %v1493 = vunpack.c.h.b16 %v317
        %v1494 = vunpack.c.l.b16 %v318
        %v1495 = vunpack.c.h.b16 %v318
        %v1496 = vunpack.c.l.b16 %v319
        %v1497 = vunpack.c.h.b16 %v319
        %v1498 = vunpack.c.l.b16 %v320
        %v1499 = vunpack.c.h.b16 %v320
        %v1500 = vunpack.c.l.b16 %v321
        %v1501 = vunpack.c.h.b16 %v321
        %v1502 = vunpack.c.l.b16 %v322
        %v1503 = vunpack.c.h.b16 %v322
        %v1504 = vunpack.c.l.b16 %v323
        %v1505 = vunpack.c.h.b16 %v323
        %v1506 = vunpack.c.l.b16 %v324
        %v1507 = vunpack.c.h.b16 %v324
        %v1508 = vunpack.c.l.b16 %v325
        %v1509 = vunpack.c.h.b16 %v325
        %v1510 = vunpack.c.l.b16 %v326
        %v1511 = vunpack.c.h.b16 %v326
        %v1512 = vunpack.c.l.b16 %v327
        %v1513 = vunpack.c.h.b16 %v327
        %v1514 = vunpack.c.l.b16 %v328
        %v1515 = vunpack.c.h.b16 %v328
        %v1516 = vunpack.c.l.b16 %v329
        %v1517 = vunpack.c.h.b16 %v329
        %v1518 = vunpack.c.l.b16 %v330
        %v1519 = vunpack.c.h.b16 %v330
        %v1520 = vunpack.c.l.b16 %v331
        %v1521 = vunpack.c.h.b16 %v331
        %v1522 = vunpack.c.l.b16 %v332
        %v1523 = vunpack.c.h.b16 %v332
        %v1524 = vunpack.c.l.b16 %v333
        %v1525 = vunpack.c.h.b16 %v333
        %v1526 = vunpack.c.l.b16 %v334
        %v1527 = vunpack.c.h.b16 %v334
        %v1528 = vunpack.c.l.b16 %v335
        %v1529 = vunpack.c.h.b16 %v335
        %v1530 = vunpack.c.l.b16 %v336
        %v1531 = vunpack.c.h.b16 %v336
        %v1532 = vunpack.c.l.b16 %v337
        %v1533 = vunpack.c.h.b16 %v337
        %v1534 = vunpack.c.l.b16 %v338
        %v1535 = vunpack.c.h.b16 %v338
        %v1536 = vunpack.c.l.b16 %v339
        %v1537 = vunpack.c.h.b16 %v339
        %v1538 = vunpack.c.l.b16 %v340
        %v1539 = vunpack.c.h.b16 %v340
        %v1540 = vunpack.c.l.b16 %v341
        %v1541 = vunpack.c.h.b16 %v341
        %v1542 = vunpack.c.l.b16 %v342
        %v1543 = vunpack.c.h.b16 %v342
        %v1544 = vunpack.c.l.b16 %v343
        %v1545 = vunpack.c.h.b16 %v343
        %v1546 = vunpack.c.l.b16 %v344
        %v1547 = vunpack.c.h.b16 %v344
        %v1548 = vunpack.c.l.b16 %v345
        %v1549 = vunpack.c.h.b16 %v345
        %v1550 = vunpack.c.l.b16 %v346
        %v1551 = vunpack.c.h.b16 %v346
        %v1552 = vunpack.c.l.b16 %v347
        %v1553 = vunpack.c.h.b16 %v347
        %v1554 = vunpack.c.l.b16 %v348
        %v1555 = vunpack.c.h.b16 %v348
        %v1556 = vunpack.c.l.b16 %v349
        %v1557 = vunpack.c.h.b16 %v349
        %v1558 = vunpack.c.l.b16 %v350
        %v1559 = vunpack.c.h.b16 %v350
        %v1560 = vunpack.c.l.b16 %v351
        %v1561 = vunpack.c.h.b16 %v351
        %v1562 = vunpack.c.l.b16 %v352
        %v1563 = vunpack.c.h.b16 %v352
        %v1564 = vunpack.c.l.b16 %v353
        %v1565 = vunpack.c.h.b16 %v353
        %v1566 = vunpack.c.l.b16 %v354
        %v1567 = vunpack.c.h.b16 %v354
        %v1568 = vunpack.c.l.b16 %v355
        %v1569 = vunpack.c.h.b16 %v355
        %v1570 = vunpack.c.l.b16 %v356
        %v1571 = vunpack.c.h.b16 %v356
        %v1572 = vunpack.c.l.b16 %v357
        %v1573 = vunpack.c.h.b16 %v357
        %v1574 = vunpack.c.l.b16 %v358
        %v1575 = vunpack.c.h.b16 %v358
        %v1576 = vunpack.c.l.b16 %v359
        %v1577 = vunpack.c.h.b16 %v359
        %v1578 = vunpack.c.l.b16 %v360
        %v1579 = vunpack.c.h.b16 %v360
        %v1580 = vunpack.c.l.b16 %v361
        %v1581 = vunpack.c.h.b16 %v361
        %v1582 = vunpack.c.l.b16 %v362
        %v1583 = vunpack.c.h.b16 %v362
        %v1584 = vunpack.c.l.b16 %v363
        %v1585 = vunpack.c.h.b16 %v363
        %v1586 = vunpack.c.l.b16 %v364
        %v1587 = vunpack.c.h.b16 %v364
        %v1588 = vunpack.c.l.b16 %v365
        %v1589 = vunpack.c.h.b16 %v365
        %v1590 = vunpack.c.l.b16 %v366
        %v1591 = vunpack.c.h.b16 %v366
        %v1592 = vunpack.c.l.b16 %v367
        %v1593 = vunpack.c.h.b16 %v367
        %v1594 = vunpack.c.l.b16 %v368
        %v1595 = vunpack.c.h.b16 %v368
        %v1596 = vunpack.c.l.b16 %v369
        %v1597 = vunpack.c.h.b16 %v369
        %v1598 = vunpack.c.l.b16 %v370
        %v1599 = vunpack.c.h.b16 %v370
        %v1600 = vunpack.c.l.b16 %v371
        %v1601 = vunpack.c.h.b16 %v371
        %v1602 = vunpack.c.l.b16 %v372
        %v1603 = vunpack.c.h.b16 %v372
        %v1604 = vunpack.c.l.b16 %v373
        %v1605 = vunpack.c.h.b16 %v373
        %v1606 = vunpack.c.l.b16 %v374
        %v1607 = vunpack.c.h.b16 %v374
        %v1608 = vunpack.c.l.b16 %v375
        %v1609 = vunpack.c.h.b16 %v375
        %v1610 = vunpack.c.l.b16 %v376
        %v1611 = vunpack.c.h.b16 %v376
        %v1612 = vunpack.c.l.b16 %v377
        %v1613 = vunpack.c.h.b16 %v377
        %v1614 = vunpack.c.l.b16 %v378
        %v1615 = vunpack.c.h.b16 %v378
        %v1616 = vunpack.c.l.b16 %v379
        %v1617 = vunpack.c.h.b16 %v379
        %v1618 = vunpack.c.l.b16 %v380
        %v1619 = vunpack.c.h.b16 %v380
        %v1620 = vunpack.c.l.b16 %v381
        %v1621 = vunpack.c.h.b16 %v381
        %v1622 = vunpack.c.l.b16 %v382
        %v1623 = vunpack.c.h.b16 %v382
        %v1624 = vunpack.c.l.b16 %v383
        %v1625 = vunpack.c.h.b16 %v383
        %v1626 = vunpack.c.l.b16 %v384
        %v1627 = vunpack.c.h.b16 %v384
        %v1628 = vunpack.c.l.b16 %v385
        %v1629 = vunpack.c.h.b16 %v385
        %v1630 = vunpack.c.l.b16 %v386
        %v1631 = vunpack.c.h.b16 %v386
        %v1632 = vunpack.c.l.b16 %v387
        %v1633 = vunpack.c.h.b16 %v387
        %v1634 = vunpack.c.l.b16 %v388
        %v1635 = vunpack.c.h.b16 %v388
        %v1636 = vunpack.c.l.b16 %v389
        %v1637 = vunpack.c.h.b16 %v389
        %v1638 = vunpack.c.l.b16 %v390
        %v1639 = vunpack.c.h.b16 %v390
        %v1640 = vunpack.c.l.b16 %v391
        %v1641 = vunpack.c.h.b16 %v391
        %v1642 = vunpack.c.l.b16 %v392
        %v1643 = vunpack.c.h.b16 %v392
        %v1644 = vunpack.c.l.b16 %v393
        %v1645 = vunpack.c.h.b16 %v393
        %v1646 = vunpack.c.l.b16 %v394
        %v1647 = vunpack.c.h.b16 %v394
        %v1648 = vunpack.c.l.b16 %v395
        %v1649 = vunpack.c.h.b16 %v395
        %v1650 = vunpack.c.l.b16 %v396
        %v1651 = vunpack.c.h.b16 %v396
        %v1652 = vunpack.c.l.b16 %v397
        %v1653 = vunpack.c.h.b16 %v397
        %v1654 = vunpack.c.l.b16 %v398
        %v1655 = vunpack.c.h.b16 %v398
        %v1656 = vunpack.c.l.b16 %v399
        %v1657 = vunpack.c.h.b16 %v399
        %v1658 = vunpack.c.l.b16 %v400
        %v1659 = vunpack.c.h.b16 %v400
        %v1660 = vunpack.c.l.b16 %v401
        %v1661 = vunpack.c.h.b16 %v401
        %v1662 = vunpack.c.l.b16 %v402
        %v1663 = vunpack.c.h.b16 %v402
        %v1664 = vunpack.c.l.b16 %v403
        %v1665 = vunpack.c.h.b16 %v403
        %v1666 = vunpack.c.l.b16 %v404
        %v1667 = vunpack.c.h.b16 %v404
        %v1668 = vunpack.c.l.b16 %v405
        %v1669 = vunpack.c.h.b16 %v405
        %v1670 = vunpack.c.l.b16 %v406
        %v1671 = vunpack.c.h.b16 %v406
        %v1672 = vunpack.c.l.b16 %v407
        %v1673 = vunpack.c.h.b16 %v407
        %v1674 = vunpack.c.l.b16 %v408
        %v1675 = vunpack.c.h.b16 %v408
        %v1676 = vunpack.c.l.b16 %v409
        %v1677 = vunpack.c.h.b16 %v409
        %v1678 = vunpack.c.l.b16 %v410
        %v1679 = vunpack.c.h.b16 %v410
        %v1680 = vunpack.c.l.b16 %v411
        %v1681 = vunpack.c.h.b16 %v411
        %v1682 = vunpack.c.l.b16 %v412
        %v1683 = vunpack.c.h.b16 %v412
        %v1684 = vunpack.c.l.b16 %v413
        %v1685 = vunpack.c.h.b16 %v413
        %v1686 = vunpack.c.l.b16 %v414
        %v1687 = vunpack.c.h.b16 %v414
        %v1688 = vunpack.c.l.b16 %v415
        %v1689 = vunpack.c.h.b16 %v415
        %v1690 = vunpack.c.l.b16 %v416
        %v1691 = vunpack.c.h.b16 %v416
        %v1692 = vunpack.c.l.b16 %v417
        %v1693 = vunpack.c.h.b16 %v417
        %v1694 = vunpack.c.l.b16 %v418
        %v1695 = vunpack.c.h.b16 %v418
        %v1696 = vunpack.c.l.b16 %v419
        %v1697 = vunpack.c.h.b16 %v419
        %v1698 = vunpack.c.l.b16 %v420
        %v1699 = vunpack.c.h.b16 %v420
        %v1700 = vunpack.c.l.b16 %v421
        %v1701 = vunpack.c.h.b16 %v421
        %v1702 = vunpack.c.l.b16 %v422
        %v1703 = vunpack.c.h.b16 %v422
        %v1704 = vunpack.c.l.b16 %v423
        %v1705 = vunpack.c.h.b16 %v423
        %v1706 = vunpack.c.l.b16 %v424
        %v1707 = vunpack.c.h.b16 %v424
        %v1708 = vunpack.c.l.b16 %v425
        %v1709 = vunpack.c.h.b16 %v425
        %v1710 = vunpack.c.l.b16 %v426
        %v1711 = vunpack.c.h.b16 %v426
        %v1712 = vunpack.c.l.b16 %v427
        %v1713 = vunpack.c.h.b16 %v427
        %v1714 = vunpack.c.l.b16 %v428
        %v1715 = vunpack.c.h.b16 %v428
        %v1716 = vunpack.c.l.b16 %v429
        %v1717 = vunpack.c.h.b16 %v429
        %v1718 = vunpack.c.l.b16 %v430
        %v1719 = vunpack.c.h.b16 %v430
        %v1720 = vunpack.c.l.b16 %v431
        %v1721 = vunpack.c.h.b16 %v431
        %v1722 = vunpack.c.l.b16 %v432
        %v1723 = vunpack.c.h.b16 %v432
        %v1724 = vunpack.c.l.b16 %v433
        %v1725 = vunpack.c.h.b16 %v433
        %v1726 = vunpack.c.l.b16 %v434
        %v1727 = vunpack.c.h.b16 %v434
        %v1728 = vunpack.c.l.b16 %v435
        %v1729 = vunpack.c.h.b16 %v435
        %v1730 = vunpack.c.l.b16 %v436
        %v1731 = vunpack.c.h.b16 %v436
        %v1732 = vunpack.c.l.b16 %v437
        %v1733 = vunpack.c.h.b16 %v437
        %v1734 = vunpack.c.l.b16 %v438
        %v1735 = vunpack.c.h.b16 %v438
        %v1736 = vunpack.c.l.b16 %v439
        %v1737 = vunpack.c.h.b16 %v439
        %v1738 = vunpack.c.l.b16 %v440
        %v1739 = vunpack.c.h.b16 %v440
        %v1740 = vunpack.c.l.b16 %v441
        %v1741 = vunpack.c.h.b16 %v441
        %v1742 = vunpack.c.l.b16 %v442
        %v1743 = vunpack.c.h.b16 %v442
        %v1744 = vunpack.c.l.b16 %v443
        %v1745 = vunpack.c.h.b16 %v443
        %v1746 = vunpack.c.l.b16 %v444
        %v1747 = vunpack.c.h.b16 %v444
        %v1748 = vunpack.c.l.b16 %v445
        %v1749 = vunpack.c.h.b16 %v445
        %v1750 = vunpack.c.l.b16 %v446
        %v1751 = vunpack.c.h.b16 %v446
        %v1752 = vunpack.c.l.b16 %v447
        %v1753 = vunpack.c.h.b16 %v447
        %v1754 = vunpack.c.l.b16 %v448
        %v1755 = vunpack.c.h.b16 %v448
        %v1756 = vunpack.c.l.b16 %v449
        %v1757 = vunpack.c.h.b16 %v449
        %v1758 = vunpack.c.l.b16 %v450
        %v1759 = vunpack.c.h.b16 %v450
        %v1760 = vunpack.c.l.b16 %v451
        %v1761 = vunpack.c.h.b16 %v451
        %v1762 = vunpack.c.l.b16 %v452
        %v1763 = vunpack.c.h.b16 %v452
        %v1764 = vunpack.c.l.b16 %v453
        %v1765 = vunpack.c.h.b16 %v453
        %v1766 = vunpack.c.l.b16 %v454
        %v1767 = vunpack.c.h.b16 %v454
        %v1768 = vunpack.c.l.b16 %v455
        %v1769 = vunpack.c.h.b16 %v455
        %v1770 = vunpack.c.l.b16 %v456
        %v1771 = vunpack.c.h.b16 %v456
        %v1772 = vunpack.c.l.b16 %v457
        %v1773 = vunpack.c.h.b16 %v457
        %v1774 = vunpack.c.l.b16 %v458
        %v1775 = vunpack.c.h.b16 %v458
        %v1776 = vunpack.c.l.b16 %v459
        %v1777 = vunpack.c.h.b16 %v459
        %v1778 = vunpack.c.l.b16 %v460
        %v1779 = vunpack.c.h.b16 %v460
        %v1780 = vunpack.c.l.b16 %v461
        %v1781 = vunpack.c.h.b16 %v461
        %v1782 = vunpack.c.l.b16 %v462
        %v1783 = vunpack.c.h.b16 %v462
        %v1784 = vunpack.c.l.b16 %v463
        %v1785 = vunpack.c.h.b16 %v463
        %v1786 = vunpack.c.l.b16 %v464
        %v1787 = vunpack.c.h.b16 %v464
        %v1788 = vunpack.c.l.b16 %v465
        %v1789 = vunpack.c.h.b16 %v465
        %v1790 = vunpack.c.l.b16 %v466
        %v1791 = vunpack.c.h.b16 %v466
        %v1792 = vunpack.c.l.b16 %v467
        %v1793 = vunpack.c.h.b16 %v467
        %v1794 = vunpack.c.l.b16 %v468
        %v1795 = vunpack.c.h.b16 %v468
        %v1796 = vunpack.c.l.b16 %v469
        %v1797 = vunpack.c.h.b16 %v469
        %v1798 = vunpack.c.l.b16 %v470
        %v1799 = vunpack.c.h.b16 %v470
        %v1800 = vunpack.c.l.b16 %v471
        %v1801 = vunpack.c.h.b16 %v471
        %v1802 = vunpack.c.l.b16 %v472
        %v1803 = vunpack.c.h.b16 %v472
        %v1804 = vunpack.c.l.b16 %v473
        %v1805 = vunpack.c.h.b16 %v473
        %v1806 = vunpack.c.l.b16 %v474
        %v1807 = vunpack.c.h.b16 %v474
        %v1808 = vunpack.c.l.b16 %v475
        %v1809 = vunpack.c.h.b16 %v475
        %v1810 = vunpack.c.l.b16 %v476
        %v1811 = vunpack.c.h.b16 %v476
        %v1812 = vunpack.c.l.b16 %v477
        %v1813 = vunpack.c.h.b16 %v477
        %v1814 = vunpack.c.l.b16 %v478
        %v1815 = vunpack.c.h.b16 %v478
        %v1816 = vunpack.c.l.b16 %v479
        %v1817 = vunpack.c.h.b16 %v479
        %v1818 = vunpack.c.l.b16 %v480
        %v1819 = vunpack.c.h.b16 %v480
        %v1820 = vunpack.c.l.b16 %v481
        %v1821 = vunpack.c.h.b16 %v481
        %v1822 = vunpack.c.l.b16 %v482
        %v1823 = vunpack.c.h.b16 %v482
        %v1824 = vunpack.c.l.b16 %v483
        %v1825 = vunpack.c.h.b16 %v483
        %v1826 = vunpack.c.l.b16 %v484
        %v1827 = vunpack.c.h.b16 %v484
        %v1828 = vunpack.c.l.b16 %v485
        %v1829 = vunpack.c.h.b16 %v485
        %v1830 = vunpack.c.l.b16 %v486
        %v1831 = vunpack.c.h.b16 %v486
        %v1832 = vunpack.c.l.b16 %v487
        %v1833 = vunpack.c.h.b16 %v487
        %v1834 = vunpack.c.l.b16 %v488
        %v1835 = vunpack.c.h.b16 %v488
        %v1836 = vunpack.c.l.b16 %v489
        %v1837 = vunpack.c.h.b16 %v489
        %v1838 = vunpack.c.l.b16 %v490
        %v1839 = vunpack.c.h.b16 %v490
        %v1840 = vunpack.c.l.b16 %v491
        %v1841 = vunpack.c.h.b16 %v491
        %v1842 = vunpack.c.l.b16 %v492
        %v1843 = vunpack.c.h.b16 %v492
        %v1844 = vunpack.c.l.b16 %v493
        %v1845 = vunpack.c.h.b16 %v493
        %v1846 = vunpack.c.l.b16 %v494
        %v1847 = vunpack.c.h.b16 %v494
        %v1848 = vunpack.c.l.b16 %v495
        %v1849 = vunpack.c.h.b16 %v495
        %v1850 = vunpack.c.l.b16 %v496
        %v1851 = vunpack.c.h.b16 %v496
        %v1852 = vunpack.c.l.b16 %v497
        %v1853 = vunpack.c.h.b16 %v497
        %v1854 = vunpack.c.l.b16 %v498
        %v1855 = vunpack.c.h.b16 %v498
        %v1856 = vunpack.c.l.b16 %v499
        %v1857 = vunpack.c.h.b16 %v499
        %v1858 = vunpack.c.l.b16 %v500
        %v1859 = vunpack.c.h.b16 %v500
        %v1860 = vunpack.c.l.b16 %v501
        %v1861 = vunpack.c.h.b16 %v501
        %v1862 = vunpack.c.l.b16 %v502
        %v1863 = vunpack.c.h.b16 %v502
        %v1864 = vunpack.c.l.b16 %v503
        %v1865 = vunpack.c.h.b16 %v503
        %v1866 = vunpack.c.l.b16 %v504
        %v1867 = vunpack.c.h.b16 %v504
        %v1868 = vunpack.c.l.b16 %v505
        %v1869 = vunpack.c.h.b16 %v505
        %v1870 = vunpack.c.l.b16 %v506
        %v1871 = vunpack.c.h.b16 %v506
        %v1872 = vunpack.c.l.b16 %v507
        %v1873 = vunpack.c.h.b16 %v507
        %v1874 = vunpack.c.l.b16 %v508
        %v1875 = vunpack.c.h.b16 %v508
        %v1876 = vunpack.c.l.b16 %v509
        %v1877 = vunpack.c.h.b16 %v509
        %v1878 = vunpack.c.l.b16 %v510
        %v1879 = vunpack.c.h.b16 %v510
        %v1880 = vunpack.c.l.b16 %v511
        %v1881 = vunpack.c.h.b16 %v511
        %v1882 = vunpack.c.l.b16 %v512
        %v1883 = vunpack.c.h.b16 %v512
        %v1884 = vunpack.c.l.b16 %v513
        %v1885 = vunpack.c.h.b16 %v513
        %v1886 = vunpack.c.l.b16 %v514
        %v1887 = vunpack.c.h.b16 %v514
        %v1888 = vunpack.c.l.b16 %v515
        %v1889 = vunpack.c.h.b16 %v515
        %v1890 = vunpack.c.l.b16 %v516
        %v1891 = vunpack.c.h.b16 %v516
        %v1892 = vunpack.c.l.b16 %v517
        %v1893 = vunpack.c.h.b16 %v517
        %v1894 = vunpack.c.l.b16 %v518
        %v1895 = vunpack.c.h.b16 %v518
        %v1896 = vunpack.c.l.b16 %v519
        %v1897 = vunpack.c.h.b16 %v519
        %v1898 = vunpack.c.l.b16 %v520
        %v1899 = vunpack.c.h.b16 %v520
        %v1900 = vunpack.c.l.b16 %v521
        %v1901 = vunpack.c.h.b16 %v521
        %v1902 = vunpack.c.l.b16 %v522
        %v1903 = vunpack.c.h.b16 %v522
        %v1904 = vunpack.c.l.b16 %v523
        %v1905 = vunpack.c.h.b16 %v523
        %v1906 = vunpack.c.l.b16 %v524
        %v1907 = vunpack.c.h.b16 %v524
        %v1908 = vunpack.c.l.b16 %v525
        %v1909 = vunpack.c.h.b16 %v525
        %v1910 = vunpack.c.l.b16 %v526
        %v1911 = vunpack.c.h.b16 %v526
        %v1912 = vunpack.c.l.b16 %v527
        %v1913 = vunpack.c.h.b16 %v527
        %v1914 = vunpack.c.l.b16 %v528
        %v1915 = vunpack.c.h.b16 %v528
        %v1916 = vunpack.c.l.b16 %v529
        %v1917 = vunpack.c.h.b16 %v529
        %v1918 = vunpack.c.l.b16 %v530
        %v1919 = vunpack.c.h.b16 %v530
        %v1920 = vunpack.c.l.b16 %v531
        %v1921 = vunpack.c.h.b16 %v531
        %v1922 = vunpack.c.l.b16 %v532
        %v1923 = vunpack.c.h.b16 %v532
        %v1924 = vunpack.c.l.b16 %v533
        %v1925 = vunpack.c.h.b16 %v533
        %v1926 = vunpack.c.l.b16 %v534
        %v1927 = vunpack.c.h.b16 %v534
        %v1928 = vunpack.c.l.b16 %v535
        %v1929 = vunpack.c.h.b16 %v535
        %v1930 = vunpack.c.l.b16 %v536
        %v1931 = vunpack.c.h.b16 %v536
        %v1932 = vunpack.c.l.b16 %v537
        %v1933 = vunpack.c.h.b16 %v537
        %v1934 = vunpack.c.l.b16 %v538
        %v1935 = vunpack.c.h.b16 %v538
        %v1936 = vunpack.c.l.b16 %v539
        %v1937 = vunpack.c.h.b16 %v539
        %v1938 = vunpack.c.l.b16 %v540
        %v1939 = vunpack.c.h.b16 %v540
        %v1940 = vunpack.c.l.b16 %v541
        %v1941 = vunpack.c.h.b16 %v541
        %v1942 = vunpack.c.l.b16 %v542
        %v1943 = vunpack.c.h.b16 %v542
        %v1944 = vunpack.c.l.b16 %v543
        %v1945 = vunpack.c.h.b16 %v543
        %v1946 = vunpack.c.l.b16 %v544
        %v1947 = vunpack.c.h.b16 %v544
        %v1948 = vunpack.c.l.b16 %v545
        %v1949 = vunpack.c.h.b16 %v545
        %v1950 = vunpack.c.l.b16 %v546
        %v1951 = vunpack.c.h.b16 %v546
        %v1952 = vunpack.c.l.b16 %v547
        %v1953 = vunpack.c.h.b16 %v547
        %v1954 = vunpack.c.l.b16 %v548
        %v1955 = vunpack.c.h.b16 %v548
        %v1956 = vunpack.c.l.b16 %v549
        %v1957 = vunpack.c.h.b16 %v549
        %v1958 = vunpack.c.l.b16 %v550
        %v1959 = vunpack.c.h.b16 %v550
        %v1960 = vunpack.c.l.b16 %v551
        %v1961 = vunpack.c.h.b16 %v551
        %v1962 = vunpack.c.l.b16 %v552
        %v1963 = vunpack.c.h.b16 %v552
        %v1964 = vunpack.c.l.b16 %v553
        %v1965 = vunpack.c.h.b16 %v553
        %v1966 = vunpack.c.l.b16 %v554
        %v1967 = vunpack.c.h.b16 %v554
        %v1968 = vunpack.c.l.b16 %v555
        %v1969 = vunpack.c.h.b16 %v555
        %v1970 = vunpack.c.l.b16 %v556
        %v1971 = vunpack.c.h.b16 %v556
        %v1972 = vunpack.c.l.b16 %v557
        %v1973 = vunpack.c.h.b16 %v557
        %v1974 = vunpack.c.l.b16 %v558
        %v1975 = vunpack.c.h.b16 %v558
        %v1976 = vunpack.c.l.b16 %v559
        %v1977 = vunpack.c.h.b16 %v559
        %v1978 = vunpack.c.l.b16 %v560
        %v1979 = vunpack.c.h.b16 %v560
        %v1980 = vunpack.c.l.b16 %v561
        %v1981 = vunpack.c.h.b16 %v561
        %v1982 = vunpack.c.l.b16 %v562
        %v1983 = vunpack.c.h.b16 %v562
        %v1984 = vunpack.c.l.b16 %v563
        %v1985 = vunpack.c.h.b16 %v563
        %v1986 = vunpack.c.l.b16 %v564
        %v1987 = vunpack.c.h.b16 %v564
        %v1988 = vunpack.c.l.b16 %v565
        %v1989 = vunpack.c.h.b16 %v565
        %v1990 = vunpack.c.l.b16 %v566
        %v1991 = vunpack.c.h.b16 %v566
        %v1992 = vunpack.c.l.b16 %v567
        %v1993 = vunpack.c.h.b16 %v567
        %v1994 = vunpack.c.l.b16 %v568
        %v1995 = vunpack.c.h.b16 %v568
        %v1996 = vunpack.c.l.b16 %v569
        %v1997 = vunpack.c.h.b16 %v569
        %v1998 = vunpack.c.l.b16 %v570
        %v1999 = vunpack.c.h.b16 %v570
        %v2000 = vunpack.c.l.b16 %v571
        %v2001 = vunpack.c.h.b16 %v571
        %v2002 = vunpack.c.l.b16 %v572
        %v2003 = vunpack.c.h.b16 %v572
        %v2004 = vunpack.c.l.b16 %v573
        %v2005 = vunpack.c.h.b16 %v573
        %v2006 = vunpack.c.l.b16 %v574
        %v2007 = vunpack.c.h.b16 %v574
        %v2008 = vunpack.c.l.b16 %v575
        %v2009 = vunpack.c.h.b16 %v575
        %v2010 = vunpack.c.l.b16 %v576
        %v2011 = vunpack.c.h.b16 %v576
        %v2012 = vunpack.c.l.b16 %v577
        %v2013 = vunpack.c.h.b16 %v577
        %v2014 = vunpack.c.l.b16 %v578
        %v2015 = vunpack.c.h.b16 %v578
        %v2016 = vunpack.c.l.b16 %v579
        %v2017 = vunpack.c.h.b16 %v579
        %v2018 = vunpack.c.l.b16 %v580
        %v2019 = vunpack.c.h.b16 %v580
        %v2020 = vunpack.c.l.b16 %v581
        %v2021 = vunpack.c.h.b16 %v581
        %v2022 = vunpack.c.l.b16 %v582
        %v2023 = vunpack.c.h.b16 %v582
        %v2024 = vunpack.c.l.b16 %v583
        %v2025 = vunpack.c.h.b16 %v583
        %v2026 = vunpack.c.l.b16 %v584
        %v2027 = vunpack.c.h.b16 %v584
        %v2028 = vunpack.c.l.b16 %v585
        %v2029 = vunpack.c.h.b16 %v585
        %v2030 = vunpack.c.l.b16 %v586
        %v2031 = vunpack.c.h.b16 %v586
        %v2032 = vunpack.c.l.b16 %v587
        %v2033 = vunpack.c.h.b16 %v587
        %v2034 = vunpack.c.l.b16 %v588
        %v2035 = vunpack.c.h.b16 %v588
        %v2036 = vunpack.c.l.b16 %v589
        %v2037 = vunpack.c.h.b16 %v589
        %v2038 = vunpack.c.l.b16 %v590
        %v2039 = vunpack.c.h.b16 %v590
        %v2040 = vunpack.c.l.b16 %v591
        %v2041 = vunpack.c.h.b16 %v591
        %v2042 = vunpack.c.l.b16 %v592
        %v2043 = vunpack.c.h.b16 %v592
        %v2044 = vunpack.c.l.b16 %v593
        %v2045 = vunpack.c.h.b16 %v593
        %v2046 = vunpack.c.l.b16 %v594
        %v2047 = vunpack.c.h.b16 %v594
        %v2048 = vunpack.c.l.b16 %v595
        %v2049 = vunpack.c.h.b16 %v595
        %v2050 = vunpack.c.l.b16 %v596
        %v2051 = vunpack.c.h.b16 %v596
        %v2052 = vunpack.c.l.b16 %v597
        %v2053 = vunpack.c.h.b16 %v597
        %v2054 = vunpack.c.l.b16 %v598
        %v2055 = vunpack.c.h.b16 %v598
        %v2056 = vunpack.c.l.b16 %v599
        %v2057 = vunpack.c.h.b16 %v599
        %v2058 = vunpack.c.l.b16 %v600
        %v2059 = vunpack.c.h.b16 %v600
        %v2060 = vunpack.c.l.b16 %v601
        %v2061 = vunpack.c.h.b16 %v601
        %v2062 = vunpack.c.l.b16 %v602
        %v2063 = vunpack.c.h.b16 %v602
        %v2064 = vunpack.c.l.b16 %v603
        %v2065 = vunpack.c.h.b16 %v603
        %v2066 = vunpack.c.l.b16 %v604
        %v2067 = vunpack.c.h.b16 %v604
        %v2068 = vunpack.c.l.b16 %v605
        %v2069 = vunpack.c.h.b16 %v605
        %v2070 = vunpack.c.l.b16 %v606
        %v2071 = vunpack.c.h.b16 %v606
        %v2072 = vunpack.c.l.b16 %v607
        %v2073 = vunpack.c.h.b16 %v607
        %v2074 = vunpack.c.l.b16 %v608
        %v2075 = vunpack.c.h.b16 %v608
        %v2076 = vunpack.c.l.b16 %v609
        %v2077 = vunpack.c.h.b16 %v609
        %v2078 = vunpack.c.l.b16 %v610
        %v2079 = vunpack.c.h.b16 %v610
        %v2080 = vunpack.c.l.b16 %v611
        %v2081 = vunpack.c.h.b16 %v611
        %v2082 = vunpack.c.l.b16 %v612
        %v2083 = vunpack.c.h.b16 %v612
        %v2084 = vunpack.c.l.b16 %v613
        %v2085 = vunpack.c.h.b16 %v613
        %v2086 = vunpack.c.l.b16 %v614
        %v2087 = vunpack.c.h.b16 %v614
        %v2088 = vunpack.c.l.b16 %v615
        %v2089 = vunpack.c.h.b16 %v615
        %v2090 = vunpack.c.l.b16 %v616
        %v2091 = vunpack.c.h.b16 %v616
        %v2092 = vunpack.c.l.b16 %v617
        %v2093 = vunpack.c.h.b16 %v617
        %v2094 = vunpack.c.l.b16 %v618
        %v2095 = vunpack.c.h.b16 %v618
        %v2096 = vunpack.c.l.b16 %v619
        %v2097 = vunpack.c.h.b16 %v619
        %v2098 = vunpack.c.l.b16 %v620
        %v2099 = vunpack.c.h.b16 %v620
        %v2100 = vunpack.c.l.b16 %v621
        %v2101 = vunpack.c.h.b16 %v621
        %v2102 = vunpack.c.l.b16 %v622
        %v2103 = vunpack.c.h.b16 %v622
        %v2104 = vunpack.c.l.b16 %v623
        %v2105 = vunpack.c.h.b16 %v623
        %v2106 = vunpack.c.l.b16 %v624
        %v2107 = vunpack.c.h.b16 %v624
        %v2108 = vunpack.c.l.b16 %v625
        %v2109 = vunpack.c.h.b16 %v625
        %v2110 = vunpack.c.l.b16 %v626
        %v2111 = vunpack.c.h.b16 %v626
        %v2112 = vunpack.c.l.b16 %v627
        %v2113 = vunpack.c.h.b16 %v627
        %v2114 = vunpack.c.l.b16 %v628
        %v2115 = vunpack.c.h.b16 %v628
        %v2116 = vunpack.c.l.b16 %v629
        %v2117 = vunpack.c.h.b16 %v629
        %v2118 = vunpack.c.l.b16 %v630
        %v2119 = vunpack.c.h.b16 %v630
        %v2120 = vunpack.c.l.b16 %v631
        %v2121 = vunpack.c.h.b16 %v631
        %v2122 = vunpack.c.l.b16 %v632
        %v2123 = vunpack.c.h.b16 %v632
        %v2124 = vunpack.c.l.b16 %v633
        %v2125 = vunpack.c.h.b16 %v633
        %v2126 = vunpack.c.l.b16 %v634
        %v2127 = vunpack.c.h.b16 %v634
        %v2128 = vunpack.c.l.b16 %v635
        %v2129 = vunpack.c.h.b16 %v635
        %v2130 = vunpack.c.l.b16 %v636
        %v2131 = vunpack.c.h.b16 %v636
        %v2132 = vunpack.c.l.b16 %v637
        %v2133 = vunpack.c.h.b16 %v637
        %v2134 = vunpack.c.l.b16 %v638
        %v2135 = vunpack.c.h.b16 %v638
        %v2136 = vunpack.c.l.b16 %v639
        %v2137 = vunpack.c.h.b16 %v639
        %v2138 = vunpack.c.l.b16 %v640
        %v2139 = vunpack.c.h.b16 %v640
        %v2140 = vunpack.c.l.b16 %v641
        %v2141 = vunpack.c.h.b16 %v641
        %v2142 = vunpack.c.l.b16 %v642
        %v2143 = vunpack.c.h.b16 %v642
        %v2144 = vunpack.c.l.b16 %v643
        %v2145 = vunpack.c.h.b16 %v643
        %v2146 = vunpack.c.l.b16 %v644
        %v2147 = vunpack.c.h.b16 %v644
        %v2148 = vunpack.c.l.b16 %v645
        %v2149 = vunpack.c.h.b16 %v645
        %v2150 = vunpack.c.l.b16 %v646
        %v2151 = vunpack.c.h.b16 %v646
        %v2152 = vunpack.c.l.b16 %v647
        %v2153 = vunpack.c.h.b16 %v647
        %v2154 = vunpack.c.l.b16 %v648
        %v2155 = vunpack.c.h.b16 %v648
        %v2156 = vunpack.c.l.b16 %v649
        %v2157 = vunpack.c.h.b16 %v649
        %v2158 = vunpack.c.l.b16 %v650
        %v2159 = vunpack.c.h.b16 %v650
        %v2160 = vunpack.c.l.b16 %v651
        %v2161 = vunpack.c.h.b16 %v651
        %v2162 = vunpack.c.l.b16 %v652
        %v2163 = vunpack.c.h.b16 %v652
        %v2164 = vunpack.c.l.b16 %v653
        %v2165 = vunpack.c.h.b16 %v653
        %v2166 = vunpack.c.l.b16 %v654
        %v2167 = vunpack.c.h.b16 %v654
        %v2168 = vunpack.c.l.b16 %v655
        %v2169 = vunpack.c.h.b16 %v655
        %v2170 = vunpack.c.l.b16 %v656
        %v2171 = vunpack.c.h.b16 %v656
        %v2172 = vunpack.c.l.b16 %v657
        %v2173 = vunpack.c.h.b16 %v657
        %v2174 = vunpack.c.l.b16 %v658
        %v2175 = vunpack.c.h.b16 %v658
        %v2176 = vunpack.c.l.b16 %v659
        %v2177 = vunpack.c.h.b16 %v659
        %v2178 = vunpack.c.l.b16 %v660
        %v2179 = vunpack.c.h.b16 %v660
        %v2180 = vunpack.c.l.b16 %v661
        %v2181 = vunpack.c.h.b16 %v661
        %v2182 = vunpack.c.l.b16 %v662
        %v2183 = vunpack.c.h.b16 %v662
        %v2184 = vunpack.c.l.b16 %v663
        %v2185 = vunpack.c.h.b16 %v663
        %v2186 = vunpack.c.l.b16 %v664
        %v2187 = vunpack.c.h.b16 %v664
        %v2188 = vunpack.c.l.b16 %v665
        %v2189 = vunpack.c.h.b16 %v665
        %v2190 = vunpack.c.l.b16 %v666
        %v2191 = vunpack.c.h.b16 %v666
        %v2192 = vunpack.c.l.b16 %v667
        %v2193 = vunpack.c.h.b16 %v667
        %v2194 = vunpack.c.l.b16 %v668
        %v2195 = vunpack.c.h.b16 %v668
        %v2196 = vunpack.c.l.b16 %v669
        %v2197 = vunpack.c.h.b16 %v669
        %v2198 = vunpack.c.l.b16 %v670
        %v2199 = vunpack.c.h.b16 %v670
        %v2200 = vunpack.c.l.b16 %v671
        %v2201 = vunpack.c.h.b16 %v671
        %v2202 = vunpack.c.l.b16 %v672
        %v2203 = vunpack.c.h.b16 %v672
        %v2204 = vunpack.c.l.b16 %v673
        %v2205 = vunpack.c.h.b16 %v673
        %v2206 = vunpack.c.l.b16 %v674
        %v2207 = vunpack.c.h.b16 %v674
        %v2208 = vunpack.c.l.b16 %v675
        %v2209 = vunpack.c.h.b16 %v675
        %v2210 = vunpack.c.l.b16 %v676
        %v2211 = vunpack.c.h.b16 %v676
        %v2212 = vunpack.c.l.b16 %v677
        %v2213 = vunpack.c.h.b16 %v677
        %v2214 = vunpack.c.l.b16 %v678
        %v2215 = vunpack.c.h.b16 %v678
        %v2216 = vunpack.c.l.b16 %v679
        %v2217 = vunpack.c.h.b16 %v679
        %v2218 = vunpack.c.l.b16 %v680
        %v2219 = vunpack.c.h.b16 %v680
        %v2220 = vunpack.c.l.b16 %v681
        %v2221 = vunpack.c.h.b16 %v681
        %v2222 = vunpack.c.l.b16 %v682
        %v2223 = vunpack.c.h.b16 %v682
        %v2224 = vunpack.c.l.b16 %v683
        %v2225 = vunpack.c.h.b16 %v683
        %v2226 = vunpack.c.l.b16 %v684
        %v2227 = vunpack.c.h.b16 %v684
        %v2228 = vunpack.c.l.b16 %v685
        %v2229 = vunpack.c.h.b16 %v685
        %v2230 = vunpack.c.l.b16 %v686
        %v2231 = vunpack.c.h.b16 %v686
        %v2232 = vunpack.c.l.b16 %v687
        %v2233 = vunpack.c.h.b16 %v687
        %v2234 = vunpack.c.l.b16 %v688
        %v2235 = vunpack.c.h.b16 %v688
        %v2236 = vunpack.c.l.b16 %v689
        %v2237 = vunpack.c.h.b16 %v689
        %v2238 = vunpack.c.l.b16 %v690
        %v2239 = vunpack.c.h.b16 %v690
        %v2240 = vunpack.c.l.b16 %v691
        %v2241 = vunpack.c.h.b16 %v691
        %v2242 = vunpack.c.l.b16 %v692
        %v2243 = vunpack.c.h.b16 %v692
        %v2244 = vunpack.c.l.b16 %v693
        %v2245 = vunpack.c.h.b16 %v693
        %v2246 = vunpack.c.l.b16 %v694
        %v2247 = vunpack.c.h.b16 %v694
        %v2248 = vunpack.c.l.b16 %v695
        %v2249 = vunpack.c.h.b16 %v695
        %v2250 = vunpack.c.l.b16 %v696
        %v2251 = vunpack.c.h.b16 %v696
        %v2252 = vunpack.c.l.b16 %v697
        %v2253 = vunpack.c.h.b16 %v697
        %v2254 = vunpack.c.l.b16 %v698
        %v2255 = vunpack.c.h.b16 %v698
        %v2256 = vunpack.c.l.b16 %v699
        %v2257 = vunpack.c.h.b16 %v699
        %v2258 = vunpack.c.l.b16 %v700
        %v2259 = vunpack.c.h.b16 %v700
        %v2260 = vunpack.c.l.b16 %v701
        %v2261 = vunpack.c.h.b16 %v701
        %v2262 = vunpack.c.l.b16 %v702
        %v2263 = vunpack.c.h.b16 %v702
        %v2264 = vunpack.c.l.b16 %v703
        %v2265 = vunpack.c.h.b16 %v703
        %v2266 = vunpack.c.l.b16 %v704
        %v2267 = vunpack.c.h.b16 %v704
        %v2268 = vunpack.c.l.b16 %v705
        %v2269 = vunpack.c.h.b16 %v705
        %v2270 = vunpack.c.l.b16 %v706
        %v2271 = vunpack.c.h.b16 %v706
        %v2272 = vunpack.c.l.b16 %v707
        %v2273 = vunpack.c.h.b16 %v707
        %v2274 = vunpack.c.l.b16 %v708
        %v2275 = vunpack.c.h.b16 %v708
        %v2276 = vunpack.c.l.b16 %v709
        %v2277 = vunpack.c.h.b16 %v709
        %v2278 = vunpack.c.l.b16 %v710
        %v2279 = vunpack.c.h.b16 %v710
        %v2280 = vunpack.c.l.b16 %v711
        %v2281 = vunpack.c.h.b16 %v711
        %v2282 = vunpack.c.l.b16 %v712
        %v2283 = vunpack.c.h.b16 %v712
        %v2284 = vunpack.c.l.b16 %v713
        %v2285 = vunpack.c.h.b16 %v713
        %v2286 = vunpack.c.l.b16 %v714
        %v2287 = vunpack.c.h.b16 %v714
        %v2288 = vunpack.c.l.b16 %v715
        %v2289 = vunpack.c.h.b16 %v715
        %v2290 = vunpack.c.l.b16 %v716
        %v2291 = vunpack.c.h.b16 %v716
        %v2292 = vunpack.c.l.b16 %v717
        %v2293 = vunpack.c.h.b16 %v717
        %v2294 = vunpack.c.l.b16 %v718
        %v2295 = vunpack.c.h.b16 %v718
        %v2296 = vunpack.c.l.b16 %v719
        %v2297 = vunpack.c.h.b16 %v719
        %v2298 = vunpack.c.l.b16 %v720
        %v2299 = vunpack.c.h.b16 %v720
        %v2300 = vunpack.c.l.b16 %v721
        %v2301 = vunpack.c.h.b16 %v721
        %v2302 = vunpack.c.l.b16 %v722
        %v2303 = vunpack.c.h.b16 %v722
        %v2304 = vunpack.c.l.b16 %v723
        %v2305 = vunpack.c.h.b16 %v723
        %v2306 = vunpack.c.l.b16 %v724
        %v2307 = vunpack.c.h.b16 %v724
        %v2308 = vunpack.c.l.b16 %v725
        %v2309 = vunpack.c.h.b16 %v725
        %v2310 = vunpack.c.l.b16 %v726
        %v2311 = vunpack.c.h.b16 %v726
        %v2312 = vunpack.c.l.b16 %v727
        %v2313 = vunpack.c.h.b16 %v727
        %v2314 = vunpack.c.l.b16 %v728
        %v2315 = vunpack.c.h.b16 %v728
        %v2316 = vunpack.c.l.b16 %v729
        %v2317 = vunpack.c.h.b16 %v729
        %v2318 = vunpack.c.l.b16 %v730
        %v2319 = vunpack.c.h.b16 %v730
        %v2320 = vunpack.c.l.b16 %v731
        %v2321 = vunpack.c.h.b16 %v731
        %v2322 = vunpack.c.l.b16 %v732
        %v2323 = vunpack.c.h.b16 %v732
        %v2324 = vunpack.c.l.b16 %v733
        %v2325 = vunpack.c.h.b16 %v733
        %v2326 = vunpack.c.l.b16 %v734
        %v2327 = vunpack.c.h.b16 %v734
        %v2328 = vunpack.c.l.b16 %v735
        %v2329 = vunpack.c.h.b16 %v735
        %v2330 = vunpack.c.l.b16 %v736
        %v2331 = vunpack.c.h.b16 %v736
        %v2332 = vunpack.c.l.b16 %v737
        %v2333 = vunpack.c.h.b16 %v737
        %v2334 = vunpack.c.l.b16 %v738
        %v2335 = vunpack.c.h.b16 %v738
        %v2336 = vunpack.c.l.b16 %v739
        %v2337 = vunpack.c.h.b16 %v739
        %v2338 = vunpack.c.l.b16 %v740
        %v2339 = vunpack.c.h.b16 %v740
        %v2340 = vunpack.c.l.b16 %v741
        %v2341 = vunpack.c.h.b16 %v741
        %v2342 = vunpack.c.l.b16 %v742
        %v2343 = vunpack.c.h.b16 %v742
        %v2344 = vunpack.c.l.b16 %v743
        %v2345 = vunpack.c.h.b16 %v743
        %v2346 = vunpack.c.l.b16 %v744
        %v2347 = vunpack.c.h.b16 %v744
        %v2348 = vunpack.c.l.b16 %v745
        %v2349 = vunpack.c.h.b16 %v745
        %v2350 = vunpack.c.l.b16 %v746
        %v2351 = vunpack.c.h.b16 %v746
        %v2352 = vunpack.c.l.b16 %v747
        %v2353 = vunpack.c.h.b16 %v747
        %v2354 = vpack.c.b16 %v1338, %v1330
        %v2355 = vpack.c.b16 %v1339, %v1331
        %v2356 = vpack.c.b16 %v1340, %v1332
        %v2357 = vpack.c.b16 %v1341, %v1333
        %v2358 = vpack.c.b16 %v1342, %v1334
        %v2359 = vpack.c.b16 %v1343, %v1335
        %v2360 = vpack.c.b16 %v1344, %v1336
        %v2361 = vpack.c.b16 %v1345, %v1337
        %v2362 = vpack.c.b16 %v1354, %v1346
        %v2363 = vpack.c.b16 %v1355, %v1347
        %v2364 = vpack.c.b16 %v1356, %v1348
        %v2365 = vpack.c.b16 %v1357, %v1349
        %v2366 = vpack.c.b16 %v1358, %v1350
        %v2367 = vpack.c.b16 %v1359, %v1351
        %v2368 = vpack.c.b16 %v1360, %v1352
        %v2369 = vpack.c.b16 %v1361, %v1353
        %v2370 = vpack.c.b16 %v1370, %v1362
        %v2371 = vpack.c.b16 %v1371, %v1363
        %v2372 = vpack.c.b16 %v1372, %v1364
        %v2373 = vpack.c.b16 %v1373, %v1365
        %v2374 = vpack.c.b16 %v1374, %v1366
        %v2375 = vpack.c.b16 %v1375, %v1367
        %v2376 = vpack.c.b16 %v1376, %v1368
        %v2377 = vpack.c.b16 %v1377, %v1369
        %v2378 = vpack.c.b16 %v1386, %v1378
        %v2379 = vpack.c.b16 %v1387, %v1379
        %v2380 = vpack.c.b16 %v1388, %v1380
        %v2381 = vpack.c.b16 %v1389, %v1381
        %v2382 = vpack.c.b16 %v1390, %v1382
        %v2383 = vpack.c.b16 %v1391, %v1383
        %v2384 = vpack.c.b16 %v1392, %v1384
        %v2385 = vpack.c.b16 %v1393, %v1385
        %v2386 = vpack.c.b16 %v1402, %v1394
        %v2387 = vpack.c.b16 %v1403, %v1395
        %v2388 = vpack.c.b16 %v1404, %v1396
        %v2389 = vpack.c.b16 %v1405, %v1397
        %v2390 = vpack.c.b16 %v1406, %v1398
        %v2391 = vpack.c.b16 %v1407, %v1399
        %v2392 = vpack.c.b16 %v1408, %v1400
        %v2393 = vpack.c.b16 %v1409, %v1401
        %v2394 = vpack.c.b16 %v1418, %v1410
        %v2395 = vpack.c.b16 %v1419, %v1411
        %v2396 = vpack.c.b16 %v1420, %v1412
        %v2397 = vpack.c.b16 %v1421, %v1413
        %v2398 = vpack.c.b16 %v1422, %v1414
        %v2399 = vpack.c.b16 %v1423, %v1415
        %v2400 = vpack.c.b16 %v1424, %v1416
        %v2401 = vpack.c.b16 %v1425, %v1417
        %v2402 = vpack.c.b16 %v1434, %v1426
        %v2403 = vpack.c.b16 %v1435, %v1427
        %v2404 = vpack.c.b16 %v1436, %v1428
        %v2405 = vpack.c.b16 %v1437, %v1429
        %v2406 = vpack.c.b16 %v1438, %v1430
        %v2407 = vpack.c.b16 %v1439, %v1431
        %v2408 = vpack.c.b16 %v1440, %v1432
        %v2409 = vpack.c.b16 %v1441, %v1433
        %v2410 = vpack.c.b16 %v1450, %v1442
        %v2411 = vpack.c.b16 %v1451, %v1443
        %v2412 = vpack.c.b16 %v1452, %v1444
        %v2413 = vpack.c.b16 %v1453, %v1445
        %v2414 = vpack.c.b16 %v1454, %v1446
        %v2415 = vpack.c.b16 %v1455, %v1447
        %v2416 = vpack.c.b16 %v1456, %v1448
        %v2417 = vpack.c.b16 %v1457, %v1449
        %v2418 = vpack.c.b16 %v1466, %v1458
        %v2419 = vpack.c.b16 %v1467, %v1459
        %v2420 = vpack.c.b16 %v1468, %v1460
        %v2421 = vpack.c.b16 %v1469, %v1461
        %v2422 = vpack.c.b16 %v1470, %v1462
        %v2423 = vpack.c.b16 %v1471, %v1463
        %v2424 = vpack.c.b16 %v1472, %v1464
        %v2425 = vpack.c.b16 %v1473, %v1465
        %v2426 = vpack.c.b16 %v1482, %v1474
        %v2427 = vpack.c.b16 %v1483, %v1475
        %v2428 = vpack.c.b16 %v1484, %v1476
        %v2429 = vpack.c.b16 %v1485, %v1477
        %v2430 = vpack.c.b16 %v1486, %v1478
        %v2431 = vpack.c.b16 %v1487, %v1479
        %v2432 = vpack.c.b16 %v1488, %v1480
        %v2433 = vpack.c.b16 %v1489, %v1481
        %v2434 = vpack.c.b16 %v1498, %v1490
        %v2435 = vpack.c.b16 %v1499, %v1491
        %v2436 = vpack.c.b16 %v1500, %v1492
        %v2437 = vpack.c.b16 %v1501, %v1493
        %v2438 = vpack.c.b16 %v1502, %v1494
        %v2439 = vpack.c.b16 %v1503, %v1495
        %v2440 = vpack.c.b16 %v1504, %v1496
        %v2441 = vpack.c.b16 %v1505, %v1497
        %v2442 = vpack.c.b16 %v1514, %v1506
        %v2443 = vpack.c.b16 %v1515, %v1507
        %v2444 = vpack.c.b16 %v1516, %v1508
        %v2445 = vpack.c.b16 %v1517, %v1509
        %v2446 = vpack.c.b16 %v1518, %v1510
        %v2447 = vpack.c.b16 %v1519, %v1511
        %v2448 = vpack.c.b16 %v1520, %v1512
        %v2449 = vpack.c.b16 %v1521, %v1513
        %v2450 = vpack.c.b16 %v1530, %v1522
        %v2451 = vpack.c.b16 %v1531, %v1523
        %v2452 = vpack.c.b16 %v1532, %v1524
        %v2453 = vpack.c.b16 %v1533, %v1525
        %v2454 = vpack.c.b16 %v1534, %v1526
        %v2455 = vpack.c.b16 %v1535, %v1527
        %v2456 = vpack.c.b16 %v1536, %v1528
        %v2457 = vpack.c.b16 %v1537, %v1529
        %v2458 = vpack.c.b16 %v1546, %v1538
        %v2459 = vpack.c.b16 %v1547, %v1539
        %v2460 = vpack.c.b16 %v1548, %v1540
        %v2461 = vpack.c.b16 %v1549, %v1541
        %v2462 = vpack.c.b16 %v1550, %v1542
        %v2463 = vpack.c.b16 %v1551, %v1543
        %v2464 = vpack.c.b16 %v1552, %v1544
        %v2465 = vpack.c.b16 %v1553, %v1545
        %v2466 = vpack.c.b16 %v1562, %v1554
        %v2467 = vpack.c.b16 %v1563, %v1555
        %v2468 = vpack.c.b16 %v1564, %v1556
        %v2469 = vpack.c.b16 %v1565, %v1557
        %v2470 = vpack.c.b16 %v1566, %v1558
        %v2471 = vpack.c.b16 %v1567, %v1559
        %v2472 = vpack.c.b16 %v1568, %v1560
        %v2473 = vpack.c.b16 %v1569, %v1561
        %v2474 = vpack.c.b16 %v1578, %v1570
        %v2475 = vpack.c.b16 %v1579, %v1571
        %v2476 = vpack.c.b16 %v1580, %v1572
        %v2477 = vpack.c.b16 %v1581, %v1573
        %v2478 = vpack.c.b16 %v1582, %v1574
        %v2479 = vpack.c.b16 %v1583, %v1575
        %v2480 = vpack.c.b16 %v1584, %v1576
        %v2481 = vpack.c.b16 %v1585, %v1577
        %v2482 = vpack.c.b16 %v1594, %v1586
        %v2483 = vpack.c.b16 %v1595, %v1587
        %v2484 = vpack.c.b16 %v1596, %v1588
        %v2485 = vpack.c.b16 %v1597, %v1589
        %v2486 = vpack.c.b16 %v1598, %v1590
        %v2487 = vpack.c.b16 %v1599, %v1591
        %v2488 = vpack.c.b16 %v1600, %v1592
        %v2489 = vpack.c.b16 %v1601, %v1593
        %v2490 = vpack.c.b16 %v1610, %v1602
        %v2491 = vpack.c.b16 %v1611, %v1603
        %v2492 = vpack.c.b16 %v1612, %v1604
        %v2493 = vpack.c.b16 %v1613, %v1605
        %v2494 = vpack.c.b16 %v1614, %v1606
        %v2495 = vpack.c.b16 %v1615, %v1607
        %v2496 = vpack.c.b16 %v1616, %v1608
        %v2497 = vpack.c.b16 %v1617, %v1609
        %v2498 = vpack.c.b16 %v1626, %v1618
        %v2499 = vpack.c.b16 %v1627, %v1619
        %v2500 = vpack.c.b16 %v1628, %v1620
        %v2501 = vpack.c.b16 %v1629, %v1621
        %v2502 = vpack.c.b16 %v1630, %v1622
        %v2503 = vpack.c.b16 %v1631, %v1623
        %v2504 = vpack.c.b16 %v1632, %v1624
        %v2505 = vpack.c.b16 %v1633, %v1625
        %v2506 = vpack.c.b16 %v1642, %v1634
        %v2507 = vpack.c.b16 %v1643, %v1635
        %v2508 = vpack.c.b16 %v1644, %v1636
        %v2509 = vpack.c.b16 %v1645, %v1637
        %v2510 = vpack.c.b16 %v1646, %v1638
        %v2511 = vpack.c.b16 %v1647, %v1639
        %v2512 = vpack.c.b16 %v1648, %v1640
        %v2513 = vpack.c.b16 %v1649, %v1641
        %v2514 = vpack.c.b16 %v1658, %v1650
        %v2515 = vpack.c.b16 %v1659, %v1651
        %v2516 = vpack.c.b16 %v1660, %v1652
        %v2517 = vpack.c.b16 %v1661, %v1653
        %v2518 = vpack.c.b16 %v1662, %v1654
        %v2519 = vpack.c.b16 %v1663, %v1655
        %v2520 = vpack.c.b16 %v1664, %v1656
        %v2521 = vpack.c.b16 %v1665, %v1657
        %v2522 = vpack.c.b16 %v1674, %v1666
        %v2523 = vpack.c.b16 %v1675, %v1667
        %v2524 = vpack.c.b16 %v1676, %v1668
        %v2525 = vpack.c.b16 %v1677, %v1669
        %v2526 = vpack.c.b16 %v1678, %v1670
        %v2527 = vpack.c.b16 %v1679, %v1671
        %v2528 = vpack.c.b16 %v1680, %v1672
        %v2529 = vpack.c.b16 %v1681, %v1673
        %v2530 = vpack.c.b16 %v1690, %v1682
        %v2531 = vpack.c.b16 %v1691, %v1683
        %v2532 = vpack.c.b16 %v1692, %v1684
        %v2533 = vpack.c.b16 %v1693, %v1685
        %v2534 = vpack.c.b16 %v1694, %v1686
        %v2535 = vpack.c.b16 %v1695, %v1687
        %v2536 = vpack.c.b16 %v1696, %v1688
        %v2537 = vpack.c.b16 %v1697, %v1689
        %v2538 = vpack.c.b16 %v1706, %v1698
        %v2539 = vpack.c.b16 %v1707, %v1699
        %v2540 = vpack.c.b16 %v1708, %v1700
        %v2541 = vpack.c.b16 %v1709, %v1701
        %v2542 = vpack.c.b16 %v1710, %v1702
        %v2543 = vpack.c.b16 %v1711, %v1703
        %v2544 = vpack.c.b16 %v1712, %v1704
        %v2545 = vpack.c.b16 %v1713, %v1705
        %v2546 = vpack.c.b16 %v1722, %v1714
        %v2547 = vpack.c.b16 %v1723, %v1715
        %v2548 = vpack.c.b16 %v1724, %v1716
        %v2549 = vpack.c.b16 %v1725, %v1717
        %v2550 = vpack.c.b16 %v1726, %v1718
        %v2551 = vpack.c.b16 %v1727, %v1719
        %v2552 = vpack.c.b16 %v1728, %v1720
        %v2553 = vpack.c.b16 %v1729, %v1721
        %v2554 = vpack.c.b16 %v1738, %v1730
        %v2555 = vpack.c.b16 %v1739, %v1731
        %v2556 = vpack.c.b16 %v1740, %v1732
        %v2557 = vpack.c.b16 %v1741, %v1733
        %v2558 = vpack.c.b16 %v1742, %v1734
        %v2559 = vpack.c.b16 %v1743, %v1735
        %v2560 = vpack.c.b16 %v1744, %v1736
        %v2561 = vpack.c.b16 %v1745, %v1737
        %v2562 = vpack.c.b16 %v1754, %v1746
        %v2563 = vpack.c.b16 %v1755, %v1747
        %v2564 = vpack.c.b16 %v1756, %v1748
        %v2565 = vpack.c.b16 %v1757, %v1749
        %v2566 = vpack.c.b16 %v1758, %v1750
        %v2567 = vpack.c.b16 %v1759, %v1751
        %v2568 = vpack.c.b16 %v1760, %v1752
        %v2569 = vpack.c.b16 %v1761, %v1753
        %v2570 = vpack.c.b16 %v1770, %v1762
        %v2571 = vpack.c.b16 %v1771, %v1763
        %v2572 = vpack.c.b16 %v1772, %v1764
        %v2573 = vpack.c.b16 %v1773, %v1765
        %v2574 = vpack.c.b16 %v1774, %v1766
        %v2575 = vpack.c.b16 %v1775, %v1767
        %v2576 = vpack.c.b16 %v1776, %v1768
        %v2577 = vpack.c.b16 %v1777, %v1769
        %v2578 = vpack.c.b16 %v1786, %v1778
        %v2579 = vpack.c.b16 %v1787, %v1779
        %v2580 = vpack.c.b16 %v1788, %v1780
        %v2581 = vpack.c.b16 %v1789, %v1781
        %v2582 = vpack.c.b16 %v1790, %v1782
        %v2583 = vpack.c.b16 %v1791, %v1783
        %v2584 = vpack.c.b16 %v1792, %v1784
        %v2585 = vpack.c.b16 %v1793, %v1785
        %v2586 = vpack.c.b16 %v1802, %v1794
        %v2587 = vpack.c.b16 %v1803, %v1795
        %v2588 = vpack.c.b16 %v1804, %v1796
        %v2589 = vpack.c.b16 %v1805, %v1797
        %v2590 = vpack.c.b16 %v1806, %v1798
        %v2591 = vpack.c.b16 %v1807, %v1799
        %v2592 = vpack.c.b16 %v1808, %v1800
        %v2593 = vpack.c.b16 %v1809, %v1801
        %v2594 = vpack.c.b16 %v1818, %v1810
        %v2595 = vpack.c.b16 %v1819, %v1811
        %v2596 = vpack.c.b16 %v1820, %v1812
        %v2597 = vpack.c.b16 %v1821, %v1813
        %v2598 = vpack.c.b16 %v1822, %v1814
        %v2599 = vpack.c.b16 %v1823, %v1815
        %v2600 = vpack.c.b16 %v1824, %v1816
        %v2601 = vpack.c.b16 %v1825, %v1817
        %v2602 = vpack.c.b16 %v1834, %v1826
        %v2603 = vpack.c.b16 %v1835, %v1827
        %v2604 = vpack.c.b16 %v1836, %v1828
        %v2605 = vpack.c.b16 %v1837, %v1829
        %v2606 = vpack.c.b16 %v1838, %v1830
        %v2607 = vpack.c.b16 %v1839, %v1831
        %v2608 = vpack.c.b16 %v1840, %v1832
        %v2609 = vpack.c.b16 %v1841, %v1833
        %v2610 = vpack.c.b16 %v1850, %v1842
        %v2611 = vpack.c.b16 %v1851, %v1843
        %v2612 = vpack.c.b16 %v1852, %v1844
        %v2613 = vpack.c.b16 %v1853, %v1845
        %v2614 = vpack.c.b16 %v1854, %v1846
        %v2615 = vpack.c.b16 %v1855, %v1847
        %v2616 = vpack.c.b16 %v1856, %v1848
        %v2617 = vpack.c.b16 %v1857, %v1849
        %v2618 = vpack.c.b16 %v1866, %v1858
        %v2619 = vpack.c.b16 %v1867, %v1859
        %v2620 = vpack.c.b16 %v1868, %v1860
        %v2621 = vpack.c.b16 %v1869, %v1861
        %v2622 = vpack.c.b16 %v1870, %v1862
        %v2623 = vpack.c.b16 %v1871, %v1863
        %v2624 = vpack.c.b16 %v1872, %v1864
        %v2625 = vpack.c.b16 %v1873, %v1865
        %v2626 = vpack.c.b16 %v1882, %v1874
        %v2627 = vpack.c.b16 %v1883, %v1875
        %v2628 = vpack.c.b16 %v1884, %v1876
        %v2629 = vpack.c.b16 %v1885, %v1877
        %v2630 = vpack.c.b16 %v1886, %v1878
        %v2631 = vpack.c.b16 %v1887, %v1879
        %v2632 = vpack.c.b16 %v1888, %v1880
        %v2633 = vpack.c.b16 %v1889, %v1881
        %v2634 = vpack.c.b16 %v1898, %v1890
        %v2635 = vpack.c.b16 %v1899, %v1891
        %v2636 = vpack.c.b16 %v1900, %v1892
        %v2637 = vpack.c.b16 %v1901, %v1893
        %v2638 = vpack.c.b16 %v1902, %v1894
        %v2639 = vpack.c.b16 %v1903, %v1895
        %v2640 = vpack.c.b16 %v1904, %v1896
        %v2641 = vpack.c.b16 %v1905, %v1897
        %v2642 = vpack.c.b16 %v1914, %v1906
        %v2643 = vpack.c.b16 %v1915, %v1907
        %v2644 = vpack.c.b16 %v1916, %v1908
        %v2645 = vpack.c.b16 %v1917, %v1909
        %v2646 = vpack.c.b16 %v1918, %v1910
        %v2647 = vpack.c.b16 %v1919, %v1911
        %v2648 = vpack.c.b16 %v1920, %v1912
        %v2649 = vpack.c.b16 %v1921, %v1913
        %v2650 = vpack.c.b16 %v1930, %v1922
        %v2651 = vpack.c.b16 %v1931, %v1923
        %v2652 = vpack.c.b16 %v1932, %v1924
        %v2653 = vpack.c.b16 %v1933, %v1925
        %v2654 = vpack.c.b16 %v1934, %v1926
        %v2655 = vpack.c.b16 %v1935, %v1927
        %v2656 = vpack.c.b16 %v1936, %v1928
        %v2657 = vpack.c.b16 %v1937, %v1929
        %v2658 = vpack.c.b16 %v1946, %v1938
        %v2659 = vpack.c.b16 %v1947, %v1939
        %v2660 = vpack.c.b16 %v1948, %v1940
        %v2661 = vpack.c.b16 %v1949, %v1941
        %v2662 = vpack.c.b16 %v1950, %v1942
        %v2663 = vpack.c.b16 %v1951, %v1943
        %v2664 = vpack.c.b16 %v1952, %v1944
        %v2665 = vpack.c.b16 %v1953, %v1945
        %v2666 = vpack.c.b16 %v1962, %v1954
        %v2667 = vpack.c.b16 %v1963, %v1955
        %v2668 = vpack.c.b16 %v1964, %v1956
        %v2669 = vpack.c.b16 %v1965, %v1957
        %v2670 = vpack.c.b16 %v1966, %v1958
        %v2671 = vpack.c.b16 %v1967, %v1959
        %v2672 = vpack.c.b16 %v1968, %v1960
        %v2673 = vpack.c.b16 %v1969, %v1961
        %v2674 = vpack.c.b16 %v1978, %v1970
        %v2675 = vpack.c.b16 %v1979, %v1971
        %v2676 = vpack.c.b16 %v1980, %v1972
        %v2677 = vpack.c.b16 %v1981, %v1973
        %v2678 = vpack.c.b16 %v1982, %v1974
        %v2679 = vpack.c.b16 %v1983, %v1975
        %v2680 = vpack.c.b16 %v1984, %v1976
        %v2681 = vpack.c.b16 %v1985, %v1977
        %v2682 = vpack.c.b16 %v1994, %v1986
        %v2683 = vpack.c.b16 %v1995, %v1987
        %v2684 = vpack.c.b16 %v1996, %v1988
        %v2685 = vpack.c.b16 %v1997, %v1989
        %v2686 = vpack.c.b16 %v1998, %v1990
        %v2687 = vpack.c.b16 %v1999, %v1991
        %v2688 = vpack.c.b16 %v2000, %v1992
        %v2689 = vpack.c.b16 %v2001, %v1993
        %v2690 = vpack.c.b16 %v2010, %v2002
        %v2691 = vpack.c.b16 %v2011, %v2003
        %v2692 = vpack.c.b16 %v2012, %v2004
        %v2693 = vpack.c.b16 %v2013, %v2005
        %v2694 = vpack.c.b16 %v2014, %v2006
        %v2695 = vpack.c.b16 %v2015, %v2007
        %v2696 = vpack.c.b16 %v2016, %v2008
        %v2697 = vpack.c.b16 %v2017, %v2009
        %v2698 = vpack.c.b16 %v2026, %v2018
        %v2699 = vpack.c.b16 %v2027, %v2019
        %v2700 = vpack.c.b16 %v2028, %v2020
        %v2701 = vpack.c.b16 %v2029, %v2021
        %v2702 = vpack.c.b16 %v2030, %v2022
        %v2703 = vpack.c.b16 %v2031, %v2023
        %v2704 = vpack.c.b16 %v2032, %v2024
        %v2705 = vpack.c.b16 %v2033, %v2025
        %v2706 = vpack.c.b16 %v2042, %v2034
        %v2707 = vpack.c.b16 %v2043, %v2035
        %v2708 = vpack.c.b16 %v2044, %v2036
        %v2709 = vpack.c.b16 %v2045, %v2037
        %v2710 = vpack.c.b16 %v2046, %v2038
        %v2711 = vpack.c.b16 %v2047, %v2039
        %v2712 = vpack.c.b16 %v2048, %v2040
        %v2713 = vpack.c.b16 %v2049, %v2041
        %v2714 = vpack.c.b16 %v2058, %v2050
        %v2715 = vpack.c.b16 %v2059, %v2051
        %v2716 = vpack.c.b16 %v2060, %v2052
        %v2717 = vpack.c.b16 %v2061, %v2053
        %v2718 = vpack.c.b16 %v2062, %v2054
        %v2719 = vpack.c.b16 %v2063, %v2055
        %v2720 = vpack.c.b16 %v2064, %v2056
        %v2721 = vpack.c.b16 %v2065, %v2057
        %v2722 = vpack.c.b16 %v2074, %v2066
        %v2723 = vpack.c.b16 %v2075, %v2067
        %v2724 = vpack.c.b16 %v2076, %v2068
        %v2725 = vpack.c.b16 %v2077, %v2069
        %v2726 = vpack.c.b16 %v2078, %v2070
        %v2727 = vpack.c.b16 %v2079, %v2071
        %v2728 = vpack.c.b16 %v2080, %v2072
        %v2729 = vpack.c.b16 %v2081, %v2073
        %v2730 = vpack.c.b16 %v2090, %v2082
        %v2731 = vpack.c.b16 %v2091, %v2083
        %v2732 = vpack.c.b16 %v2092, %v2084
        %v2733 = vpack.c.b16 %v2093, %v2085
        %v2734 = vpack.c.b16 %v2094, %v2086
        %v2735 = vpack.c.b16 %v2095, %v2087
        %v2736 = vpack.c.b16 %v2096, %v2088
        %v2737 = vpack.c.b16 %v2097, %v2089
        %v2738 = vpack.c.b16 %v2106, %v2098
        %v2739 = vpack.c.b16 %v2107, %v2099
        %v2740 = vpack.c.b16 %v2108, %v2100
        %v2741 = vpack.c.b16 %v2109, %v2101
        %v2742 = vpack.c.b16 %v2110, %v2102
        %v2743 = vpack.c.b16 %v2111, %v2103
        %v2744 = vpack.c.b16 %v2112, %v2104
        %v2745 = vpack.c.b16 %v2113, %v2105
        %v2746 = vpack.c.b16 %v2122, %v2114
        %v2747 = vpack.c.b16 %v2123, %v2115
        %v2748 = vpack.c.b16 %v2124, %v2116
        %v2749 = vpack.c.b16 %v2125, %v2117
        %v2750 = vpack.c.b16 %v2126, %v2118
        %v2751 = vpack.c.b16 %v2127, %v2119
        %v2752 = vpack.c.b16 %v2128, %v2120
        %v2753 = vpack.c.b16 %v2129, %v2121
        %v2754 = vpack.c.b16 %v2138, %v2130
        %v2755 = vpack.c.b16 %v2139, %v2131
        %v2756 = vpack.c.b16 %v2140, %v2132
        %v2757 = vpack.c.b16 %v2141, %v2133
        %v2758 = vpack.c.b16 %v2142, %v2134
        %v2759 = vpack.c.b16 %v2143, %v2135
        %v2760 = vpack.c.b16 %v2144, %v2136
        %v2761 = vpack.c.b16 %v2145, %v2137
        %v2762 = vpack.c.b16 %v2154, %v2146
        %v2763 = vpack.c.b16 %v2155, %v2147
        %v2764 = vpack.c.b16 %v2156, %v2148
        %v2765 = vpack.c.b16 %v2157, %v2149
        %v2766 = vpack.c.b16 %v2158, %v2150
        %v2767 = vpack.c.b16 %v2159, %v2151
        %v2768 = vpack.c.b16 %v2160, %v2152
        %v2769 = vpack.c.b16 %v2161, %v2153
        %v2770 = vpack.c.b16 %v2170, %v2162
        %v2771 = vpack.c.b16 %v2171, %v2163
        %v2772 = vpack.c.b16 %v2172, %v2164
        %v2773 = vpack.c.b16 %v2173, %v2165
        %v2774 = vpack.c.b16 %v2174, %v2166
        %v2775 = vpack.c.b16 %v2175, %v2167
        %v2776 = vpack.c.b16 %v2176, %v2168
        %v2777 = vpack.c.b16 %v2177, %v2169
        %v2778 = vpack.c.b16 %v2186, %v2178
        %v2779 = vpack.c.b16 %v2187, %v2179
        %v2780 = vpack.c.b16 %v2188, %v2180
        %v2781 = vpack.c.b16 %v2189, %v2181
        %v2782 = vpack.c.b16 %v2190, %v2182
        %v2783 = vpack.c.b16 %v2191, %v2183
        %v2784 = vpack.c.b16 %v2192, %v2184
        %v2785 = vpack.c.b16 %v2193, %v2185
        %v2786 = vpack.c.b16 %v2202, %v2194
        %v2787 = vpack.c.b16 %v2203, %v2195
        %v2788 = vpack.c.b16 %v2204, %v2196
        %v2789 = vpack.c.b16 %v2205, %v2197
        %v2790 = vpack.c.b16 %v2206, %v2198
        %v2791 = vpack.c.b16 %v2207, %v2199
        %v2792 = vpack.c.b16 %v2208, %v2200
        %v2793 = vpack.c.b16 %v2209, %v2201
        %v2794 = vpack.c.b16 %v2218, %v2210
        %v2795 = vpack.c.b16 %v2219, %v2211
        %v2796 = vpack.c.b16 %v2220, %v2212
        %v2797 = vpack.c.b16 %v2221, %v2213
        %v2798 = vpack.c.b16 %v2222, %v2214
        %v2799 = vpack.c.b16 %v2223, %v2215
        %v2800 = vpack.c.b16 %v2224, %v2216
        %v2801 = vpack.c.b16 %v2225, %v2217
        %v2802 = vpack.c.b16 %v2234, %v2226
        %v2803 = vpack.c.b16 %v2235, %v2227
        %v2804 = vpack.c.b16 %v2236, %v2228
        %v2805 = vpack.c.b16 %v2237, %v2229
        %v2806 = vpack.c.b16 %v2238, %v2230
        %v2807 = vpack.c.b16 %v2239, %v2231
        %v2808 = vpack.c.b16 %v2240, %v2232
        %v2809 = vpack.c.b16 %v2241, %v2233
        %v2810 = vpack.c.b16 %v2250, %v2242
        %v2811 = vpack.c.b16 %v2251, %v2243
        %v2812 = vpack.c.b16 %v2252, %v2244
        %v2813 = vpack.c.b16 %v2253, %v2245
        %v2814 = vpack.c.b16 %v2254, %v2246
        %v2815 = vpack.c.b16 %v2255, %v2247
        %v2816 = vpack.c.b16 %v2256, %v2248
        %v2817 = vpack.c.b16 %v2257, %v2249
        %v2818 = vpack.c.b16 %v2266, %v2258
        %v2819 = vpack.c.b16 %v2267, %v2259
        %v2820 = vpack.c.b16 %v2268, %v2260
        %v2821 = vpack.c.b16 %v2269, %v2261
        %v2822 = vpack.c.b16 %v2270, %v2262
        %v2823 = vpack.c.b16 %v2271, %v2263
        %v2824 = vpack.c.b16 %v2272, %v2264
        %v2825 = vpack.c.b16 %v2273, %v2265
        %v2826 = vpack.c.b16 %v2282, %v2274
        %v2827 = vpack.c.b16 %v2283, %v2275
        %v2828 = vpack.c.b16 %v2284, %v2276
        %v2829 = vpack.c.b16 %v2285, %v2277
        %v2830 = vpack.c.b16 %v2286, %v2278
        %v2831 = vpack.c.b16 %v2287, %v2279
        %v2832 = vpack.c.b16 %v2288, %v2280
        %v2833 = vpack.c.b16 %v2289, %v2281
        %v2834 = vpack.c.b16 %v2298, %v2290
        %v2835 = vpack.c.b16 %v2299, %v2291
        %v2836 = vpack.c.b16 %v2300, %v2292
        %v2837 = vpack.c.b16 %v2301, %v2293
        %v2838 = vpack.c.b16 %v2302, %v2294
        %v2839 = vpack.c.b16 %v2303, %v2295
        %v2840 = vpack.c.b16 %v2304, %v2296
        %v2841 = vpack.c.b16 %v2305, %v2297
        %v2842 = vpack.c.b16 %v2314, %v2306
        %v2843 = vpack.c.b16 %v2315, %v2307
        %v2844 = vpack.c.b16 %v2316, %v2308
        %v2845 = vpack.c.b16 %v2317, %v2309
        %v2846 = vpack.c.b16 %v2318, %v2310
        %v2847 = vpack.c.b16 %v2319, %v2311
        %v2848 = vpack.c.b16 %v2320, %v2312
        %v2849 = vpack.c.b16 %v2321, %v2313
        %v2850 = vpack.c.b16 %v2330, %v2322
        %v2851 = vpack.c.b16 %v2331, %v2323
        %v2852 = vpack.c.b16 %v2332, %v2324
        %v2853 = vpack.c.b16 %v2333, %v2325
        %v2854 = vpack.c.b16 %v2334, %v2326
        %v2855 = vpack.c.b16 %v2335, %v2327
        %v2856 = vpack.c.b16 %v2336, %v2328
        %v2857 = vpack.c.b16 %v2337, %v2329
        %v2858 = vpack.c.b16 %v2346, %v2338
        %v2859 = vpack.c.b16 %v2347, %v2339
        %v2860 = vpack.c.b16 %v2348, %v2340
        %v2861 = vpack.c.b16 %v2349, %v2341
        %v2862 = vpack.c.b16 %v2350, %v2342
        %v2863 = vpack.c.b16 %v2351, %v2343
        %v2864 = vpack.c.b16 %v2352, %v2344
        %v2865 = vpack.c.b16 %v2353, %v2345
        %3378 = vmatprep.subr.bf16.mxu0 %v2355
        %3379 = vmatpush1.bf16.msra.mxu0 %v2354
        %3380 = vmatprep.subr.bf16.mxu0 %v2363
        %3381 = vmatpush1.bf16.msra.mxu0 %v2362
        %3382 = vmatprep.subr.bf16.mxu0 %v2371
        %3383 = vmatpush1.bf16.msra.mxu0 %v2370
        %3384 = vmatprep.subr.bf16.mxu0 %v2379
        %3385 = vmatpush1.bf16.msra.mxu0 %v2378
        %3386 = vmatprep.subr.bf16.mxu0 %v2387
        %3387 = vmatpush1.bf16.msra.mxu0 %v2386
        %3388 = vmatprep.subr.bf16.mxu0 %v2395
        %3389 = vmatpush1.bf16.msra.mxu0 %v2394
        %3390 = vmatprep.subr.bf16.mxu0 %v2403
        %3391 = vmatpush1.bf16.msra.mxu0 %v2402
        %3392 = vmatprep.subr.bf16.mxu0 %v2411
        %3393 = vmatpush1.bf16.msra.mxu0 %v2410
        %3394 = vmatprep.subr.bf16.mxu0 %v2419
        %3395 = vmatpush1.bf16.msra.mxu0 %v2418
        %3396 = vmatprep.subr.bf16.mxu0 %v2427
        %3397 = vmatpush1.bf16.msra.mxu0 %v2426
        %3398 = vmatprep.subr.bf16.mxu0 %v2435
        %3399 = vmatpush1.bf16.msra.mxu0 %v2434
        %3400 = vmatprep.subr.bf16.mxu0 %v2443
        %3401 = vmatpush1.bf16.msra.mxu0 %v2442
        %3402 = vmatprep.subr.bf16.mxu0 %v2451
        %3403 = vmatpush1.bf16.msra.mxu0 %v2450
        %3404 = vmatprep.subr.bf16.mxu0 %v2459
        %3405 = vmatpush1.bf16.msra.mxu0 %v2458
        %3406 = vmatprep.subr.bf16.mxu0 %v2467
        %3407 = vmatpush1.bf16.msra.mxu0 %v2466
        %3408 = vmatprep.subr.bf16.mxu0 %v2475
        %3409 = vmatpush1.bf16.msra.mxu0 %v2474
        %3410 = vmatprep.mubr.bf16.mxu0 %v803
        %3411 = vmatmul.mubr.bf16.gmra.mrb[0].mxu0 %v802
        %v3412 = vpop.f32.mrb[0].mxu0
        %v3413 = vadd.f32 %v753, %v3412
        %v3414 = vpop.f32.mrb[0].mxu0
        %v3415 = vadd.f32 %v757, %v3414
        %v3416 = vpop.f32.mrb[0].mxu0
        %v3417 = vpop.f32.mrb[0].mxu0
        %3418 = vdwg.mxu0
        %3419 = vmatprep.subr.bf16.mxu0 %v2483
        %3420 = vmatpush1.bf16.msra.mxu0 %v2482
        %3421 = vmatprep.subr.bf16.mxu0 %v2491
        %3422 = vmatpush1.bf16.msra.mxu0 %v2490
        %3423 = vmatprep.subr.bf16.mxu0 %v2499
        %3424 = vmatpush1.bf16.msra.mxu0 %v2498
        %3425 = vmatprep.subr.bf16.mxu0 %v2507
        %3426 = vmatpush1.bf16.msra.mxu0 %v2506
        %3427 = vmatprep.subr.bf16.mxu0 %v2515
        %3428 = vmatpush1.bf16.msra.mxu0 %v2514
        %3429 = vmatprep.subr.bf16.mxu0 %v2523
        %3430 = vmatpush1.bf16.msra.mxu0 %v2522
        %3431 = vmatprep.subr.bf16.mxu0 %v2531
        %3432 = vmatpush1.bf16.msra.mxu0 %v2530
        %3433 = vmatprep.subr.bf16.mxu0 %v2539
        %3434 = vmatpush1.bf16.msra.mxu0 %v2538
        %3435 = vmatprep.subr.bf16.mxu0 %v2547
        %3436 = vmatpush1.bf16.msra.mxu0 %v2546
        %3437 = vmatprep.subr.bf16.mxu0 %v2555
        %3438 = vmatpush1.bf16.msra.mxu0 %v2554
        %3439 = vmatprep.subr.bf16.mxu0 %v2563
        %3440 = vmatpush1.bf16.msra.mxu0 %v2562
        %3441 = vmatprep.subr.bf16.mxu0 %v2571
        %3442 = vmatpush1.bf16.msra.mxu0 %v2570
        %3443 = vmatprep.subr.bf16.mxu0 %v2579
        %3444 = vmatpush1.bf16.msra.mxu0 %v2578
        %3445 = vmatprep.subr.bf16.mxu0 %v2587
        %3446 = vmatpush1.bf16.msra.mxu0 %v2586
        %3447 = vmatprep.subr.bf16.mxu0 %v2595
        %3448 = vmatpush1.bf16.msra.mxu0 %v2594
        %3449 = vmatprep.subr.bf16.mxu0 %v2603
        %3450 = vmatpush1.bf16.msra.mxu0 %v2602
        %3451 = vmatprep.mubr.bf16.mxu0 %v805
        %3452 = vmatmul.mubr.bf16.gmra.mrb[0].mxu0 %v804
        %v3453 = vpop.f32.mrb[0].mxu0
        %v3454 = vadd.f32 %v3413, %v3453
        %v3455 = vpop.f32.mrb[0].mxu0
        %v3456 = vadd.f32 %v3415, %v3455
        %v3457 = vpop.f32.mrb[0].mxu0
        %v3458 = vpop.f32.mrb[0].mxu0
        %3459 = vdwg.mxu0
        %3460 = vmatprep.subr.bf16.mxu0 %v2611
        %3461 = vmatpush1.bf16.msra.mxu0 %v2610
        %3462 = vmatprep.subr.bf16.mxu0 %v2619
        %3463 = vmatpush1.bf16.msra.mxu0 %v2618
        %3464 = vmatprep.subr.bf16.mxu0 %v2627
        %3465 = vmatpush1.bf16.msra.mxu0 %v2626
        %3466 = vmatprep.subr.bf16.mxu0 %v2635
        %3467 = vmatpush1.bf16.msra.mxu0 %v2634
        %3468 = vmatprep.subr.bf16.mxu0 %v2643
        %3469 = vmatpush1.bf16.msra.mxu0 %v2642
        %3470 = vmatprep.subr.bf16.mxu0 %v2651
        %3471 = vmatpush1.bf16.msra.mxu0 %v2650
        %3472 = vmatprep.subr.bf16.mxu0 %v2659
        %3473 = vmatpush1.bf16.msra.mxu0 %v2658
        %3474 = vmatprep.subr.bf16.mxu0 %v2667
        %3475 = vmatpush1.bf16.msra.mxu0 %v2666
        %3476 = vmatprep.subr.bf16.mxu0 %v2675
        %3477 = vmatpush1.bf16.msra.mxu0 %v2674
        %3478 = vmatprep.subr.bf16.mxu0 %v2683
        %3479 = vmatpush1.bf16.msra.mxu0 %v2682
        %3480 = vmatprep.subr.bf16.mxu0 %v2691
        %3481 = vmatpush1.bf16.msra.mxu0 %v2690
        %3482 = vmatprep.subr.bf16.mxu0 %v2699
        %3483 = vmatpush1.bf16.msra.mxu0 %v2698
        %3484 = vmatprep.subr.bf16.mxu0 %v2707
        %3485 = vmatpush1.bf16.msra.mxu0 %v2706
        %3486 = vmatprep.subr.bf16.mxu0 %v2715
        %3487 = vmatpush1.bf16.msra.mxu0 %v2714
        %3488 = vmatprep.subr.bf16.mxu0 %v2723
        %3489 = vmatpush1.bf16.msra.mxu0 %v2722
        %3490 = vmatprep.subr.bf16.mxu0 %v2731
        %3491 = vmatpush1.bf16.msra.mxu0 %v2730
        %3492 = vmatprep.mubr.bf16.mxu0 %v807
        %3493 = vmatmul.mubr.bf16.gmra.mrb[0].mxu0 %v806
        %v3494 = vpop.f32.mrb[0].mxu0
        %v3495 = vadd.f32 %v3454, %v3494
        %v3496 = vpop.f32.mrb[0].mxu0
        %v3497 = vadd.f32 %v3456, %v3496
        %v3498 = vpop.f32.mrb[0].mxu0
        %v3499 = vpop.f32.mrb[0].mxu0
        %3500 = vdwg.mxu0
        %3501 = vmatprep.subr.bf16.mxu0 %v2739
        %3502 = vmatpush1.bf16.msra.mxu0 %v2738
        %3503 = vmatprep.subr.bf16.mxu0 %v2747
        %3504 = vmatpush1.bf16.msra.mxu0 %v2746
        %3505 = vmatprep.subr.bf16.mxu0 %v2755
        %3506 = vmatpush1.bf16.msra.mxu0 %v2754
        %3507 = vmatprep.subr.bf16.mxu0 %v2763
        %3508 = vmatpush1.bf16.msra.mxu0 %v2762
        %3509 = vmatprep.subr.bf16.mxu0 %v2771
        %3510 = vmatpush1.bf16.msra.mxu0 %v2770
        %3511 = vmatprep.subr.bf16.mxu0 %v2779
        %3512 = vmatpush1.bf16.msra.mxu0 %v2778
        %3513 = vmatprep.subr.bf16.mxu0 %v2787
        %3514 = vmatpush1.bf16.msra.mxu0 %v2786
        %3515 = vmatprep.subr.bf16.mxu0 %v2795
        %3516 = vmatpush1.bf16.msra.mxu0 %v2794
        %3517 = vmatprep.subr.bf16.mxu0 %v2803
        %3518 = vmatpush1.bf16.msra.mxu0 %v2802
        %3519 = vmatprep.subr.bf16.mxu0 %v2811
        %3520 = vmatpush1.bf16.msra.mxu0 %v2810
        %3521 = vmatprep.subr.bf16.mxu0 %v2819
        %3522 = vmatpush1.bf16.msra.mxu0 %v2818
        %3523 = vmatprep.subr.bf16.mxu0 %v2827
        %3524 = vmatpush1.bf16.msra.mxu0 %v2826
        %3525 = vmatprep.subr.bf16.mxu0 %v2835
        %3526 = vmatpush1.bf16.msra.mxu0 %v2834
        %3527 = vmatprep.subr.bf16.mxu0 %v2843
        %3528 = vmatpush1.bf16.msra.mxu0 %v2842
        %3529 = vmatprep.subr.bf16.mxu0 %v2851
        %3530 = vmatpush1.bf16.msra.mxu0 %v2850
        %3531 = vmatprep.subr.bf16.mxu0 %v2859
        %3532 = vmatpush1.bf16.msra.mxu0 %v2858
        %3533 = vmatprep.mubr.bf16.mxu0 %v809
        %3534 = vmatmul.mubr.bf16.gmra.mrb[0].mxu0 %v808
        %v3535 = vpop.f32.mrb[0].mxu0
        %v3536 = vadd.f32 %v3495, %v3535
        %v3537 = vpop.f32.mrb[0].mxu0
        %v3538 = vadd.f32 %v3497, %v3537
        %v3539 = vpop.f32.mrb[0].mxu0
        %v3540 = vpop.f32.mrb[0].mxu0
        %3541 = vdwg.mxu0
        %3542 = vmatprep.subr.bf16.mxu0 %v2357
        %3543 = vmatpush1.bf16.msra.mxu0 %v2356
        %3544 = vmatprep.subr.bf16.mxu0 %v2365
        %3545 = vmatpush1.bf16.msra.mxu0 %v2364
        %3546 = vmatprep.subr.bf16.mxu0 %v2373
        %3547 = vmatpush1.bf16.msra.mxu0 %v2372
        %3548 = vmatprep.subr.bf16.mxu0 %v2381
        %3549 = vmatpush1.bf16.msra.mxu0 %v2380
        %3550 = vmatprep.subr.bf16.mxu0 %v2389
        %3551 = vmatpush1.bf16.msra.mxu0 %v2388
        %3552 = vmatprep.subr.bf16.mxu0 %v2397
        %3553 = vmatpush1.bf16.msra.mxu0 %v2396
        %3554 = vmatprep.subr.bf16.mxu0 %v2405
        %3555 = vmatpush1.bf16.msra.mxu0 %v2404
        %3556 = vmatprep.subr.bf16.mxu0 %v2413
        %3557 = vmatpush1.bf16.msra.mxu0 %v2412
        %3558 = vmatprep.subr.bf16.mxu0 %v2421
        %3559 = vmatpush1.bf16.msra.mxu0 %v2420
        %3560 = vmatprep.subr.bf16.mxu0 %v2429
        %3561 = vmatpush1.bf16.msra.mxu0 %v2428
        %3562 = vmatprep.subr.bf16.mxu0 %v2437
        %3563 = vmatpush1.bf16.msra.mxu0 %v2436
        %3564 = vmatprep.subr.bf16.mxu0 %v2445
        %3565 = vmatpush1.bf16.msra.mxu0 %v2444
        %3566 = vmatprep.subr.bf16.mxu0 %v2453
        %3567 = vmatpush1.bf16.msra.mxu0 %v2452
        %3568 = vmatprep.subr.bf16.mxu0 %v2461
        %3569 = vmatpush1.bf16.msra.mxu0 %v2460
        %3570 = vmatprep.subr.bf16.mxu0 %v2469
        %3571 = vmatpush1.bf16.msra.mxu0 %v2468
        %3572 = vmatprep.subr.bf16.mxu0 %v2477
        %3573 = vmatpush1.bf16.msra.mxu0 %v2476
        %3574 = vmatprep.mubr.bf16.mxu0 %v803
        %3575 = vmatmul.mubr.bf16.gmra.mrb[0].mxu0 %v802
        %v3576 = vpop.f32.mrb[0].mxu0
        %v3577 = vadd.f32 %v761, %v3576
        %v3578 = vpop.f32.mrb[0].mxu0
        %v3579 = vadd.f32 %v765, %v3578
        %v3580 = vpop.f32.mrb[0].mxu0
        %v3581 = vpop.f32.mrb[0].mxu0
        %3582 = vdwg.mxu0
        %3583 = vmatprep.subr.bf16.mxu0 %v2485
        %3584 = vmatpush1.bf16.msra.mxu0 %v2484
        %3585 = vmatprep.subr.bf16.mxu0 %v2493
        %3586 = vmatpush1.bf16.msra.mxu0 %v2492
        %3587 = vmatprep.subr.bf16.mxu0 %v2501
        %3588 = vmatpush1.bf16.msra.mxu0 %v2500
        %3589 = vmatprep.subr.bf16.mxu0 %v2509
        %3590 = vmatpush1.bf16.msra.mxu0 %v2508
        %3591 = vmatprep.subr.bf16.mxu0 %v2517
        %3592 = vmatpush1.bf16.msra.mxu0 %v2516
        %3593 = vmatprep.subr.bf16.mxu0 %v2525
        %3594 = vmatpush1.bf16.msra.mxu0 %v2524
        %3595 = vmatprep.subr.bf16.mxu0 %v2533
        %3596 = vmatpush1.bf16.msra.mxu0 %v2532
        %3597 = vmatprep.subr.bf16.mxu0 %v2541
        %3598 = vmatpush1.bf16.msra.mxu0 %v2540
        %3599 = vmatprep.subr.bf16.mxu0 %v2549
        %3600 = vmatpush1.bf16.msra.mxu0 %v2548
        %3601 = vmatprep.subr.bf16.mxu0 %v2557
        %3602 = vmatpush1.bf16.msra.mxu0 %v2556
        %3603 = vmatprep.subr.bf16.mxu0 %v2565
        %3604 = vmatpush1.bf16.msra.mxu0 %v2564
        %3605 = vmatprep.subr.bf16.mxu0 %v2573
        %3606 = vmatpush1.bf16.msra.mxu0 %v2572
        %3607 = vmatprep.subr.bf16.mxu0 %v2581
        %3608 = vmatpush1.bf16.msra.mxu0 %v2580
        %3609 = vmatprep.subr.bf16.mxu0 %v2589
        %3610 = vmatpush1.bf16.msra.mxu0 %v2588
        %3611 = vmatprep.subr.bf16.mxu0 %v2597
        %3612 = vmatpush1.bf16.msra.mxu0 %v2596
        %3613 = vmatprep.subr.bf16.mxu0 %v2605
        %3614 = vmatpush1.bf16.msra.mxu0 %v2604
        %3615 = vmatprep.mubr.bf16.mxu0 %v805
        %3616 = vmatmul.mubr.bf16.gmra.mrb[0].mxu0 %v804
        %v3617 = vpop.f32.mrb[0].mxu0
        %v3618 = vadd.f32 %v3577, %v3617
        %v3619 = vpop.f32.mrb[0].mxu0
        %v3620 = vadd.f32 %v3579, %v3619
        %v3621 = vpop.f32.mrb[0].mxu0
        %v3622 = vpop.f32.mrb[0].mxu0
        %3623 = vdwg.mxu0
        %3624 = vmatprep.subr.bf16.mxu0 %v2613
        %3625 = vmatpush1.bf16.msra.mxu0 %v2612
        %3626 = vmatprep.subr.bf16.mxu0 %v2621
        %3627 = vmatpush1.bf16.msra.mxu0 %v2620
        %3628 = vmatprep.subr.bf16.mxu0 %v2629
        %3629 = vmatpush1.bf16.msra.mxu0 %v2628
        %3630 = vmatprep.subr.bf16.mxu0 %v2637
        %3631 = vmatpush1.bf16.msra.mxu0 %v2636
        %3632 = vmatprep.subr.bf16.mxu0 %v2645
        %3633 = vmatpush1.bf16.msra.mxu0 %v2644
        %3634 = vmatprep.subr.bf16.mxu0 %v2653
        %3635 = vmatpush1.bf16.msra.mxu0 %v2652
        %3636 = vmatprep.subr.bf16.mxu0 %v2661
        %3637 = vmatpush1.bf16.msra.mxu0 %v2660
        %3638 = vmatprep.subr.bf16.mxu0 %v2669
        %3639 = vmatpush1.bf16.msra.mxu0 %v2668
        %3640 = vmatprep.subr.bf16.mxu0 %v2677
        %3641 = vmatpush1.bf16.msra.mxu0 %v2676
        %3642 = vmatprep.subr.bf16.mxu0 %v2685
        %3643 = vmatpush1.bf16.msra.mxu0 %v2684
        %3644 = vmatprep.subr.bf16.mxu0 %v2693
        %3645 = vmatpush1.bf16.msra.mxu0 %v2692
        %3646 = vmatprep.subr.bf16.mxu0 %v2701
        %3647 = vmatpush1.bf16.msra.mxu0 %v2700
        %3648 = vmatprep.subr.bf16.mxu0 %v2709
        %3649 = vmatpush1.bf16.msra.mxu0 %v2708
        %3650 = vmatprep.subr.bf16.mxu0 %v2717
        %3651 = vmatpush1.bf16.msra.mxu0 %v2716
        %3652 = vmatprep.subr.bf16.mxu0 %v2725
        %3653 = vmatpush1.bf16.msra.mxu0 %v2724
        %3654 = vmatprep.subr.bf16.mxu0 %v2733
        %3655 = vmatpush1.bf16.msra.mxu0 %v2732
        %3656 = vmatprep.mubr.bf16.mxu0 %v807
        %3657 = vmatmul.mubr.bf16.gmra.mrb[0].mxu0 %v806
        %v3658 = vpop.f32.mrb[0].mxu0
        %v3659 = vadd.f32 %v3618, %v3658
        %v3660 = vpop.f32.mrb[0].mxu0
        %v3661 = vadd.f32 %v3620, %v3660
        %v3662 = vpop.f32.mrb[0].mxu0
        %v3663 = vpop.f32.mrb[0].mxu0
        %3664 = vdwg.mxu0
        %3665 = vmatprep.subr.bf16.mxu0 %v2741
        %3666 = vmatpush1.bf16.msra.mxu0 %v2740
        %3667 = vmatprep.subr.bf16.mxu0 %v2749
        %3668 = vmatpush1.bf16.msra.mxu0 %v2748
        %3669 = vmatprep.subr.bf16.mxu0 %v2757
        %3670 = vmatpush1.bf16.msra.mxu0 %v2756
        %3671 = vmatprep.subr.bf16.mxu0 %v2765
        %3672 = vmatpush1.bf16.msra.mxu0 %v2764
        %3673 = vmatprep.subr.bf16.mxu0 %v2773
        %3674 = vmatpush1.bf16.msra.mxu0 %v2772
        %3675 = vmatprep.subr.bf16.mxu0 %v2781
        %3676 = vmatpush1.bf16.msra.mxu0 %v2780
        %3677 = vmatprep.subr.bf16.mxu0 %v2789
        %3678 = vmatpush1.bf16.msra.mxu0 %v2788
        %3679 = vmatprep.subr.bf16.mxu0 %v2797
        %3680 = vmatpush1.bf16.msra.mxu0 %v2796
        %3681 = vmatprep.subr.bf16.mxu0 %v2805
        %3682 = vmatpush1.bf16.msra.mxu0 %v2804
        %3683 = vmatprep.subr.bf16.mxu0 %v2813
        %3684 = vmatpush1.bf16.msra.mxu0 %v2812
        %3685 = vmatprep.subr.bf16.mxu0 %v2821
        %3686 = vmatpush1.bf16.msra.mxu0 %v2820
        %3687 = vmatprep.subr.bf16.mxu0 %v2829
        %3688 = vmatpush1.bf16.msra.mxu0 %v2828
        %3689 = vmatprep.subr.bf16.mxu0 %v2837
        %3690 = vmatpush1.bf16.msra.mxu0 %v2836
        %3691 = vmatprep.subr.bf16.mxu0 %v2845
        %3692 = vmatpush1.bf16.msra.mxu0 %v2844
        %3693 = vmatprep.subr.bf16.mxu0 %v2853
        %3694 = vmatpush1.bf16.msra.mxu0 %v2852
        %3695 = vmatprep.subr.bf16.mxu0 %v2861
        %3696 = vmatpush1.bf16.msra.mxu0 %v2860
        %3697 = vmatprep.mubr.bf16.mxu0 %v809
        %3698 = vmatmul.mubr.bf16.gmra.mrb[0].mxu0 %v808
        %v3699 = vpop.f32.mrb[0].mxu0
        %v3700 = vadd.f32 %v3659, %v3699
        %v3701 = vpop.f32.mrb[0].mxu0
        %v3702 = vadd.f32 %v3661, %v3701
        %v3703 = vpop.f32.mrb[0].mxu0
        %v3704 = vpop.f32.mrb[0].mxu0
        %3705 = vdwg.mxu0
        %3706 = vmatprep.subr.bf16.mxu0 %v2359
        %3707 = vmatpush1.bf16.msra.mxu0 %v2358
        %3708 = vmatprep.subr.bf16.mxu0 %v2367
        %3709 = vmatpush1.bf16.msra.mxu0 %v2366
        %3710 = vmatprep.subr.bf16.mxu0 %v2375
        %3711 = vmatpush1.bf16.msra.mxu0 %v2374
        %3712 = vmatprep.subr.bf16.mxu0 %v2383
        %3713 = vmatpush1.bf16.msra.mxu0 %v2382
        %3714 = vmatprep.subr.bf16.mxu0 %v2391
        %3715 = vmatpush1.bf16.msra.mxu0 %v2390
        %3716 = vmatprep.subr.bf16.mxu0 %v2399
        %3717 = vmatpush1.bf16.msra.mxu0 %v2398
        %3718 = vmatprep.subr.bf16.mxu0 %v2407
        %3719 = vmatpush1.bf16.msra.mxu0 %v2406
        %3720 = vmatprep.subr.bf16.mxu0 %v2415
        %3721 = vmatpush1.bf16.msra.mxu0 %v2414
        %3722 = vmatprep.subr.bf16.mxu0 %v2423
        %3723 = vmatpush1.bf16.msra.mxu0 %v2422
        %3724 = vmatprep.subr.bf16.mxu0 %v2431
        %3725 = vmatpush1.bf16.msra.mxu0 %v2430
        %3726 = vmatprep.subr.bf16.mxu0 %v2439
        %3727 = vmatpush1.bf16.msra.mxu0 %v2438
        %3728 = vmatprep.subr.bf16.mxu0 %v2447
        %3729 = vmatpush1.bf16.msra.mxu0 %v2446
        %3730 = vmatprep.subr.bf16.mxu0 %v2455
        %3731 = vmatpush1.bf16.msra.mxu0 %v2454
        %3732 = vmatprep.subr.bf16.mxu0 %v2463
        %3733 = vmatpush1.bf16.msra.mxu0 %v2462
        %3734 = vmatprep.subr.bf16.mxu0 %v2471
        %3735 = vmatpush1.bf16.msra.mxu0 %v2470
        %3736 = vmatprep.subr.bf16.mxu0 %v2479
        %3737 = vmatpush1.bf16.msra.mxu0 %v2478
        %3738 = vmatprep.mubr.bf16.mxu0 %v803
        %3739 = vmatmul.mubr.bf16.gmra.mrb[0].mxu0 %v802
        %v3740 = vpop.f32.mrb[0].mxu0
        %v3741 = vadd.f32 %v769, %v3740
        %v3742 = vpop.f32.mrb[0].mxu0
        %v3743 = vadd.f32 %v773, %v3742
        %v3744 = vpop.f32.mrb[0].mxu0
        %v3745 = vpop.f32.mrb[0].mxu0
        %3746 = vdwg.mxu0
        %3747 = vmatprep.subr.bf16.mxu0 %v2487
        %3748 = vmatpush1.bf16.msra.mxu0 %v2486
        %3749 = vmatprep.subr.bf16.mxu0 %v2495
        %3750 = vmatpush1.bf16.msra.mxu0 %v2494
        %3751 = vmatprep.subr.bf16.mxu0 %v2503
        %3752 = vmatpush1.bf16.msra.mxu0 %v2502
        %3753 = vmatprep.subr.bf16.mxu0 %v2511
        %3754 = vmatpush1.bf16.msra.mxu0 %v2510
        %3755 = vmatprep.subr.bf16.mxu0 %v2519
        %3756 = vmatpush1.bf16.msra.mxu0 %v2518
        %3757 = vmatprep.subr.bf16.mxu0 %v2527
        %3758 = vmatpush1.bf16.msra.mxu0 %v2526
        %3759 = vmatprep.subr.bf16.mxu0 %v2535
        %3760 = vmatpush1.bf16.msra.mxu0 %v2534
        %3761 = vmatprep.subr.bf16.mxu0 %v2543
        %3762 = vmatpush1.bf16.msra.mxu0 %v2542
        %3763 = vmatprep.subr.bf16.mxu0 %v2551
        %3764 = vmatpush1.bf16.msra.mxu0 %v2550
        %3765 = vmatprep.subr.bf16.mxu0 %v2559
        %3766 = vmatpush1.bf16.msra.mxu0 %v2558
        %3767 = vmatprep.subr.bf16.mxu0 %v2567
        %3768 = vmatpush1.bf16.msra.mxu0 %v2566
        %3769 = vmatprep.subr.bf16.mxu0 %v2575
        %3770 = vmatpush1.bf16.msra.mxu0 %v2574
        %3771 = vmatprep.subr.bf16.mxu0 %v2583
        %3772 = vmatpush1.bf16.msra.mxu0 %v2582
        %3773 = vmatprep.subr.bf16.mxu0 %v2591
        %3774 = vmatpush1.bf16.msra.mxu0 %v2590
        %3775 = vmatprep.subr.bf16.mxu0 %v2599
        %3776 = vmatpush1.bf16.msra.mxu0 %v2598
        %3777 = vmatprep.subr.bf16.mxu0 %v2607
        %3778 = vmatpush1.bf16.msra.mxu0 %v2606
        %3779 = vmatprep.mubr.bf16.mxu0 %v805
        %3780 = vmatmul.mubr.bf16.gmra.mrb[0].mxu0 %v804
        %v3781 = vpop.f32.mrb[0].mxu0
        %v3782 = vadd.f32 %v3741, %v3781
        %v3783 = vpop.f32.mrb[0].mxu0
        %v3784 = vadd.f32 %v3743, %v3783
        %v3785 = vpop.f32.mrb[0].mxu0
        %v3786 = vpop.f32.mrb[0].mxu0
        %3787 = vdwg.mxu0
        %3788 = vmatprep.subr.bf16.mxu0 %v2615
        %3789 = vmatpush1.bf16.msra.mxu0 %v2614
        %3790 = vmatprep.subr.bf16.mxu0 %v2623
        %3791 = vmatpush1.bf16.msra.mxu0 %v2622
        %3792 = vmatprep.subr.bf16.mxu0 %v2631
        %3793 = vmatpush1.bf16.msra.mxu0 %v2630
        %3794 = vmatprep.subr.bf16.mxu0 %v2639
        %3795 = vmatpush1.bf16.msra.mxu0 %v2638
        %3796 = vmatprep.subr.bf16.mxu0 %v2647
        %3797 = vmatpush1.bf16.msra.mxu0 %v2646
        %3798 = vmatprep.subr.bf16.mxu0 %v2655
        %3799 = vmatpush1.bf16.msra.mxu0 %v2654
        %3800 = vmatprep.subr.bf16.mxu0 %v2663
        %3801 = vmatpush1.bf16.msra.mxu0 %v2662
        %3802 = vmatprep.subr.bf16.mxu0 %v2671
        %3803 = vmatpush1.bf16.msra.mxu0 %v2670
        %3804 = vmatprep.subr.bf16.mxu0 %v2679
        %3805 = vmatpush1.bf16.msra.mxu0 %v2678
        %3806 = vmatprep.subr.bf16.mxu0 %v2687
        %3807 = vmatpush1.bf16.msra.mxu0 %v2686
        %3808 = vmatprep.subr.bf16.mxu0 %v2695
        %3809 = vmatpush1.bf16.msra.mxu0 %v2694
        %3810 = vmatprep.subr.bf16.mxu0 %v2703
        %3811 = vmatpush1.bf16.msra.mxu0 %v2702
        %3812 = vmatprep.subr.bf16.mxu0 %v2711
        %3813 = vmatpush1.bf16.msra.mxu0 %v2710
        %3814 = vmatprep.subr.bf16.mxu0 %v2719
        %3815 = vmatpush1.bf16.msra.mxu0 %v2718
        %3816 = vmatprep.subr.bf16.mxu0 %v2727
        %3817 = vmatpush1.bf16.msra.mxu0 %v2726
        %3818 = vmatprep.subr.bf16.mxu0 %v2735
        %3819 = vmatpush1.bf16.msra.mxu0 %v2734
        %3820 = vmatprep.mubr.bf16.mxu0 %v807
        %3821 = vmatmul.mubr.bf16.gmra.mrb[0].mxu0 %v806
        %v3822 = vpop.f32.mrb[0].mxu0
        %v3823 = vadd.f32 %v3782, %v3822
        %v3824 = vpop.f32.mrb[0].mxu0
        %v3825 = vadd.f32 %v3784, %v3824
        %v3826 = vpop.f32.mrb[0].mxu0
        %v3827 = vpop.f32.mrb[0].mxu0
        %3828 = vdwg.mxu0
        %3829 = vmatprep.subr.bf16.mxu0 %v2743
        %3830 = vmatpush1.bf16.msra.mxu0 %v2742
        %3831 = vmatprep.subr.bf16.mxu0 %v2751
        %3832 = vmatpush1.bf16.msra.mxu0 %v2750
        %3833 = vmatprep.subr.bf16.mxu0 %v2759
        %3834 = vmatpush1.bf16.msra.mxu0 %v2758
        %3835 = vmatprep.subr.bf16.mxu0 %v2767
        %3836 = vmatpush1.bf16.msra.mxu0 %v2766
        %3837 = vmatprep.subr.bf16.mxu0 %v2775
        %3838 = vmatpush1.bf16.msra.mxu0 %v2774
        %3839 = vmatprep.subr.bf16.mxu0 %v2783
        %3840 = vmatpush1.bf16.msra.mxu0 %v2782
        %3841 = vmatprep.subr.bf16.mxu0 %v2791
        %3842 = vmatpush1.bf16.msra.mxu0 %v2790
        %3843 = vmatprep.subr.bf16.mxu0 %v2799
        %3844 = vmatpush1.bf16.msra.mxu0 %v2798
        %3845 = vmatprep.subr.bf16.mxu0 %v2807
        %3846 = vmatpush1.bf16.msra.mxu0 %v2806
        %3847 = vmatprep.subr.bf16.mxu0 %v2815
        %3848 = vmatpush1.bf16.msra.mxu0 %v2814
        %3849 = vmatprep.subr.bf16.mxu0 %v2823
        %3850 = vmatpush1.bf16.msra.mxu0 %v2822
        %3851 = vmatprep.subr.bf16.mxu0 %v2831
        %3852 = vmatpush1.bf16.msra.mxu0 %v2830
        %3853 = vmatprep.subr.bf16.mxu0 %v2839
        %3854 = vmatpush1.bf16.msra.mxu0 %v2838
        %3855 = vmatprep.subr.bf16.mxu0 %v2847
        %3856 = vmatpush1.bf16.msra.mxu0 %v2846
        %3857 = vmatprep.subr.bf16.mxu0 %v2855
        %3858 = vmatpush1.bf16.msra.mxu0 %v2854
        %3859 = vmatprep.subr.bf16.mxu0 %v2863
        %3860 = vmatpush1.bf16.msra.mxu0 %v2862
        %3861 = vmatprep.mubr.bf16.mxu0 %v809
        %3862 = vmatmul.mubr.bf16.gmra.mrb[0].mxu0 %v808
        %v3863 = vpop.f32.mrb[0].mxu0
        %v3864 = vadd.f32 %v3823, %v3863
        %v3865 = vpop.f32.mrb[0].mxu0
        %v3866 = vadd.f32 %v3825, %v3865
        %v3867 = vpop.f32.mrb[0].mxu0
        %v3868 = vpop.f32.mrb[0].mxu0
        %3869 = vdwg.mxu0
        %3870 = vmatprep.subr.bf16.mxu0 %v2361
        %3871 = vmatpush1.bf16.msra.mxu0 %v2360
        %3872 = vmatprep.subr.bf16.mxu0 %v2369
        %3873 = vmatpush1.bf16.msra.mxu0 %v2368
        %3874 = vmatprep.subr.bf16.mxu0 %v2377
        %3875 = vmatpush1.bf16.msra.mxu0 %v2376
        %3876 = vmatprep.subr.bf16.mxu0 %v2385
        %3877 = vmatpush1.bf16.msra.mxu0 %v2384
        %3878 = vmatprep.subr.bf16.mxu0 %v2393
        %3879 = vmatpush1.bf16.msra.mxu0 %v2392
        %3880 = vmatprep.subr.bf16.mxu0 %v2401
        %3881 = vmatpush1.bf16.msra.mxu0 %v2400
        %3882 = vmatprep.subr.bf16.mxu0 %v2409
        %3883 = vmatpush1.bf16.msra.mxu0 %v2408
        %3884 = vmatprep.subr.bf16.mxu0 %v2417
        %3885 = vmatpush1.bf16.msra.mxu0 %v2416
        %3886 = vmatprep.subr.bf16.mxu0 %v2425
        %3887 = vmatpush1.bf16.msra.mxu0 %v2424
        %3888 = vmatprep.subr.bf16.mxu0 %v2433
        %3889 = vmatpush1.bf16.msra.mxu0 %v2432
        %3890 = vmatprep.subr.bf16.mxu0 %v2441
        %3891 = vmatpush1.bf16.msra.mxu0 %v2440
        %3892 = vmatprep.subr.bf16.mxu0 %v2449
        %3893 = vmatpush1.bf16.msra.mxu0 %v2448
        %3894 = vmatprep.subr.bf16.mxu0 %v2457
        %3895 = vmatpush1.bf16.msra.mxu0 %v2456
        %3896 = vmatprep.subr.bf16.mxu0 %v2465
        %3897 = vmatpush1.bf16.msra.mxu0 %v2464
        %3898 = vmatprep.subr.bf16.mxu0 %v2473
        %3899 = vmatpush1.bf16.msra.mxu0 %v2472
        %3900 = vmatprep.subr.bf16.mxu0 %v2481
        %3901 = vmatpush1.bf16.msra.mxu0 %v2480
        %3902 = vmatprep.mubr.bf16.mxu0 %v803
        %3903 = vmatmul.mubr.bf16.gmra.mrb[0].mxu0 %v802
        %v3904 = vpop.f32.mrb[0].mxu0
        %v3905 = vadd.f32 %v777, %v3904
        %v3906 = vpop.f32.mrb[0].mxu0
        %v3907 = vadd.f32 %v781, %v3906
        %v3908 = vpop.f32.mrb[0].mxu0
        %v3909 = vpop.f32.mrb[0].mxu0
        %3910 = vdwg.mxu0
        %3911 = vmatprep.subr.bf16.mxu0 %v2489
        %3912 = vmatpush1.bf16.msra.mxu0 %v2488
        %3913 = vmatprep.subr.bf16.mxu0 %v2497
        %3914 = vmatpush1.bf16.msra.mxu0 %v2496
        %3915 = vmatprep.subr.bf16.mxu0 %v2505
        %3916 = vmatpush1.bf16.msra.mxu0 %v2504
        %3917 = vmatprep.subr.bf16.mxu0 %v2513
        %3918 = vmatpush1.bf16.msra.mxu0 %v2512
        %3919 = vmatprep.subr.bf16.mxu0 %v2521
        %3920 = vmatpush1.bf16.msra.mxu0 %v2520
        %3921 = vmatprep.subr.bf16.mxu0 %v2529
        %3922 = vmatpush1.bf16.msra.mxu0 %v2528
        %3923 = vmatprep.subr.bf16.mxu0 %v2537
        %3924 = vmatpush1.bf16.msra.mxu0 %v2536
        %3925 = vmatprep.subr.bf16.mxu0 %v2545
        %3926 = vmatpush1.bf16.msra.mxu0 %v2544
        %3927 = vmatprep.subr.bf16.mxu0 %v2553
        %3928 = vmatpush1.bf16.msra.mxu0 %v2552
        %3929 = vmatprep.subr.bf16.mxu0 %v2561
        %3930 = vmatpush1.bf16.msra.mxu0 %v2560
        %3931 = vmatprep.subr.bf16.mxu0 %v2569
        %3932 = vmatpush1.bf16.msra.mxu0 %v2568
        %3933 = vmatprep.subr.bf16.mxu0 %v2577
        %3934 = vmatpush1.bf16.msra.mxu0 %v2576
        %3935 = vmatprep.subr.bf16.mxu0 %v2585
        %3936 = vmatpush1.bf16.msra.mxu0 %v2584
        %3937 = vmatprep.subr.bf16.mxu0 %v2593
        %3938 = vmatpush1.bf16.msra.mxu0 %v2592
        %3939 = vmatprep.subr.bf16.mxu0 %v2601
        %3940 = vmatpush1.bf16.msra.mxu0 %v2600
        %3941 = vmatprep.subr.bf16.mxu0 %v2609
        %3942 = vmatpush1.bf16.msra.mxu0 %v2608
        %3943 = vmatprep.mubr.bf16.mxu0 %v805
        %3944 = vmatmul.mubr.bf16.gmra.mrb[0].mxu0 %v804
        %v3945 = vpop.f32.mrb[0].mxu0
        %v3946 = vadd.f32 %v3905, %v3945
        %v3947 = vpop.f32.mrb[0].mxu0
        %v3948 = vadd.f32 %v3907, %v3947
        %v3949 = vpop.f32.mrb[0].mxu0
        %v3950 = vpop.f32.mrb[0].mxu0
        %3951 = vdwg.mxu0
        %3952 = vmatprep.subr.bf16.mxu0 %v2617
        %3953 = vmatpush1.bf16.msra.mxu0 %v2616
        %3954 = vmatprep.subr.bf16.mxu0 %v2625
        %3955 = vmatpush1.bf16.msra.mxu0 %v2624
        %3956 = vmatprep.subr.bf16.mxu0 %v2633
        %3957 = vmatpush1.bf16.msra.mxu0 %v2632
        %3958 = vmatprep.subr.bf16.mxu0 %v2641
        %3959 = vmatpush1.bf16.msra.mxu0 %v2640
        %3960 = vmatprep.subr.bf16.mxu0 %v2649
        %3961 = vmatpush1.bf16.msra.mxu0 %v2648
        %3962 = vmatprep.subr.bf16.mxu0 %v2657
        %3963 = vmatpush1.bf16.msra.mxu0 %v2656
        %3964 = vmatprep.subr.bf16.mxu0 %v2665
        %3965 = vmatpush1.bf16.msra.mxu0 %v2664
        %3966 = vmatprep.subr.bf16.mxu0 %v2673
        %3967 = vmatpush1.bf16.msra.mxu0 %v2672
        %3968 = vmatprep.subr.bf16.mxu0 %v2681
        %3969 = vmatpush1.bf16.msra.mxu0 %v2680
        %3970 = vmatprep.subr.bf16.mxu0 %v2689
        %3971 = vmatpush1.bf16.msra.mxu0 %v2688
        %3972 = vmatprep.subr.bf16.mxu0 %v2697
        %3973 = vmatpush1.bf16.msra.mxu0 %v2696
        %3974 = vmatprep.subr.bf16.mxu0 %v2705
        %3975 = vmatpush1.bf16.msra.mxu0 %v2704
        %3976 = vmatprep.subr.bf16.mxu0 %v2713
        %3977 = vmatpush1.bf16.msra.mxu0 %v2712
        %3978 = vmatprep.subr.bf16.mxu0 %v2721
        %3979 = vmatpush1.bf16.msra.mxu0 %v2720
        %3980 = vmatprep.subr.bf16.mxu0 %v2729
        %3981 = vmatpush1.bf16.msra.mxu0 %v2728
        %3982 = vmatprep.subr.bf16.mxu0 %v2737
        %3983 = vmatpush1.bf16.msra.mxu0 %v2736
        %3984 = vmatprep.mubr.bf16.mxu0 %v807
        %3985 = vmatmul.mubr.bf16.gmra.mrb[0].mxu0 %v806
        %v3986 = vpop.f32.mrb[0].mxu0
        %v3987 = vadd.f32 %v3946, %v3986
        %v3988 = vpop.f32.mrb[0].mxu0
        %v3989 = vadd.f32 %v3948, %v3988
        %v3990 = vpop.f32.mrb[0].mxu0
        %v3991 = vpop.f32.mrb[0].mxu0
        %3992 = vdwg.mxu0
        %3993 = vmatprep.subr.bf16.mxu0 %v2745
        %3994 = vmatpush1.bf16.msra.mxu0 %v2744
        %3995 = vmatprep.subr.bf16.mxu0 %v2753
        %3996 = vmatpush1.bf16.msra.mxu0 %v2752
        %3997 = vmatprep.subr.bf16.mxu0 %v2761
        %3998 = vmatpush1.bf16.msra.mxu0 %v2760
        %3999 = vmatprep.subr.bf16.mxu0 %v2769
        %4000 = vmatpush1.bf16.msra.mxu0 %v2768
        %4001 = vmatprep.subr.bf16.mxu0 %v2777
        %4002 = vmatpush1.bf16.msra.mxu0 %v2776
        %4003 = vmatprep.subr.bf16.mxu0 %v2785
        %4004 = vmatpush1.bf16.msra.mxu0 %v2784
        %4005 = vmatprep.subr.bf16.mxu0 %v2793
        %4006 = vmatpush1.bf16.msra.mxu0 %v2792
        %4007 = vmatprep.subr.bf16.mxu0 %v2801
        %4008 = vmatpush1.bf16.msra.mxu0 %v2800
        %4009 = vmatprep.subr.bf16.mxu0 %v2809
        %4010 = vmatpush1.bf16.msra.mxu0 %v2808
        %4011 = vmatprep.subr.bf16.mxu0 %v2817
        %4012 = vmatpush1.bf16.msra.mxu0 %v2816
        %4013 = vmatprep.subr.bf16.mxu0 %v2825
        %4014 = vmatpush1.bf16.msra.mxu0 %v2824
        %4015 = vmatprep.subr.bf16.mxu0 %v2833
        %4016 = vmatpush1.bf16.msra.mxu0 %v2832
        %4017 = vmatprep.subr.bf16.mxu0 %v2841
        %4018 = vmatpush1.bf16.msra.mxu0 %v2840
        %4019 = vmatprep.subr.bf16.mxu0 %v2849
        %4020 = vmatpush1.bf16.msra.mxu0 %v2848
        %4021 = vmatprep.subr.bf16.mxu0 %v2857
        %4022 = vmatpush1.bf16.msra.mxu0 %v2856
        %4023 = vmatprep.subr.bf16.mxu0 %v2865
        %4024 = vmatpush1.bf16.msra.mxu0 %v2864
        %4025 = vmatprep.mubr.bf16.mxu0 %v809
        %4026 = vmatmul.mubr.bf16.gmra.mrb[0].mxu0 %v808
        %v4027 = vpop.f32.mrb[0].mxu0
        %v4028 = vadd.f32 %v3987, %v4027
        %v4029 = vpop.f32.mrb[0].mxu0
        %v4030 = vadd.f32 %v3989, %v4029
        %v4031 = vpop.f32.mrb[0].mxu0
        %v4032 = vpop.f32.mrb[0].mxu0
        %4033 = vdwg.mxu0
        %4034 = vst [vmem:[%s230] sm:$0xff] %v3536
        %4035 = vst [vmem:[%s230 + $0x8] sm:$0xff] %v3538
        %4036 = vst [vmem:[%s230 + $0x10] sm:$0xff] %v3700
        %4037 = vst [vmem:[%s230 + $0x18] sm:$0xff] %v3702
        %4038 = vst [vmem:[%s230 + $0x20] sm:$0xff] %v3864
        %4039 = vst [vmem:[%s230 + $0x28] sm:$0xff] %v3866
        %4040 = vst [vmem:[%s230 + $0x30] sm:$0xff] %v4028
        %4041 = vst [vmem:[%s230 + $0x38] sm:$0xff] %v4030
        %s4042 = smul.u32 8, %s20
        %p4043 = scmp.lt.s32.totalorder %s4042, 47
        %s4044 = scalar_select %p4043, %s4042, 47
        %s4045 = smul.addr %s4044, 8
        %s4046 = scalar_lea.vmem %s3, %s4045
        // Predicated region
        $region41: #{pointvae_forward.3} parent=31 // pred_check
          %p4047 = pneg %p111
        $region42: #{pointvae_forward.3} parent=31 // pred_check_branch
          %4049 = sbr.rel (%p4047) target = $region44
        $region43: #{pointvae_forward.3} parent=31 // pred_region
          %s4050 = smul.u32 8, %s20
        $region44: #{pointvae_forward.3} parent=31 // pred_fallthru
          _
      $region32: #{pointvae_forward.3} parent=5 // pred_fallthru
        _
      %p4051 = scmp.le.s32.totalorder 2, %s15
      // Predicated region
      $region45: #{pointvae_forward.3} parent=5 // pred_check
        %p4052 = pneg %p4051
      $region46: #{pointvae_forward.3} parent=5 // pred_check_branch
        %4054 = sbr.rel (%p4052) target = $region48
      $region47: #{pointvae_forward.3} parent=5 // pred_region
        %s4055 = ssub.s32 %s15, 2
        // Predicated region
        $region49: #{pointvae_forward.3} parent=47 // pred_check
          %p4056 = pneg %p117
        $region50: #{pointvae_forward.3} parent=47 // pred_check_branch
          %4058 = sbr.rel (%p4056) target = $region52
        $region51: #{pointvae_forward.3} parent=47 // pred_region
          %s4059 = smul.u32 8, %s21
          %p4060 = scmp.lt.s32.totalorder %s4059, 47
          %s4061 = scalar_select %p4060, %s4059, 47
          %s4062 = smul.addr %s4061, 8
          %s4063 = scalar_lea.vmem %s3, %s4062
        $region52: #{pointvae_forward.3} parent=47 // pred_fallthru
          _
      $region48: #{pointvae_forward.3} parent=5 // pred_fallthru
        _
    $region6: #{pointvae_forward.3} parent=1 // loop_footer
      %s19 = sadd.s32 1, %s15
    $region7: #{pointvae_forward.3} parent=1 // loop_footer_branch
      %14 = sbr.rel target = $region3
    $region8: #{pointvae_forward.3} parent=1 // loop_exit
      _
    %4064 = vsyncpa [#allocation3], 1
    %s4065 = scalar_lea.sflag [#allocation3], 1
    %4066 = vsyncpa %s4065, 1
    %4067 = vsyncpa [#allocation5], 1
    %s4068 = scalar_lea.sflag [#allocation5], 1
    %4069 = vsyncpa %s4068, 1

</llo_original>
